<compile_context>
chip_gen: v7x
topology: tpu7x:2x2x1
jax: 0.10.0
libtpu: 0.0.40
codegen_flags: <defaults>
</compile_context>

<pallas_src>
import functools

import jax
import jax.numpy as jnp
from jax.experimental import pallas as pl
from jax.experimental.pallas import tpu as pltpu

# ----------------------------- model config (small) -------------------------
NUM_CLASSES = 4                     # num_classes
C1, C2, C3, C4 = 16, 32, 64, 64     # backbone stage channels (scaled-down resnet)
IN_CHANNELS = C4                    # in_channels fed to ASPP / fdn / memory module
FEATS_CHANNELS = C4                 # feats_channels (== in_channels so fdn residual add is valid)
OUT_CHANNELS = 32                   # out_channels (ASPP out / memory output / TFM out)
EDGE_HIDDEN = 32                    # FEF hidden channels
FUSE_UP = {1: 2, 2: 1, 3: 1}        # TFM up_factor per fuse{i}
BN_EPS = 1e-5
MEM_MOMENTUM = 0.9

MAX_TM = 512                        # large row tiles: ~85% of HBM roofline vs 29% at 128
SMALL_M = 256                       # below this, pallas_call overhead > the work -> XLA
VMEM_LIMIT_BYTES = 32 * 1024 * 1024  # explicit scoped-VMEM budget (safe on v5e/v6e/v7x)


def _round_up(x, m):
    return ((x + m - 1) // m) * m


def _pick_tile(m):
    """Balance tile rows across grid steps instead of always padding to 512."""
    steps = max(1, -(-m // MAX_TM))
    tm = _round_up(-(-m // steps), 8)
    mp = _round_up(m, tm)
    return tm, mp


def _mosaic_params(semantics):
    return pltpu.CompilerParams(dimension_semantics=semantics,
                                vmem_limit_bytes=VMEM_LIMIT_BYTES)


# ----------------------------- Pallas kernels -------------------------------


def _fused_multi_kernel(*refs, n_in, branch_relu, final_relu):
    """sum_i [relu?](x_i @ w_i + b_i), optional final relu.

    refs layout: x_0..x_{n-1}, w_0..w_{n-1}, b_0..b_{n-1}, o_ref.
    Serves FEF laterals (per-branch relu), TFM fuse (final relu) and decoder2
    (no relu) with the inputs passed separately -> no HBM concat.
    """
    o_ref = refs[3 * n_in]
    acc = None
    for t in range(n_in):
        x_ref, w_ref, b_ref = refs[t], refs[n_in + t], refs[2 * n_in + t]
        y = jnp.dot(x_ref[...], w_ref[...],
                    preferred_element_type=jnp.float32) + b_ref[...]
        if branch_relu:
            y = jnp.maximum(y, 0.0)
        acc = y if acc is None else acc + y
    if final_relu:
        acc = jnp.maximum(acc, 0.0)
    o_ref[...] = acc.astype(o_ref.dtype)


def fused_conv1x1_multi(xs, ws, bs, *, branch_relu=False, final_relu=False,
                        out_dtype=jnp.bfloat16):
    """Multi-input 1x1 conv (NHWC): sum of per-input matmuls, fused in VMEM.

    xs: list of (N,H,W,Ci) tensors (same N/H/W), ws: list of (Ci, Cout) 2-D
    weights, bs: list of (Cout,) biases (None -> zeros).
    """
    N, H, W, _ = xs[0].shape
    M = N * H * W
    Cout = ws[0].shape[-1]
    bs = [jnp.zeros((Cout,), jnp.float32) if b is None else b.astype(jnp.float32)
          for b in bs]

    if M < SMALL_M or Cout < 8:
        # Tiny problem: let XLA fuse it (pallas launch + pad/slice overhead
        # would exceed the work).  Still no concat: partial matmuls summed.
        acc = None
        for x, w, b in zip(xs, ws, bs):
            y = jnp.einsum("nhwc,cd->nhwd", x.astype(jnp.bfloat16),
                           w.astype(jnp.bfloat16),
                           preferred_element_type=jnp.float32) + b
            if branch_relu:
                y = jnp.maximum(y, 0.0)
            acc = y if acc is None else acc + y
        if final_relu:
            acc = jnp.maximum(acc, 0.0)
        return acc.astype(out_dtype)

    TM, Mp = _pick_tile(M)
    n_in = len(xs)

    def flat(t):
        t2 = t.reshape(M, t.shape[-1]).astype(jnp.bfloat16)
        if Mp != M:
            t2 = jnp.pad(t2, ((0, Mp - M), (0, 0)))
        return t2

    xs2 = [flat(x) for x in xs]
    ws2 = [w.astype(jnp.bfloat16) for w in ws]
    bs2 = [b.reshape(1, Cout) for b in bs]

    in_specs = ([pl.BlockSpec((TM, x.shape[1]), lambda i: (i, 0)) for x in xs2]
                + [pl.BlockSpec(w.shape, lambda i: (0, 0)) for w in ws2]
                + [pl.BlockSpec((1, Cout), lambda i: (0, 0)) for _ in bs2])

    kernel = functools.partial(_fused_multi_kernel, n_in=n_in,
                               branch_relu=branch_relu, final_relu=final_relu)
    out = pl.pallas_call(
        kernel,
        out_shape=jax.ShapeDtypeStruct((Mp, Cout), out_dtype),
        grid=(Mp // TM,),
        in_specs=in_specs,
        out_specs=pl.BlockSpec((TM, Cout), lambda i: (i, 0)),
        compiler_params=_mosaic_params(("parallel",)),
    )(*xs2, *ws2, *bs2)
    return out[:M].reshape(N, H, W, Cout)


def _pemr_mega_kernel(c4_ref, b2_ref, gpc_ref,
                      wa1_ref, ba1_ref, wp1_ref, wp2_ref,
                      wd1_ref, bd1_ref, proto_ref,
                      wmp_ref, bmp_ref, wo_ref, bo_ref, o_ref):
    """Fused ASPP(1x1 branch + projection) + decoder1 + PEMR memory read.

      b1    = relu(c4 @ W_aspp1 + b_aspp1)              (ASPP 1x1 branch)
      feats = relu(b1 @ Wp1 + b2 @ Wp2 + gpc)           (ASPP projection; gpc
                                                         already holds the
                                                         global-pool branch
                                                         contribution + bias)
      wm    = feats @ W_dec1 + b_dec1                   (decoder1, stays in VMEM)
      proj  = relu(c4 @ W_memproj + b_memproj)
      attn  = softmax(proj @ P^T + wm)                  (f32 softmax)
      mem   = attn @ P
      out   = relu(concat([proj, mem]) @ W_out + b_out) (single K=2*Cf matmul)
    """
    c4 = c4_ref[...]                                                   # bf16
    b1 = jnp.dot(c4, wa1_ref[...], preferred_element_type=jnp.float32)
    b1 = jnp.maximum(b1 + ba1_ref[...], 0.0)
    feats = (jnp.dot(b1.astype(jnp.bfloat16), wp1_ref[...],
                     preferred_element_type=jnp.float32)
             + jnp.dot(b2_ref[...], wp2_ref[...],
                       preferred_element_type=jnp.float32)
             + gpc_ref[...])
    feats = jnp.maximum(feats, 0.0)
    wm = jnp.dot(feats.astype(jnp.bfloat16), wd1_ref[...],
                 preferred_element_type=jnp.float32) + bd1_ref[...]    # (TM, K)

    proj = jnp.dot(c4, wmp_ref[...], preferred_element_type=jnp.float32)
    proj = jnp.maximum(proj + bmp_ref[...], 0.0)                       # (TM, Cf)
    proj_bf = proj.astype(jnp.bfloat16)

    p_bf = proto_ref[...].astype(jnp.bfloat16)                         # (K, Cf)
    logits = jax.lax.dot_general(proj_bf, p_bf, (((1,), (1,)), ((), ())),
                                 preferred_element_type=jnp.float32) + wm
    m = jnp.max(logits, axis=-1, keepdims=True)
    e = jnp.exp(logits - m)
    attn = e * pl.reciprocal(jnp.sum(e, axis=-1, keepdims=True), approx=True)

    mem = jnp.dot(attn.astype(jnp.bfloat16), p_bf,
                  preferred_element_type=jnp.float32)                  # (TM, Cf)
    cat = jnp.concatenate([proj_bf, mem.astype(jnp.bfloat16)], axis=-1)
    out = jnp.dot(cat, wo_ref[...], preferred_element_type=jnp.float32) + bo_ref[...]
    o_ref[...] = jnp.maximum(out, 0.0).astype(o_ref.dtype)


def pemr_mega(c4, b2, gpc, params):
    """Fused ASPP-proj/dec1/PEMR.  Returns memory_output (N,Hc,Wc,OUT) bf16."""
    N, Hc, Wc, Cin = c4.shape
    M = N * Hc * Wc
    Cf, K, Co = FEATS_CHANNELS, NUM_CLASSES, OUT_CHANNELS
    TM, Mp = _pick_tile(M)

    def flat(t, dt):
        t2 = t.reshape(M, t.shape[-1]).astype(dt)
        if Mp != M:
            t2 = jnp.pad(t2, ((0, Mp - M), (0, 0)))
        return t2

    c4f = flat(c4, jnp.bfloat16)
    b2f = flat(b2, jnp.bfloat16)
    gpcf = flat(gpc, jnp.float32)

    w_proj = params["aspp_proj_w"].reshape(3 * Co, Co)
    wa1 = params["aspp1_w"].reshape(Cin, Co).astype(jnp.bfloat16)
    ba1 = params["aspp1_b"].reshape(1, Co).astype(jnp.float32)
    wp1 = w_proj[:Co].astype(jnp.bfloat16)
    wp2 = w_proj[Co:2 * Co].astype(jnp.bfloat16)
    wd1 = params["dec1_w"].reshape(Co, K).astype(jnp.bfloat16)
    bd1 = params["dec1_b"].reshape(1, K).astype(jnp.float32)
    protos = params["prototypes"].astype(jnp.float32)
    wmp = params["mem_proj_w"].reshape(Cin, Cf).astype(jnp.bfloat16)
    bmp = params["mem_proj_b"].reshape(1, Cf).astype(jnp.float32)
    wo = params["mem_out_w"].reshape(2 * Cf, Co).astype(jnp.bfloat16)
    bo = params["mem_out_b"].reshape(1, Co).astype(jnp.float32)

    def row_spec(c):
        return pl.BlockSpec((TM, c), lambda i: (i, 0))

    def full(shape):
        return pl.BlockSpec(shape, lambda i: (0, 0))

    out = pl.pallas_call(
        _pemr_mega_kernel,
        out_shape=jax.ShapeDtypeStruct((Mp, Co), jnp.bfloat16),
        grid=(Mp // TM,),
        in_specs=[row_spec(Cin), row_spec(Co), row_spec(Co),
                  full((Cin, Co)), full((1, Co)),
                  full((Co, Co)), full((Co, Co)),
                  full((Co, K)), full((1, K)),
                  full((K, Cf)),
                  full((Cin, Cf)), full((1, Cf)),
                  full((2 * Cf, Co)), full((1, Co))],
        out_specs=pl.BlockSpec((TM, Co), lambda i: (i, 0)),
        compiler_params=_mosaic_params(("parallel",)),
    )(c4f, b2f, gpcf, wa1, ba1, wp1, wp2, wd1, bd1, protos, wmp, bmp, wo, bo)
    return out[:M].reshape(N, Hc, Wc, Co)


def _memory_update_kernel(lab_ref, f_ref, p_ref, new_ref, acc_sc,
                          *, momentum, num_classes):
    """No-grad prototype EMA update.

    Labels arrive as int32; one-hot is built in-kernel (iota compare).  The
    feature tile is pre-augmented with a ones column, so a SINGLE matmul per
    tile produces both the per-class feature sums and the per-class counts
    (last column).  Partial sums accumulate in VMEM scratch across the grid
    and the EMA is finalized at the last step (P3 pattern).
    """
    step = pl.program_id(0)

    @pl.when(step == 0)
    def _():
        acc_sc[...] = jnp.zeros_like(acc_sc)

    lab = lab_ref[...]                                          # (TM, 1) int32
    f_aug = f_ref[...]                                          # (TM, C+1) f32
    cls = jax.lax.broadcasted_iota(jnp.int32, (lab.shape[0], num_classes), 1)
    oh = (lab == cls).astype(jnp.float32)                       # (TM, K); pad rows (-1) stay 0
    acc_sc[...] += jax.lax.dot_general(
        oh, f_aug, (((0,), (0,)), ((), ())), preferred_element_type=jnp.float32)

    @pl.when(step == pl.num_programs(0) - 1)
    def _():
        c_feat = f_aug.shape[-1] - 1
        acc = acc_sc[...]                                       # (K, C+1)
        sums = acc[:, :c_feat]                                  # (K, C)
        counts = acc[:, c_feat:]                                # (K, 1)
        means = sums / jnp.maximum(counts, 1.0)
        p = p_ref[...]
        new_ref[...] = jnp.where(counts > 0.0,
                                 momentum * p + (1.0 - momentum) * means, p)


def memory_update(labels, feat2d, prototypes, momentum=MEM_MOMENTUM):
    M, C = feat2d.shape
    K = prototypes.shape[0]
    TM, Mp = _pick_tile(M)

    ones = jnp.ones((M, 1), jnp.float32)
    f_aug = jnp.concatenate([feat2d.astype(jnp.float32), ones], axis=-1)  # (M, C+1)
    lab = labels.reshape(M, 1).astype(jnp.int32)
    if Mp != M:
        f_aug = jnp.pad(f_aug, ((0, Mp - M), (0, 0)))
        lab = jnp.pad(lab, ((0, Mp - M), (0, 0)), constant_values=-1)

    kernel = functools.partial(_memory_update_kernel,
                               momentum=momentum, num_classes=K)
    return pl.pallas_call(
        kernel,
        out_shape=jax.ShapeDtypeStruct((K, C), jnp.float32),
        grid=(Mp // TM,),
        in_specs=[
            pl.BlockSpec((TM, 1), lambda i: (i, 0)),
            pl.BlockSpec((TM, C + 1), lambda i: (i, 0)),
            pl.BlockSpec((K, C), lambda i: (0, 0)),
        ],
        out_specs=pl.BlockSpec((K, C), lambda i: (0, 0)),
        scratch_shapes=[pltpu.VMEM((K, C + 1), jnp.float32)],
        compiler_params=_mosaic_params(("arbitrary",)),
    )(lab, f_aug, prototypes.astype(jnp.float32))


# ----------------------------- conv / resize glue ----------------------------


def conv2d_spatial(x, w, b, stride=1, padding=0, dilation=1, act="none"):
    """KxK conv via XLA's native TPU conv (bf16 operands, f32 accumulate)."""
    y = jax.lax.conv_general_dilated(
        x.astype(jnp.bfloat16), w.astype(jnp.bfloat16),
        window_strides=(stride, stride),
        padding=((padding, padding), (padding, padding)),
        rhs_dilation=(dilation, dilation),
        dimension_numbers=("NHWC", "HWIO", "NHWC"),
        preferred_element_type=jnp.float32)
    y = y + b.reshape(1, 1, 1, -1)
    if act == "relu":
        y = jnp.maximum(y, 0.0)
    return y


def resize(x, hw):
    # TODO(synk): jax.image.resize bilinear ~ F.interpolate(align_corners=False);
    # exact corner semantics may differ by sub-pixel amounts.
    N, _, _, C = x.shape
    return jax.image.resize(x, (N, hw[0], hw[1], C), method="bilinear")


# ----------------------------- parameters ------------------------------------


def init_params(key):
    keys = iter(jax.random.split(key, 64))

    def w(shape, scale=0.1):
        return scale * jax.random.normal(next(keys), shape, dtype=jnp.float32)

    def zb(c):
        return jnp.zeros((c,), jnp.float32)

    p = {}
    # synthetic backbone (stand-in for pretrained resnet50 — untranslatable)
    p["stem_w"], p["stem_b"] = w((3, 3, 3, C1)), zb(C1)
    p["c1_w"], p["c1_b"] = w((3, 3, C1, C1)), zb(C1)
    p["c2_w"], p["c2_b"] = w((3, 3, C1, C2)), zb(C2)
    p["c3_w"], p["c3_b"] = w((3, 3, C2, C3)), zb(C3)
    p["c4_w"], p["c4_b"] = w((3, 3, C3, C4)), zb(C4)
    # ASPP
    p["aspp1_w"], p["aspp1_b"] = w((1, 1, IN_CHANNELS, OUT_CHANNELS)), zb(OUT_CHANNELS)
    p["aspp2_w"], p["aspp2_b"] = w((3, 3, IN_CHANNELS, OUT_CHANNELS)), zb(OUT_CHANNELS)
    p["aspp_pool_w"], p["aspp_pool_b"] = w((1, 1, IN_CHANNELS, OUT_CHANNELS)), zb(OUT_CHANNELS)
    p["aspp_proj_w"], p["aspp_proj_b"] = w((1, 1, 3 * OUT_CHANNELS, OUT_CHANNELS)), zb(OUT_CHANNELS)
    # decoder1 -> weighting map over classes
    p["dec1_w"], p["dec1_b"] = w((1, 1, OUT_CHANNELS, NUM_CLASSES)), zb(NUM_CLASSES)
    # PEMR memory module
    p["mem_proj_w"], p["mem_proj_b"] = w((1, 1, IN_CHANNELS, FEATS_CHANNELS)), zb(FEATS_CHANNELS)
    p["prototypes"] = w((NUM_CLASSES, FEATS_CHANNELS), scale=1.0)
    p["mem_out_w"], p["mem_out_b"] = w((1, 1, FEATS_CHANNELS * 2, OUT_CHANNELS)), zb(OUT_CHANNELS)
    # FEF edge net
    p["edge1_w"], p["edge1_b"] = w((1, 1, C1, EDGE_HIDDEN)), zb(EDGE_HIDDEN)
    p["edge2_w"], p["edge2_b"] = w((1, 1, C2, EDGE_HIDDEN)), zb(EDGE_HIDDEN)
    p["edge3_w"], p["edge3_b"] = w((1, 1, C3, EDGE_HIDDEN)), zb(EDGE_HIDDEN)
    p["edge_feat_w"], p["edge_feat_b"] = w((3, 3, EDGE_HIDDEN, EDGE_HIDDEN)), zb(EDGE_HIDDEN)
    p["edge_out_w"], p["edge_out_b"] = w((1, 1, EDGE_HIDDEN, 1)), zb(1)
    # TFM fuse modules (concat(high_up, low) -> 1x1 conv -> relu)
    p["fuse3_w"], p["fuse3_b"] = w((1, 1, OUT_CHANNELS + C3, OUT_CHANNELS)), zb(OUT_CHANNELS)
    p["fuse2_w"], p["fuse2_b"] = w((1, 1, OUT_CHANNELS + C2, OUT_CHANNELS)), zb(OUT_CHANNELS)
    p["fuse1_w"], p["fuse1_b"] = w((1, 1, OUT_CHANNELS + C1, OUT_CHANNELS)), zb(OUT_CHANNELS)
    # fdn: Conv3x3(no bias) + SyncBatchNorm + ReLU.
    # TODO(synk): BN folded with fixed inference stats; PyTorch TRAIN-mode
    # SyncBatchNorm would use batch statistics.
    gamma = 1.0 + 0.05 * jax.random.normal(next(keys), (FEATS_CHANNELS,), jnp.float32)
    beta = 0.05 * jax.random.normal(next(keys), (FEATS_CHANNELS,), jnp.float32)
    r_mean = 0.05 * jax.random.normal(next(keys), (FEATS_CHANNELS,), jnp.float32)
    r_var = jnp.abs(1.0 + 0.05 * jax.random.normal(next(keys), (FEATS_CHANNELS,), jnp.float32))
    scale = gamma / jnp.sqrt(r_var + BN_EPS)
    fdn_w = w((3, 3, IN_CHANNELS, FEATS_CHANNELS))
    p["fdn_w"] = fdn_w * scale[None, None, None, :]
    p["fdn_b"] = beta - r_mean * scale
    # decoder2: 1x1 conv over concat([edge_feat] + 4 lateral outputs)
    dec2_in = EDGE_HIDDEN + 4 * OUT_CHANNELS
    p["dec2_w"], p["dec2_b"] = w((1, 1, dec2_in, NUM_CLASSES)), zb(NUM_CLASSES)
    return p


# ----------------------------- forward ---------------------------------------


def protomgnet_forward(params, x, seg_target=None, mode="TRAIN"):
    assert mode in ("TRAIN", "TEST")
    N, H, W, _ = x.shape
    img_size = (H, W)

    # -------- backbone (synthetic stand-in for resnet50) --------
    # TODO(synk): pretrained resnet50 not reproducible; scaled-down conv stack.
    s = conv2d_spatial(x, params["stem_w"], params["stem_b"], stride=2, padding=1, act="relu")
    c1 = conv2d_spatial(s, params["c1_w"], params["c1_b"], stride=2, padding=1, act="relu")    # /4
    c2 = conv2d_spatial(c1, params["c2_w"], params["c2_b"], stride=2, padding=1, act="relu")   # /8
    c3 = conv2d_spatial(c2, params["c3_w"], params["c3_b"], stride=1, padding=1, act="relu")   # /8
    c4 = conv2d_spatial(c3, params["c4_w"], params["c4_b"], stride=1, padding=1, act="relu")   # /8
    backbone_outputs = [c1, c2, c3, c4]

    # -------- ASPP pieces that feed the fused PEMR kernel --------
    # 3x3 dilated branch stays an XLA spatial conv.
    b2 = conv2d_spatial(c4, params["aspp2_w"], params["aspp2_b"],
                        padding=2, dilation=2, act="relu")
    # Global-pool branch (M == batch size): tiny -> plain jnp, then fold its
    # contribution to the ASPP projection (+ projection bias) into one
    # per-sample vector that the fused kernel just adds.
    gp_vec = jnp.mean(c4, axis=(1, 2))                                           # (N, Cin)
    gp_vec = jnp.maximum(
        gp_vec @ params["aspp_pool_w"].reshape(IN_CHANNELS, OUT_CHANNELS)
        + params["aspp_pool_b"], 0.0)                                            # (N, OUT)
    w_proj = params["aspp_proj_w"].reshape(3 * OUT_CHANNELS, OUT_CHANNELS)
    gpc_vec = gp_vec @ w_proj[2 * OUT_CHANNELS:] + params["aspp_proj_b"]         # (N, OUT)
    Hc, Wc = c4.shape[1:3]
    gpc = jnp.broadcast_to(gpc_vec[:, None, None, :], (N, Hc, Wc, OUT_CHANNELS))

    # -------- fused ASPP proj + decoder1 + PEMR memory read --------
    # feats_aspp and wm stay in VMEM; memory_output is bf16 for downstream use.
    memory_output = pemr_mega(c4, b2, gpc, params)

    # -------- FEF edge net over backbone_outputs[:-1] (fused laterals) --------
    lat_hw = c1.shape[1:3]
    e_sum = fused_conv1x1_multi(
        [c1, resize(c2, lat_hw), resize(c3, lat_hw)],
        [params["edge1_w"].reshape(C1, EDGE_HIDDEN),
         params["edge2_w"].reshape(C2, EDGE_HIDDEN),
         params["edge3_w"].reshape(C3, EDGE_HIDDEN)],
        [params["edge1_b"], params["edge2_b"], params["edge3_b"]],
        branch_relu=True, final_relu=False, out_dtype=jnp.bfloat16)
    edge_feat = conv2d_spatial(e_sum, params["edge_feat_w"], params["edge_feat_b"],
                               padding=1, act="relu")
    edge = fused_conv1x1_multi(
        [edge_feat], [params["edge_out_w"].reshape(EDGE_HIDDEN, 1)],
        [params["edge_out_b"]], out_dtype=jnp.float32)      # Cout=1 -> XLA bypass

    # -------- top-down TFM fusion (no HBM concat: split weights per input) -----
    lateral_outputs = backbone_outputs[:-1]
    lateral_outputs.append(memory_output)
    for i in range(len(lateral_outputs) - 1, 0, -1):
        high = lateral_outputs[i]
        low = lateral_outputs[i - 1]
        up = FUSE_UP[i]
        if up > 1:
            high = resize(high, (high.shape[1] * up, high.shape[2] * up))
        wf = params[f"fuse{i}_w"].reshape(high.shape[-1] + low.shape[-1], OUT_CHANNELS)
        lateral_outputs[i - 1] = fused_conv1x1_multi(
            [high, low], [wf[:high.shape[-1]], wf[high.shape[-1]:]],
            [params[f"fuse{i}_b"], None],
            branch_relu=False, final_relu=True, out_dtype=jnp.bfloat16)
    tgt_hw = lateral_outputs[0].shape[1:3]
    lateral_outputs = [resize(o, tgt_hw) for o in lateral_outputs]

    # -------- decoder2 over [edge_feat] + laterals (no HBM concat) --------
    dec_inputs = [edge_feat] + lateral_outputs
    wd2 = params["dec2_w"].reshape(EDGE_HIDDEN + 4 * OUT_CHANNELS, NUM_CLASSES)
    w_chunks, b_chunks, off = [], [], 0
    for t in dec_inputs:
        c = t.shape[-1]
        w_chunks.append(wd2[off:off + c])
        b_chunks.append(params["dec2_b"] if off == 0 else None)
        off += c
    preds = fused_conv1x1_multi(dec_inputs, w_chunks, b_chunks,
                                branch_relu=False, final_relu=False,
                                out_dtype=jnp.float32)

    new_prototypes = params["prototypes"]
    if mode == "TRAIN":
        # fdn branch: conv3x3 + (folded) BN + ReLU, residual add onto c4
        fdn = conv2d_spatial(c4, params["fdn_w"], params["fdn_b"], padding=1, act="relu")
        fdn = c4 + fdn
        # no-grad prototype update against the segmentation targets
        feat_full = jax.lax.stop_gradient(resize(fdn, img_size))
        feat_flat = feat_full.reshape(N * H * W, FEATS_CHANNELS)
        new_prototypes = memory_update(seg_target.reshape(-1), feat_flat,
                                       params["prototypes"])
        edge = resize(edge, img_size)

    # PyTorch module returns (preds, edge); the prototype update is an in-place
    # buffer mutation there, so it is returned explicitly here.
    return preds, edge, new_prototypes


# ----------------------------- main -------------------------------------------

if __name__ == "__main__":
    key = jax.random.PRNGKey(0)
    pkey, xkey, tkey = jax.random.split(key, 3)
    params = init_params(pkey)

    # x: NHWC (PyTorch would be NCHW (2, 3, 64, 64))
    x = jax.random.normal(xkey, (2, 64, 64, 3), dtype=jnp.float32)
    seg_target = jax.random.randint(tkey, (2, 64, 64), 0, NUM_CLASSES)

    fwd = jax.jit(functools.partial(protomgnet_forward, mode="TRAIN"))
    preds, edge, new_protos = fwd(params, x, seg_target)
    jax.block_until_ready((preds, edge, new_protos))

    assert preds.shape == (2, 16, 16, NUM_CLASSES)
    assert edge.shape == (2, 64, 64, 1)
    assert new_protos.shape == (NUM_CLASSES, FEATS_CHANNELS)
    print("KERNEL_OK")
</pallas_src>

<mosaic_0001>
module attributes {stable_mosaic.version = 11 : i64} {
  func.func @_fused_multi_kernel(%arg0: i32, %arg1: memref<512x16xbf16, #tpu.memory_space<vmem>>, %arg2: memref<512x32xbf16, #tpu.memory_space<vmem>>, %arg3: memref<512x64xbf16, #tpu.memory_space<vmem>>, %arg4: memref<16x32xbf16, #tpu.memory_space<vmem>>, %arg5: memref<32x32xbf16, #tpu.memory_space<vmem>>, %arg6: memref<64x32xbf16, #tpu.memory_space<vmem>>, %arg7: memref<1x32xf32, #tpu.memory_space<vmem>>, %arg8: memref<1x32xf32, #tpu.memory_space<vmem>>, %arg9: memref<1x32xf32, #tpu.memory_space<vmem>>, %arg10: memref<512x32xbf16, #tpu.memory_space<vmem>>) attributes {dimension_semantics = [#tpu.dimension_semantics<parallel>], iteration_bounds = array<i64: 1>, scalar_prefetch = 0 : i64, scratch_operands = 0 : i64, tpu.core_type = #tpu.core_type<tc>, window_params = [{transform_indices = @transform_0, window_bounds = array<i64: 512, 16>}, {transform_indices = @transform_1, window_bounds = array<i64: 512, 32>}, {transform_indices = @transform_2, window_bounds = array<i64: 512, 64>}, {pipeline_mode = #tpu.pipeline_mode<synchronous>, transform_indices = @transform_3, window_bounds = array<i64: 16, 32>}, {pipeline_mode = #tpu.pipeline_mode<synchronous>, transform_indices = @transform_4, window_bounds = array<i64: 32, 32>}, {pipeline_mode = #tpu.pipeline_mode<synchronous>, transform_indices = @transform_5, window_bounds = array<i64: 64, 32>}, {pipeline_mode = #tpu.pipeline_mode<synchronous>, transform_indices = @transform_6, window_bounds = array<i64: 1, 32>}, {pipeline_mode = #tpu.pipeline_mode<synchronous>, transform_indices = @transform_7, window_bounds = array<i64: 1, 32>}, {pipeline_mode = #tpu.pipeline_mode<synchronous>, transform_indices = @transform_8, window_bounds = array<i64: 1, 32>}, {transform_indices = @transform_9, window_bounds = array<i64: 512, 32>}]} {
    %c0 = arith.constant 0 : index
    %c0_0 = arith.constant 0 : index
    %0 = vector.load %arg1[%c0, %c0_0] : memref<512x16xbf16, #tpu.memory_space<vmem>>, vector<512x16xbf16>
    %c0_1 = arith.constant 0 : index
    %c0_2 = arith.constant 0 : index
    %1 = vector.load %arg4[%c0_1, %c0_2] : memref<16x32xbf16, #tpu.memory_space<vmem>>, vector<16x32xbf16>
    %cst = arith.constant dense<0.000000e+00> : vector<512x32xf32>
    %2 = tpu.matmul %0, %1, %cst {dimension_numbers = #tpu.dot_dimension_numbers<[1], [0], [0], [1], [0, 0, 1, 1], [], []>} : vector<512x16xbf16>, vector<16x32xbf16>, vector<512x32xf32> -> vector<512x32xf32>
    %c0_3 = arith.constant 0 : index
    %c0_4 = arith.constant 0 : index
    %3 = vector.load %arg7[%c0_3, %c0_4] : memref<1x32xf32, #tpu.memory_space<vmem>>, vector<1x32xf32>
    %4 = vector.broadcast %3 : vector<1x32xf32> to vector<512x32xf32>
    %5 = arith.addf %2, %4 : vector<512x32xf32>
    %cst_5 = arith.constant 0.000000e+00 : f32
    %6 = vector.broadcast %cst_5 : f32 to vector<512x32xf32>
    %7 = arith.maximumf %5, %6 : vector<512x32xf32>
    %c0_6 = arith.constant 0 : index
    %c0_7 = arith.constant 0 : index
    %8 = vector.load %arg2[%c0_6, %c0_7] : memref<512x32xbf16, #tpu.memory_space<vmem>>, vector<512x32xbf16>
    %c0_8 = arith.constant 0 : index
    %c0_9 = arith.constant 0 : index
    %9 = vector.load %arg5[%c0_8, %c0_9] : memref<32x32xbf16, #tpu.memory_space<vmem>>, vector<32x32xbf16>
    %cst_10 = arith.constant dense<0.000000e+00> : vector<512x32xf32>
    %10 = tpu.matmul %8, %9, %cst_10 {dimension_numbers = #tpu.dot_dimension_numbers<[1], [0], [0], [1], [0, 0, 1, 1], [], []>} : vector<512x32xbf16>, vector<32x32xbf16>, vector<512x32xf32> -> vector<512x32xf32>
    %c0_11 = arith.constant 0 : index
    %c0_12 = arith.constant 0 : index
    %11 = vector.load %arg8[%c0_11, %c0_12] : memref<1x32xf32, #tpu.memory_space<vmem>>, vector<1x32xf32>
    %12 = vector.broadcast %11 : vector<1x32xf32> to vector<512x32xf32>
    %13 = arith.addf %10, %12 : vector<512x32xf32>
    %cst_13 = arith.constant 0.000000e+00 : f32
    %14 = vector.broadcast %cst_13 : f32 to vector<512x32xf32>
    %15 = arith.maximumf %13, %14 : vector<512x32xf32>
    %16 = arith.addf %7, %15 : vector<512x32xf32>
    %c0_14 = arith.constant 0 : index
    %c0_15 = arith.constant 0 : index
    %17 = vector.load %arg3[%c0_14, %c0_15] : memref<512x64xbf16, #tpu.memory_space<vmem>>, vector<512x64xbf16>
    %c0_16 = arith.constant 0 : index
    %c0_17 = arith.constant 0 : index
    %18 = vector.load %arg6[%c0_16, %c0_17] : memref<64x32xbf16, #tpu.memory_space<vmem>>, vector<64x32xbf16>
    %cst_18 = arith.constant dense<0.000000e+00> : vector<512x32xf32>
    %19 = tpu.matmul %17, %18, %cst_18 {dimension_numbers = #tpu.dot_dimension_numbers<[1], [0], [0], [1], [0, 0, 1, 1], [], []>} : vector<512x64xbf16>, vector<64x32xbf16>, vector<512x32xf32> -> vector<512x32xf32>
    %c0_19 = arith.constant 0 : index
    %c0_20 = arith.constant 0 : index
    %20 = vector.load %arg9[%c0_19, %c0_20] : memref<1x32xf32, #tpu.memory_space<vmem>>, vector<1x32xf32>
    %21 = vector.broadcast %20 : vector<1x32xf32> to vector<512x32xf32>
    %22 = arith.addf %19, %21 : vector<512x32xf32>
    %cst_21 = arith.constant 0.000000e+00 : f32
    %23 = vector.broadcast %cst_21 : f32 to vector<512x32xf32>
    %24 = arith.maximumf %22, %23 : vector<512x32xf32>
    %25 = arith.addf %16, %24 : vector<512x32xf32>
    %26 = arith.truncf %25 : vector<512x32xf32> to vector<512x32xbf16>
    %c0_22 = arith.constant 0 : index
    %c0_23 = arith.constant 0 : index
    %27 = vector.load %arg10[%c0_22, %c0_23] : memref<512x32xbf16, #tpu.memory_space<vmem>>, vector<512x32xbf16>
    tpu.vector_store %arg10[%c0_22, %c0_23], %26 {strides = array<i32>} : memref<512x32xbf16, #tpu.memory_space<vmem>>, vector<512x32xbf16>,
    return
  }
  func.func @transform_0(%arg0: i32) -> (i32, i32) {
    %c0_i32 = arith.constant 0 : i32
    %c0_i32_0 = arith.constant 0 : i32
    return %arg0, %c0_i32 : i32, i32
  }
  func.func @transform_1(%arg0: i32) -> (i32, i32) {
    %c0_i32 = arith.constant 0 : i32
    %c0_i32_0 = arith.constant 0 : i32
    return %arg0, %c0_i32 : i32, i32
  }
  func.func @transform_2(%arg0: i32) -> (i32, i32) {
    %c0_i32 = arith.constant 0 : i32
    %c0_i32_0 = arith.constant 0 : i32
    return %arg0, %c0_i32 : i32, i32
  }
  func.func @transform_3(%arg0: i32) -> (i32, i32) {
    %c0_i32 = arith.constant 0 : i32
    %c0_i32_0 = arith.constant 0 : i32
    %c0_i32_1 = arith.constant 0 : i32
    return %c0_i32, %c0_i32_0 : i32, i32
  }
  func.func @transform_4(%arg0: i32) -> (i32, i32) {
    %c0_i32 = arith.constant 0 : i32
    %c0_i32_0 = arith.constant 0 : i32
    %c0_i32_1 = arith.constant 0 : i32
    return %c0_i32, %c0_i32_0 : i32, i32
  }
  func.func @transform_5(%arg0: i32) -> (i32, i32) {
    %c0_i32 = arith.constant 0 : i32
    %c0_i32_0 = arith.constant 0 : i32
    %c0_i32_1 = arith.constant 0 : i32
    return %c0_i32, %c0_i32_0 : i32, i32
  }
  func.func @transform_6(%arg0: i32) -> (i32, i32) {
    %c0_i32 = arith.constant 0 : i32
    %c0_i32_0 = arith.constant 0 : i32
    %c0_i32_1 = arith.constant 0 : i32
    return %c0_i32, %c0_i32_0 : i32, i32
  }
  func.func @transform_7(%arg0: i32) -> (i32, i32) {
    %c0_i32 = arith.constant 0 : i32
    %c0_i32_0 = arith.constant 0 : i32
    %c0_i32_1 = arith.constant 0 : i32
    return %c0_i32, %c0_i32_0 : i32, i32
  }
  func.func @transform_8(%arg0: i32) -> (i32, i32) {
    %c0_i32 = arith.constant 0 : i32
    %c0_i32_0 = arith.constant 0 : i32
    %c0_i32_1 = arith.constant 0 : i32
    return %c0_i32, %c0_i32_0 : i32, i32
  }
  func.func @transform_9(%arg0: i32) -> (i32, i32) {
    %c0_i32 = arith.constant 0 : i32
    %c0_i32_0 = arith.constant 0 : i32
    return %arg0, %c0_i32 : i32, i32
  }
}

module attributes {stable_mosaic.version = 11 : i64} {
  func.func @_pemr_mega_kernel(%arg0: i32, %arg1: memref<128x64xbf16, #tpu.memory_space<vmem>>, %arg2: memref<128x32xbf16, #tpu.memory_space<vmem>>, %arg3: memref<128x32xf32, #tpu.memory_space<vmem>>, %arg4: memref<64x32xbf16, #tpu.memory_space<vmem>>, %arg5: memref<1x32xf32, #tpu.memory_space<vmem>>, %arg6: memref<32x32xbf16, #tpu.memory_space<vmem>>, %arg7: memref<32x32xbf16, #tpu.memory_space<vmem>>, %arg8: memref<32x4xbf16, #tpu.memory_space<vmem>>, %arg9: memref<1x4xf32, #tpu.memory_space<vmem>>, %arg10: memref<4x64xf32, #tpu.memory_space<vmem>>, %arg11: memref<64x64xbf16, #tpu.memory_space<vmem>>, %arg12: memref<1x64xf32, #tpu.memory_space<vmem>>, %arg13: memref<128x32xbf16, #tpu.memory_space<vmem>>, %arg14: memref<1x32xf32, #tpu.memory_space<vmem>>, %arg15: memref<128x32xbf16, #tpu.memory_space<vmem>>) attributes {dimension_semantics = [#tpu.dimension_semantics<parallel>], iteration_bounds = array<i64: 1>, scalar_prefetch = 0 : i64, scratch_operands = 0 : i64, tpu.core_type = #tpu.core_type<tc>, window_params = [{transform_indices = @transform_0, window_bounds = array<i64: 128, 64>}, {transform_indices = @transform_1, window_bounds = array<i64: 128, 32>}, {transform_indices = @transform_2, window_bounds = array<i64: 128, 32>}, {pipeline_mode = #tpu.pipeline_mode<synchronous>, transform_indices = @transform_3, window_bounds = array<i64: 64, 32>}, {pipeline_mode = #tpu.pipeline_mode<synchronous>, transform_indices = @transform_4, window_bounds = array<i64: 1, 32>}, {pipeline_mode = #tpu.pipeline_mode<synchronous>, transform_indices = @transform_5, window_bounds = array<i64: 32, 32>}, {pipeline_mode = #tpu.pipeline_mode<synchronous>, transform_indices = @transform_6, window_bounds = array<i64: 32, 32>}, {pipeline_mode = #tpu.pipeline_mode<synchronous>, transform_indices = @transform_7, window_bounds = array<i64: 32, 4>}, {pipeline_mode = #tpu.pipeline_mode<synchronous>, transform_indices = @transform_8, window_bounds = array<i64: 1, 4>}, {pipeline_mode = #tpu.pipeline_mode<synchronous>, transform_indices = @transform_9, window_bounds = array<i64: 4, 64>}, {pipeline_mode = #tpu.pipeline_mode<synchronous>, transform_indices = @transform_10, window_bounds = array<i64: 64, 64>}, {pipeline_mode = #tpu.pipeline_mode<synchronous>, transform_indices = @transform_11, window_bounds = array<i64: 1, 64>}, {pipeline_mode = #tpu.pipeline_mode<synchronous>, transform_indices = @transform_12, window_bounds = array<i64: 128, 32>}, {pipeline_mode = #tpu.pipeline_mode<synchronous>, transform_indices = @transform_13, window_bounds = array<i64: 1, 32>}, {transform_indices = @transform_14, window_bounds = array<i64: 128, 32>}]} {
    %c0 = arith.constant 0 : index
    %c0_0 = arith.constant 0 : index
    %0 = vector.load %arg1[%c0, %c0_0] : memref<128x64xbf16, #tpu.memory_space<vmem>>, vector<128x64xbf16>
    %c0_1 = arith.constant 0 : index
    %c0_2 = arith.constant 0 : index
    %1 = vector.load %arg4[%c0_1, %c0_2] : memref<64x32xbf16, #tpu.memory_space<vmem>>, vector<64x32xbf16>
    %cst = arith.constant dense<0.000000e+00> : vector<128x32xf32>
    %2 = tpu.matmul %0, %1, %cst {dimension_numbers = #tpu.dot_dimension_numbers<[1], [0], [0], [1], [0, 0, 1, 1], [], []>} : vector<128x64xbf16>, vector<64x32xbf16>, vector<128x32xf32> -> vector<128x32xf32>
    %c0_3 = arith.constant 0 : index
    %c0_4 = arith.constant 0 : index
    %3 = vector.load %arg5[%c0_3, %c0_4] : memref<1x32xf32, #tpu.memory_space<vmem>>, vector<1x32xf32>
    %4 = vector.broadcast %3 : vector<1x32xf32> to vector<128x32xf32>
    %5 = arith.addf %2, %4 : vector<128x32xf32>
    %cst_5 = arith.constant 0.000000e+00 : f32
    %6 = vector.broadcast %cst_5 : f32 to vector<128x32xf32>
    %7 = arith.maximumf %5, %6 : vector<128x32xf32>
    %8 = arith.truncf %7 : vector<128x32xf32> to vector<128x32xbf16>
    %c0_6 = arith.constant 0 : index
    %c0_7 = arith.constant 0 : index
    %9 = vector.load %arg6[%c0_6, %c0_7] : memref<32x32xbf16, #tpu.memory_space<vmem>>, vector<32x32xbf16>
    %cst_8 = arith.constant dense<0.000000e+00> : vector<128x32xf32>
    %10 = tpu.matmul %8, %9, %cst_8 {dimension_numbers = #tpu.dot_dimension_numbers<[1], [0], [0], [1], [0, 0, 1, 1], [], []>} : vector<128x32xbf16>, vector<32x32xbf16>, vector<128x32xf32> -> vector<128x32xf32>
    %c0_9 = arith.constant 0 : index
    %c0_10 = arith.constant 0 : index
    %11 = vector.load %arg2[%c0_9, %c0_10] : memref<128x32xbf16, #tpu.memory_space<vmem>>, vector<128x32xbf16>
    %c0_11 = arith.constant 0 : index
    %c0_12 = arith.constant 0 : index
    %12 = vector.load %arg7[%c0_11, %c0_12] : memref<32x32xbf16, #tpu.memory_space<vmem>>, vector<32x32xbf16>
    %cst_13 = arith.constant dense<0.000000e+00> : vector<128x32xf32>
    %13 = tpu.matmul %11, %12, %cst_13 {dimension_numbers = #tpu.dot_dimension_numbers<[1], [0], [0], [1], [0, 0, 1, 1], [], []>} : vector<128x32xbf16>, vector<32x32xbf16>, vector<128x32xf32> -> vector<128x32xf32>
    %14 = arith.addf %10, %13 : vector<128x32xf32>
    %c0_14 = arith.constant 0 : index
    %c0_15 = arith.constant 0 : index
    %15 = vector.load %arg3[%c0_14, %c0_15] : memref<128x32xf32, #tpu.memory_space<vmem>>, vector<128x32xf32>
    %16 = arith.addf %14, %15 : vector<128x32xf32>
    %cst_16 = arith.constant 0.000000e+00 : f32
    %17 = vector.broadcast %cst_16 : f32 to vector<128x32xf32>
    %18 = arith.maximumf %16, %17 : vector<128x32xf32>
    %19 = arith.truncf %18 : vector<128x32xf32> to vector<128x32xbf16>
    %c0_17 = arith.constant 0 : index
    %c0_18 = arith.constant 0 : index
    %20 = vector.load %arg8[%c0_17, %c0_18] : memref<32x4xbf16, #tpu.memory_space<vmem>>, vector<32x4xbf16>
    %cst_19 = arith.constant dense<0.000000e+00> : vector<128x4xf32>
    %21 = tpu.matmul %19, %20, %cst_19 {dimension_numbers = #tpu.dot_dimension_numbers<[1], [0], [0], [1], [0, 0, 1, 1], [], []>} : vector<128x32xbf16>, vector<32x4xbf16>, vector<128x4xf32> -> vector<128x4xf32>
    %c0_20 = arith.constant 0 : index
    %c0_21 = arith.constant 0 : index
    %22 = vector.load %arg9[%c0_20, %c0_21] : memref<1x4xf32, #tpu.memory_space<vmem>>, vector<1x4xf32>
    %23 = vector.broadcast %22 : vector<1x4xf32> to vector<128x4xf32>
    %24 = arith.addf %21, %23 : vector<128x4xf32>
    %c0_22 = arith.constant 0 : index
    %c0_23 = arith.constant 0 : index
    %25 = vector.load %arg11[%c0_22, %c0_23] : memref<64x64xbf16, #tpu.memory_space<vmem>>, vector<64x64xbf16>
    %cst_24 = arith.constant dense<0.000000e+00> : vector<128x64xf32>
    %26 = tpu.matmul %0, %25, %cst_24 {dimension_numbers = #tpu.dot_dimension_numbers<[1], [0], [0], [1], [0, 0, 1, 1], [], []>} : vector<128x64xbf16>, vector<64x64xbf16>, vector<128x64xf32> -> vector<128x64xf32>
    %c0_25 = arith.constant 0 : index
    %c0_26 = arith.constant 0 : index
    %27 = vector.load %arg12[%c0_25, %c0_26] : memref<1x64xf32, #tpu.memory_space<vmem>>, vector<1x64xf32>
    %28 = vector.broadcast %27 : vector<1x64xf32> to vector<128x64xf32>
    %29 = arith.addf %26, %28 : vector<128x64xf32>
    %cst_27 = arith.constant 0.000000e+00 : f32
    %30 = vector.broadcast %cst_27 : f32 to vector<128x64xf32>
    %31 = arith.maximumf %29, %30 : vector<128x64xf32>
    %32 = arith.truncf %31 : vector<128x64xf32> to vector<128x64xbf16>
    %c0_28 = arith.constant 0 : index
    %c0_29 = arith.constant 0 : index
    %33 = vector.load %arg10[%c0_28, %c0_29] : memref<4x64xf32, #tpu.memory_space<vmem>>, vector<4x64xf32>
    %34 = arith.truncf %33 : vector<4x64xf32> to vector<4x64xbf16>
    %cst_30 = arith.constant dense<0.000000e+00> : vector<128x4xf32>
    %35 = tpu.matmul %32, %34, %cst_30 {dimension_numbers = #tpu.dot_dimension_numbers<[1], [1], [0], [0], [0, 0, 1, 0], [], []>} : vector<128x64xbf16>, vector<4x64xbf16>, vector<128x4xf32> -> vector<128x4xf32>
    %36 = arith.addf %35, %24 : vector<128x4xf32>
    %cst_31 = arith.constant dense<0xFF800000> : vector<128xf32>
    %37 = vector.multi_reduction <maximumf>, %36, %cst_31 [1] : vector<128x4xf32> to vector<128xf32>
    %38 = vector.shape_cast %37 : vector<128xf32> to vector<128x1xf32>
    %39 = vector.broadcast %38 : vector<128x1xf32> to vector<128x4xf32>
    %40 = arith.subf %36, %39 : vector<128x4xf32>
    %41 = math.exp %40 : vector<128x4xf32>
    %cst_32 = arith.constant dense<0.000000e+00> : vector<128xf32>
    %42 = vector.multi_reduction <add>, %41, %cst_32 [1] : vector<128x4xf32> to vector<128xf32>
    %43 = vector.shape_cast %42 : vector<128xf32> to vector<128x1xf32>
    %44 = tpu.reciprocal %43 {approx = true} : vector<128x1xf32> -> vector<128x1xf32>
    %45 = vector.broadcast %44 : vector<128x1xf32> to vector<128x4xf32>
    %46 = arith.mulf %41, %45 : vector<128x4xf32>
    %47 = arith.truncf %46 : vector<128x4xf32> to vector<128x4xbf16>
    %cst_33 = arith.constant dense<0.000000e+00> : vector<128x64xf32>
    %48 = tpu.matmul %47, %34, %cst_33 {dimension_numbers = #tpu.dot_dimension_numbers<[1], [0], [0], [1], [0, 0, 1, 1], [], []>} : vector<128x4xbf16>, vector<4x64xbf16>, vector<128x64xf32> -> vector<128x64xf32>
    %49 = arith.truncf %48 : vector<128x64xf32> to vector<128x64xbf16>
    %50 = tpu.concatenate %32, %49 in 1 : vector<128x64xbf16>, vector<128x64xbf16> -> vector<128x128xbf16>
    %c0_34 = arith.constant 0 : index
    %c0_35 = arith.constant 0 : index
    %51 = vector.load %arg13[%c0_34, %c0_35] : memref<128x32xbf16, #tpu.memory_space<vmem>>, vector<128x32xbf16>
    %cst_36 = arith.constant dense<0.000000e+00> : vector<128x32xf32>
    %52 = tpu.matmul %50, %51, %cst_36 {dimension_numbers = #tpu.dot_dimension_numbers<[1], [0], [0], [1], [0, 0, 1, 1], [], []>} : vector<128x128xbf16>, vector<128x32xbf16>, vector<128x32xf32> -> vector<128x32xf32>
    %c0_37 = arith.constant 0 : index
    %c0_38 = arith.constant 0 : index
    %53 = vector.load %arg14[%c0_37, %c0_38] : memref<1x32xf32, #tpu.memory_space<vmem>>, vector<1x32xf32>
    %54 = vector.broadcast %53 : vector<1x32xf32> to vector<128x32xf32>
    %55 = arith.addf %52, %54 : vector<128x32xf32>
    %cst_39 = arith.constant 0.000000e+00 : f32
    %56 = vector.broadcast %cst_39 : f32 to vector<128x32xf32>
    %57 = arith.maximumf %55, %56 : vector<128x32xf32>
    %58 = arith.truncf %57 : vector<128x32xf32> to vector<128x32xbf16>
    %c0_40 = arith.constant 0 : index
    %c0_41 = arith.constant 0 : index
    %59 = vector.load %arg15[%c0_40, %c0_41] : memref<128x32xbf16, #tpu.memory_space<vmem>>, vector<128x32xbf16>
    tpu.vector_store %arg15[%c0_40, %c0_41], %58 {strides = array<i32>} : memref<128x32xbf16, #tpu.memory_space<vmem>>, vector<128x32xbf16>,
    return
  }
  func.func @transform_0(%arg0: i32) -> (i32, i32) {
    %c0_i32 = arith.constant 0 : i32
    %c0_i32_0 = arith.constant 0 : i32
    return %arg0, %c0_i32 : i32, i32
  }
  func.func @transform_1(%arg0: i32) -> (i32, i32) {
    %c0_i32 = arith.constant 0 : i32
    %c0_i32_0 = arith.constant 0 : i32
    return %arg0, %c0_i32 : i32, i32
  }
  func.func @transform_2(%arg0: i32) -> (i32, i32) {
    %c0_i32 = arith.constant 0 : i32
    %c0_i32_0 = arith.constant 0 : i32
    return %arg0, %c0_i32 : i32, i32
  }
  func.func @transform_3(%arg0: i32) -> (i32, i32) {
    %c0_i32 = arith.constant 0 : i32
    %c0_i32_0 = arith.constant 0 : i32
    %c0_i32_1 = arith.constant 0 : i32
    return %c0_i32, %c0_i32_0 : i32, i32
  }
  func.func @transform_4(%arg0: i32) -> (i32, i32) {
    %c0_i32 = arith.constant 0 : i32
    %c0_i32_0 = arith.constant 0 : i32
    %c0_i32_1 = arith.constant 0 : i32
    return %c0_i32, %c0_i32_0 : i32, i32
  }
  func.func @transform_5(%arg0: i32) -> (i32, i32) {
    %c0_i32 = arith.constant 0 : i32
    %c0_i32_0 = arith.constant 0 : i32
    %c0_i32_1 = arith.constant 0 : i32
    return %c0_i32, %c0_i32_0 : i32, i32
  }
  func.func @transform_6(%arg0: i32) -> (i32, i32) {
    %c0_i32 = arith.constant 0 : i32
    %c0_i32_0 = arith.constant 0 : i32
    %c0_i32_1 = arith.constant 0 : i32
    return %c0_i32, %c0_i32_0 : i32, i32
  }
  func.func @transform_7(%arg0: i32) -> (i32, i32) {
    %c0_i32 = arith.constant 0 : i32
    %c0_i32_0 = arith.constant 0 : i32
    %c0_i32_1 = arith.constant 0 : i32
    return %c0_i32, %c0_i32_0 : i32, i32
  }
  func.func @transform_8(%arg0: i32) -> (i32, i32) {
    %c0_i32 = arith.constant 0 : i32
    %c0_i32_0 = arith.constant 0 : i32
    %c0_i32_1 = arith.constant 0 : i32
    return %c0_i32, %c0_i32_0 : i32, i32
  }
  func.func @transform_9(%arg0: i32) -> (i32, i32) {
    %c0_i32 = arith.constant 0 : i32
    %c0_i32_0 = arith.constant 0 : i32
    %c0_i32_1 = arith.constant 0 : i32
    return %c0_i32, %c0_i32_0 : i32, i32
  }
  func.func @transform_10(%arg0: i32) -> (i32, i32) {
    %c0_i32 = arith.constant 0 : i32
    %c0_i32_0 = arith.constant 0 : i32
    %c0_i32_1 = arith.constant 0 : i32
    return %c0_i32, %c0_i32_0 : i32, i32
  }
  func.func @transform_11(%arg0: i32) -> (i32, i32) {
    %c0_i32 = arith.constant 0 : i32
    %c0_i32_0 = arith.constant 0 : i32
    %c0_i32_1 = arith.constant 0 : i32
    return %c0_i32, %c0_i32_0 : i32, i32
  }
  func.func @transform_12(%arg0: i32) -> (i32, i32) {
    %c0_i32 = arith.constant 0 : i32
    %c0_i32_0 = arith.constant 0 : i32
    %c0_i32_1 = arith.constant 0 : i32
    return %c0_i32, %c0_i32_0 : i32, i32
  }
  func.func @transform_13(%arg0: i32) -> (i32, i32) {
    %c0_i32 = arith.constant 0 : i32
    %c0_i32_0 = arith.constant 0 : i32
    %c0_i32_1 = arith.constant 0 : i32
    return %c0_i32, %c0_i32_0 : i32, i32
  }
  func.func @transform_14(%arg0: i32) -> (i32, i32) {
    %c0_i32 = arith.constant 0 : i32
    %c0_i32_0 = arith.constant 0 : i32
    return %arg0, %c0_i32 : i32, i32
  }
}

module attributes {stable_mosaic.version = 11 : i64} {
  func.func @_fused_multi_kernel(%arg0: i32, %arg1: memref<512x32xbf16, #tpu.memory_space<vmem>>, %arg2: memref<512x16xbf16, #tpu.memory_space<vmem>>, %arg3: memref<32x32xbf16, #tpu.memory_space<vmem>>, %arg4: memref<16x32xbf16, #tpu.memory_space<vmem>>, %arg5: memref<1x32xf32, #tpu.memory_space<vmem>>, %arg6: memref<1x32xf32, #tpu.memory_space<vmem>>, %arg7: memref<512x32xbf16, #tpu.memory_space<vmem>>) attributes {dimension_semantics = [#tpu.dimension_semantics<parallel>], iteration_bounds = array<i64: 1>, scalar_prefetch = 0 : i64, scratch_operands = 0 : i64, tpu.core_type = #tpu.core_type<tc>, window_params = [{transform_indices = @transform_0, window_bounds = array<i64: 512, 32>}, {transform_indices = @transform_1, window_bounds = array<i64: 512, 16>}, {pipeline_mode = #tpu.pipeline_mode<synchronous>, transform_indices = @transform_2, window_bounds = array<i64: 32, 32>}, {pipeline_mode = #tpu.pipeline_mode<synchronous>, transform_indices = @transform_3, window_bounds = array<i64: 16, 32>}, {pipeline_mode = #tpu.pipeline_mode<synchronous>, transform_indices = @transform_4, window_bounds = array<i64: 1, 32>}, {pipeline_mode = #tpu.pipeline_mode<synchronous>, transform_indices = @transform_5, window_bounds = array<i64: 1, 32>}, {transform_indices = @transform_6, window_bounds = array<i64: 512, 32>}]} {
    %c0 = arith.constant 0 : index
    %c0_0 = arith.constant 0 : index
    %0 = vector.load %arg1[%c0, %c0_0] : memref<512x32xbf16, #tpu.memory_space<vmem>>, vector<512x32xbf16>
    %c0_1 = arith.constant 0 : index
    %c0_2 = arith.constant 0 : index
    %1 = vector.load %arg3[%c0_1, %c0_2] : memref<32x32xbf16, #tpu.memory_space<vmem>>, vector<32x32xbf16>
    %cst = arith.constant dense<0.000000e+00> : vector<512x32xf32>
    %2 = tpu.matmul %0, %1, %cst {dimension_numbers = #tpu.dot_dimension_numbers<[1], [0], [0], [1], [0, 0, 1, 1], [], []>} : vector<512x32xbf16>, vector<32x32xbf16>, vector<512x32xf32> -> vector<512x32xf32>
    %c0_3 = arith.constant 0 : index
    %c0_4 = arith.constant 0 : index
    %3 = vector.load %arg5[%c0_3, %c0_4] : memref<1x32xf32, #tpu.memory_space<vmem>>, vector<1x32xf32>
    %4 = vector.broadcast %3 : vector<1x32xf32> to vector<512x32xf32>
    %5 = arith.addf %2, %4 : vector<512x32xf32>
    %c0_5 = arith.constant 0 : index
    %c0_6 = arith.constant 0 : index
    %6 = vector.load %arg2[%c0_5, %c0_6] : memref<512x16xbf16, #tpu.memory_space<vmem>>, vector<512x16xbf16>
    %c0_7 = arith.constant 0 : index
    %c0_8 = arith.constant 0 : index
    %7 = vector.load %arg4[%c0_7, %c0_8] : memref<16x32xbf16, #tpu.memory_space<vmem>>, vector<16x32xbf16>
    %cst_9 = arith.constant dense<0.000000e+00> : vector<512x32xf32>
    %8 = tpu.matmul %6, %7, %cst_9 {dimension_numbers = #tpu.dot_dimension_numbers<[1], [0], [0], [1], [0, 0, 1, 1], [], []>} : vector<512x16xbf16>, vector<16x32xbf16>, vector<512x32xf32> -> vector<512x32xf32>
    %c0_10 = arith.constant 0 : index
    %c0_11 = arith.constant 0 : index
    %9 = vector.load %arg6[%c0_10, %c0_11] : memref<1x32xf32, #tpu.memory_space<vmem>>, vector<1x32xf32>
    %10 = vector.broadcast %9 : vector<1x32xf32> to vector<512x32xf32>
    %11 = arith.addf %8, %10 : vector<512x32xf32>
    %12 = arith.addf %5, %11 : vector<512x32xf32>
    %cst_12 = arith.constant 0.000000e+00 : f32
    %13 = vector.broadcast %cst_12 : f32 to vector<512x32xf32>
    %14 = arith.maximumf %12, %13 : vector<512x32xf32>
    %15 = arith.truncf %14 : vector<512x32xf32> to vector<512x32xbf16>
    %c0_13 = arith.constant 0 : index
    %c0_14 = arith.constant 0 : index
    %16 = vector.load %arg7[%c0_13, %c0_14] : memref<512x32xbf16, #tpu.memory_space<vmem>>, vector<512x32xbf16>
    tpu.vector_store %arg7[%c0_13, %c0_14], %15 {strides = array<i32>} : memref<512x32xbf16, #tpu.memory_space<vmem>>, vector<512x32xbf16>,
    return
  }
  func.func @transform_0(%arg0: i32) -> (i32, i32) {
    %c0_i32 = arith.constant 0 : i32
    %c0_i32_0 = arith.constant 0 : i32
    return %arg0, %c0_i32 : i32, i32
  }
  func.func @transform_1(%arg0: i32) -> (i32, i32) {
    %c0_i32 = arith.constant 0 : i32
    %c0_i32_0 = arith.constant 0 : i32
    return %arg0, %c0_i32 : i32, i32
  }
  func.func @transform_2(%arg0: i32) -> (i32, i32) {
    %c0_i32 = arith.constant 0 : i32
    %c0_i32_0 = arith.constant 0 : i32
    %c0_i32_1 = arith.constant 0 : i32
    return %c0_i32, %c0_i32_0 : i32, i32
  }
  func.func @transform_3(%arg0: i32) -> (i32, i32) {
    %c0_i32 = arith.constant 0 : i32
    %c0_i32_0 = arith.constant 0 : i32
    %c0_i32_1 = arith.constant 0 : i32
    return %c0_i32, %c0_i32_0 : i32, i32
  }
  func.func @transform_4(%arg0: i32) -> (i32, i32) {
    %c0_i32 = arith.constant 0 : i32
    %c0_i32_0 = arith.constant 0 : i32
    %c0_i32_1 = arith.constant 0 : i32
    return %c0_i32, %c0_i32_0 : i32, i32
  }
  func.func @transform_5(%arg0: i32) -> (i32, i32) {
    %c0_i32 = arith.constant 0 : i32
    %c0_i32_0 = arith.constant 0 : i32
    %c0_i32_1 = arith.constant 0 : i32
    return %c0_i32, %c0_i32_0 : i32, i32
  }
  func.func @transform_6(%arg0: i32) -> (i32, i32) {
    %c0_i32 = arith.constant 0 : i32
    %c0_i32_0 = arith.constant 0 : i32
    return %arg0, %c0_i32 : i32, i32
  }
}

module attributes {stable_mosaic.version = 11 : i64} {
  func.func @_memory_update_kernel(%arg0: i32, %arg1: memref<512x1xi32, #tpu.memory_space<vmem>>, %arg2: memref<512x65xf32, #tpu.memory_space<vmem>>, %arg3: memref<4x64xf32, #tpu.memory_space<vmem>>, %arg4: memref<4x64xf32, #tpu.memory_space<vmem>>, %arg5: memref<4x65xf32, #tpu.memory_space<vmem>>) attributes {dimension_semantics = [#tpu.dimension_semantics<arbitrary>], iteration_bounds = array<i64: 16>, scalar_prefetch = 0 : i64, scratch_operands = 1 : i64, tpu.core_type = #tpu.core_type<tc>, window_params = [{transform_indices = @transform_0, window_bounds = array<i64: 512, 1>}, {transform_indices = @transform_1, window_bounds = array<i64: 512, 65>}, {pipeline_mode = #tpu.pipeline_mode<synchronous>, transform_indices = @transform_2, window_bounds = array<i64: 4, 64>}, {pipeline_mode = #tpu.pipeline_mode<synchronous>, transform_indices = @transform_3, window_bounds = array<i64: 4, 64>}]} {
    %c0_i32 = arith.constant 0 : i32
    %0 = arith.cmpi eq, %arg0, %c0_i32 : i32
    %1 = arith.extui %0 : i1 to i32
    %c0_i32_0 = arith.constant 0 : i32
    %2 = arith.cmpi ne, %1, %c0_i32_0 : i32
    scf.if %2 {
      %cst_9 = arith.constant 0.000000e+00 : f32
      %17 = vector.broadcast %cst_9 : f32 to vector<4x65xf32>
      %c0_10 = arith.constant 0 : index
      %c0_11 = arith.constant 0 : index
      %18 = vector.load %arg5[%c0_10, %c0_11] : memref<4x65xf32, #tpu.memory_space<vmem>>, vector<4x65xf32>
      tpu.vector_store %arg5[%c0_10, %c0_11], %17 {strides = array<i32>} : memref<4x65xf32, #tpu.memory_space<vmem>>, vector<4x65xf32>,
    } else {
    }
    %c0 = arith.constant 0 : index
    %c0_1 = arith.constant 0 : index
    %3 = vector.load %arg1[%c0, %c0_1] : memref<512x1xi32, #tpu.memory_space<vmem>>, vector<512x1xi32>
    %c0_2 = arith.constant 0 : index
    %c0_3 = arith.constant 0 : index
    %4 = vector.load %arg2[%c0_2, %c0_3] : memref<512x65xf32, #tpu.memory_space<vmem>>, vector<512x65xf32>
    %5 = tpu.iota {dimensions = array<i32: 1>} : vector<512x4xi32>
    %6 = vector.broadcast %3 : vector<512x1xi32> to vector<512x4xi32>
    %7 = arith.cmpi eq, %6, %5 : vector<512x4xi32>
    %8 = arith.extui %7 : vector<512x4xi1> to vector<512x4xi32>
    %9 = arith.sitofp %8 : vector<512x4xi32> to vector<512x4xf32>
    %c0_4 = arith.constant 0 : index
    %c0_5 = arith.constant 0 : index
    %10 = vector.load %arg5[%c0_4, %c0_5] : memref<4x65xf32, #tpu.memory_space<vmem>>, vector<4x65xf32>
    %cst = arith.constant dense<0.000000e+00> : vector<4x65xf32>
    %11 = tpu.matmul %9, %4, %cst {dimension_numbers = #tpu.dot_dimension_numbers<[0], [0], [1], [1], [0, 1, 1, 1], [], []>} : vector<512x4xf32>, vector<512x65xf32>, vector<4x65xf32> -> vector<4x65xf32>
    %12 = arith.addf %10, %11 : vector<4x65xf32>
    %c0_6 = arith.constant 0 : index
    %c0_7 = arith.constant 0 : index
    %13 = vector.load %arg5[%c0_6, %c0_7] : memref<4x65xf32, #tpu.memory_space<vmem>>, vector<4x65xf32>
    tpu.vector_store %arg5[%c0_6, %c0_7], %12 {strides = array<i32>} : memref<4x65xf32, #tpu.memory_space<vmem>>, vector<4x65xf32>,
    %c15_i32 = arith.constant 15 : i32
    %14 = arith.cmpi eq, %arg0, %c15_i32 : i32
    %15 = arith.extui %14 : i1 to i32
    %c0_i32_8 = arith.constant 0 : i32
    %16 = arith.cmpi ne, %15, %c0_i32_8 : i32
    scf.if %16 {
      %c0_9 = arith.constant 0 : index
      %c0_10 = arith.constant 0 : index
      %17 = vector.load %arg5[%c0_9, %c0_10] : memref<4x65xf32, #tpu.memory_space<vmem>>, vector<4x65xf32>
      %18 = vector.extract_strided_slice %17 {offsets = [0, 0], sizes = [4, 64], strides = [1, 1]} : vector<4x65xf32> to vector<4x64xf32>
      %19 = vector.extract_strided_slice %17 {offsets = [0, 64], sizes = [4, 1], strides = [1, 1]} : vector<4x65xf32> to vector<4x1xf32>
      %cst_11 = arith.constant 1.000000e+00 : f32
      %20 = vector.broadcast %cst_11 : f32 to vector<4x1xf32>
      %21 = arith.maximumf %19, %20 : vector<4x1xf32>
      %22 = vector.broadcast %21 : vector<4x1xf32> to vector<4x64xf32>
      %23 = arith.divf %18, %22 : vector<4x64xf32>
      %c0_12 = arith.constant 0 : index
      %c0_13 = arith.constant 0 : index
      %24 = vector.load %arg3[%c0_12, %c0_13] : memref<4x64xf32, #tpu.memory_space<vmem>>, vector<4x64xf32>
      %cst_14 = arith.constant 0.000000e+00 : f32
      %25 = vector.broadcast %cst_14 : f32 to vector<4x1xf32>
      %26 = arith.cmpf ogt, %19, %25 : vector<4x1xf32>
      %cst_15 = arith.constant 0.899999976 : f32
      %27 = vector.broadcast %cst_15 : f32 to vector<4x64xf32>
      %28 = arith.mulf %27, %24 : vector<4x64xf32>
      %cst_16 = arith.constant 1.000000e-01 : f32
      %29 = vector.broadcast %cst_16 : f32 to vector<4x64xf32>
      %30 = arith.mulf %29, %23 : vector<4x64xf32>
      %31 = arith.addf %28, %30 : vector<4x64xf32>
      %32 = vector.shape_cast %26 : vector<4x1xi1> to vector<4x1xi1>
      %33 = vector.broadcast %32 : vector<4x1xi1> to vector<4x64xi1>
      %34 = arith.select %33, %31, %24 : vector<4x64xi1>, vector<4x64xf32>
      %c0_17 = arith.constant 0 : index
      %c0_18 = arith.constant 0 : index
      %35 = vector.load %arg4[%c0_17, %c0_18] : memref<4x64xf32, #tpu.memory_space<vmem>>, vector<4x64xf32>
      tpu.vector_store %arg4[%c0_17, %c0_18], %34 {strides = array<i32>} : memref<4x64xf32, #tpu.memory_space<vmem>>, vector<4x64xf32>,
    } else {
    }
    return
  }
  func.func @transform_0(%arg0: i32) -> (i32, i32) {
    %c0_i32 = arith.constant 0 : i32
    %c0_i32_0 = arith.constant 0 : i32
    return %arg0, %c0_i32 : i32, i32
  }
  func.func @transform_1(%arg0: i32) -> (i32, i32) {
    %c0_i32 = arith.constant 0 : i32
    %c0_i32_0 = arith.constant 0 : i32
    return %arg0, %c0_i32 : i32, i32
  }
  func.func @transform_2(%arg0: i32) -> (i32, i32) {
    %c0_i32 = arith.constant 0 : i32
    %c0_i32_0 = arith.constant 0 : i32
    %c0_i32_1 = arith.constant 0 : i32
    return %c0_i32, %c0_i32_0 : i32, i32
  }
  func.func @transform_3(%arg0: i32) -> (i32, i32) {
    %c0_i32 = arith.constant 0 : i32
    %c0_i32_0 = arith.constant 0 : i32
    %c0_i32_1 = arith.constant 0 : i32
    return %c0_i32, %c0_i32_0 : i32, i32
  }
}

</mosaic_0001>

<llo_original>
// kernel: protomgnet_forward.5
$region0: #{protomgnet_forward.5}
  #allocation0 [shape = 'u32[]', space=smem, size = 0x4, offset = 0x4, fixed_abs, tag = 'smem constant byte address 0x4 - core index']
  #allocation1 [shape = 'u32[144,128]{1,0:T(1,128)}', space=vmem, size = 0x12000, scoped, tag = 'internal scratch']
  %s0 = inlined_call_operand.vmem [shape: bf16[512,16], index: 0, kind: input, shape index: {}]
  %s1 = inlined_call_operand.vmem [shape: bf16[512,32], index: 1, kind: input, shape index: {}]
  %s2 = inlined_call_operand.vmem [shape: bf16[512,64], index: 2, kind: input, shape index: {}]
  %s3 = inlined_call_operand.vmem [shape: bf16[16,32], index: 3, kind: input, shape index: {}]
  %s4 = inlined_call_operand.vmem [shape: bf16[32,32], index: 4, kind: input, shape index: {}]
  %s5 = inlined_call_operand.vmem [shape: bf16[64,32], index: 5, kind: input, shape index: {}]
  %s6 = inlined_call_operand.vmem [shape: f32[1,32], index: 6, kind: input, shape index: {}]
  %s7 = inlined_call_operand.vmem [shape: f32[1,32], index: 7, kind: input, shape index: {}]
  %s8 = inlined_call_operand.vmem [shape: f32[1,32], index: 8, kind: input, shape index: {}]
  %s9 = inlined_call_operand.vmem [shape: bf16[512,32], index: 9, kind: output, shape index: {}]
  %s10 = sld [smem:[#allocation0]]
  $region46: #{protomgnet_forward.5} parent=0
    _
  %s12 = ssub.s32 1, %s10
  %s13 = scalar_select 0, %s12, %s10
  // Predicated region
  $region2: #{protomgnet_forward.5} parent=0 // pred_check
    _
  $region3: #{protomgnet_forward.5} parent=0 // pred_check_branch
    %15 = sbr.rel (0) target = $region5
  $region4: #{protomgnet_forward.5} parent=0 // pred_region
    _
  $region5: #{protomgnet_forward.5} parent=0 // pred_fallthru
    _
  // Predicated region
  $region6: #{protomgnet_forward.5} parent=0 // pred_check
    _
  $region7: #{protomgnet_forward.5} parent=0 // pred_check_branch
    %17 = sbr.rel (0) target = $region9
  $region8: #{protomgnet_forward.5} parent=0 // pred_region
    _
  $region9: #{protomgnet_forward.5} parent=0 // pred_fallthru
    _
  // Predicated region
  $region10: #{protomgnet_forward.5} parent=0 // pred_check
    _
  $region11: #{protomgnet_forward.5} parent=0 // pred_check_branch
    %19 = sbr.rel (0) target = $region13
  $region12: #{protomgnet_forward.5} parent=0 // pred_region
    _
  $region13: #{protomgnet_forward.5} parent=0 // pred_fallthru
    _
  // Predicated region
  $region14: #{protomgnet_forward.5} parent=0 // pred_check
    _
  $region15: #{protomgnet_forward.5} parent=0 // pred_check_branch
    %21 = sbr.rel (0) target = $region17
  $region16: #{protomgnet_forward.5} parent=0 // pred_region
    _
  $region17: #{protomgnet_forward.5} parent=0 // pred_fallthru
    _
  // Predicated region
  $region18: #{protomgnet_forward.5} parent=0 // pred_check
    _
  $region19: #{protomgnet_forward.5} parent=0 // pred_check_branch
    %23 = sbr.rel (0) target = $region21
  $region20: #{protomgnet_forward.5} parent=0 // pred_region
    _
  $region21: #{protomgnet_forward.5} parent=0 // pred_fallthru
    _
  // Predicated region
  $region22: #{protomgnet_forward.5} parent=0 // pred_check
    _
  $region23: #{protomgnet_forward.5} parent=0 // pred_check_branch
    %25 = sbr.rel (0) target = $region25
  $region24: #{protomgnet_forward.5} parent=0 // pred_region
    _
  $region25: #{protomgnet_forward.5} parent=0 // pred_fallthru
    _
  // Predicated region
  $region26: #{protomgnet_forward.5} parent=0 // pred_check
    _
  $region27: #{protomgnet_forward.5} parent=0 // pred_check_branch
    %27 = sbr.rel (0) target = $region29
  $region28: #{protomgnet_forward.5} parent=0 // pred_region
    _
  $region29: #{protomgnet_forward.5} parent=0 // pred_fallthru
    _
  // Predicated region
  $region30: #{protomgnet_forward.5} parent=0 // pred_check
    _
  $region31: #{protomgnet_forward.5} parent=0 // pred_check_branch
    %29 = sbr.rel (0) target = $region33
  $region32: #{protomgnet_forward.5} parent=0 // pred_region
    _
  $region33: #{protomgnet_forward.5} parent=0 // pred_fallthru
    _
  // Predicated region
  $region34: #{protomgnet_forward.5} parent=0 // pred_check
    _
  $region35: #{protomgnet_forward.5} parent=0 // pred_check_branch
    %31 = sbr.rel (0) target = $region37
  $region36: #{protomgnet_forward.5} parent=0 // pred_region
    _
  $region37: #{protomgnet_forward.5} parent=0 // pred_fallthru
    _
  %v33 = vld [vmem:[%s0] sm:$0xf]
  %v34 = vld [vmem:[%s0 + $0x4] sm:$0xf]
  %v35 = vld [vmem:[%s0 + $0x8] sm:$0xf]
  %v36 = vld [vmem:[%s0 + $0xc] sm:$0xf]
  %v37 = vld [vmem:[%s0 + $0x10] sm:$0xf]
  %v38 = vld [vmem:[%s0 + $0x14] sm:$0xf]
  %v39 = vld [vmem:[%s0 + $0x18] sm:$0xf]
  %v40 = vld [vmem:[%s0 + $0x1c] sm:$0xf]
  %v41 = vld [vmem:[%s0 + $0x20] sm:$0xf]
  %v42 = vld [vmem:[%s0 + $0x24] sm:$0xf]
  %v43 = vld [vmem:[%s0 + $0x28] sm:$0xf]
  %v44 = vld [vmem:[%s0 + $0x2c] sm:$0xf]
  %v45 = vld [vmem:[%s0 + $0x30] sm:$0xf]
  %v46 = vld [vmem:[%s0 + $0x34] sm:$0xf]
  %v47 = vld [vmem:[%s0 + $0x38] sm:$0xf]
  %v48 = vld [vmem:[%s0 + $0x3c] sm:$0xf]
  %v49 = vld [vmem:[%s0 + $0x40] sm:$0xf]
  %v50 = vld [vmem:[%s0 + $0x44] sm:$0xf]
  %v51 = vld [vmem:[%s0 + $0x48] sm:$0xf]
  %v52 = vld [vmem:[%s0 + $0x4c] sm:$0xf]
  %v53 = vld [vmem:[%s0 + $0x50] sm:$0xf]
  %v54 = vld [vmem:[%s0 + $0x54] sm:$0xf]
  %v55 = vld [vmem:[%s0 + $0x58] sm:$0xf]
  %v56 = vld [vmem:[%s0 + $0x5c] sm:$0xf]
  %v57 = vld [vmem:[%s0 + $0x60] sm:$0xf]
  %v58 = vld [vmem:[%s0 + $0x64] sm:$0xf]
  %v59 = vld [vmem:[%s0 + $0x68] sm:$0xf]
  %v60 = vld [vmem:[%s0 + $0x6c] sm:$0xf]
  %v61 = vld [vmem:[%s0 + $0x70] sm:$0xf]
  %v62 = vld [vmem:[%s0 + $0x74] sm:$0xf]
  %v63 = vld [vmem:[%s0 + $0x78] sm:$0xf]
  %v64 = vld [vmem:[%s0 + $0x7c] sm:$0xf]
  %v65 = vld [vmem:[%s0 + $0x80] sm:$0xf]
  %v66 = vld [vmem:[%s0 + $0x84] sm:$0xf]
  %v67 = vld [vmem:[%s0 + $0x88] sm:$0xf]
  %v68 = vld [vmem:[%s0 + $0x8c] sm:$0xf]
  %v69 = vld [vmem:[%s0 + $0x90] sm:$0xf]
  %v70 = vld [vmem:[%s0 + $0x94] sm:$0xf]
  %v71 = vld [vmem:[%s0 + $0x98] sm:$0xf]
  %v72 = vld [vmem:[%s0 + $0x9c] sm:$0xf]
  %v73 = vld [vmem:[%s0 + $0xa0] sm:$0xf]
  %v74 = vld [vmem:[%s0 + $0xa4] sm:$0xf]
  %v75 = vld [vmem:[%s0 + $0xa8] sm:$0xf]
  %v76 = vld [vmem:[%s0 + $0xac] sm:$0xf]
  %v77 = vld [vmem:[%s0 + $0xb0] sm:$0xf]
  %v78 = vld [vmem:[%s0 + $0xb4] sm:$0xf]
  %v79 = vld [vmem:[%s0 + $0xb8] sm:$0xf]
  %v80 = vld [vmem:[%s0 + $0xbc] sm:$0xf]
  %v81 = vld [vmem:[%s0 + $0xc0] sm:$0xf]
  %v82 = vld [vmem:[%s0 + $0xc4] sm:$0xf]
  %v83 = vld [vmem:[%s0 + $0xc8] sm:$0xf]
  %v84 = vld [vmem:[%s0 + $0xcc] sm:$0xf]
  %v85 = vld [vmem:[%s0 + $0xd0] sm:$0xf]
  %v86 = vld [vmem:[%s0 + $0xd4] sm:$0xf]
  %v87 = vld [vmem:[%s0 + $0xd8] sm:$0xf]
  %v88 = vld [vmem:[%s0 + $0xdc] sm:$0xf]
  %v89 = vld [vmem:[%s0 + $0xe0] sm:$0xf]
  %v90 = vld [vmem:[%s0 + $0xe4] sm:$0xf]
  %v91 = vld [vmem:[%s0 + $0xe8] sm:$0xf]
  %v92 = vld [vmem:[%s0 + $0xec] sm:$0xf]
  %v93 = vld [vmem:[%s0 + $0xf0] sm:$0xf]
  %v94 = vld [vmem:[%s0 + $0xf4] sm:$0xf]
  %v95 = vld [vmem:[%s0 + $0xf8] sm:$0xf]
  %v96 = vld [vmem:[%s0 + $0xfc] sm:$0xf]
  %v97 = vld [vmem:[%s3] sm:$0xf]
  %v98 = vld [vmem:[%s3 + $0x4] sm:$0xf]
  %v99 = vld [vmem:[%s6] sm:$0x1]
  %v101 = vlaneseq
  %v102 = vshrl.u32 %v101, 7
  %v103 = vsub.s32 0, %v102
  %v104 = vrot.slane %v99, %v103
  %v170 = vunpack.c.l.b16 %v33
  %v171 = vunpack.c.l.b16 %v34
  %v172 = vunpack.c.l.b16 %v35
  %v173 = vunpack.c.l.b16 %v36
  %v174 = vunpack.c.l.b16 %v37
  %v175 = vunpack.c.l.b16 %v38
  %v176 = vunpack.c.l.b16 %v39
  %v177 = vunpack.c.l.b16 %v40
  %v178 = vunpack.c.l.b16 %v41
  %v179 = vunpack.c.l.b16 %v42
  %v180 = vunpack.c.l.b16 %v43
  %v181 = vunpack.c.l.b16 %v44
  %v182 = vunpack.c.l.b16 %v45
  %v183 = vunpack.c.l.b16 %v46
  %v184 = vunpack.c.l.b16 %v47
  %v185 = vunpack.c.l.b16 %v48
  %v186 = vunpack.c.l.b16 %v49
  %v187 = vunpack.c.l.b16 %v50
  %v188 = vunpack.c.l.b16 %v51
  %v189 = vunpack.c.l.b16 %v52
  %v190 = vunpack.c.l.b16 %v53
  %v191 = vunpack.c.l.b16 %v54
  %v192 = vunpack.c.l.b16 %v55
  %v193 = vunpack.c.l.b16 %v56
  %v194 = vunpack.c.l.b16 %v57
  %v195 = vunpack.c.l.b16 %v58
  %v196 = vunpack.c.l.b16 %v59
  %v197 = vunpack.c.l.b16 %v60
  %v198 = vunpack.c.l.b16 %v61
  %v199 = vunpack.c.l.b16 %v62
  %v200 = vunpack.c.l.b16 %v63
  %v201 = vunpack.c.l.b16 %v64
  %v202 = vunpack.c.l.b16 %v65
  %v203 = vunpack.c.l.b16 %v66
  %v204 = vunpack.c.l.b16 %v67
  %v205 = vunpack.c.l.b16 %v68
  %v206 = vunpack.c.l.b16 %v69
  %v207 = vunpack.c.l.b16 %v70
  %v208 = vunpack.c.l.b16 %v71
  %v209 = vunpack.c.l.b16 %v72
  %v210 = vunpack.c.l.b16 %v73
  %v211 = vunpack.c.l.b16 %v74
  %v212 = vunpack.c.l.b16 %v75
  %v213 = vunpack.c.l.b16 %v76
  %v214 = vunpack.c.l.b16 %v77
  %v215 = vunpack.c.l.b16 %v78
  %v216 = vunpack.c.l.b16 %v79
  %v217 = vunpack.c.l.b16 %v80
  %v218 = vunpack.c.l.b16 %v81
  %v219 = vunpack.c.l.b16 %v82
  %v220 = vunpack.c.l.b16 %v83
  %v221 = vunpack.c.l.b16 %v84
  %v222 = vunpack.c.l.b16 %v85
  %v223 = vunpack.c.l.b16 %v86
  %v224 = vunpack.c.l.b16 %v87
  %v225 = vunpack.c.l.b16 %v88
  %v226 = vunpack.c.l.b16 %v89
  %v227 = vunpack.c.l.b16 %v90
  %v228 = vunpack.c.l.b16 %v91
  %v229 = vunpack.c.l.b16 %v92
  %v230 = vunpack.c.l.b16 %v93
  %v231 = vunpack.c.l.b16 %v94
  %v232 = vunpack.c.l.b16 %v95
  %v233 = vunpack.c.l.b16 %v96
  %v234 = vpack.c.b16 %v171, %v170
  %v235 = vpack.c.b16 %v173, %v172
  %v236 = vpack.c.b16 %v175, %v174
  %v237 = vpack.c.b16 %v177, %v176
  %v238 = vpack.c.b16 %v179, %v178
  %v239 = vpack.c.b16 %v181, %v180
  %v240 = vpack.c.b16 %v183, %v182
  %v241 = vpack.c.b16 %v185, %v184
  %v242 = vpack.c.b16 %v187, %v186
  %v243 = vpack.c.b16 %v189, %v188
  %v244 = vpack.c.b16 %v191, %v190
  %v245 = vpack.c.b16 %v193, %v192
  %v246 = vpack.c.b16 %v195, %v194
  %v247 = vpack.c.b16 %v197, %v196
  %v248 = vpack.c.b16 %v199, %v198
  %v249 = vpack.c.b16 %v201, %v200
  %v250 = vpack.c.b16 %v203, %v202
  %v251 = vpack.c.b16 %v205, %v204
  %v252 = vpack.c.b16 %v207, %v206
  %v253 = vpack.c.b16 %v209, %v208
  %v254 = vpack.c.b16 %v211, %v210
  %v255 = vpack.c.b16 %v213, %v212
  %v256 = vpack.c.b16 %v215, %v214
  %v257 = vpack.c.b16 %v217, %v216
  %v258 = vpack.c.b16 %v219, %v218
  %v259 = vpack.c.b16 %v221, %v220
  %v260 = vpack.c.b16 %v223, %v222
  %v261 = vpack.c.b16 %v225, %v224
  %v262 = vpack.c.b16 %v227, %v226
  %v263 = vpack.c.b16 %v229, %v228
  %v264 = vpack.c.b16 %v231, %v230
  %v265 = vpack.c.b16 %v233, %v232
  %v268 = vunpack.c.l.b16 %v97
  %v269 = vunpack.c.l.b16 %v98
  %v270 = vpack.c.b16 %v269, %v268
  %vm272 = vcmask 130048
  %v274 = vsel %vm272, %v234, 0
  %v277 = vsel %vm272, %v235, 0
  %v280 = vsel %vm272, %v236, 0
  %v283 = vsel %vm272, %v237, 0
  %v286 = vsel %vm272, %v238, 0
  %v289 = vsel %vm272, %v239, 0
  %v292 = vsel %vm272, %v240, 0
  %v295 = vsel %vm272, %v241, 0
  %v298 = vsel %vm272, %v242, 0
  %v301 = vsel %vm272, %v243, 0
  %v304 = vsel %vm272, %v244, 0
  %v307 = vsel %vm272, %v245, 0
  %v310 = vsel %vm272, %v246, 0
  %v313 = vsel %vm272, %v247, 0
  %v316 = vsel %vm272, %v248, 0
  %v319 = vsel %vm272, %v249, 0
  %v322 = vsel %vm272, %v250, 0
  %v325 = vsel %vm272, %v251, 0
  %v328 = vsel %vm272, %v252, 0
  %v331 = vsel %vm272, %v253, 0
  %v334 = vsel %vm272, %v254, 0
  %v337 = vsel %vm272, %v255, 0
  %v340 = vsel %vm272, %v256, 0
  %v343 = vsel %vm272, %v257, 0
  %v346 = vsel %vm272, %v258, 0
  %v349 = vsel %vm272, %v259, 0
  %v352 = vsel %vm272, %v260, 0
  %v355 = vsel %vm272, %v261, 0
  %v358 = vsel %vm272, %v262, 0
  %v361 = vsel %vm272, %v263, 0
  %v364 = vsel %vm272, %v264, 0
  %v367 = vsel %vm272, %v265, 0
  %369 = vmatprep.subr.bf16.mxu0 0
  %370 = vmatpush1.bf16.msra.mxu0 %v270
  %371 = vmatprep.subr.bf16.mxu0 0
  %372 = vmatpush1.bf16.msra.mxu0 0
  %373 = vmatprep.subr.bf16.mxu0 0
  %374 = vmatpush1.bf16.msra.mxu0 0
  %375 = vmatprep.subr.bf16.mxu0 0
  %376 = vmatpush1.bf16.msra.mxu0 0
  %377 = vmatprep.subr.bf16.mxu0 0
  %378 = vmatpush1.bf16.msra.mxu0 0
  %379 = vmatprep.subr.bf16.mxu0 0
  %380 = vmatpush1.bf16.msra.mxu0 0
  %381 = vmatprep.subr.bf16.mxu0 0
  %382 = vmatpush1.bf16.msra.mxu0 0
  %383 = vmatprep.subr.bf16.mxu0 0
  %384 = vmatpush1.bf16.msra.mxu0 0
  %385 = vmatprep.subr.bf16.mxu0 0
  %386 = vmatpush1.bf16.msra.mxu0 0
  %387 = vmatprep.subr.bf16.mxu0 0
  %388 = vmatpush1.bf16.msra.mxu0 0
  %389 = vmatprep.subr.bf16.mxu0 0
  %390 = vmatpush1.bf16.msra.mxu0 0
  %391 = vmatprep.subr.bf16.mxu0 0
  %392 = vmatpush1.bf16.msra.mxu0 0
  %393 = vmatprep.subr.bf16.mxu0 0
  %394 = vmatpush1.bf16.msra.mxu0 0
  %395 = vmatprep.subr.bf16.mxu0 0
  %396 = vmatpush1.bf16.msra.mxu0 0
  %397 = vmatprep.subr.bf16.mxu0 0
  %398 = vmatpush1.bf16.msra.mxu0 0
  %399 = vmatprep.subr.bf16.mxu0 0
  %400 = vmatpush1.bf16.msra.mxu0 0
  %401 = vmatprep.mubr.bf16.mxu0 0
  %402 = vmatmul.mubr.bf16.gmra.mrb[0].mxu0 %v274
  %v403 = vpop.f32.mrb[0].mxu0
  %v404 = vadd.f32 %v104, %v403
  %v405 = vpop.f32.mrb[0].mxu0
  %v406 = vpop.f32.mrb[0].mxu0
  %v407 = vadd.f32 %v104, %v406
  %v408 = vpop.f32.mrb[0].mxu0
  %409 = vmatprep.mubr.bf16.mxu0 0
  %410 = vmatmul.mubr.bf16.gmra.mrb[0].mxu0 %v277
  %v411 = vpop.f32.mrb[0].mxu0
  %v412 = vadd.f32 %v104, %v411
  %v413 = vpop.f32.mrb[0].mxu0
  %v414 = vpop.f32.mrb[0].mxu0
  %v415 = vadd.f32 %v104, %v414
  %v416 = vpop.f32.mrb[0].mxu0
  %417 = vmatprep.mubr.bf16.mxu0 0
  %418 = vmatmul.mubr.bf16.gmra.mrb[0].mxu0 %v280
  %v419 = vpop.f32.mrb[0].mxu0
  %v420 = vadd.f32 %v104, %v419
  %v421 = vpop.f32.mrb[0].mxu0
  %v422 = vpop.f32.mrb[0].mxu0
  %v423 = vadd.f32 %v104, %v422
  %v424 = vpop.f32.mrb[0].mxu0
  %425 = vmatprep.mubr.bf16.mxu0 0
  %426 = vmatmul.mubr.bf16.gmra.mrb[0].mxu0 %v283
  %v427 = vpop.f32.mrb[0].mxu0
  %v428 = vadd.f32 %v104, %v427
  %v429 = vpop.f32.mrb[0].mxu0
  %v430 = vpop.f32.mrb[0].mxu0
  %v431 = vadd.f32 %v104, %v430
  %v432 = vpop.f32.mrb[0].mxu0
  %433 = vmatprep.mubr.bf16.mxu0 0
  %434 = vmatmul.mubr.bf16.gmra.mrb[0].mxu0 %v286
  %v435 = vpop.f32.mrb[0].mxu0
  %v436 = vadd.f32 %v104, %v435
  %v437 = vpop.f32.mrb[0].mxu0
  %v438 = vpop.f32.mrb[0].mxu0
  %v439 = vadd.f32 %v104, %v438
  %v440 = vpop.f32.mrb[0].mxu0
  %441 = vmatprep.mubr.bf16.mxu0 0
  %442 = vmatmul.mubr.bf16.gmra.mrb[0].mxu0 %v289
  %v443 = vpop.f32.mrb[0].mxu0
  %v444 = vadd.f32 %v104, %v443
  %v445 = vpop.f32.mrb[0].mxu0
  %v446 = vpop.f32.mrb[0].mxu0
  %v447 = vadd.f32 %v104, %v446
  %v448 = vpop.f32.mrb[0].mxu0
  %449 = vmatprep.mubr.bf16.mxu0 0
  %450 = vmatmul.mubr.bf16.gmra.mrb[0].mxu0 %v292
  %v451 = vpop.f32.mrb[0].mxu0
  %v452 = vadd.f32 %v104, %v451
  %v453 = vpop.f32.mrb[0].mxu0
  %v454 = vpop.f32.mrb[0].mxu0
  %v455 = vadd.f32 %v104, %v454
  %v456 = vpop.f32.mrb[0].mxu0
  %457 = vmatprep.mubr.bf16.mxu0 0
  %458 = vmatmul.mubr.bf16.gmra.mrb[0].mxu0 %v295
  %v459 = vpop.f32.mrb[0].mxu0
  %v460 = vadd.f32 %v104, %v459
  %v461 = vpop.f32.mrb[0].mxu0
  %v462 = vpop.f32.mrb[0].mxu0
  %v463 = vadd.f32 %v104, %v462
  %v464 = vpop.f32.mrb[0].mxu0
  %465 = vmatprep.mubr.bf16.mxu0 0
  %466 = vmatmul.mubr.bf16.gmra.mrb[0].mxu0 %v298
  %v467 = vpop.f32.mrb[0].mxu0
  %v468 = vadd.f32 %v104, %v467
  %v469 = vpop.f32.mrb[0].mxu0
  %v470 = vpop.f32.mrb[0].mxu0
  %v471 = vadd.f32 %v104, %v470
  %v472 = vpop.f32.mrb[0].mxu0
  %473 = vmatprep.mubr.bf16.mxu0 0
  %474 = vmatmul.mubr.bf16.gmra.mrb[0].mxu0 %v301
  %v475 = vpop.f32.mrb[0].mxu0
  %v476 = vadd.f32 %v104, %v475
  %v477 = vpop.f32.mrb[0].mxu0
  %v478 = vpop.f32.mrb[0].mxu0
  %v479 = vadd.f32 %v104, %v478
  %v480 = vpop.f32.mrb[0].mxu0
  %481 = vmatprep.mubr.bf16.mxu0 0
  %482 = vmatmul.mubr.bf16.gmra.mrb[0].mxu0 %v304
  %v483 = vpop.f32.mrb[0].mxu0
  %v484 = vadd.f32 %v104, %v483
  %v485 = vpop.f32.mrb[0].mxu0
  %v486 = vpop.f32.mrb[0].mxu0
  %v487 = vadd.f32 %v104, %v486
  %v488 = vpop.f32.mrb[0].mxu0
  %489 = vmatprep.mubr.bf16.mxu0 0
  %490 = vmatmul.mubr.bf16.gmra.mrb[0].mxu0 %v307
  %v491 = vpop.f32.mrb[0].mxu0
  %v492 = vadd.f32 %v104, %v491
  %v493 = vpop.f32.mrb[0].mxu0
  %v494 = vpop.f32.mrb[0].mxu0
  %v495 = vadd.f32 %v104, %v494
  %v496 = vpop.f32.mrb[0].mxu0
  %497 = vmatprep.mubr.bf16.mxu0 0
  %498 = vmatmul.mubr.bf16.gmra.mrb[0].mxu0 %v310
  %v499 = vpop.f32.mrb[0].mxu0
  %v500 = vadd.f32 %v104, %v499
  %v501 = vpop.f32.mrb[0].mxu0
  %v502 = vpop.f32.mrb[0].mxu0
  %v503 = vadd.f32 %v104, %v502
  %v504 = vpop.f32.mrb[0].mxu0
  %505 = vmatprep.mubr.bf16.mxu0 0
  %506 = vmatmul.mubr.bf16.gmra.mrb[0].mxu0 %v313
  %v507 = vpop.f32.mrb[0].mxu0
  %v508 = vadd.f32 %v104, %v507
  %v509 = vpop.f32.mrb[0].mxu0
  %v510 = vpop.f32.mrb[0].mxu0
  %v511 = vadd.f32 %v104, %v510
  %v512 = vpop.f32.mrb[0].mxu0
  %513 = vmatprep.mubr.bf16.mxu0 0
  %514 = vmatmul.mubr.bf16.gmra.mrb[0].mxu0 %v316
  %v515 = vpop.f32.mrb[0].mxu0
  %v516 = vadd.f32 %v104, %v515
  %v517 = vpop.f32.mrb[0].mxu0
  %v518 = vpop.f32.mrb[0].mxu0
  %v519 = vadd.f32 %v104, %v518
  %v520 = vpop.f32.mrb[0].mxu0
  %521 = vmatprep.mubr.bf16.mxu0 0
  %522 = vmatmul.mubr.bf16.gmra.mrb[0].mxu0 %v319
  %v523 = vpop.f32.mrb[0].mxu0
  %v524 = vadd.f32 %v104, %v523
  %v525 = vpop.f32.mrb[0].mxu0
  %v526 = vpop.f32.mrb[0].mxu0
  %v527 = vadd.f32 %v104, %v526
  %v528 = vpop.f32.mrb[0].mxu0
  %529 = vmatprep.mubr.bf16.mxu0 0
  %530 = vmatmul.mubr.bf16.gmra.mrb[0].mxu0 %v322
  %v531 = vpop.f32.mrb[0].mxu0
  %v532 = vadd.f32 %v104, %v531
  %v533 = vpop.f32.mrb[0].mxu0
  %v534 = vpop.f32.mrb[0].mxu0
  %v535 = vadd.f32 %v104, %v534
  %v536 = vpop.f32.mrb[0].mxu0
  %537 = vmatprep.mubr.bf16.mxu0 0
  %538 = vmatmul.mubr.bf16.gmra.mrb[0].mxu0 %v325
  %v539 = vpop.f32.mrb[0].mxu0
  %v540 = vadd.f32 %v104, %v539
  %v541 = vpop.f32.mrb[0].mxu0
  %v542 = vpop.f32.mrb[0].mxu0
  %v543 = vadd.f32 %v104, %v542
  %v544 = vpop.f32.mrb[0].mxu0
  %545 = vmatprep.mubr.bf16.mxu0 0
  %546 = vmatmul.mubr.bf16.gmra.mrb[0].mxu0 %v328
  %v547 = vpop.f32.mrb[0].mxu0
  %v548 = vadd.f32 %v104, %v547
  %v549 = vpop.f32.mrb[0].mxu0
  %v550 = vpop.f32.mrb[0].mxu0
  %v551 = vadd.f32 %v104, %v550
  %v552 = vpop.f32.mrb[0].mxu0
  %553 = vmatprep.mubr.bf16.mxu0 0
  %554 = vmatmul.mubr.bf16.gmra.mrb[0].mxu0 %v331
  %v555 = vpop.f32.mrb[0].mxu0
  %v556 = vadd.f32 %v104, %v555
  %v557 = vpop.f32.mrb[0].mxu0
  %v558 = vpop.f32.mrb[0].mxu0
  %v559 = vadd.f32 %v104, %v558
  %v560 = vpop.f32.mrb[0].mxu0
  %561 = vmatprep.mubr.bf16.mxu0 0
  %562 = vmatmul.mubr.bf16.gmra.mrb[0].mxu0 %v334
  %v563 = vpop.f32.mrb[0].mxu0
  %v564 = vadd.f32 %v104, %v563
  %v565 = vpop.f32.mrb[0].mxu0
  %v566 = vpop.f32.mrb[0].mxu0
  %v567 = vadd.f32 %v104, %v566
  %v568 = vpop.f32.mrb[0].mxu0
  %569 = vmatprep.mubr.bf16.mxu0 0
  %570 = vmatmul.mubr.bf16.gmra.mrb[0].mxu0 %v337
  %v571 = vpop.f32.mrb[0].mxu0
  %v572 = vadd.f32 %v104, %v571
  %v573 = vpop.f32.mrb[0].mxu0
  %v574 = vpop.f32.mrb[0].mxu0
  %v575 = vadd.f32 %v104, %v574
  %v576 = vpop.f32.mrb[0].mxu0
  %577 = vmatprep.mubr.bf16.mxu0 0
  %578 = vmatmul.mubr.bf16.gmra.mrb[0].mxu0 %v340
  %v579 = vpop.f32.mrb[0].mxu0
  %v580 = vadd.f32 %v104, %v579
  %v581 = vpop.f32.mrb[0].mxu0
  %v582 = vpop.f32.mrb[0].mxu0
  %v583 = vadd.f32 %v104, %v582
  %v584 = vpop.f32.mrb[0].mxu0
  %585 = vmatprep.mubr.bf16.mxu0 0
  %586 = vmatmul.mubr.bf16.gmra.mrb[0].mxu0 %v343
  %v587 = vpop.f32.mrb[0].mxu0
  %v588 = vadd.f32 %v104, %v587
  %v589 = vpop.f32.mrb[0].mxu0
  %v590 = vpop.f32.mrb[0].mxu0
  %v591 = vadd.f32 %v104, %v590
  %v592 = vpop.f32.mrb[0].mxu0
  %593 = vmatprep.mubr.bf16.mxu0 0
  %594 = vmatmul.mubr.bf16.gmra.mrb[0].mxu0 %v346
  %v595 = vpop.f32.mrb[0].mxu0
  %v596 = vadd.f32 %v104, %v595
  %v597 = vpop.f32.mrb[0].mxu0
  %v598 = vpop.f32.mrb[0].mxu0
  %v599 = vadd.f32 %v104, %v598
  %v600 = vpop.f32.mrb[0].mxu0
  %601 = vmatprep.mubr.bf16.mxu0 0
  %602 = vmatmul.mubr.bf16.gmra.mrb[0].mxu0 %v349
  %v603 = vpop.f32.mrb[0].mxu0
  %v604 = vadd.f32 %v104, %v603
  %v605 = vpop.f32.mrb[0].mxu0
  %v606 = vpop.f32.mrb[0].mxu0
  %v607 = vadd.f32 %v104, %v606
  %v608 = vpop.f32.mrb[0].mxu0
  %609 = vmatprep.mubr.bf16.mxu0 0
  %610 = vmatmul.mubr.bf16.gmra.mrb[0].mxu0 %v352
  %v611 = vpop.f32.mrb[0].mxu0
  %v612 = vadd.f32 %v104, %v611
  %v613 = vpop.f32.mrb[0].mxu0
  %v614 = vpop.f32.mrb[0].mxu0
  %v615 = vadd.f32 %v104, %v614
  %v616 = vpop.f32.mrb[0].mxu0
  %617 = vmatprep.mubr.bf16.mxu0 0
  %618 = vmatmul.mubr.bf16.gmra.mrb[0].mxu0 %v355
  %v619 = vpop.f32.mrb[0].mxu0
  %v620 = vadd.f32 %v104, %v619
  %v621 = vpop.f32.mrb[0].mxu0
  %v622 = vpop.f32.mrb[0].mxu0
  %v623 = vadd.f32 %v104, %v622
  %v624 = vpop.f32.mrb[0].mxu0
  %625 = vmatprep.mubr.bf16.mxu0 0
  %626 = vmatmul.mubr.bf16.gmra.mrb[0].mxu0 %v358
  %v627 = vpop.f32.mrb[0].mxu0
  %v628 = vadd.f32 %v104, %v627
  %v629 = vpop.f32.mrb[0].mxu0
  %v630 = vpop.f32.mrb[0].mxu0
  %v631 = vadd.f32 %v104, %v630
  %v632 = vpop.f32.mrb[0].mxu0
  %633 = vmatprep.mubr.bf16.mxu0 0
  %634 = vmatmul.mubr.bf16.gmra.mrb[0].mxu0 %v361
  %v635 = vpop.f32.mrb[0].mxu0
  %v636 = vadd.f32 %v104, %v635
  %v637 = vpop.f32.mrb[0].mxu0
  %v638 = vpop.f32.mrb[0].mxu0
  %v639 = vadd.f32 %v104, %v638
  %v640 = vpop.f32.mrb[0].mxu0
  %641 = vmatprep.mubr.bf16.mxu0 0
  %642 = vmatmul.mubr.bf16.gmra.mrb[0].mxu0 %v364
  %v643 = vpop.f32.mrb[0].mxu0
  %v644 = vadd.f32 %v104, %v643
  %v645 = vpop.f32.mrb[0].mxu0
  %v646 = vpop.f32.mrb[0].mxu0
  %v647 = vadd.f32 %v104, %v646
  %v648 = vpop.f32.mrb[0].mxu0
  %649 = vmatprep.mubr.bf16.mxu0 0
  %650 = vmatmul.mubr.bf16.gmra.mrb[0].mxu0 %v367
  %v651 = vpop.f32.mrb[0].mxu0
  %v652 = vadd.f32 %v104, %v651
  %v653 = vpop.f32.mrb[0].mxu0
  %v654 = vpop.f32.mrb[0].mxu0
  %v655 = vadd.f32 %v104, %v654
  %v656 = vpop.f32.mrb[0].mxu0
  %657 = vdwg.mxu0
  %v658 = vmax.f32 %v404, 0.0
  %v659 = vmax.f32 %v407, 0.0
  %v660 = vmax.f32 %v412, 0.0
  %v661 = vmax.f32 %v415, 0.0
  %v662 = vmax.f32 %v420, 0.0
  %v663 = vmax.f32 %v423, 0.0
  %v664 = vmax.f32 %v428, 0.0
  %v665 = vmax.f32 %v431, 0.0
  %v666 = vmax.f32 %v436, 0.0
  %v667 = vmax.f32 %v439, 0.0
  %v668 = vmax.f32 %v444, 0.0
  %v669 = vmax.f32 %v447, 0.0
  %v670 = vmax.f32 %v452, 0.0
  %v671 = vmax.f32 %v455, 0.0
  %v672 = vmax.f32 %v460, 0.0
  %v673 = vmax.f32 %v463, 0.0
  %v674 = vmax.f32 %v468, 0.0
  %v675 = vmax.f32 %v471, 0.0
  %v676 = vmax.f32 %v476, 0.0
  %v677 = vmax.f32 %v479, 0.0
  %v678 = vmax.f32 %v484, 0.0
  %v679 = vmax.f32 %v487, 0.0
  %v680 = vmax.f32 %v492, 0.0
  %v681 = vmax.f32 %v495, 0.0
  %v682 = vmax.f32 %v500, 0.0
  %v683 = vmax.f32 %v503, 0.0
  %v684 = vmax.f32 %v508, 0.0
  %v685 = vmax.f32 %v511, 0.0
  %v686 = vmax.f32 %v516, 0.0
  %v687 = vmax.f32 %v519, 0.0
  %v688 = vmax.f32 %v524, 0.0
  %v689 = vmax.f32 %v527, 0.0
  %v690 = vmax.f32 %v532, 0.0
  %v691 = vmax.f32 %v535, 0.0
  %v692 = vmax.f32 %v540, 0.0
  %v693 = vmax.f32 %v543, 0.0
  %v694 = vmax.f32 %v548, 0.0
  %v695 = vmax.f32 %v551, 0.0
  %v696 = vmax.f32 %v556, 0.0
  %v697 = vmax.f32 %v559, 0.0
  %v698 = vmax.f32 %v564, 0.0
  %v699 = vmax.f32 %v567, 0.0
  %v700 = vmax.f32 %v572, 0.0
  %v701 = vmax.f32 %v575, 0.0
  %v702 = vmax.f32 %v580, 0.0
  %v703 = vmax.f32 %v583, 0.0
  %v704 = vmax.f32 %v588, 0.0
  %v705 = vmax.f32 %v591, 0.0
  %v706 = vmax.f32 %v596, 0.0
  %v707 = vmax.f32 %v599, 0.0
  %v708 = vmax.f32 %v604, 0.0
  %v709 = vmax.f32 %v607, 0.0
  %v710 = vmax.f32 %v612, 0.0
  %v711 = vmax.f32 %v615, 0.0
  %v712 = vmax.f32 %v620, 0.0
  %v713 = vmax.f32 %v623, 0.0
  %v714 = vmax.f32 %v628, 0.0
  %v715 = vmax.f32 %v631, 0.0
  %v716 = vmax.f32 %v636, 0.0
  %v717 = vmax.f32 %v639, 0.0
  %v718 = vmax.f32 %v644, 0.0
  %v719 = vmax.f32 %v647, 0.0
  %v720 = vmax.f32 %v652, 0.0
  %v721 = vmax.f32 %v655, 0.0
  %v722 = vld [vmem:[%s1] sm:$0xf]
  %v723 = vld [vmem:[%s1 + $0x4] sm:$0xf]
  %v724 = vld [vmem:[%s1 + $0x8] sm:$0xf]
  %v725 = vld [vmem:[%s1 + $0xc] sm:$0xf]
  %v726 = vld [vmem:[%s1 + $0x10] sm:$0xf]
  %v727 = vld [vmem:[%s1 + $0x14] sm:$0xf]
  %v728 = vld [vmem:[%s1 + $0x18] sm:$0xf]
  %v729 = vld [vmem:[%s1 + $0x1c] sm:$0xf]
  %v730 = vld [vmem:[%s1 + $0x20] sm:$0xf]
  %v731 = vld [vmem:[%s1 + $0x24] sm:$0xf]
  %v732 = vld [vmem:[%s1 + $0x28] sm:$0xf]
  %v733 = vld [vmem:[%s1 + $0x2c] sm:$0xf]
  %v734 = vld [vmem:[%s1 + $0x30] sm:$0xf]
  %v735 = vld [vmem:[%s1 + $0x34] sm:$0xf]
  %v736 = vld [vmem:[%s1 + $0x38] sm:$0xf]
  %v737 = vld [vmem:[%s1 + $0x3c] sm:$0xf]
  %v738 = vld [vmem:[%s1 + $0x40] sm:$0xf]
  %v739 = vld [vmem:[%s1 + $0x44] sm:$0xf]
  %v740 = vld [vmem:[%s1 + $0x48] sm:$0xf]
  %v741 = vld [vmem:[%s1 + $0x4c] sm:$0xf]
  %v742 = vld [vmem:[%s1 + $0x50] sm:$0xf]
  %v743 = vld [vmem:[%s1 + $0x54] sm:$0xf]
  %v744 = vld [vmem:[%s1 + $0x58] sm:$0xf]
  %v745 = vld [vmem:[%s1 + $0x5c] sm:$0xf]
  %v746 = vld [vmem:[%s1 + $0x60] sm:$0xf]
  %v747 = vld [vmem:[%s1 + $0x64] sm:$0xf]
  %v748 = vld [vmem:[%s1 + $0x68] sm:$0xf]
  %v749 = vld [vmem:[%s1 + $0x6c] sm:$0xf]
  %v750 = vld [vmem:[%s1 + $0x70] sm:$0xf]
  %v751 = vld [vmem:[%s1 + $0x74] sm:$0xf]
  %v752 = vld [vmem:[%s1 + $0x78] sm:$0xf]
  %v753 = vld [vmem:[%s1 + $0x7c] sm:$0xf]
  %v754 = vld [vmem:[%s1 + $0x80] sm:$0xf]
  %v755 = vld [vmem:[%s1 + $0x84] sm:$0xf]
  %v756 = vld [vmem:[%s1 + $0x88] sm:$0xf]
  %v757 = vld [vmem:[%s1 + $0x8c] sm:$0xf]
  %v758 = vld [vmem:[%s1 + $0x90] sm:$0xf]
  %v759 = vld [vmem:[%s1 + $0x94] sm:$0xf]
  %v760 = vld [vmem:[%s1 + $0x98] sm:$0xf]
  %v761 = vld [vmem:[%s1 + $0x9c] sm:$0xf]
  %v762 = vld [vmem:[%s1 + $0xa0] sm:$0xf]
  %v763 = vld [vmem:[%s1 + $0xa4] sm:$0xf]
  %v764 = vld [vmem:[%s1 + $0xa8] sm:$0xf]
  %v765 = vld [vmem:[%s1 + $0xac] sm:$0xf]
  %v766 = vld [vmem:[%s1 + $0xb0] sm:$0xf]
  %v767 = vld [vmem:[%s1 + $0xb4] sm:$0xf]
  %v768 = vld [vmem:[%s1 + $0xb8] sm:$0xf]
  %v769 = vld [vmem:[%s1 + $0xbc] sm:$0xf]
  %v770 = vld [vmem:[%s1 + $0xc0] sm:$0xf]
  %v771 = vld [vmem:[%s1 + $0xc4] sm:$0xf]
  %v772 = vld [vmem:[%s1 + $0xc8] sm:$0xf]
  %v773 = vld [vmem:[%s1 + $0xcc] sm:$0xf]
  %v774 = vld [vmem:[%s1 + $0xd0] sm:$0xf]
  %v775 = vld [vmem:[%s1 + $0xd4] sm:$0xf]
  %v776 = vld [vmem:[%s1 + $0xd8] sm:$0xf]
  %v777 = vld [vmem:[%s1 + $0xdc] sm:$0xf]
  %v778 = vld [vmem:[%s1 + $0xe0] sm:$0xf]
  %v779 = vld [vmem:[%s1 + $0xe4] sm:$0xf]
  %v780 = vld [vmem:[%s1 + $0xe8] sm:$0xf]
  %v781 = vld [vmem:[%s1 + $0xec] sm:$0xf]
  %v782 = vld [vmem:[%s1 + $0xf0] sm:$0xf]
  %v783 = vld [vmem:[%s1 + $0xf4] sm:$0xf]
  %v784 = vld [vmem:[%s1 + $0xf8] sm:$0xf]
  %v785 = vld [vmem:[%s1 + $0xfc] sm:$0xf]
  %v786 = vld [vmem:[%s4] sm:$0xf]
  %v787 = vld [vmem:[%s4 + $0x4] sm:$0xf]
  %v788 = vld [vmem:[%s4 + $0x8] sm:$0xf]
  %v789 = vld [vmem:[%s4 + $0xc] sm:$0xf]
  %v790 = vld [vmem:[%s7] sm:$0x1]
  %v792 = vlaneseq
  %v793 = vshrl.u32 %v792, 7
  %v794 = vsub.s32 0, %v793
  %v795 = vrot.slane %v790, %v794
  %v861 = vunpack.c.l.b16 %v722
  %v862 = vunpack.c.l.b16 %v723
  %v863 = vunpack.c.l.b16 %v724
  %v864 = vunpack.c.l.b16 %v725
  %v865 = vunpack.c.l.b16 %v726
  %v866 = vunpack.c.l.b16 %v727
  %v867 = vunpack.c.l.b16 %v728
  %v868 = vunpack.c.l.b16 %v729
  %v869 = vunpack.c.l.b16 %v730
  %v870 = vunpack.c.l.b16 %v731
  %v871 = vunpack.c.l.b16 %v732
  %v872 = vunpack.c.l.b16 %v733
  %v873 = vunpack.c.l.b16 %v734
  %v874 = vunpack.c.l.b16 %v735
  %v875 = vunpack.c.l.b16 %v736
  %v876 = vunpack.c.l.b16 %v737
  %v877 = vunpack.c.l.b16 %v738
  %v878 = vunpack.c.l.b16 %v739
  %v879 = vunpack.c.l.b16 %v740
  %v880 = vunpack.c.l.b16 %v741
  %v881 = vunpack.c.l.b16 %v742
  %v882 = vunpack.c.l.b16 %v743
  %v883 = vunpack.c.l.b16 %v744
  %v884 = vunpack.c.l.b16 %v745
  %v885 = vunpack.c.l.b16 %v746
  %v886 = vunpack.c.l.b16 %v747
  %v887 = vunpack.c.l.b16 %v748
  %v888 = vunpack.c.l.b16 %v749
  %v889 = vunpack.c.l.b16 %v750
  %v890 = vunpack.c.l.b16 %v751
  %v891 = vunpack.c.l.b16 %v752
  %v892 = vunpack.c.l.b16 %v753
  %v893 = vunpack.c.l.b16 %v754
  %v894 = vunpack.c.l.b16 %v755
  %v895 = vunpack.c.l.b16 %v756
  %v896 = vunpack.c.l.b16 %v757
  %v897 = vunpack.c.l.b16 %v758
  %v898 = vunpack.c.l.b16 %v759
  %v899 = vunpack.c.l.b16 %v760
  %v900 = vunpack.c.l.b16 %v761
  %v901 = vunpack.c.l.b16 %v762
  %v902 = vunpack.c.l.b16 %v763
  %v903 = vunpack.c.l.b16 %v764
  %v904 = vunpack.c.l.b16 %v765
  %v905 = vunpack.c.l.b16 %v766
  %v906 = vunpack.c.l.b16 %v767
  %v907 = vunpack.c.l.b16 %v768
  %v908 = vunpack.c.l.b16 %v769
  %v909 = vunpack.c.l.b16 %v770
  %v910 = vunpack.c.l.b16 %v771
  %v911 = vunpack.c.l.b16 %v772
  %v912 = vunpack.c.l.b16 %v773
  %v913 = vunpack.c.l.b16 %v774
  %v914 = vunpack.c.l.b16 %v775
  %v915 = vunpack.c.l.b16 %v776
  %v916 = vunpack.c.l.b16 %v777
  %v917 = vunpack.c.l.b16 %v778
  %v918 = vunpack.c.l.b16 %v779
  %v919 = vunpack.c.l.b16 %v780
  %v920 = vunpack.c.l.b16 %v781
  %v921 = vunpack.c.l.b16 %v782
  %v922 = vunpack.c.l.b16 %v783
  %v923 = vunpack.c.l.b16 %v784
  %v924 = vunpack.c.l.b16 %v785
  %v925 = vpack.c.b16 %v862, %v861
  %v926 = vpack.c.b16 %v864, %v863
  %v927 = vpack.c.b16 %v866, %v865
  %v928 = vpack.c.b16 %v868, %v867
  %v929 = vpack.c.b16 %v870, %v869
  %v930 = vpack.c.b16 %v872, %v871
  %v931 = vpack.c.b16 %v874, %v873
  %v932 = vpack.c.b16 %v876, %v875
  %v933 = vpack.c.b16 %v878, %v877
  %v934 = vpack.c.b16 %v880, %v879
  %v935 = vpack.c.b16 %v882, %v881
  %v936 = vpack.c.b16 %v884, %v883
  %v937 = vpack.c.b16 %v886, %v885
  %v938 = vpack.c.b16 %v888, %v887
  %v939 = vpack.c.b16 %v890, %v889
  %v940 = vpack.c.b16 %v892, %v891
  %v941 = vpack.c.b16 %v894, %v893
  %v942 = vpack.c.b16 %v896, %v895
  %v943 = vpack.c.b16 %v898, %v897
  %v944 = vpack.c.b16 %v900, %v899
  %v945 = vpack.c.b16 %v902, %v901
  %v946 = vpack.c.b16 %v904, %v903
  %v947 = vpack.c.b16 %v906, %v905
  %v948 = vpack.c.b16 %v908, %v907
  %v949 = vpack.c.b16 %v910, %v909
  %v950 = vpack.c.b16 %v912, %v911
  %v951 = vpack.c.b16 %v914, %v913
  %v952 = vpack.c.b16 %v916, %v915
  %v953 = vpack.c.b16 %v918, %v917
  %v954 = vpack.c.b16 %v920, %v919
  %v955 = vpack.c.b16 %v922, %v921
  %v956 = vpack.c.b16 %v924, %v923
  %v961 = vunpack.c.l.b16 %v786
  %v962 = vunpack.c.l.b16 %v787
  %v963 = vunpack.c.l.b16 %v788
  %v964 = vunpack.c.l.b16 %v789
  %v965 = vpack.c.b16 %v962, %v961
  %v966 = vpack.c.b16 %v964, %v963
  %vm969 = vcmask 261120
  %v971 = vsel %vm969, %v925, 0
  %v974 = vsel %vm969, %v926, 0
  %v977 = vsel %vm969, %v927, 0
  %v980 = vsel %vm969, %v928, 0
  %v983 = vsel %vm969, %v929, 0
  %v986 = vsel %vm969, %v930, 0
  %v989 = vsel %vm969, %v931, 0
  %v992 = vsel %vm969, %v932, 0
  %v995 = vsel %vm969, %v933, 0
  %v998 = vsel %vm969, %v934, 0
  %v1001 = vsel %vm969, %v935, 0
  %v1004 = vsel %vm969, %v936, 0
  %v1007 = vsel %vm969, %v937, 0
  %v1010 = vsel %vm969, %v938, 0
  %v1013 = vsel %vm969, %v939, 0
  %v1016 = vsel %vm969, %v940, 0
  %v1019 = vsel %vm969, %v941, 0
  %v1022 = vsel %vm969, %v942, 0
  %v1025 = vsel %vm969, %v943, 0
  %v1028 = vsel %vm969, %v944, 0
  %v1031 = vsel %vm969, %v945, 0
  %v1034 = vsel %vm969, %v946, 0
  %v1037 = vsel %vm969, %v947, 0
  %v1040 = vsel %vm969, %v948, 0
  %v1043 = vsel %vm969, %v949, 0
  %v1046 = vsel %vm969, %v950, 0
  %v1049 = vsel %vm969, %v951, 0
  %v1052 = vsel %vm969, %v952, 0
  %v1055 = vsel %vm969, %v953, 0
  %v1058 = vsel %vm969, %v954, 0
  %v1061 = vsel %vm969, %v955, 0
  %v1064 = vsel %vm969, %v956, 0
  %1066 = vmatprep.subr.bf16.mxu0 0
  %1067 = vmatpush1.bf16.msra.mxu0 %v965
  %1068 = vmatprep.subr.bf16.mxu0 0
  %1069 = vmatpush1.bf16.msra.mxu0 %v966
  %1070 = vmatprep.subr.bf16.mxu0 0
  %1071 = vmatpush1.bf16.msra.mxu0 0
  %1072 = vmatprep.subr.bf16.mxu0 0
  %1073 = vmatpush1.bf16.msra.mxu0 0
  %1074 = vmatprep.subr.bf16.mxu0 0
  %1075 = vmatpush1.bf16.msra.mxu0 0
  %1076 = vmatprep.subr.bf16.mxu0 0
  %1077 = vmatpush1.bf16.msra.mxu0 0
  %1078 = vmatprep.subr.bf16.mxu0 0
  %1079 = vmatpush1.bf16.msra.mxu0 0
  %1080 = vmatprep.subr.bf16.mxu0 0
  %1081 = vmatpush1.bf16.msra.mxu0 0
  %1082 = vmatprep.subr.bf16.mxu0 0
  %1083 = vmatpush1.bf16.msra.mxu0 0
  %1084 = vmatprep.subr.bf16.mxu0 0
  %1085 = vmatpush1.bf16.msra.mxu0 0
  %1086 = vmatprep.subr.bf16.mxu0 0
  %1087 = vmatpush1.bf16.msra.mxu0 0
  %1088 = vmatprep.subr.bf16.mxu0 0
  %1089 = vmatpush1.bf16.msra.mxu0 0
  %1090 = vmatprep.subr.bf16.mxu0 0
  %1091 = vmatpush1.bf16.msra.mxu0 0
  %1092 = vmatprep.subr.bf16.mxu0 0
  %1093 = vmatpush1.bf16.msra.mxu0 0
  %1094 = vmatprep.subr.bf16.mxu0 0
  %1095 = vmatpush1.bf16.msra.mxu0 0
  %1096 = vmatprep.subr.bf16.mxu0 0
  %1097 = vmatpush1.bf16.msra.mxu0 0
  %1098 = vmatprep.mubr.bf16.mxu0 0
  %1099 = vmatmul.mubr.bf16.gmra.mrb[0].mxu0 %v971
  %v1100 = vpop.f32.mrb[0].mxu0
  %v1101 = vadd.f32 %v795, %v1100
  %v1102 = vpop.f32.mrb[0].mxu0
  %v1103 = vpop.f32.mrb[0].mxu0
  %v1104 = vadd.f32 %v795, %v1103
  %v1105 = vpop.f32.mrb[0].mxu0
  %1106 = vmatprep.mubr.bf16.mxu0 0
  %1107 = vmatmul.mubr.bf16.gmra.mrb[0].mxu0 %v974
  %v1108 = vpop.f32.mrb[0].mxu0
  %v1109 = vadd.f32 %v795, %v1108
  %v1110 = vpop.f32.mrb[0].mxu0
  %v1111 = vpop.f32.mrb[0].mxu0
  %v1112 = vadd.f32 %v795, %v1111
  %v1113 = vpop.f32.mrb[0].mxu0
  %1114 = vmatprep.mubr.bf16.mxu0 0
  %1115 = vmatmul.mubr.bf16.gmra.mrb[0].mxu0 %v977
  %v1116 = vpop.f32.mrb[0].mxu0
  %v1117 = vadd.f32 %v795, %v1116
  %v1118 = vpop.f32.mrb[0].mxu0
  %v1119 = vpop.f32.mrb[0].mxu0
  %v1120 = vadd.f32 %v795, %v1119
  %v1121 = vpop.f32.mrb[0].mxu0
  %1122 = vmatprep.mubr.bf16.mxu0 0
  %1123 = vmatmul.mubr.bf16.gmra.mrb[0].mxu0 %v980
  %v1124 = vpop.f32.mrb[0].mxu0
  %v1125 = vadd.f32 %v795, %v1124
  %v1126 = vpop.f32.mrb[0].mxu0
  %v1127 = vpop.f32.mrb[0].mxu0
  %v1128 = vadd.f32 %v795, %v1127
  %v1129 = vpop.f32.mrb[0].mxu0
  %1130 = vmatprep.mubr.bf16.mxu0 0
  %1131 = vmatmul.mubr.bf16.gmra.mrb[0].mxu0 %v983
  %v1132 = vpop.f32.mrb[0].mxu0
  %v1133 = vadd.f32 %v795, %v1132
  %v1134 = vpop.f32.mrb[0].mxu0
  %v1135 = vpop.f32.mrb[0].mxu0
  %v1136 = vadd.f32 %v795, %v1135
  %v1137 = vpop.f32.mrb[0].mxu0
  %1138 = vmatprep.mubr.bf16.mxu0 0
  %1139 = vmatmul.mubr.bf16.gmra.mrb[0].mxu0 %v986
  %v1140 = vpop.f32.mrb[0].mxu0
  %v1141 = vadd.f32 %v795, %v1140
  %v1142 = vpop.f32.mrb[0].mxu0
  %v1143 = vpop.f32.mrb[0].mxu0
  %v1144 = vadd.f32 %v795, %v1143
  %v1145 = vpop.f32.mrb[0].mxu0
  %1146 = vmatprep.mubr.bf16.mxu0 0
  %1147 = vmatmul.mubr.bf16.gmra.mrb[0].mxu0 %v989
  %v1148 = vpop.f32.mrb[0].mxu0
  %v1149 = vadd.f32 %v795, %v1148
  %v1150 = vpop.f32.mrb[0].mxu0
  %v1151 = vpop.f32.mrb[0].mxu0
  %v1152 = vadd.f32 %v795, %v1151
  %v1153 = vpop.f32.mrb[0].mxu0
  %1154 = vmatprep.mubr.bf16.mxu0 0
  %1155 = vmatmul.mubr.bf16.gmra.mrb[0].mxu0 %v992
  %v1156 = vpop.f32.mrb[0].mxu0
  %v1157 = vadd.f32 %v795, %v1156
  %v1158 = vpop.f32.mrb[0].mxu0
  %v1159 = vpop.f32.mrb[0].mxu0
  %v1160 = vadd.f32 %v795, %v1159
  %v1161 = vpop.f32.mrb[0].mxu0
  %1162 = vmatprep.mubr.bf16.mxu0 0
  %1163 = vmatmul.mubr.bf16.gmra.mrb[0].mxu0 %v995
  %v1164 = vpop.f32.mrb[0].mxu0
  %v1165 = vadd.f32 %v795, %v1164
  %v1166 = vpop.f32.mrb[0].mxu0
  %v1167 = vpop.f32.mrb[0].mxu0
  %v1168 = vadd.f32 %v795, %v1167
  %v1169 = vpop.f32.mrb[0].mxu0
  %1170 = vmatprep.mubr.bf16.mxu0 0
  %1171 = vmatmul.mubr.bf16.gmra.mrb[0].mxu0 %v998
  %v1172 = vpop.f32.mrb[0].mxu0
  %v1173 = vadd.f32 %v795, %v1172
  %v1174 = vpop.f32.mrb[0].mxu0
  %v1175 = vpop.f32.mrb[0].mxu0
  %v1176 = vadd.f32 %v795, %v1175
  %v1177 = vpop.f32.mrb[0].mxu0
  %1178 = vmatprep.mubr.bf16.mxu0 0
  %1179 = vmatmul.mubr.bf16.gmra.mrb[0].mxu0 %v1001
  %v1180 = vpop.f32.mrb[0].mxu0
  %v1181 = vadd.f32 %v795, %v1180
  %v1182 = vpop.f32.mrb[0].mxu0
  %v1183 = vpop.f32.mrb[0].mxu0
  %v1184 = vadd.f32 %v795, %v1183
  %v1185 = vpop.f32.mrb[0].mxu0
  %1186 = vmatprep.mubr.bf16.mxu0 0
  %1187 = vmatmul.mubr.bf16.gmra.mrb[0].mxu0 %v1004
  %v1188 = vpop.f32.mrb[0].mxu0
  %v1189 = vadd.f32 %v795, %v1188
  %v1190 = vpop.f32.mrb[0].mxu0
  %v1191 = vpop.f32.mrb[0].mxu0
  %v1192 = vadd.f32 %v795, %v1191
  %v1193 = vpop.f32.mrb[0].mxu0
  %1194 = vmatprep.mubr.bf16.mxu0 0
  %1195 = vmatmul.mubr.bf16.gmra.mrb[0].mxu0 %v1007
  %v1196 = vpop.f32.mrb[0].mxu0
  %v1197 = vadd.f32 %v795, %v1196
  %v1198 = vpop.f32.mrb[0].mxu0
  %v1199 = vpop.f32.mrb[0].mxu0
  %v1200 = vadd.f32 %v795, %v1199
  %v1201 = vpop.f32.mrb[0].mxu0
  %1202 = vmatprep.mubr.bf16.mxu0 0
  %1203 = vmatmul.mubr.bf16.gmra.mrb[0].mxu0 %v1010
  %v1204 = vpop.f32.mrb[0].mxu0
  %v1205 = vadd.f32 %v795, %v1204
  %v1206 = vpop.f32.mrb[0].mxu0
  %v1207 = vpop.f32.mrb[0].mxu0
  %v1208 = vadd.f32 %v795, %v1207
  %v1209 = vpop.f32.mrb[0].mxu0
  %1210 = vmatprep.mubr.bf16.mxu0 0
  %1211 = vmatmul.mubr.bf16.gmra.mrb[0].mxu0 %v1013
  %v1212 = vpop.f32.mrb[0].mxu0
  %v1213 = vadd.f32 %v795, %v1212
  %v1214 = vpop.f32.mrb[0].mxu0
  %v1215 = vpop.f32.mrb[0].mxu0
  %v1216 = vadd.f32 %v795, %v1215
  %v1217 = vpop.f32.mrb[0].mxu0
  %1218 = vmatprep.mubr.bf16.mxu0 0
  %1219 = vmatmul.mubr.bf16.gmra.mrb[0].mxu0 %v1016
  %v1220 = vpop.f32.mrb[0].mxu0
  %v1221 = vadd.f32 %v795, %v1220
  %v1222 = vpop.f32.mrb[0].mxu0
  %v1223 = vpop.f32.mrb[0].mxu0
  %v1224 = vadd.f32 %v795, %v1223
  %v1225 = vpop.f32.mrb[0].mxu0
  %1226 = vmatprep.mubr.bf16.mxu0 0
  %1227 = vmatmul.mubr.bf16.gmra.mrb[0].mxu0 %v1019
  %v1228 = vpop.f32.mrb[0].mxu0
  %v1229 = vadd.f32 %v795, %v1228
  %v1230 = vpop.f32.mrb[0].mxu0
  %v1231 = vpop.f32.mrb[0].mxu0
  %v1232 = vadd.f32 %v795, %v1231
  %v1233 = vpop.f32.mrb[0].mxu0
  %1234 = vmatprep.mubr.bf16.mxu0 0
  %1235 = vmatmul.mubr.bf16.gmra.mrb[0].mxu0 %v1022
  %v1236 = vpop.f32.mrb[0].mxu0
  %v1237 = vadd.f32 %v795, %v1236
  %v1238 = vpop.f32.mrb[0].mxu0
  %v1239 = vpop.f32.mrb[0].mxu0
  %v1240 = vadd.f32 %v795, %v1239
  %v1241 = vpop.f32.mrb[0].mxu0
  %1242 = vmatprep.mubr.bf16.mxu0 0
  %1243 = vmatmul.mubr.bf16.gmra.mrb[0].mxu0 %v1025
  %v1244 = vpop.f32.mrb[0].mxu0
  %v1245 = vadd.f32 %v795, %v1244
  %v1246 = vpop.f32.mrb[0].mxu0
  %v1247 = vpop.f32.mrb[0].mxu0
  %v1248 = vadd.f32 %v795, %v1247
  %v1249 = vpop.f32.mrb[0].mxu0
  %1250 = vmatprep.mubr.bf16.mxu0 0
  %1251 = vmatmul.mubr.bf16.gmra.mrb[0].mxu0 %v1028
  %v1252 = vpop.f32.mrb[0].mxu0
  %v1253 = vadd.f32 %v795, %v1252
  %v1254 = vpop.f32.mrb[0].mxu0
  %v1255 = vpop.f32.mrb[0].mxu0
  %v1256 = vadd.f32 %v795, %v1255
  %v1257 = vpop.f32.mrb[0].mxu0
  %1258 = vmatprep.mubr.bf16.mxu0 0
  %1259 = vmatmul.mubr.bf16.gmra.mrb[0].mxu0 %v1031
  %v1260 = vpop.f32.mrb[0].mxu0
  %v1261 = vadd.f32 %v795, %v1260
  %v1262 = vpop.f32.mrb[0].mxu0
  %v1263 = vpop.f32.mrb[0].mxu0
  %v1264 = vadd.f32 %v795, %v1263
  %v1265 = vpop.f32.mrb[0].mxu0
  %1266 = vmatprep.mubr.bf16.mxu0 0
  %1267 = vmatmul.mubr.bf16.gmra.mrb[0].mxu0 %v1034
  %v1268 = vpop.f32.mrb[0].mxu0
  %v1269 = vadd.f32 %v795, %v1268
  %v1270 = vpop.f32.mrb[0].mxu0
  %v1271 = vpop.f32.mrb[0].mxu0
  %v1272 = vadd.f32 %v795, %v1271
  %v1273 = vpop.f32.mrb[0].mxu0
  %1274 = vmatprep.mubr.bf16.mxu0 0
  %1275 = vmatmul.mubr.bf16.gmra.mrb[0].mxu0 %v1037
  %v1276 = vpop.f32.mrb[0].mxu0
  %v1277 = vadd.f32 %v795, %v1276
  %v1278 = vpop.f32.mrb[0].mxu0
  %v1279 = vpop.f32.mrb[0].mxu0
  %v1280 = vadd.f32 %v795, %v1279
  %v1281 = vpop.f32.mrb[0].mxu0
  %1282 = vmatprep.mubr.bf16.mxu0 0
  %1283 = vmatmul.mubr.bf16.gmra.mrb[0].mxu0 %v1040
  %v1284 = vpop.f32.mrb[0].mxu0
  %v1285 = vadd.f32 %v795, %v1284
  %v1286 = vpop.f32.mrb[0].mxu0
  %v1287 = vpop.f32.mrb[0].mxu0
  %v1288 = vadd.f32 %v795, %v1287
  %v1289 = vpop.f32.mrb[0].mxu0
  %1290 = vmatprep.mubr.bf16.mxu0 0
  %1291 = vmatmul.mubr.bf16.gmra.mrb[0].mxu0 %v1043
  %v1292 = vpop.f32.mrb[0].mxu0
  %v1293 = vadd.f32 %v795, %v1292
  %v1294 = vpop.f32.mrb[0].mxu0
  %v1295 = vpop.f32.mrb[0].mxu0
  %v1296 = vadd.f32 %v795, %v1295
  %v1297 = vpop.f32.mrb[0].mxu0
  %1298 = vmatprep.mubr.bf16.mxu0 0
  %1299 = vmatmul.mubr.bf16.gmra.mrb[0].mxu0 %v1046
  %v1300 = vpop.f32.mrb[0].mxu0
  %v1301 = vadd.f32 %v795, %v1300
  %v1302 = vpop.f32.mrb[0].mxu0
  %v1303 = vpop.f32.mrb[0].mxu0
  %v1304 = vadd.f32 %v795, %v1303
  %v1305 = vpop.f32.mrb[0].mxu0
  %1306 = vmatprep.mubr.bf16.mxu0 0
  %1307 = vmatmul.mubr.bf16.gmra.mrb[0].mxu0 %v1049
  %v1308 = vpop.f32.mrb[0].mxu0
  %v1309 = vadd.f32 %v795, %v1308
  %v1310 = vpop.f32.mrb[0].mxu0
  %v1311 = vpop.f32.mrb[0].mxu0
  %v1312 = vadd.f32 %v795, %v1311
  %v1313 = vpop.f32.mrb[0].mxu0
  %1314 = vmatprep.mubr.bf16.mxu0 0
  %1315 = vmatmul.mubr.bf16.gmra.mrb[0].mxu0 %v1052
  %v1316 = vpop.f32.mrb[0].mxu0
  %v1317 = vadd.f32 %v795, %v1316
  %v1318 = vpop.f32.mrb[0].mxu0
  %v1319 = vpop.f32.mrb[0].mxu0
  %v1320 = vadd.f32 %v795, %v1319
  %v1321 = vpop.f32.mrb[0].mxu0
  %1322 = vmatprep.mubr.bf16.mxu0 0
  %1323 = vmatmul.mubr.bf16.gmra.mrb[0].mxu0 %v1055
  %v1324 = vpop.f32.mrb[0].mxu0
  %v1325 = vadd.f32 %v795, %v1324
  %v1326 = vpop.f32.mrb[0].mxu0
  %v1327 = vpop.f32.mrb[0].mxu0
  %v1328 = vadd.f32 %v795, %v1327
  %v1329 = vpop.f32.mrb[0].mxu0
  %1330 = vmatprep.mubr.bf16.mxu0 0
  %1331 = vmatmul.mubr.bf16.gmra.mrb[0].mxu0 %v1058
  %v1332 = vpop.f32.mrb[0].mxu0
  %v1333 = vadd.f32 %v795, %v1332
  %v1334 = vpop.f32.mrb[0].mxu0
  %v1335 = vpop.f32.mrb[0].mxu0
  %v1336 = vadd.f32 %v795, %v1335
  %v1337 = vpop.f32.mrb[0].mxu0
  %1338 = vmatprep.mubr.bf16.mxu0 0
  %1339 = vmatmul.mubr.bf16.gmra.mrb[0].mxu0 %v1061
  %v1340 = vpop.f32.mrb[0].mxu0
  %v1341 = vadd.f32 %v795, %v1340
  %v1342 = vpop.f32.mrb[0].mxu0
  %v1343 = vpop.f32.mrb[0].mxu0
  %v1344 = vadd.f32 %v795, %v1343
  %v1345 = vpop.f32.mrb[0].mxu0
  %1346 = vmatprep.mubr.bf16.mxu0 0
  %1347 = vmatmul.mubr.bf16.gmra.mrb[0].mxu0 %v1064
  %v1348 = vpop.f32.mrb[0].mxu0
  %v1349 = vadd.f32 %v795, %v1348
  %v1350 = vpop.f32.mrb[0].mxu0
  %v1351 = vpop.f32.mrb[0].mxu0
  %v1352 = vadd.f32 %v795, %v1351
  %v1353 = vpop.f32.mrb[0].mxu0
  %1354 = vdwg.mxu0
  %v1355 = vmax.f32 %v1101, 0.0
  %v1356 = vmax.f32 %v1104, 0.0
  %v1357 = vmax.f32 %v1109, 0.0
  %v1358 = vmax.f32 %v1112, 0.0
  %v1359 = vmax.f32 %v1117, 0.0
  %v1360 = vmax.f32 %v1120, 0.0
  %v1361 = vmax.f32 %v1125, 0.0
  %v1362 = vmax.f32 %v1128, 0.0
  %v1363 = vmax.f32 %v1133, 0.0
  %v1364 = vmax.f32 %v1136, 0.0
  %v1365 = vmax.f32 %v1141, 0.0
  %v1366 = vmax.f32 %v1144, 0.0
  %v1367 = vmax.f32 %v1149, 0.0
  %v1368 = vmax.f32 %v1152, 0.0
  %v1369 = vmax.f32 %v1157, 0.0
  %v1370 = vmax.f32 %v1160, 0.0
  %v1371 = vmax.f32 %v1165, 0.0
  %v1372 = vmax.f32 %v1168, 0.0
  %v1373 = vmax.f32 %v1173, 0.0
  %v1374 = vmax.f32 %v1176, 0.0
  %v1375 = vmax.f32 %v1181, 0.0
  %v1376 = vmax.f32 %v1184, 0.0
  %v1377 = vmax.f32 %v1189, 0.0
  %v1378 = vmax.f32 %v1192, 0.0
  %v1379 = vmax.f32 %v1197, 0.0
  %v1380 = vmax.f32 %v1200, 0.0
  %v1381 = vmax.f32 %v1205, 0.0
  %v1382 = vmax.f32 %v1208, 0.0
  %v1383 = vmax.f32 %v1213, 0.0
  %v1384 = vmax.f32 %v1216, 0.0
  %v1385 = vmax.f32 %v1221, 0.0
  %v1386 = vmax.f32 %v1224, 0.0
  %v1387 = vmax.f32 %v1229, 0.0
  %v1388 = vmax.f32 %v1232, 0.0
  %v1389 = vmax.f32 %v1237, 0.0
  %v1390 = vmax.f32 %v1240, 0.0
  %v1391 = vmax.f32 %v1245, 0.0
  %v1392 = vmax.f32 %v1248, 0.0
  %v1393 = vmax.f32 %v1253, 0.0
  %v1394 = vmax.f32 %v1256, 0.0
  %v1395 = vmax.f32 %v1261, 0.0
  %v1396 = vmax.f32 %v1264, 0.0
  %v1397 = vmax.f32 %v1269, 0.0
  %v1398 = vmax.f32 %v1272, 0.0
  %v1399 = vmax.f32 %v1277, 0.0
  %v1400 = vmax.f32 %v1280, 0.0
  %v1401 = vmax.f32 %v1285, 0.0
  %v1402 = vmax.f32 %v1288, 0.0
  %v1403 = vmax.f32 %v1293, 0.0
  %v1404 = vmax.f32 %v1296, 0.0
  %v1405 = vmax.f32 %v1301, 0.0
  %v1406 = vmax.f32 %v1304, 0.0
  %v1407 = vmax.f32 %v1309, 0.0
  %v1408 = vmax.f32 %v1312, 0.0
  %v1409 = vmax.f32 %v1317, 0.0
  %v1410 = vmax.f32 %v1320, 0.0
  %v1411 = vmax.f32 %v1325, 0.0
  %v1412 = vmax.f32 %v1328, 0.0
  %v1413 = vmax.f32 %v1333, 0.0
  %v1414 = vmax.f32 %v1336, 0.0
  %v1415 = vmax.f32 %v1341, 0.0
  %v1416 = vmax.f32 %v1344, 0.0
  %v1417 = vmax.f32 %v1349, 0.0
  %v1418 = vmax.f32 %v1352, 0.0
  %v1419 = vadd.f32 %v658, %v1355
  %v1420 = vadd.f32 %v659, %v1356
  %v1421 = vadd.f32 %v660, %v1357
  %v1422 = vadd.f32 %v661, %v1358
  %v1423 = vadd.f32 %v662, %v1359
  %v1424 = vadd.f32 %v663, %v1360
  %v1425 = vadd.f32 %v664, %v1361
  %v1426 = vadd.f32 %v665, %v1362
  %v1427 = vadd.f32 %v666, %v1363
  %v1428 = vadd.f32 %v667, %v1364
  %v1429 = vadd.f32 %v668, %v1365
  %v1430 = vadd.f32 %v669, %v1366
  %v1431 = vadd.f32 %v670, %v1367
  %v1432 = vadd.f32 %v671, %v1368
  %v1433 = vadd.f32 %v672, %v1369
  %v1434 = vadd.f32 %v673, %v1370
  %v1435 = vadd.f32 %v674, %v1371
  %v1436 = vadd.f32 %v675, %v1372
  %v1437 = vadd.f32 %v676, %v1373
  %v1438 = vadd.f32 %v677, %v1374
  %v1439 = vadd.f32 %v678, %v1375
  %v1440 = vadd.f32 %v679, %v1376
  %v1441 = vadd.f32 %v680, %v1377
  %v1442 = vadd.f32 %v681, %v1378
  %v1443 = vadd.f32 %v682, %v1379
  %v1444 = vadd.f32 %v683, %v1380
  %v1445 = vadd.f32 %v684, %v1381
  %v1446 = vadd.f32 %v685, %v1382
  %v1447 = vadd.f32 %v686, %v1383
  %v1448 = vadd.f32 %v687, %v1384
  %v1449 = vadd.f32 %v688, %v1385
  %v1450 = vadd.f32 %v689, %v1386
  %v1451 = vadd.f32 %v690, %v1387
  %v1452 = vadd.f32 %v691, %v1388
  %v1453 = vadd.f32 %v692, %v1389
  %v1454 = vadd.f32 %v693, %v1390
  %v1455 = vadd.f32 %v694, %v1391
  %v1456 = vadd.f32 %v695, %v1392
  %v1457 = vadd.f32 %v696, %v1393
  %v1458 = vadd.f32 %v697, %v1394
  %v1459 = vadd.f32 %v698, %v1395
  %v1460 = vadd.f32 %v699, %v1396
  %v1461 = vadd.f32 %v700, %v1397
  %v1462 = vadd.f32 %v701, %v1398
  %v1463 = vadd.f32 %v702, %v1399
  %v1464 = vadd.f32 %v703, %v1400
  %v1465 = vadd.f32 %v704, %v1401
  %v1466 = vadd.f32 %v705, %v1402
  %v1467 = vadd.f32 %v706, %v1403
  %v1468 = vadd.f32 %v707, %v1404
  %v1469 = vadd.f32 %v708, %v1405
  %v1470 = vadd.f32 %v709, %v1406
  %v1471 = vadd.f32 %v710, %v1407
  %v1472 = vadd.f32 %v711, %v1408
  %v1473 = vadd.f32 %v712, %v1409
  %v1474 = vadd.f32 %v713, %v1410
  %v1475 = vadd.f32 %v714, %v1411
  %v1476 = vadd.f32 %v715, %v1412
  %v1477 = vadd.f32 %v716, %v1413
  %v1478 = vadd.f32 %v717, %v1414
  %v1479 = vadd.f32 %v718, %v1415
  %v1480 = vadd.f32 %v719, %v1416
  %v1481 = vadd.f32 %v720, %v1417
  %v1482 = vadd.f32 %v721, %v1418
  %v1483 = vld [vmem:[%s2] sm:$0xf]
  %v1484 = vld [vmem:[%s2 + $0x4] sm:$0xf]
  %v1485 = vld [vmem:[%s2 + $0x8] sm:$0xf]
  %v1486 = vld [vmem:[%s2 + $0xc] sm:$0xf]
  %v1487 = vld [vmem:[%s2 + $0x10] sm:$0xf]
  %v1488 = vld [vmem:[%s2 + $0x14] sm:$0xf]
  %v1489 = vld [vmem:[%s2 + $0x18] sm:$0xf]
  %v1490 = vld [vmem:[%s2 + $0x1c] sm:$0xf]
  %v1491 = vld [vmem:[%s2 + $0x20] sm:$0xf]
  %v1492 = vld [vmem:[%s2 + $0x24] sm:$0xf]
  %v1493 = vld [vmem:[%s2 + $0x28] sm:$0xf]
  %v1494 = vld [vmem:[%s2 + $0x2c] sm:$0xf]
  %v1495 = vld [vmem:[%s2 + $0x30] sm:$0xf]
  %v1496 = vld [vmem:[%s2 + $0x34] sm:$0xf]
  %v1497 = vld [vmem:[%s2 + $0x38] sm:$0xf]
  %v1498 = vld [vmem:[%s2 + $0x3c] sm:$0xf]
  %v1499 = vld [vmem:[%s2 + $0x40] sm:$0xf]
  %v1500 = vld [vmem:[%s2 + $0x44] sm:$0xf]
  %v1501 = vld [vmem:[%s2 + $0x48] sm:$0xf]
  %v1502 = vld [vmem:[%s2 + $0x4c] sm:$0xf]
  %v1503 = vld [vmem:[%s2 + $0x50] sm:$0xf]
  %v1504 = vld [vmem:[%s2 + $0x54] sm:$0xf]
  %v1505 = vld [vmem:[%s2 + $0x58] sm:$0xf]
  %v1506 = vld [vmem:[%s2 + $0x5c] sm:$0xf]
  %v1507 = vld [vmem:[%s2 + $0x60] sm:$0xf]
  %v1508 = vld [vmem:[%s2 + $0x64] sm:$0xf]
  %v1509 = vld [vmem:[%s2 + $0x68] sm:$0xf]
  %v1510 = vld [vmem:[%s2 + $0x6c] sm:$0xf]
  %v1511 = vld [vmem:[%s2 + $0x70] sm:$0xf]
  %v1512 = vld [vmem:[%s2 + $0x74] sm:$0xf]
  %v1513 = vld [vmem:[%s2 + $0x78] sm:$0xf]
  %v1514 = vld [vmem:[%s2 + $0x7c] sm:$0xf]
  %v1515 = vld [vmem:[%s2 + $0x80] sm:$0xf]
  %v1516 = vld [vmem:[%s2 + $0x84] sm:$0xf]
  %v1517 = vld [vmem:[%s2 + $0x88] sm:$0xf]
  %v1518 = vld [vmem:[%s2 + $0x8c] sm:$0xf]
  %v1519 = vld [vmem:[%s2 + $0x90] sm:$0xf]
  %v1520 = vld [vmem:[%s2 + $0x94] sm:$0xf]
  %v1521 = vld [vmem:[%s2 + $0x98] sm:$0xf]
  %v1522 = vld [vmem:[%s2 + $0x9c] sm:$0xf]
  %v1523 = vld [vmem:[%s2 + $0xa0] sm:$0xf]
  %v1524 = vld [vmem:[%s2 + $0xa4] sm:$0xf]
  %v1525 = vld [vmem:[%s2 + $0xa8] sm:$0xf]
  %v1526 = vld [vmem:[%s2 + $0xac] sm:$0xf]
  %v1527 = vld [vmem:[%s2 + $0xb0] sm:$0xf]
  %v1528 = vld [vmem:[%s2 + $0xb4] sm:$0xf]
  %v1529 = vld [vmem:[%s2 + $0xb8] sm:$0xf]
  %v1530 = vld [vmem:[%s2 + $0xbc] sm:$0xf]
  %v1531 = vld [vmem:[%s2 + $0xc0] sm:$0xf]
  %v1532 = vld [vmem:[%s2 + $0xc4] sm:$0xf]
  %v1533 = vld [vmem:[%s2 + $0xc8] sm:$0xf]
  %v1534 = vld [vmem:[%s2 + $0xcc] sm:$0xf]
  %v1535 = vld [vmem:[%s2 + $0xd0] sm:$0xf]
  %v1536 = vld [vmem:[%s2 + $0xd4] sm:$0xf]
  %v1537 = vld [vmem:[%s2 + $0xd8] sm:$0xf]
  %v1538 = vld [vmem:[%s2 + $0xdc] sm:$0xf]
  %v1539 = vld [vmem:[%s2 + $0xe0] sm:$0xf]
  %v1540 = vld [vmem:[%s2 + $0xe4] sm:$0xf]
  %v1541 = vld [vmem:[%s2 + $0xe8] sm:$0xf]
  %v1542 = vld [vmem:[%s2 + $0xec] sm:$0xf]
  %v1543 = vld [vmem:[%s2 + $0xf0] sm:$0xf]
  %v1544 = vld [vmem:[%s2 + $0xf4] sm:$0xf]
  %v1545 = vld [vmem:[%s2 + $0xf8] sm:$0xf]
  %v1546 = vld [vmem:[%s2 + $0xfc] sm:$0xf]
  %v1547 = vld [vmem:[%s5] sm:$0xf]
  %v1548 = vld [vmem:[%s5 + $0x4] sm:$0xf]
  %v1549 = vld [vmem:[%s5 + $0x8] sm:$0xf]
  %v1550 = vld [vmem:[%s5 + $0xc] sm:$0xf]
  %v1551 = vld [vmem:[%s5 + $0x10] sm:$0xf]
  %v1552 = vld [vmem:[%s5 + $0x14] sm:$0xf]
  %v1553 = vld [vmem:[%s5 + $0x18] sm:$0xf]
  %v1554 = vld [vmem:[%s5 + $0x1c] sm:$0xf]
  %v1555 = vld [vmem:[%s8] sm:$0x1]
  %v1557 = vlaneseq
  %v1558 = vshrl.u32 %v1557, 7
  %v1559 = vsub.s32 0, %v1558
  %v1560 = vrot.slane %v1555, %v1559
  %v1626 = vunpack.c.l.b16 %v1483
  %v1627 = vunpack.c.l.b16 %v1484
  %v1628 = vunpack.c.l.b16 %v1485
  %v1629 = vunpack.c.l.b16 %v1486
  %v1630 = vunpack.c.l.b16 %v1487
  %v1631 = vunpack.c.l.b16 %v1488
  %v1632 = vunpack.c.l.b16 %v1489
  %v1633 = vunpack.c.l.b16 %v1490
  %v1634 = vunpack.c.l.b16 %v1491
  %v1635 = vunpack.c.l.b16 %v1492
  %v1636 = vunpack.c.l.b16 %v1493
  %v1637 = vunpack.c.l.b16 %v1494
  %v1638 = vunpack.c.l.b16 %v1495
  %v1639 = vunpack.c.l.b16 %v1496
  %v1640 = vunpack.c.l.b16 %v1497
  %v1641 = vunpack.c.l.b16 %v1498
  %v1642 = vunpack.c.l.b16 %v1499
  %v1643 = vunpack.c.l.b16 %v1500
  %v1644 = vunpack.c.l.b16 %v1501
  %v1645 = vunpack.c.l.b16 %v1502
  %v1646 = vunpack.c.l.b16 %v1503
  %v1647 = vunpack.c.l.b16 %v1504
  %v1648 = vunpack.c.l.b16 %v1505
  %v1649 = vunpack.c.l.b16 %v1506
  %v1650 = vunpack.c.l.b16 %v1507
  %v1651 = vunpack.c.l.b16 %v1508
  %v1652 = vunpack.c.l.b16 %v1509
  %v1653 = vunpack.c.l.b16 %v1510
  %v1654 = vunpack.c.l.b16 %v1511
  %v1655 = vunpack.c.l.b16 %v1512
  %v1656 = vunpack.c.l.b16 %v1513
  %v1657 = vunpack.c.l.b16 %v1514
  %v1658 = vunpack.c.l.b16 %v1515
  %v1659 = vunpack.c.l.b16 %v1516
  %v1660 = vunpack.c.l.b16 %v1517
  %v1661 = vunpack.c.l.b16 %v1518
  %v1662 = vunpack.c.l.b16 %v1519
  %v1663 = vunpack.c.l.b16 %v1520
  %v1664 = vunpack.c.l.b16 %v1521
  %v1665 = vunpack.c.l.b16 %v1522
  %v1666 = vunpack.c.l.b16 %v1523
  %v1667 = vunpack.c.l.b16 %v1524
  %v1668 = vunpack.c.l.b16 %v1525
  %v1669 = vunpack.c.l.b16 %v1526
  %v1670 = vunpack.c.l.b16 %v1527
  %v1671 = vunpack.c.l.b16 %v1528
  %v1672 = vunpack.c.l.b16 %v1529
  %v1673 = vunpack.c.l.b16 %v1530
  %v1674 = vunpack.c.l.b16 %v1531
  %v1675 = vunpack.c.l.b16 %v1532
  %v1676 = vunpack.c.l.b16 %v1533
  %v1677 = vunpack.c.l.b16 %v1534
  %v1678 = vunpack.c.l.b16 %v1535
  %v1679 = vunpack.c.l.b16 %v1536
  %v1680 = vunpack.c.l.b16 %v1537
  %v1681 = vunpack.c.l.b16 %v1538
  %v1682 = vunpack.c.l.b16 %v1539
  %v1683 = vunpack.c.l.b16 %v1540
  %v1684 = vunpack.c.l.b16 %v1541
  %v1685 = vunpack.c.l.b16 %v1542
  %v1686 = vunpack.c.l.b16 %v1543
  %v1687 = vunpack.c.l.b16 %v1544
  %v1688 = vunpack.c.l.b16 %v1545
  %v1689 = vunpack.c.l.b16 %v1546
  %v1690 = vpack.c.b16 %v1627, %v1626
  %v1691 = vpack.c.b16 %v1629, %v1628
  %v1692 = vpack.c.b16 %v1631, %v1630
  %v1693 = vpack.c.b16 %v1633, %v1632
  %v1694 = vpack.c.b16 %v1635, %v1634
  %v1695 = vpack.c.b16 %v1637, %v1636
  %v1696 = vpack.c.b16 %v1639, %v1638
  %v1697 = vpack.c.b16 %v1641, %v1640
  %v1698 = vpack.c.b16 %v1643, %v1642
  %v1699 = vpack.c.b16 %v1645, %v1644
  %v1700 = vpack.c.b16 %v1647, %v1646
  %v1701 = vpack.c.b16 %v1649, %v1648
  %v1702 = vpack.c.b16 %v1651, %v1650
  %v1703 = vpack.c.b16 %v1653, %v1652
  %v1704 = vpack.c.b16 %v1655, %v1654
  %v1705 = vpack.c.b16 %v1657, %v1656
  %v1706 = vpack.c.b16 %v1659, %v1658
  %v1707 = vpack.c.b16 %v1661, %v1660
  %v1708 = vpack.c.b16 %v1663, %v1662
  %v1709 = vpack.c.b16 %v1665, %v1664
  %v1710 = vpack.c.b16 %v1667, %v1666
  %v1711 = vpack.c.b16 %v1669, %v1668
  %v1712 = vpack.c.b16 %v1671, %v1670
  %v1713 = vpack.c.b16 %v1673, %v1672
  %v1714 = vpack.c.b16 %v1675, %v1674
  %v1715 = vpack.c.b16 %v1677, %v1676
  %v1716 = vpack.c.b16 %v1679, %v1678
  %v1717 = vpack.c.b16 %v1681, %v1680
  %v1718 = vpack.c.b16 %v1683, %v1682
  %v1719 = vpack.c.b16 %v1685, %v1684
  %v1720 = vpack.c.b16 %v1687, %v1686
  %v1721 = vpack.c.b16 %v1689, %v1688
  %v1730 = vunpack.c.l.b16 %v1547
  %v1731 = vunpack.c.l.b16 %v1548
  %v1732 = vunpack.c.l.b16 %v1549
  %v1733 = vunpack.c.l.b16 %v1550
  %v1734 = vunpack.c.l.b16 %v1551
  %v1735 = vunpack.c.l.b16 %v1552
  %v1736 = vunpack.c.l.b16 %v1553
  %v1737 = vunpack.c.l.b16 %v1554
  %v1738 = vpack.c.b16 %v1731, %v1730
  %v1739 = vpack.c.b16 %v1733, %v1732
  %v1740 = vpack.c.b16 %v1735, %v1734
  %v1741 = vpack.c.b16 %v1737, %v1736
  %vm1746 = vcmask 523264
  %v1748 = vsel %vm1746, %v1690, 0
  %v1751 = vsel %vm1746, %v1691, 0
  %v1754 = vsel %vm1746, %v1692, 0
  %v1757 = vsel %vm1746, %v1693, 0
  %v1760 = vsel %vm1746, %v1694, 0
  %v1763 = vsel %vm1746, %v1695, 0
  %v1766 = vsel %vm1746, %v1696, 0
  %v1769 = vsel %vm1746, %v1697, 0
  %v1772 = vsel %vm1746, %v1698, 0
  %v1775 = vsel %vm1746, %v1699, 0
  %v1778 = vsel %vm1746, %v1700, 0
  %v1781 = vsel %vm1746, %v1701, 0
  %v1784 = vsel %vm1746, %v1702, 0
  %v1787 = vsel %vm1746, %v1703, 0
  %v1790 = vsel %vm1746, %v1704, 0
  %v1793 = vsel %vm1746, %v1705, 0
  %v1796 = vsel %vm1746, %v1706, 0
  %v1799 = vsel %vm1746, %v1707, 0
  %v1802 = vsel %vm1746, %v1708, 0
  %v1805 = vsel %vm1746, %v1709, 0
  %v1808 = vsel %vm1746, %v1710, 0
  %v1811 = vsel %vm1746, %v1711, 0
  %v1814 = vsel %vm1746, %v1712, 0
  %v1817 = vsel %vm1746, %v1713, 0
  %v1820 = vsel %vm1746, %v1714, 0
  %v1823 = vsel %vm1746, %v1715, 0
  %v1826 = vsel %vm1746, %v1716, 0
  %v1829 = vsel %vm1746, %v1717, 0
  %v1832 = vsel %vm1746, %v1718, 0
  %v1835 = vsel %vm1746, %v1719, 0
  %v1838 = vsel %vm1746, %v1720, 0
  %v1841 = vsel %vm1746, %v1721, 0
  %1843 = vmatprep.subr.bf16.mxu0 0
  %1844 = vmatpush1.bf16.msra.mxu0 %v1738
  %1845 = vmatprep.subr.bf16.mxu0 0
  %1846 = vmatpush1.bf16.msra.mxu0 %v1739
  %1847 = vmatprep.subr.bf16.mxu0 0
  %1848 = vmatpush1.bf16.msra.mxu0 %v1740
  %1849 = vmatprep.subr.bf16.mxu0 0
  %1850 = vmatpush1.bf16.msra.mxu0 %v1741
  %1851 = vmatprep.subr.bf16.mxu0 0
  %1852 = vmatpush1.bf16.msra.mxu0 0
  %1853 = vmatprep.subr.bf16.mxu0 0
  %1854 = vmatpush1.bf16.msra.mxu0 0
  %1855 = vmatprep.subr.bf16.mxu0 0
  %1856 = vmatpush1.bf16.msra.mxu0 0
  %1857 = vmatprep.subr.bf16.mxu0 0
  %1858 = vmatpush1.bf16.msra.mxu0 0
  %1859 = vmatprep.subr.bf16.mxu0 0
  %1860 = vmatpush1.bf16.msra.mxu0 0
  %1861 = vmatprep.subr.bf16.mxu0 0
  %1862 = vmatpush1.bf16.msra.mxu0 0
  %1863 = vmatprep.subr.bf16.mxu0 0
  %1864 = vmatpush1.bf16.msra.mxu0 0
  %1865 = vmatprep.subr.bf16.mxu0 0
  %1866 = vmatpush1.bf16.msra.mxu0 0
  %1867 = vmatprep.subr.bf16.mxu0 0
  %1868 = vmatpush1.bf16.msra.mxu0 0
  %1869 = vmatprep.subr.bf16.mxu0 0
  %1870 = vmatpush1.bf16.msra.mxu0 0
  %1871 = vmatprep.subr.bf16.mxu0 0
  %1872 = vmatpush1.bf16.msra.mxu0 0
  %1873 = vmatprep.subr.bf16.mxu0 0
  %1874 = vmatpush1.bf16.msra.mxu0 0
  %1875 = vmatprep.mubr.bf16.mxu0 0
  %1876 = vmatmul.mubr.bf16.gmra.mrb[0].mxu0 %v1748
  %v1877 = vpop.f32.mrb[0].mxu0
  %v1878 = vadd.f32 %v1560, %v1877
  %v1879 = vpop.f32.mrb[0].mxu0
  %v1880 = vpop.f32.mrb[0].mxu0
  %v1881 = vadd.f32 %v1560, %v1880
  %v1882 = vpop.f32.mrb[0].mxu0
  %1883 = vmatprep.mubr.bf16.mxu0 0
  %1884 = vmatmul.mubr.bf16.gmra.mrb[0].mxu0 %v1751
  %v1885 = vpop.f32.mrb[0].mxu0
  %v1886 = vadd.f32 %v1560, %v1885
  %v1887 = vpop.f32.mrb[0].mxu0
  %v1888 = vpop.f32.mrb[0].mxu0
  %v1889 = vadd.f32 %v1560, %v1888
  %v1890 = vpop.f32.mrb[0].mxu0
  %1891 = vmatprep.mubr.bf16.mxu0 0
  %1892 = vmatmul.mubr.bf16.gmra.mrb[0].mxu0 %v1754
  %v1893 = vpop.f32.mrb[0].mxu0
  %v1894 = vadd.f32 %v1560, %v1893
  %v1895 = vpop.f32.mrb[0].mxu0
  %v1896 = vpop.f32.mrb[0].mxu0
  %v1897 = vadd.f32 %v1560, %v1896
  %v1898 = vpop.f32.mrb[0].mxu0
  %1899 = vmatprep.mubr.bf16.mxu0 0
  %1900 = vmatmul.mubr.bf16.gmra.mrb[0].mxu0 %v1757
  %v1901 = vpop.f32.mrb[0].mxu0
  %v1902 = vadd.f32 %v1560, %v1901
  %v1903 = vpop.f32.mrb[0].mxu0
  %v1904 = vpop.f32.mrb[0].mxu0
  %v1905 = vadd.f32 %v1560, %v1904
  %v1906 = vpop.f32.mrb[0].mxu0
  %1907 = vmatprep.mubr.bf16.mxu0 0
  %1908 = vmatmul.mubr.bf16.gmra.mrb[0].mxu0 %v1760
  %v1909 = vpop.f32.mrb[0].mxu0
  %v1910 = vadd.f32 %v1560, %v1909
  %v1911 = vpop.f32.mrb[0].mxu0
  %v1912 = vpop.f32.mrb[0].mxu0
  %v1913 = vadd.f32 %v1560, %v1912
  %v1914 = vpop.f32.mrb[0].mxu0
  %1915 = vmatprep.mubr.bf16.mxu0 0
  %1916 = vmatmul.mubr.bf16.gmra.mrb[0].mxu0 %v1763
  %v1917 = vpop.f32.mrb[0].mxu0
  %v1918 = vadd.f32 %v1560, %v1917
  %v1919 = vpop.f32.mrb[0].mxu0
  %v1920 = vpop.f32.mrb[0].mxu0
  %v1921 = vadd.f32 %v1560, %v1920
  %v1922 = vpop.f32.mrb[0].mxu0
  %1923 = vmatprep.mubr.bf16.mxu0 0
  %1924 = vmatmul.mubr.bf16.gmra.mrb[0].mxu0 %v1766
  %v1925 = vpop.f32.mrb[0].mxu0
  %v1926 = vadd.f32 %v1560, %v1925
  %v1927 = vpop.f32.mrb[0].mxu0
  %v1928 = vpop.f32.mrb[0].mxu0
  %v1929 = vadd.f32 %v1560, %v1928
  %v1930 = vpop.f32.mrb[0].mxu0
  %1931 = vmatprep.mubr.bf16.mxu0 0
  %1932 = vmatmul.mubr.bf16.gmra.mrb[0].mxu0 %v1769
  %v1933 = vpop.f32.mrb[0].mxu0
  %v1934 = vadd.f32 %v1560, %v1933
  %v1935 = vpop.f32.mrb[0].mxu0
  %v1936 = vpop.f32.mrb[0].mxu0
  %v1937 = vadd.f32 %v1560, %v1936
  %v1938 = vpop.f32.mrb[0].mxu0
  %1939 = vmatprep.mubr.bf16.mxu0 0
  %1940 = vmatmul.mubr.bf16.gmra.mrb[0].mxu0 %v1772
  %v1941 = vpop.f32.mrb[0].mxu0
  %v1942 = vadd.f32 %v1560, %v1941
  %v1943 = vpop.f32.mrb[0].mxu0
  %v1944 = vpop.f32.mrb[0].mxu0
  %v1945 = vadd.f32 %v1560, %v1944
  %v1946 = vpop.f32.mrb[0].mxu0
  %1947 = vmatprep.mubr.bf16.mxu0 0
  %1948 = vmatmul.mubr.bf16.gmra.mrb[0].mxu0 %v1775
  %v1949 = vpop.f32.mrb[0].mxu0
  %v1950 = vadd.f32 %v1560, %v1949
  %v1951 = vpop.f32.mrb[0].mxu0
  %v1952 = vpop.f32.mrb[0].mxu0
  %v1953 = vadd.f32 %v1560, %v1952
  %v1954 = vpop.f32.mrb[0].mxu0
  %1955 = vmatprep.mubr.bf16.mxu0 0
  %1956 = vmatmul.mubr.bf16.gmra.mrb[0].mxu0 %v1778
  %v1957 = vpop.f32.mrb[0].mxu0
  %v1958 = vadd.f32 %v1560, %v1957
  %v1959 = vpop.f32.mrb[0].mxu0
  %v1960 = vpop.f32.mrb[0].mxu0
  %v1961 = vadd.f32 %v1560, %v1960
  %v1962 = vpop.f32.mrb[0].mxu0
  %1963 = vmatprep.mubr.bf16.mxu0 0
  %1964 = vmatmul.mubr.bf16.gmra.mrb[0].mxu0 %v1781
  %v1965 = vpop.f32.mrb[0].mxu0
  %v1966 = vadd.f32 %v1560, %v1965
  %v1967 = vpop.f32.mrb[0].mxu0
  %v1968 = vpop.f32.mrb[0].mxu0
  %v1969 = vadd.f32 %v1560, %v1968
  %v1970 = vpop.f32.mrb[0].mxu0
  %1971 = vmatprep.mubr.bf16.mxu0 0
  %1972 = vmatmul.mubr.bf16.gmra.mrb[0].mxu0 %v1784
  %v1973 = vpop.f32.mrb[0].mxu0
  %v1974 = vadd.f32 %v1560, %v1973
  %v1975 = vpop.f32.mrb[0].mxu0
  %v1976 = vpop.f32.mrb[0].mxu0
  %v1977 = vadd.f32 %v1560, %v1976
  %v1978 = vpop.f32.mrb[0].mxu0
  %1979 = vmatprep.mubr.bf16.mxu0 0
  %1980 = vmatmul.mubr.bf16.gmra.mrb[0].mxu0 %v1787
  %v1981 = vpop.f32.mrb[0].mxu0
  %v1982 = vadd.f32 %v1560, %v1981
  %v1983 = vpop.f32.mrb[0].mxu0
  %v1984 = vpop.f32.mrb[0].mxu0
  %v1985 = vadd.f32 %v1560, %v1984
  %v1986 = vpop.f32.mrb[0].mxu0
  %1987 = vmatprep.mubr.bf16.mxu0 0
  %1988 = vmatmul.mubr.bf16.gmra.mrb[0].mxu0 %v1790
  %v1989 = vpop.f32.mrb[0].mxu0
  %v1990 = vadd.f32 %v1560, %v1989
  %v1991 = vpop.f32.mrb[0].mxu0
  %v1992 = vpop.f32.mrb[0].mxu0
  %v1993 = vadd.f32 %v1560, %v1992
  %v1994 = vpop.f32.mrb[0].mxu0
  %1995 = vmatprep.mubr.bf16.mxu0 0
  %1996 = vmatmul.mubr.bf16.gmra.mrb[0].mxu0 %v1793
  %v1997 = vpop.f32.mrb[0].mxu0
  %v1998 = vadd.f32 %v1560, %v1997
  %v1999 = vpop.f32.mrb[0].mxu0
  %v2000 = vpop.f32.mrb[0].mxu0
  %v2001 = vadd.f32 %v1560, %v2000
  %v2002 = vpop.f32.mrb[0].mxu0
  %2003 = vmatprep.mubr.bf16.mxu0 0
  %2004 = vmatmul.mubr.bf16.gmra.mrb[0].mxu0 %v1796
  %v2005 = vpop.f32.mrb[0].mxu0
  %v2006 = vadd.f32 %v1560, %v2005
  %v2007 = vpop.f32.mrb[0].mxu0
  %v2008 = vpop.f32.mrb[0].mxu0
  %v2009 = vadd.f32 %v1560, %v2008
  %v2010 = vpop.f32.mrb[0].mxu0
  %2011 = vmatprep.mubr.bf16.mxu0 0
  %2012 = vmatmul.mubr.bf16.gmra.mrb[0].mxu0 %v1799
  %v2013 = vpop.f32.mrb[0].mxu0
  %v2014 = vadd.f32 %v1560, %v2013
  %v2015 = vpop.f32.mrb[0].mxu0
  %v2016 = vpop.f32.mrb[0].mxu0
  %v2017 = vadd.f32 %v1560, %v2016
  %v2018 = vpop.f32.mrb[0].mxu0
  %2019 = vmatprep.mubr.bf16.mxu0 0
  %2020 = vmatmul.mubr.bf16.gmra.mrb[0].mxu0 %v1802
  %v2021 = vpop.f32.mrb[0].mxu0
  %v2022 = vadd.f32 %v1560, %v2021
  %v2023 = vpop.f32.mrb[0].mxu0
  %v2024 = vpop.f32.mrb[0].mxu0
  %v2025 = vadd.f32 %v1560, %v2024
  %v2026 = vpop.f32.mrb[0].mxu0
  %2027 = vmatprep.mubr.bf16.mxu0 0
  %2028 = vmatmul.mubr.bf16.gmra.mrb[0].mxu0 %v1805
  %v2029 = vpop.f32.mrb[0].mxu0
  %v2030 = vadd.f32 %v1560, %v2029
  %v2031 = vpop.f32.mrb[0].mxu0
  %v2032 = vpop.f32.mrb[0].mxu0
  %v2033 = vadd.f32 %v1560, %v2032
  %v2034 = vpop.f32.mrb[0].mxu0
  %2035 = vmatprep.mubr.bf16.mxu0 0
  %2036 = vmatmul.mubr.bf16.gmra.mrb[0].mxu0 %v1808
  %v2037 = vpop.f32.mrb[0].mxu0
  %v2038 = vadd.f32 %v1560, %v2037
  %v2039 = vpop.f32.mrb[0].mxu0
  %v2040 = vpop.f32.mrb[0].mxu0
  %v2041 = vadd.f32 %v1560, %v2040
  %v2042 = vpop.f32.mrb[0].mxu0
  %2043 = vmatprep.mubr.bf16.mxu0 0
  %2044 = vmatmul.mubr.bf16.gmra.mrb[0].mxu0 %v1811
  %v2045 = vpop.f32.mrb[0].mxu0
  %v2046 = vadd.f32 %v1560, %v2045
  %v2047 = vpop.f32.mrb[0].mxu0
  %v2048 = vpop.f32.mrb[0].mxu0
  %v2049 = vadd.f32 %v1560, %v2048
  %v2050 = vpop.f32.mrb[0].mxu0
  %2051 = vmatprep.mubr.bf16.mxu0 0
  %2052 = vmatmul.mubr.bf16.gmra.mrb[0].mxu0 %v1814
  %v2053 = vpop.f32.mrb[0].mxu0
  %v2054 = vadd.f32 %v1560, %v2053
  %v2055 = vpop.f32.mrb[0].mxu0
  %v2056 = vpop.f32.mrb[0].mxu0
  %v2057 = vadd.f32 %v1560, %v2056
  %v2058 = vpop.f32.mrb[0].mxu0
  %2059 = vmatprep.mubr.bf16.mxu0 0
  %2060 = vmatmul.mubr.bf16.gmra.mrb[0].mxu0 %v1817
  %v2061 = vpop.f32.mrb[0].mxu0
  %v2062 = vadd.f32 %v1560, %v2061
  %v2063 = vpop.f32.mrb[0].mxu0
  %v2064 = vpop.f32.mrb[0].mxu0
  %v2065 = vadd.f32 %v1560, %v2064
  %v2066 = vpop.f32.mrb[0].mxu0
  %2067 = vmatprep.mubr.bf16.mxu0 0
  %2068 = vmatmul.mubr.bf16.gmra.mrb[0].mxu0 %v1820
  %v2069 = vpop.f32.mrb[0].mxu0
  %v2070 = vadd.f32 %v1560, %v2069
  %v2071 = vpop.f32.mrb[0].mxu0
  %v2072 = vpop.f32.mrb[0].mxu0
  %v2073 = vadd.f32 %v1560, %v2072
  %v2074 = vpop.f32.mrb[0].mxu0
  %2075 = vmatprep.mubr.bf16.mxu0 0
  %2076 = vmatmul.mubr.bf16.gmra.mrb[0].mxu0 %v1823
  %v2077 = vpop.f32.mrb[0].mxu0
  %v2078 = vadd.f32 %v1560, %v2077
  %v2079 = vpop.f32.mrb[0].mxu0
  %v2080 = vpop.f32.mrb[0].mxu0
  %v2081 = vadd.f32 %v1560, %v2080
  %v2082 = vpop.f32.mrb[0].mxu0
  %2083 = vmatprep.mubr.bf16.mxu0 0
  %2084 = vmatmul.mubr.bf16.gmra.mrb[0].mxu0 %v1826
  %v2085 = vpop.f32.mrb[0].mxu0
  %v2086 = vadd.f32 %v1560, %v2085
  %v2087 = vpop.f32.mrb[0].mxu0
  %v2088 = vpop.f32.mrb[0].mxu0
  %v2089 = vadd.f32 %v1560, %v2088
  %v2090 = vpop.f32.mrb[0].mxu0
  %2091 = vmatprep.mubr.bf16.mxu0 0
  %2092 = vmatmul.mubr.bf16.gmra.mrb[0].mxu0 %v1829
  %v2093 = vpop.f32.mrb[0].mxu0
  %v2094 = vadd.f32 %v1560, %v2093
  %v2095 = vpop.f32.mrb[0].mxu0
  %v2096 = vpop.f32.mrb[0].mxu0
  %v2097 = vadd.f32 %v1560, %v2096
  %v2098 = vpop.f32.mrb[0].mxu0
  %2099 = vmatprep.mubr.bf16.mxu0 0
  %2100 = vmatmul.mubr.bf16.gmra.mrb[0].mxu0 %v1832
  %v2101 = vpop.f32.mrb[0].mxu0
  %v2102 = vadd.f32 %v1560, %v2101
  %v2103 = vpop.f32.mrb[0].mxu0
  %v2104 = vpop.f32.mrb[0].mxu0
  %v2105 = vadd.f32 %v1560, %v2104
  %v2106 = vpop.f32.mrb[0].mxu0
  %2107 = vmatprep.mubr.bf16.mxu0 0
  %2108 = vmatmul.mubr.bf16.gmra.mrb[0].mxu0 %v1835
  %v2109 = vpop.f32.mrb[0].mxu0
  %v2110 = vadd.f32 %v1560, %v2109
  %v2111 = vpop.f32.mrb[0].mxu0
  %v2112 = vpop.f32.mrb[0].mxu0
  %v2113 = vadd.f32 %v1560, %v2112
  %v2114 = vpop.f32.mrb[0].mxu0
  %2115 = vmatprep.mubr.bf16.mxu0 0
  %2116 = vmatmul.mubr.bf16.gmra.mrb[0].mxu0 %v1838
  %v2117 = vpop.f32.mrb[0].mxu0
  %v2118 = vadd.f32 %v1560, %v2117
  %v2119 = vpop.f32.mrb[0].mxu0
  %v2120 = vpop.f32.mrb[0].mxu0
  %v2121 = vadd.f32 %v1560, %v2120
  %v2122 = vpop.f32.mrb[0].mxu0
  %2123 = vmatprep.mubr.bf16.mxu0 0
  %2124 = vmatmul.mubr.bf16.gmra.mrb[0].mxu0 %v1841
  %v2125 = vpop.f32.mrb[0].mxu0
  %v2126 = vadd.f32 %v1560, %v2125
  %v2127 = vpop.f32.mrb[0].mxu0
  %v2128 = vpop.f32.mrb[0].mxu0
  %v2129 = vadd.f32 %v1560, %v2128
  %v2130 = vpop.f32.mrb[0].mxu0
  %2131 = vdwg.mxu0
  %v2132 = vmax.f32 %v1878, 0.0
  %v2133 = vmax.f32 %v1881, 0.0
  %v2134 = vmax.f32 %v1886, 0.0
  %v2135 = vmax.f32 %v1889, 0.0
  %v2136 = vmax.f32 %v1894, 0.0
  %v2137 = vmax.f32 %v1897, 0.0
  %v2138 = vmax.f32 %v1902, 0.0
  %v2139 = vmax.f32 %v1905, 0.0
  %v2140 = vmax.f32 %v1910, 0.0
  %v2141 = vmax.f32 %v1913, 0.0
  %v2142 = vmax.f32 %v1918, 0.0
  %v2143 = vmax.f32 %v1921, 0.0
  %v2144 = vmax.f32 %v1926, 0.0
  %v2145 = vmax.f32 %v1929, 0.0
  %v2146 = vmax.f32 %v1934, 0.0
  %v2147 = vmax.f32 %v1937, 0.0
  %v2148 = vmax.f32 %v1942, 0.0
  %v2149 = vmax.f32 %v1945, 0.0
  %v2150 = vmax.f32 %v1950, 0.0
  %v2151 = vmax.f32 %v1953, 0.0
  %v2152 = vmax.f32 %v1958, 0.0
  %v2153 = vmax.f32 %v1961, 0.0
  %v2154 = vmax.f32 %v1966, 0.0
  %v2155 = vmax.f32 %v1969, 0.0
  %v2156 = vmax.f32 %v1974, 0.0
  %v2157 = vmax.f32 %v1977, 0.0
  %v2158 = vmax.f32 %v1982, 0.0
  %v2159 = vmax.f32 %v1985, 0.0
  %v2160 = vmax.f32 %v1990, 0.0
  %v2161 = vmax.f32 %v1993, 0.0
  %v2162 = vmax.f32 %v1998, 0.0
  %v2163 = vmax.f32 %v2001, 0.0
  %v2164 = vmax.f32 %v2006, 0.0
  %v2165 = vmax.f32 %v2009, 0.0
  %v2166 = vmax.f32 %v2014, 0.0
  %v2167 = vmax.f32 %v2017, 0.0
  %v2168 = vmax.f32 %v2022, 0.0
  %v2169 = vmax.f32 %v2025, 0.0
  %v2170 = vmax.f32 %v2030, 0.0
  %v2171 = vmax.f32 %v2033, 0.0
  %v2172 = vmax.f32 %v2038, 0.0
  %v2173 = vmax.f32 %v2041, 0.0
  %v2174 = vmax.f32 %v2046, 0.0
  %v2175 = vmax.f32 %v2049, 0.0
  %v2176 = vmax.f32 %v2054, 0.0
  %v2177 = vmax.f32 %v2057, 0.0
  %v2178 = vmax.f32 %v2062, 0.0
  %v2179 = vmax.f32 %v2065, 0.0
  %v2180 = vmax.f32 %v2070, 0.0
  %v2181 = vmax.f32 %v2073, 0.0
  %v2182 = vmax.f32 %v2078, 0.0
  %v2183 = vmax.f32 %v2081, 0.0
  %v2184 = vmax.f32 %v2086, 0.0
  %v2185 = vmax.f32 %v2089, 0.0
  %v2186 = vmax.f32 %v2094, 0.0
  %v2187 = vmax.f32 %v2097, 0.0
  %v2188 = vmax.f32 %v2102, 0.0
  %v2189 = vmax.f32 %v2105, 0.0
  %v2190 = vmax.f32 %v2110, 0.0
  %v2191 = vmax.f32 %v2113, 0.0
  %v2192 = vmax.f32 %v2118, 0.0
  %v2193 = vmax.f32 %v2121, 0.0
  %v2194 = vmax.f32 %v2126, 0.0
  %v2195 = vmax.f32 %v2129, 0.0
  %v2196 = vadd.f32 %v1419, %v2132
  %v2197 = vadd.f32 %v1420, %v2133
  %v2198 = vadd.f32 %v1421, %v2134
  %v2199 = vadd.f32 %v1422, %v2135
  %v2200 = vadd.f32 %v1423, %v2136
  %v2201 = vadd.f32 %v1424, %v2137
  %v2202 = vadd.f32 %v1425, %v2138
  %v2203 = vadd.f32 %v1426, %v2139
  %v2204 = vadd.f32 %v1427, %v2140
  %v2205 = vadd.f32 %v1428, %v2141
  %v2206 = vadd.f32 %v1429, %v2142
  %v2207 = vadd.f32 %v1430, %v2143
  %v2208 = vadd.f32 %v1431, %v2144
  %v2209 = vadd.f32 %v1432, %v2145
  %v2210 = vadd.f32 %v1433, %v2146
  %v2211 = vadd.f32 %v1434, %v2147
  %v2212 = vadd.f32 %v1435, %v2148
  %v2213 = vadd.f32 %v1436, %v2149
  %v2214 = vadd.f32 %v1437, %v2150
  %v2215 = vadd.f32 %v1438, %v2151
  %v2216 = vadd.f32 %v1439, %v2152
  %v2217 = vadd.f32 %v1440, %v2153
  %v2218 = vadd.f32 %v1441, %v2154
  %v2219 = vadd.f32 %v1442, %v2155
  %v2220 = vadd.f32 %v1443, %v2156
  %v2221 = vadd.f32 %v1444, %v2157
  %v2222 = vadd.f32 %v1445, %v2158
  %v2223 = vadd.f32 %v1446, %v2159
  %v2224 = vadd.f32 %v1447, %v2160
  %v2225 = vadd.f32 %v1448, %v2161
  %v2226 = vadd.f32 %v1449, %v2162
  %v2227 = vadd.f32 %v1450, %v2163
  %v2228 = vadd.f32 %v1451, %v2164
  %v2229 = vadd.f32 %v1452, %v2165
  %v2230 = vadd.f32 %v1453, %v2166
  %v2231 = vadd.f32 %v1454, %v2167
  %v2232 = vadd.f32 %v1455, %v2168
  %v2233 = vadd.f32 %v1456, %v2169
  %v2234 = vadd.f32 %v1457, %v2170
  %v2235 = vadd.f32 %v1458, %v2171
  %v2236 = vadd.f32 %v1459, %v2172
  %v2237 = vadd.f32 %v1460, %v2173
  %v2238 = vadd.f32 %v1461, %v2174
  %v2239 = vadd.f32 %v1462, %v2175
  %v2240 = vadd.f32 %v1463, %v2176
  %v2241 = vadd.f32 %v1464, %v2177
  %v2242 = vadd.f32 %v1465, %v2178
  %v2243 = vadd.f32 %v1466, %v2179
  %v2244 = vadd.f32 %v1467, %v2180
  %v2245 = vadd.f32 %v1468, %v2181
  %v2246 = vadd.f32 %v1469, %v2182
  %v2247 = vadd.f32 %v1470, %v2183
  %v2248 = vadd.f32 %v1471, %v2184
  %v2249 = vadd.f32 %v1472, %v2185
  %v2250 = vadd.f32 %v1473, %v2186
  %v2251 = vadd.f32 %v1474, %v2187
  %v2252 = vadd.f32 %v1475, %v2188
  %v2253 = vadd.f32 %v1476, %v2189
  %v2254 = vadd.f32 %v1477, %v2190
  %v2255 = vadd.f32 %v1478, %v2191
  %v2256 = vadd.f32 %v1479, %v2192
  %v2257 = vadd.f32 %v1480, %v2193
  %v2258 = vadd.f32 %v1481, %v2194
  %v2259 = vadd.f32 %v1482, %v2195
  %v2260 = vpack.c.bf16 %v2197, %v2196
  %v2261 = vpack.c.bf16 %v2199, %v2198
  %v2262 = vpack.c.bf16 %v2201, %v2200
  %v2263 = vpack.c.bf16 %v2203, %v2202
  %v2264 = vpack.c.bf16 %v2205, %v2204
  %v2265 = vpack.c.bf16 %v2207, %v2206
  %v2266 = vpack.c.bf16 %v2209, %v2208
  %v2267 = vpack.c.bf16 %v2211, %v2210
  %v2268 = vpack.c.bf16 %v2213, %v2212
  %v2269 = vpack.c.bf16 %v2215, %v2214
  %v2270 = vpack.c.bf16 %v2217, %v2216
  %v2271 = vpack.c.bf16 %v2219, %v2218
  %v2272 = vpack.c.bf16 %v2221, %v2220
  %v2273 = vpack.c.bf16 %v2223, %v2222
  %v2274 = vpack.c.bf16 %v2225, %v2224
  %v2275 = vpack.c.bf16 %v2227, %v2226
  %v2276 = vpack.c.bf16 %v2229, %v2228
  %v2277 = vpack.c.bf16 %v2231, %v2230
  %v2278 = vpack.c.bf16 %v2233, %v2232
  %v2279 = vpack.c.bf16 %v2235, %v2234
  %v2280 = vpack.c.bf16 %v2237, %v2236
  %v2281 = vpack.c.bf16 %v2239, %v2238
  %v2282 = vpack.c.bf16 %v2241, %v2240
  %v2283 = vpack.c.bf16 %v2243, %v2242
  %v2284 = vpack.c.bf16 %v2245, %v2244
  %v2285 = vpack.c.bf16 %v2247, %v2246
  %v2286 = vpack.c.bf16 %v2249, %v2248
  %v2287 = vpack.c.bf16 %v2251, %v2250
  %v2288 = vpack.c.bf16 %v2253, %v2252
  %v2289 = vpack.c.bf16 %v2255, %v2254
  %v2290 = vpack.c.bf16 %v2257, %v2256
  %v2291 = vpack.c.bf16 %v2259, %v2258
  %v2324 = vunpack.c.l.b16 %v2260
  %v2325 = vunpack.c.h.b16 %v2260
  %v2326 = vunpack.c.l.b16 %v2261
  %v2327 = vunpack.c.h.b16 %v2261
  %v2328 = vunpack.c.l.b16 %v2262
  %v2329 = vunpack.c.h.b16 %v2262
  %v2330 = vunpack.c.l.b16 %v2263
  %v2331 = vunpack.c.h.b16 %v2263
  %v2332 = vunpack.c.l.b16 %v2264
  %v2333 = vunpack.c.h.b16 %v2264
  %v2334 = vunpack.c.l.b16 %v2265
  %v2335 = vunpack.c.h.b16 %v2265
  %v2336 = vunpack.c.l.b16 %v2266
  %v2337 = vunpack.c.h.b16 %v2266
  %v2338 = vunpack.c.l.b16 %v2267
  %v2339 = vunpack.c.h.b16 %v2267
  %v2340 = vunpack.c.l.b16 %v2268
  %v2341 = vunpack.c.h.b16 %v2268
  %v2342 = vunpack.c.l.b16 %v2269
  %v2343 = vunpack.c.h.b16 %v2269
  %v2344 = vunpack.c.l.b16 %v2270
  %v2345 = vunpack.c.h.b16 %v2270
  %v2346 = vunpack.c.l.b16 %v2271
  %v2347 = vunpack.c.h.b16 %v2271
  %v2348 = vunpack.c.l.b16 %v2272
  %v2349 = vunpack.c.h.b16 %v2272
  %v2350 = vunpack.c.l.b16 %v2273
  %v2351 = vunpack.c.h.b16 %v2273
  %v2352 = vunpack.c.l.b16 %v2274
  %v2353 = vunpack.c.h.b16 %v2274
  %v2354 = vunpack.c.l.b16 %v2275
  %v2355 = vunpack.c.h.b16 %v2275
  %v2356 = vunpack.c.l.b16 %v2276
  %v2357 = vunpack.c.h.b16 %v2276
  %v2358 = vunpack.c.l.b16 %v2277
  %v2359 = vunpack.c.h.b16 %v2277
  %v2360 = vunpack.c.l.b16 %v2278
  %v2361 = vunpack.c.h.b16 %v2278
  %v2362 = vunpack.c.l.b16 %v2279
  %v2363 = vunpack.c.h.b16 %v2279
  %v2364 = vunpack.c.l.b16 %v2280
  %v2365 = vunpack.c.h.b16 %v2280
  %v2366 = vunpack.c.l.b16 %v2281
  %v2367 = vunpack.c.h.b16 %v2281
  %v2368 = vunpack.c.l.b16 %v2282
  %v2369 = vunpack.c.h.b16 %v2282
  %v2370 = vunpack.c.l.b16 %v2283
  %v2371 = vunpack.c.h.b16 %v2283
  %v2372 = vunpack.c.l.b16 %v2284
  %v2373 = vunpack.c.h.b16 %v2284
  %v2374 = vunpack.c.l.b16 %v2285
  %v2375 = vunpack.c.h.b16 %v2285
  %v2376 = vunpack.c.l.b16 %v2286
  %v2377 = vunpack.c.h.b16 %v2286
  %v2378 = vunpack.c.l.b16 %v2287
  %v2379 = vunpack.c.h.b16 %v2287
  %v2380 = vunpack.c.l.b16 %v2288
  %v2381 = vunpack.c.h.b16 %v2288
  %v2382 = vunpack.c.l.b16 %v2289
  %v2383 = vunpack.c.h.b16 %v2289
  %v2384 = vunpack.c.l.b16 %v2290
  %v2385 = vunpack.c.h.b16 %v2290
  %v2386 = vunpack.c.l.b16 %v2291
  %v2387 = vunpack.c.h.b16 %v2291
  %v2388 = vpack.c.b16 %v2324, %v2324
  %v2389 = vpack.c.b16 %v2325, %v2325
  %v2390 = vpack.c.b16 %v2326, %v2326
  %v2391 = vpack.c.b16 %v2327, %v2327
  %v2392 = vpack.c.b16 %v2328, %v2328
  %v2393 = vpack.c.b16 %v2329, %v2329
  %v2394 = vpack.c.b16 %v2330, %v2330
  %v2395 = vpack.c.b16 %v2331, %v2331
  %v2396 = vpack.c.b16 %v2332, %v2332
  %v2397 = vpack.c.b16 %v2333, %v2333
  %v2398 = vpack.c.b16 %v2334, %v2334
  %v2399 = vpack.c.b16 %v2335, %v2335
  %v2400 = vpack.c.b16 %v2336, %v2336
  %v2401 = vpack.c.b16 %v2337, %v2337
  %v2402 = vpack.c.b16 %v2338, %v2338
  %v2403 = vpack.c.b16 %v2339, %v2339
  %v2404 = vpack.c.b16 %v2340, %v2340
  %v2405 = vpack.c.b16 %v2341, %v2341
  %v2406 = vpack.c.b16 %v2342, %v2342
  %v2407 = vpack.c.b16 %v2343, %v2343
  %v2408 = vpack.c.b16 %v2344, %v2344
  %v2409 = vpack.c.b16 %v2345, %v2345
  %v2410 = vpack.c.b16 %v2346, %v2346
  %v2411 = vpack.c.b16 %v2347, %v2347
  %v2412 = vpack.c.b16 %v2348, %v2348
  %v2413 = vpack.c.b16 %v2349, %v2349
  %v2414 = vpack.c.b16 %v2350, %v2350
  %v2415 = vpack.c.b16 %v2351, %v2351
  %v2416 = vpack.c.b16 %v2352, %v2352
  %v2417 = vpack.c.b16 %v2353, %v2353
  %v2418 = vpack.c.b16 %v2354, %v2354
  %v2419 = vpack.c.b16 %v2355, %v2355
  %v2420 = vpack.c.b16 %v2356, %v2356
  %v2421 = vpack.c.b16 %v2357, %v2357
  %v2422 = vpack.c.b16 %v2358, %v2358
  %v2423 = vpack.c.b16 %v2359, %v2359
  %v2424 = vpack.c.b16 %v2360, %v2360
  %v2425 = vpack.c.b16 %v2361, %v2361
  %v2426 = vpack.c.b16 %v2362, %v2362
  %v2427 = vpack.c.b16 %v2363, %v2363
  %v2428 = vpack.c.b16 %v2364, %v2364
  %v2429 = vpack.c.b16 %v2365, %v2365
  %v2430 = vpack.c.b16 %v2366, %v2366
  %v2431 = vpack.c.b16 %v2367, %v2367
  %v2432 = vpack.c.b16 %v2368, %v2368
  %v2433 = vpack.c.b16 %v2369, %v2369
  %v2434 = vpack.c.b16 %v2370, %v2370
  %v2435 = vpack.c.b16 %v2371, %v2371
  %v2436 = vpack.c.b16 %v2372, %v2372
  %v2437 = vpack.c.b16 %v2373, %v2373
  %v2438 = vpack.c.b16 %v2374, %v2374
  %v2439 = vpack.c.b16 %v2375, %v2375
  %v2440 = vpack.c.b16 %v2376, %v2376
  %v2441 = vpack.c.b16 %v2377, %v2377
  %v2442 = vpack.c.b16 %v2378, %v2378
  %v2443 = vpack.c.b16 %v2379, %v2379
  %v2444 = vpack.c.b16 %v2380, %v2380
  %v2445 = vpack.c.b16 %v2381, %v2381
  %v2446 = vpack.c.b16 %v2382, %v2382
  %v2447 = vpack.c.b16 %v2383, %v2383
  %v2448 = vpack.c.b16 %v2384, %v2384
  %v2449 = vpack.c.b16 %v2385, %v2385
  %v2450 = vpack.c.b16 %v2386, %v2386
  %v2451 = vpack.c.b16 %v2387, %v2387
  %vm2516 = vcmask 257024
  %2517 = vst.msk [vmem:[%s9] sm:$0xf] %vm2516, %v2388
  %2518 = vst.msk [vmem:[%s9 + $0x4] sm:$0xf] %vm2516, %v2389
  %2519 = vst.msk [vmem:[%s9 + $0x8] sm:$0xf] %vm2516, %v2390
  %2520 = vst.msk [vmem:[%s9 + $0xc] sm:$0xf] %vm2516, %v2391
  %2521 = vst.msk [vmem:[%s9 + $0x10] sm:$0xf] %vm2516, %v2392
  %2522 = vst.msk [vmem:[%s9 + $0x14] sm:$0xf] %vm2516, %v2393
  %2523 = vst.msk [vmem:[%s9 + $0x18] sm:$0xf] %vm2516, %v2394
  %2524 = vst.msk [vmem:[%s9 + $0x1c] sm:$0xf] %vm2516, %v2395
  %2525 = vst.msk [vmem:[%s9 + $0x20] sm:$0xf] %vm2516, %v2396
  %2526 = vst.msk [vmem:[%s9 + $0x24] sm:$0xf] %vm2516, %v2397
  %2527 = vst.msk [vmem:[%s9 + $0x28] sm:$0xf] %vm2516, %v2398
  %2528 = vst.msk [vmem:[%s9 + $0x2c] sm:$0xf] %vm2516, %v2399
  %2529 = vst.msk [vmem:[%s9 + $0x30] sm:$0xf] %vm2516, %v2400
  %2530 = vst.msk [vmem:[%s9 + $0x34] sm:$0xf] %vm2516, %v2401
  %2531 = vst.msk [vmem:[%s9 + $0x38] sm:$0xf] %vm2516, %v2402
  %2532 = vst.msk [vmem:[%s9 + $0x3c] sm:$0xf] %vm2516, %v2403
  %2533 = vst.msk [vmem:[%s9 + $0x40] sm:$0xf] %vm2516, %v2404
  %2534 = vst.msk [vmem:[%s9 + $0x44] sm:$0xf] %vm2516, %v2405
  %2535 = vst.msk [vmem:[%s9 + $0x48] sm:$0xf] %vm2516, %v2406
  %2536 = vst.msk [vmem:[%s9 + $0x4c] sm:$0xf] %vm2516, %v2407
  %2537 = vst.msk [vmem:[%s9 + $0x50] sm:$0xf] %vm2516, %v2408
  %2538 = vst.msk [vmem:[%s9 + $0x54] sm:$0xf] %vm2516, %v2409
  %2539 = vst.msk [vmem:[%s9 + $0x58] sm:$0xf] %vm2516, %v2410
  %2540 = vst.msk [vmem:[%s9 + $0x5c] sm:$0xf] %vm2516, %v2411
  %2541 = vst.msk [vmem:[%s9 + $0x60] sm:$0xf] %vm2516, %v2412
  %2542 = vst.msk [vmem:[%s9 + $0x64] sm:$0xf] %vm2516, %v2413
  %2543 = vst.msk [vmem:[%s9 + $0x68] sm:$0xf] %vm2516, %v2414
  %2544 = vst.msk [vmem:[%s9 + $0x6c] sm:$0xf] %vm2516, %v2415
  %2545 = vst.msk [vmem:[%s9 + $0x70] sm:$0xf] %vm2516, %v2416
  %2546 = vst.msk [vmem:[%s9 + $0x74] sm:$0xf] %vm2516, %v2417
  %2547 = vst.msk [vmem:[%s9 + $0x78] sm:$0xf] %vm2516, %v2418
  %2548 = vst.msk [vmem:[%s9 + $0x7c] sm:$0xf] %vm2516, %v2419
  %2549 = vst.msk [vmem:[%s9 + $0x80] sm:$0xf] %vm2516, %v2420
  %2550 = vst.msk [vmem:[%s9 + $0x84] sm:$0xf] %vm2516, %v2421
  %2551 = vst.msk [vmem:[%s9 + $0x88] sm:$0xf] %vm2516, %v2422
  %2552 = vst.msk [vmem:[%s9 + $0x8c] sm:$0xf] %vm2516, %v2423
  %2553 = vst.msk [vmem:[%s9 + $0x90] sm:$0xf] %vm2516, %v2424
  %2554 = vst.msk [vmem:[%s9 + $0x94] sm:$0xf] %vm2516, %v2425
  %2555 = vst.msk [vmem:[%s9 + $0x98] sm:$0xf] %vm2516, %v2426
  %2556 = vst.msk [vmem:[%s9 + $0x9c] sm:$0xf] %vm2516, %v2427
  %2557 = vst.msk [vmem:[%s9 + $0xa0] sm:$0xf] %vm2516, %v2428
  %2558 = vst.msk [vmem:[%s9 + $0xa4] sm:$0xf] %vm2516, %v2429
  %2559 = vst.msk [vmem:[%s9 + $0xa8] sm:$0xf] %vm2516, %v2430
  %2560 = vst.msk [vmem:[%s9 + $0xac] sm:$0xf] %vm2516, %v2431
  %2561 = vst.msk [vmem:[%s9 + $0xb0] sm:$0xf] %vm2516, %v2432
  %2562 = vst.msk [vmem:[%s9 + $0xb4] sm:$0xf] %vm2516, %v2433
  %2563 = vst.msk [vmem:[%s9 + $0xb8] sm:$0xf] %vm2516, %v2434
  %2564 = vst.msk [vmem:[%s9 + $0xbc] sm:$0xf] %vm2516, %v2435
  %2565 = vst.msk [vmem:[%s9 + $0xc0] sm:$0xf] %vm2516, %v2436
  %2566 = vst.msk [vmem:[%s9 + $0xc4] sm:$0xf] %vm2516, %v2437
  %2567 = vst.msk [vmem:[%s9 + $0xc8] sm:$0xf] %vm2516, %v2438
  %2568 = vst.msk [vmem:[%s9 + $0xcc] sm:$0xf] %vm2516, %v2439
  %2569 = vst.msk [vmem:[%s9 + $0xd0] sm:$0xf] %vm2516, %v2440
  %2570 = vst.msk [vmem:[%s9 + $0xd4] sm:$0xf] %vm2516, %v2441
  %2571 = vst.msk [vmem:[%s9 + $0xd8] sm:$0xf] %vm2516, %v2442
  %2572 = vst.msk [vmem:[%s9 + $0xdc] sm:$0xf] %vm2516, %v2443
  %2573 = vst.msk [vmem:[%s9 + $0xe0] sm:$0xf] %vm2516, %v2444
  %2574 = vst.msk [vmem:[%s9 + $0xe4] sm:$0xf] %vm2516, %v2445
  %2575 = vst.msk [vmem:[%s9 + $0xe8] sm:$0xf] %vm2516, %v2446
  %2576 = vst.msk [vmem:[%s9 + $0xec] sm:$0xf] %vm2516, %v2447
  %2577 = vst.msk [vmem:[%s9 + $0xf0] sm:$0xf] %vm2516, %v2448
  %2578 = vst.msk [vmem:[%s9 + $0xf4] sm:$0xf] %vm2516, %v2449
  %2579 = vst.msk [vmem:[%s9 + $0xf8] sm:$0xf] %vm2516, %v2450
  %2580 = vst.msk [vmem:[%s9 + $0xfc] sm:$0xf] %vm2516, %v2451
  // Predicated region
  $region38: #{protomgnet_forward.5} parent=0 // pred_check
    _
  $region39: #{protomgnet_forward.5} parent=0 // pred_check_branch
    %2582 = sbr.rel (0) target = $region41
  $region40: #{protomgnet_forward.5} parent=0 // pred_region
    _
  $region41: #{protomgnet_forward.5} parent=0 // pred_fallthru
    _
  // Predicated region
  $region42: #{protomgnet_forward.5} parent=0 // pred_check
    _
  $region43: #{protomgnet_forward.5} parent=0 // pred_check_branch
    %2584 = sbr.rel (0) target = $region45
  $region44: #{protomgnet_forward.5} parent=0 // pred_region
    _
  $region45: #{protomgnet_forward.5} parent=0 // pred_fallthru
    _

// kernel: protomgnet_forward.4
$region0: #{protomgnet_forward.4}
  #allocation0 [shape = 'u32[]', space=smem, size = 0x4, offset = 0x4, fixed_abs, tag = 'smem constant byte address 0x4 - core index']
  #allocation1 [shape = 'u32[144,128]{1,0:T(1,128)}', space=vmem, size = 0x12000, scoped, tag = 'internal scratch']
  %s0 = inlined_call_operand.vmem [shape: bf16[128,64], index: 0, kind: input, shape index: {}]
  %s1 = inlined_call_operand.vmem [shape: bf16[128,32], index: 1, kind: input, shape index: {}]
  %s2 = inlined_call_operand.vmem [shape: f32[128,32], index: 2, kind: input, shape index: {}]
  %s3 = inlined_call_operand.vmem [shape: bf16[64,32], index: 3, kind: input, shape index: {}]
  %s4 = inlined_call_operand.vmem [shape: f32[1,32], index: 4, kind: input, shape index: {}]
  %s5 = inlined_call_operand.vmem [shape: bf16[32,32], index: 5, kind: input, shape index: {}]
  %s6 = inlined_call_operand.vmem [shape: bf16[32,32], index: 6, kind: input, shape index: {}]
  %s7 = inlined_call_operand.vmem [shape: bf16[32,4], index: 7, kind: input, shape index: {}]
  %s8 = inlined_call_operand.vmem [shape: f32[1,4], index: 8, kind: input, shape index: {}]
  %s9 = inlined_call_operand.vmem [shape: f32[4,64], index: 9, kind: input, shape index: {}]
  %s10 = inlined_call_operand.vmem [shape: bf16[64,64], index: 10, kind: input, shape index: {}]
  %s11 = inlined_call_operand.vmem [shape: f32[1,64], index: 11, kind: input, shape index: {}]
  %s12 = inlined_call_operand.vmem [shape: bf16[128,32], index: 12, kind: input, shape index: {}]
  %s13 = inlined_call_operand.vmem [shape: f32[1,32], index: 13, kind: input, shape index: {}]
  %s14 = inlined_call_operand.vmem [shape: bf16[128,32], index: 14, kind: output, shape index: {}]
  %s15 = sld [smem:[#allocation0]]
  $region66: #{protomgnet_forward.4} parent=0
    _
  %s17 = ssub.s32 1, %s15
  %s18 = scalar_select 0, %s17, %s15
  // Predicated region
  $region2: #{protomgnet_forward.4} parent=0 // pred_check
    _
  $region3: #{protomgnet_forward.4} parent=0 // pred_check_branch
    %20 = sbr.rel (0) target = $region5
  $region4: #{protomgnet_forward.4} parent=0 // pred_region
    _
  $region5: #{protomgnet_forward.4} parent=0 // pred_fallthru
    _
  // Predicated region
  $region6: #{protomgnet_forward.4} parent=0 // pred_check
    _
  $region7: #{protomgnet_forward.4} parent=0 // pred_check_branch
    %22 = sbr.rel (0) target = $region9
  $region8: #{protomgnet_forward.4} parent=0 // pred_region
    _
  $region9: #{protomgnet_forward.4} parent=0 // pred_fallthru
    _
  // Predicated region
  $region10: #{protomgnet_forward.4} parent=0 // pred_check
    _
  $region11: #{protomgnet_forward.4} parent=0 // pred_check_branch
    %24 = sbr.rel (0) target = $region13
  $region12: #{protomgnet_forward.4} parent=0 // pred_region
    _
  $region13: #{protomgnet_forward.4} parent=0 // pred_fallthru
    _
  // Predicated region
  $region14: #{protomgnet_forward.4} parent=0 // pred_check
    _
  $region15: #{protomgnet_forward.4} parent=0 // pred_check_branch
    %26 = sbr.rel (0) target = $region17
  $region16: #{protomgnet_forward.4} parent=0 // pred_region
    _
  $region17: #{protomgnet_forward.4} parent=0 // pred_fallthru
    _
  // Predicated region
  $region18: #{protomgnet_forward.4} parent=0 // pred_check
    _
  $region19: #{protomgnet_forward.4} parent=0 // pred_check_branch
    %28 = sbr.rel (0) target = $region21
  $region20: #{protomgnet_forward.4} parent=0 // pred_region
    _
  $region21: #{protomgnet_forward.4} parent=0 // pred_fallthru
    _
  // Predicated region
  $region22: #{protomgnet_forward.4} parent=0 // pred_check
    _
  $region23: #{protomgnet_forward.4} parent=0 // pred_check_branch
    %30 = sbr.rel (0) target = $region25
  $region24: #{protomgnet_forward.4} parent=0 // pred_region
    _
  $region25: #{protomgnet_forward.4} parent=0 // pred_fallthru
    _
  // Predicated region
  $region26: #{protomgnet_forward.4} parent=0 // pred_check
    _
  $region27: #{protomgnet_forward.4} parent=0 // pred_check_branch
    %32 = sbr.rel (0) target = $region29
  $region28: #{protomgnet_forward.4} parent=0 // pred_region
    _
  $region29: #{protomgnet_forward.4} parent=0 // pred_fallthru
    _
  // Predicated region
  $region30: #{protomgnet_forward.4} parent=0 // pred_check
    _
  $region31: #{protomgnet_forward.4} parent=0 // pred_check_branch
    %34 = sbr.rel (0) target = $region33
  $region32: #{protomgnet_forward.4} parent=0 // pred_region
    _
  $region33: #{protomgnet_forward.4} parent=0 // pred_fallthru
    _
  // Predicated region
  $region34: #{protomgnet_forward.4} parent=0 // pred_check
    _
  $region35: #{protomgnet_forward.4} parent=0 // pred_check_branch
    %36 = sbr.rel (0) target = $region37
  $region36: #{protomgnet_forward.4} parent=0 // pred_region
    _
  $region37: #{protomgnet_forward.4} parent=0 // pred_fallthru
    _
  // Predicated region
  $region38: #{protomgnet_forward.4} parent=0 // pred_check
    _
  $region39: #{protomgnet_forward.4} parent=0 // pred_check_branch
    %38 = sbr.rel (0) target = $region41
  $region40: #{protomgnet_forward.4} parent=0 // pred_region
    _
  $region41: #{protomgnet_forward.4} parent=0 // pred_fallthru
    _
  // Predicated region
  $region42: #{protomgnet_forward.4} parent=0 // pred_check
    _
  $region43: #{protomgnet_forward.4} parent=0 // pred_check_branch
    %40 = sbr.rel (0) target = $region45
  $region44: #{protomgnet_forward.4} parent=0 // pred_region
    _
  $region45: #{protomgnet_forward.4} parent=0 // pred_fallthru
    _
  // Predicated region
  $region46: #{protomgnet_forward.4} parent=0 // pred_check
    _
  $region47: #{protomgnet_forward.4} parent=0 // pred_check_branch
    %42 = sbr.rel (0) target = $region49
  $region48: #{protomgnet_forward.4} parent=0 // pred_region
    _
  $region49: #{protomgnet_forward.4} parent=0 // pred_fallthru
    _
  // Predicated region
  $region50: #{protomgnet_forward.4} parent=0 // pred_check
    _
  $region51: #{protomgnet_forward.4} parent=0 // pred_check_branch
    %44 = sbr.rel (0) target = $region53
  $region52: #{protomgnet_forward.4} parent=0 // pred_region
    _
  $region53: #{protomgnet_forward.4} parent=0 // pred_fallthru
    _
  // Predicated region
  $region54: #{protomgnet_forward.4} parent=0 // pred_check
    _
  $region55: #{protomgnet_forward.4} parent=0 // pred_check_branch
    %46 = sbr.rel (0) target = $region57
  $region56: #{protomgnet_forward.4} parent=0 // pred_region
    _
  $region57: #{protomgnet_forward.4} parent=0 // pred_fallthru
    _
  %v48 = vld [vmem:[%s0] sm:$0xf]
  %v49 = vld [vmem:[%s0 + $0x4] sm:$0xf]
  %v50 = vld [vmem:[%s0 + $0x8] sm:$0xf]
  %v51 = vld [vmem:[%s0 + $0xc] sm:$0xf]
  %v52 = vld [vmem:[%s0 + $0x10] sm:$0xf]
  %v53 = vld [vmem:[%s0 + $0x14] sm:$0xf]
  %v54 = vld [vmem:[%s0 + $0x18] sm:$0xf]
  %v55 = vld [vmem:[%s0 + $0x1c] sm:$0xf]
  %v56 = vld [vmem:[%s0 + $0x20] sm:$0xf]
  %v57 = vld [vmem:[%s0 + $0x24] sm:$0xf]
  %v58 = vld [vmem:[%s0 + $0x28] sm:$0xf]
  %v59 = vld [vmem:[%s0 + $0x2c] sm:$0xf]
  %v60 = vld [vmem:[%s0 + $0x30] sm:$0xf]
  %v61 = vld [vmem:[%s0 + $0x34] sm:$0xf]
  %v62 = vld [vmem:[%s0 + $0x38] sm:$0xf]
  %v63 = vld [vmem:[%s0 + $0x3c] sm:$0xf]
  %v64 = vld [vmem:[%s3] sm:$0xf]
  %v65 = vld [vmem:[%s3 + $0x4] sm:$0xf]
  %v66 = vld [vmem:[%s3 + $0x8] sm:$0xf]
  %v67 = vld [vmem:[%s3 + $0xc] sm:$0xf]
  %v68 = vld [vmem:[%s3 + $0x10] sm:$0xf]
  %v69 = vld [vmem:[%s3 + $0x14] sm:$0xf]
  %v70 = vld [vmem:[%s3 + $0x18] sm:$0xf]
  %v71 = vld [vmem:[%s3 + $0x1c] sm:$0xf]
  %v72 = vld [vmem:[%s4] sm:$0x1]
  %v74 = vlaneseq
  %v75 = vshrl.u32 %v74, 7
  %v76 = vsub.s32 0, %v75
  %v77 = vrot.slane %v72, %v76
  %v95 = vunpack.c.l.b16 %v48
  %v96 = vunpack.c.l.b16 %v49
  %v97 = vunpack.c.l.b16 %v50
  %v98 = vunpack.c.l.b16 %v51
  %v99 = vunpack.c.l.b16 %v52
  %v100 = vunpack.c.l.b16 %v53
  %v101 = vunpack.c.l.b16 %v54
  %v102 = vunpack.c.l.b16 %v55
  %v103 = vunpack.c.l.b16 %v56
  %v104 = vunpack.c.l.b16 %v57
  %v105 = vunpack.c.l.b16 %v58
  %v106 = vunpack.c.l.b16 %v59
  %v107 = vunpack.c.l.b16 %v60
  %v108 = vunpack.c.l.b16 %v61
  %v109 = vunpack.c.l.b16 %v62
  %v110 = vunpack.c.l.b16 %v63
  %v111 = vpack.c.b16 %v96, %v95
  %v112 = vpack.c.b16 %v98, %v97
  %v113 = vpack.c.b16 %v100, %v99
  %v114 = vpack.c.b16 %v102, %v101
  %v115 = vpack.c.b16 %v104, %v103
  %v116 = vpack.c.b16 %v106, %v105
  %v117 = vpack.c.b16 %v108, %v107
  %v118 = vpack.c.b16 %v110, %v109
  %v127 = vunpack.c.l.b16 %v64
  %v128 = vunpack.c.l.b16 %v65
  %v129 = vunpack.c.l.b16 %v66
  %v130 = vunpack.c.l.b16 %v67
  %v131 = vunpack.c.l.b16 %v68
  %v132 = vunpack.c.l.b16 %v69
  %v133 = vunpack.c.l.b16 %v70
  %v134 = vunpack.c.l.b16 %v71
  %v135 = vpack.c.b16 %v128, %v127
  %v136 = vpack.c.b16 %v130, %v129
  %v137 = vpack.c.b16 %v132, %v131
  %v138 = vpack.c.b16 %v134, %v133
  %vm143 = vcmask 523264
  %v145 = vsel %vm143, %v111, 0
  %v148 = vsel %vm143, %v112, 0
  %v151 = vsel %vm143, %v113, 0
  %v154 = vsel %vm143, %v114, 0
  %v157 = vsel %vm143, %v115, 0
  %v160 = vsel %vm143, %v116, 0
  %v163 = vsel %vm143, %v117, 0
  %v166 = vsel %vm143, %v118, 0
  %168 = vmatprep.subr.bf16.mxu0 0
  %169 = vmatpush1.bf16.msra.mxu0 %v135
  %170 = vmatprep.subr.bf16.mxu0 0
  %171 = vmatpush1.bf16.msra.mxu0 %v136
  %172 = vmatprep.subr.bf16.mxu0 0
  %173 = vmatpush1.bf16.msra.mxu0 %v137
  %174 = vmatprep.subr.bf16.mxu0 0
  %175 = vmatpush1.bf16.msra.mxu0 %v138
  %176 = vmatprep.subr.bf16.mxu0 0
  %177 = vmatpush1.bf16.msra.mxu0 0
  %178 = vmatprep.subr.bf16.mxu0 0
  %179 = vmatpush1.bf16.msra.mxu0 0
  %180 = vmatprep.subr.bf16.mxu0 0
  %181 = vmatpush1.bf16.msra.mxu0 0
  %182 = vmatprep.subr.bf16.mxu0 0
  %183 = vmatpush1.bf16.msra.mxu0 0
  %184 = vmatprep.subr.bf16.mxu0 0
  %185 = vmatpush1.bf16.msra.mxu0 0
  %186 = vmatprep.subr.bf16.mxu0 0
  %187 = vmatpush1.bf16.msra.mxu0 0
  %188 = vmatprep.subr.bf16.mxu0 0
  %189 = vmatpush1.bf16.msra.mxu0 0
  %190 = vmatprep.subr.bf16.mxu0 0
  %191 = vmatpush1.bf16.msra.mxu0 0
  %192 = vmatprep.subr.bf16.mxu0 0
  %193 = vmatpush1.bf16.msra.mxu0 0
  %194 = vmatprep.subr.bf16.mxu0 0
  %195 = vmatpush1.bf16.msra.mxu0 0
  %196 = vmatprep.subr.bf16.mxu0 0
  %197 = vmatpush1.bf16.msra.mxu0 0
  %198 = vmatprep.subr.bf16.mxu0 0
  %199 = vmatpush1.bf16.msra.mxu0 0
  %200 = vmatprep.mubr.bf16.mxu0 0
  %201 = vmatmul.mubr.bf16.gmra.mrb[0].mxu0 %v145
  %v202 = vpop.f32.mrb[0].mxu0
  %v203 = vadd.f32 %v77, %v202
  %v204 = vpop.f32.mrb[0].mxu0
  %v205 = vpop.f32.mrb[0].mxu0
  %v206 = vadd.f32 %v77, %v205
  %v207 = vpop.f32.mrb[0].mxu0
  %208 = vmatprep.mubr.bf16.mxu0 0
  %209 = vmatmul.mubr.bf16.gmra.mrb[0].mxu0 %v148
  %v210 = vpop.f32.mrb[0].mxu0
  %v211 = vadd.f32 %v77, %v210
  %v212 = vpop.f32.mrb[0].mxu0
  %v213 = vpop.f32.mrb[0].mxu0
  %v214 = vadd.f32 %v77, %v213
  %v215 = vpop.f32.mrb[0].mxu0
  %216 = vmatprep.mubr.bf16.mxu0 0
  %217 = vmatmul.mubr.bf16.gmra.mrb[0].mxu0 %v151
  %v218 = vpop.f32.mrb[0].mxu0
  %v219 = vadd.f32 %v77, %v218
  %v220 = vpop.f32.mrb[0].mxu0
  %v221 = vpop.f32.mrb[0].mxu0
  %v222 = vadd.f32 %v77, %v221
  %v223 = vpop.f32.mrb[0].mxu0
  %224 = vmatprep.mubr.bf16.mxu0 0
  %225 = vmatmul.mubr.bf16.gmra.mrb[0].mxu0 %v154
  %v226 = vpop.f32.mrb[0].mxu0
  %v227 = vadd.f32 %v77, %v226
  %v228 = vpop.f32.mrb[0].mxu0
  %v229 = vpop.f32.mrb[0].mxu0
  %v230 = vadd.f32 %v77, %v229
  %v231 = vpop.f32.mrb[0].mxu0
  %232 = vmatprep.mubr.bf16.mxu0 0
  %233 = vmatmul.mubr.bf16.gmra.mrb[0].mxu0 %v157
  %v234 = vpop.f32.mrb[0].mxu0
  %v235 = vadd.f32 %v77, %v234
  %v236 = vpop.f32.mrb[0].mxu0
  %v237 = vpop.f32.mrb[0].mxu0
  %v238 = vadd.f32 %v77, %v237
  %v239 = vpop.f32.mrb[0].mxu0
  %240 = vmatprep.mubr.bf16.mxu0 0
  %241 = vmatmul.mubr.bf16.gmra.mrb[0].mxu0 %v160
  %v242 = vpop.f32.mrb[0].mxu0
  %v243 = vadd.f32 %v77, %v242
  %v244 = vpop.f32.mrb[0].mxu0
  %v245 = vpop.f32.mrb[0].mxu0
  %v246 = vadd.f32 %v77, %v245
  %v247 = vpop.f32.mrb[0].mxu0
  %248 = vmatprep.mubr.bf16.mxu0 0
  %249 = vmatmul.mubr.bf16.gmra.mrb[0].mxu0 %v163
  %v250 = vpop.f32.mrb[0].mxu0
  %v251 = vadd.f32 %v77, %v250
  %v252 = vpop.f32.mrb[0].mxu0
  %v253 = vpop.f32.mrb[0].mxu0
  %v254 = vadd.f32 %v77, %v253
  %v255 = vpop.f32.mrb[0].mxu0
  %256 = vmatprep.mubr.bf16.mxu0 0
  %257 = vmatmul.mubr.bf16.gmra.mrb[0].mxu0 %v166
  %v258 = vpop.f32.mrb[0].mxu0
  %v259 = vadd.f32 %v77, %v258
  %v260 = vpop.f32.mrb[0].mxu0
  %v261 = vpop.f32.mrb[0].mxu0
  %v262 = vadd.f32 %v77, %v261
  %v263 = vpop.f32.mrb[0].mxu0
  %264 = vdwg.mxu0
  %v265 = vmax.f32 %v203, 0.0
  %v266 = vmax.f32 %v206, 0.0
  %v267 = vmax.f32 %v211, 0.0
  %v268 = vmax.f32 %v214, 0.0
  %v269 = vmax.f32 %v219, 0.0
  %v270 = vmax.f32 %v222, 0.0
  %v271 = vmax.f32 %v227, 0.0
  %v272 = vmax.f32 %v230, 0.0
  %v273 = vmax.f32 %v235, 0.0
  %v274 = vmax.f32 %v238, 0.0
  %v275 = vmax.f32 %v243, 0.0
  %v276 = vmax.f32 %v246, 0.0
  %v277 = vmax.f32 %v251, 0.0
  %v278 = vmax.f32 %v254, 0.0
  %v279 = vmax.f32 %v259, 0.0
  %v280 = vmax.f32 %v262, 0.0
  %v281 = vpack.c.bf16 %v266, %v265
  %v282 = vpack.c.bf16 %v268, %v267
  %v283 = vpack.c.bf16 %v270, %v269
  %v284 = vpack.c.bf16 %v272, %v271
  %v285 = vpack.c.bf16 %v274, %v273
  %v286 = vpack.c.bf16 %v276, %v275
  %v287 = vpack.c.bf16 %v278, %v277
  %v288 = vpack.c.bf16 %v280, %v279
  %v289 = vld [vmem:[%s5] sm:$0xf]
  %v290 = vld [vmem:[%s5 + $0x4] sm:$0xf]
  %v291 = vld [vmem:[%s5 + $0x8] sm:$0xf]
  %v292 = vld [vmem:[%s5 + $0xc] sm:$0xf]
  %v293 = vld [vmem:[%s1] sm:$0xf]
  %v294 = vld [vmem:[%s1 + $0x4] sm:$0xf]
  %v295 = vld [vmem:[%s1 + $0x8] sm:$0xf]
  %v296 = vld [vmem:[%s1 + $0xc] sm:$0xf]
  %v297 = vld [vmem:[%s1 + $0x10] sm:$0xf]
  %v298 = vld [vmem:[%s1 + $0x14] sm:$0xf]
  %v299 = vld [vmem:[%s1 + $0x18] sm:$0xf]
  %v300 = vld [vmem:[%s1 + $0x1c] sm:$0xf]
  %v301 = vld [vmem:[%s1 + $0x20] sm:$0xf]
  %v302 = vld [vmem:[%s1 + $0x24] sm:$0xf]
  %v303 = vld [vmem:[%s1 + $0x28] sm:$0xf]
  %v304 = vld [vmem:[%s1 + $0x2c] sm:$0xf]
  %v305 = vld [vmem:[%s1 + $0x30] sm:$0xf]
  %v306 = vld [vmem:[%s1 + $0x34] sm:$0xf]
  %v307 = vld [vmem:[%s1 + $0x38] sm:$0xf]
  %v308 = vld [vmem:[%s1 + $0x3c] sm:$0xf]
  %v309 = vld [vmem:[%s6] sm:$0xf]
  %v310 = vld [vmem:[%s6 + $0x4] sm:$0xf]
  %v311 = vld [vmem:[%s6 + $0x8] sm:$0xf]
  %v312 = vld [vmem:[%s6 + $0xc] sm:$0xf]
  %v329 = vunpack.c.l.b16 %v293
  %v330 = vunpack.c.l.b16 %v294
  %v331 = vunpack.c.l.b16 %v295
  %v332 = vunpack.c.l.b16 %v296
  %v333 = vunpack.c.l.b16 %v297
  %v334 = vunpack.c.l.b16 %v298
  %v335 = vunpack.c.l.b16 %v299
  %v336 = vunpack.c.l.b16 %v300
  %v337 = vunpack.c.l.b16 %v301
  %v338 = vunpack.c.l.b16 %v302
  %v339 = vunpack.c.l.b16 %v303
  %v340 = vunpack.c.l.b16 %v304
  %v341 = vunpack.c.l.b16 %v305
  %v342 = vunpack.c.l.b16 %v306
  %v343 = vunpack.c.l.b16 %v307
  %v344 = vunpack.c.l.b16 %v308
  %v345 = vpack.c.b16 %v330, %v329
  %v346 = vpack.c.b16 %v332, %v331
  %v347 = vpack.c.b16 %v334, %v333
  %v348 = vpack.c.b16 %v336, %v335
  %v349 = vpack.c.b16 %v338, %v337
  %v350 = vpack.c.b16 %v340, %v339
  %v351 = vpack.c.b16 %v342, %v341
  %v352 = vpack.c.b16 %v344, %v343
  %v357 = vunpack.c.l.b16 %v309
  %v358 = vunpack.c.l.b16 %v310
  %v359 = vunpack.c.l.b16 %v311
  %v360 = vunpack.c.l.b16 %v312
  %v361 = vpack.c.b16 %v358, %v357
  %v362 = vpack.c.b16 %v360, %v359
  %vm365 = vcmask 261120
  %v367 = vsel %vm365, %v345, 0
  %v370 = vsel %vm365, %v346, 0
  %v373 = vsel %vm365, %v347, 0
  %v376 = vsel %vm365, %v348, 0
  %v379 = vsel %vm365, %v349, 0
  %v382 = vsel %vm365, %v350, 0
  %v385 = vsel %vm365, %v351, 0
  %v388 = vsel %vm365, %v352, 0
  %390 = vmatprep.subr.bf16.mxu0 0
  %391 = vmatpush1.bf16.msra.mxu0 %v361
  %392 = vmatprep.subr.bf16.mxu0 0
  %393 = vmatpush1.bf16.msra.mxu0 %v362
  %394 = vmatprep.subr.bf16.mxu0 0
  %395 = vmatpush1.bf16.msra.mxu0 0
  %396 = vmatprep.subr.bf16.mxu0 0
  %397 = vmatpush1.bf16.msra.mxu0 0
  %398 = vmatprep.subr.bf16.mxu0 0
  %399 = vmatpush1.bf16.msra.mxu0 0
  %400 = vmatprep.subr.bf16.mxu0 0
  %401 = vmatpush1.bf16.msra.mxu0 0
  %402 = vmatprep.subr.bf16.mxu0 0
  %403 = vmatpush1.bf16.msra.mxu0 0
  %404 = vmatprep.subr.bf16.mxu0 0
  %405 = vmatpush1.bf16.msra.mxu0 0
  %406 = vmatprep.subr.bf16.mxu0 0
  %407 = vmatpush1.bf16.msra.mxu0 0
  %408 = vmatprep.subr.bf16.mxu0 0
  %409 = vmatpush1.bf16.msra.mxu0 0
  %410 = vmatprep.subr.bf16.mxu0 0
  %411 = vmatpush1.bf16.msra.mxu0 0
  %412 = vmatprep.subr.bf16.mxu0 0
  %413 = vmatpush1.bf16.msra.mxu0 0
  %414 = vmatprep.subr.bf16.mxu0 0
  %415 = vmatpush1.bf16.msra.mxu0 0
  %416 = vmatprep.subr.bf16.mxu0 0
  %417 = vmatpush1.bf16.msra.mxu0 0
  %418 = vmatprep.subr.bf16.mxu0 0
  %419 = vmatpush1.bf16.msra.mxu0 0
  %420 = vmatprep.subr.bf16.mxu0 0
  %421 = vmatpush1.bf16.msra.mxu0 0
  %422 = vmatprep.mubr.bf16.mxu0 0
  %423 = vmatmul.mubr.bf16.gmra.mrb[0].mxu0 %v367
  %v424 = vpop.f32.mrb[0].mxu0
  %v425 = vadd.f32 0.0, %v424
  %v426 = vpop.f32.mrb[0].mxu0
  %v427 = vpop.f32.mrb[0].mxu0
  %v428 = vadd.f32 0.0, %v427
  %v429 = vpop.f32.mrb[0].mxu0
  %430 = vmatprep.mubr.bf16.mxu0 0
  %431 = vmatmul.mubr.bf16.gmra.mrb[0].mxu0 %v370
  %v432 = vpop.f32.mrb[0].mxu0
  %v433 = vadd.f32 0.0, %v432
  %v434 = vpop.f32.mrb[0].mxu0
  %v435 = vpop.f32.mrb[0].mxu0
  %v436 = vadd.f32 0.0, %v435
  %v437 = vpop.f32.mrb[0].mxu0
  %438 = vmatprep.mubr.bf16.mxu0 0
  %439 = vmatmul.mubr.bf16.gmra.mrb[0].mxu0 %v373
  %v440 = vpop.f32.mrb[0].mxu0
  %v441 = vadd.f32 0.0, %v440
  %v442 = vpop.f32.mrb[0].mxu0
  %v443 = vpop.f32.mrb[0].mxu0
  %v444 = vadd.f32 0.0, %v443
  %v445 = vpop.f32.mrb[0].mxu0
  %446 = vmatprep.mubr.bf16.mxu0 0
  %447 = vmatmul.mubr.bf16.gmra.mrb[0].mxu0 %v376
  %v448 = vpop.f32.mrb[0].mxu0
  %v449 = vadd.f32 0.0, %v448
  %v450 = vpop.f32.mrb[0].mxu0
  %v451 = vpop.f32.mrb[0].mxu0
  %v452 = vadd.f32 0.0, %v451
  %v453 = vpop.f32.mrb[0].mxu0
  %454 = vmatprep.mubr.bf16.mxu0 0
  %455 = vmatmul.mubr.bf16.gmra.mrb[0].mxu0 %v379
  %v456 = vpop.f32.mrb[0].mxu0
  %v457 = vadd.f32 0.0, %v456
  %v458 = vpop.f32.mrb[0].mxu0
  %v459 = vpop.f32.mrb[0].mxu0
  %v460 = vadd.f32 0.0, %v459
  %v461 = vpop.f32.mrb[0].mxu0
  %462 = vmatprep.mubr.bf16.mxu0 0
  %463 = vmatmul.mubr.bf16.gmra.mrb[0].mxu0 %v382
  %v464 = vpop.f32.mrb[0].mxu0
  %v465 = vadd.f32 0.0, %v464
  %v466 = vpop.f32.mrb[0].mxu0
  %v467 = vpop.f32.mrb[0].mxu0
  %v468 = vadd.f32 0.0, %v467
  %v469 = vpop.f32.mrb[0].mxu0
  %470 = vmatprep.mubr.bf16.mxu0 0
  %471 = vmatmul.mubr.bf16.gmra.mrb[0].mxu0 %v385
  %v472 = vpop.f32.mrb[0].mxu0
  %v473 = vadd.f32 0.0, %v472
  %v474 = vpop.f32.mrb[0].mxu0
  %v475 = vpop.f32.mrb[0].mxu0
  %v476 = vadd.f32 0.0, %v475
  %v477 = vpop.f32.mrb[0].mxu0
  %478 = vmatprep.mubr.bf16.mxu0 0
  %479 = vmatmul.mubr.bf16.gmra.mrb[0].mxu0 %v388
  %v480 = vpop.f32.mrb[0].mxu0
  %v481 = vadd.f32 0.0, %v480
  %v482 = vpop.f32.mrb[0].mxu0
  %v483 = vpop.f32.mrb[0].mxu0
  %v484 = vadd.f32 0.0, %v483
  %v485 = vpop.f32.mrb[0].mxu0
  %486 = vdwg.mxu0
  %v491 = vunpack.c.l.b16 %v289
  %v492 = vunpack.c.l.b16 %v290
  %v493 = vunpack.c.l.b16 %v291
  %v494 = vunpack.c.l.b16 %v292
  %v495 = vpack.c.b16 %v492, %v491
  %v496 = vpack.c.b16 %v494, %v493
  %v500 = vsel %vm365, %v281, 0
  %v503 = vsel %vm365, %v282, 0
  %v506 = vsel %vm365, %v283, 0
  %v509 = vsel %vm365, %v284, 0
  %v512 = vsel %vm365, %v285, 0
  %v515 = vsel %vm365, %v286, 0
  %v518 = vsel %vm365, %v287, 0
  %v521 = vsel %vm365, %v288, 0
  %523 = vmatprep.subr.bf16.mxu0 0
  %524 = vmatpush1.bf16.msra.mxu0 %v495
  %525 = vmatprep.subr.bf16.mxu0 0
  %526 = vmatpush1.bf16.msra.mxu0 %v496
  %527 = vmatprep.subr.bf16.mxu0 0
  %528 = vmatpush1.bf16.msra.mxu0 0
  %529 = vmatprep.subr.bf16.mxu0 0
  %530 = vmatpush1.bf16.msra.mxu0 0
  %531 = vmatprep.subr.bf16.mxu0 0
  %532 = vmatpush1.bf16.msra.mxu0 0
  %533 = vmatprep.subr.bf16.mxu0 0
  %534 = vmatpush1.bf16.msra.mxu0 0
  %535 = vmatprep.subr.bf16.mxu0 0
  %536 = vmatpush1.bf16.msra.mxu0 0
  %537 = vmatprep.subr.bf16.mxu0 0
  %538 = vmatpush1.bf16.msra.mxu0 0
  %539 = vmatprep.subr.bf16.mxu0 0
  %540 = vmatpush1.bf16.msra.mxu0 0
  %541 = vmatprep.subr.bf16.mxu0 0
  %542 = vmatpush1.bf16.msra.mxu0 0
  %543 = vmatprep.subr.bf16.mxu0 0
  %544 = vmatpush1.bf16.msra.mxu0 0
  %545 = vmatprep.subr.bf16.mxu0 0
  %546 = vmatpush1.bf16.msra.mxu0 0
  %547 = vmatprep.subr.bf16.mxu0 0
  %548 = vmatpush1.bf16.msra.mxu0 0
  %549 = vmatprep.subr.bf16.mxu0 0
  %550 = vmatpush1.bf16.msra.mxu0 0
  %551 = vmatprep.subr.bf16.mxu0 0
  %552 = vmatpush1.bf16.msra.mxu0 0
  %553 = vmatprep.subr.bf16.mxu0 0
  %554 = vmatpush1.bf16.msra.mxu0 0
  %555 = vmatprep.mubr.bf16.mxu0 0
  %556 = vmatmul.mubr.bf16.gmra.mrb[0].mxu0 %v500
  %v557 = vpop.f32.mrb[0].mxu0
  %v558 = vadd.f32 %v425, %v557
  %v559 = vpop.f32.mrb[0].mxu0
  %v560 = vpop.f32.mrb[0].mxu0
  %v561 = vadd.f32 %v428, %v560
  %v562 = vpop.f32.mrb[0].mxu0
  %563 = vmatprep.mubr.bf16.mxu0 0
  %564 = vmatmul.mubr.bf16.gmra.mrb[0].mxu0 %v503
  %v565 = vpop.f32.mrb[0].mxu0
  %v566 = vadd.f32 %v433, %v565
  %v567 = vpop.f32.mrb[0].mxu0
  %v568 = vpop.f32.mrb[0].mxu0
  %v569 = vadd.f32 %v436, %v568
  %v570 = vpop.f32.mrb[0].mxu0
  %571 = vmatprep.mubr.bf16.mxu0 0
  %572 = vmatmul.mubr.bf16.gmra.mrb[0].mxu0 %v506
  %v573 = vpop.f32.mrb[0].mxu0
  %v574 = vadd.f32 %v441, %v573
  %v575 = vpop.f32.mrb[0].mxu0
  %v576 = vpop.f32.mrb[0].mxu0
  %v577 = vadd.f32 %v444, %v576
  %v578 = vpop.f32.mrb[0].mxu0
  %579 = vmatprep.mubr.bf16.mxu0 0
  %580 = vmatmul.mubr.bf16.gmra.mrb[0].mxu0 %v509
  %v581 = vpop.f32.mrb[0].mxu0
  %v582 = vadd.f32 %v449, %v581
  %v583 = vpop.f32.mrb[0].mxu0
  %v584 = vpop.f32.mrb[0].mxu0
  %v585 = vadd.f32 %v452, %v584
  %v586 = vpop.f32.mrb[0].mxu0
  %587 = vmatprep.mubr.bf16.mxu0 0
  %588 = vmatmul.mubr.bf16.gmra.mrb[0].mxu0 %v512
  %v589 = vpop.f32.mrb[0].mxu0
  %v590 = vadd.f32 %v457, %v589
  %v591 = vpop.f32.mrb[0].mxu0
  %v592 = vpop.f32.mrb[0].mxu0
  %v593 = vadd.f32 %v460, %v592
  %v594 = vpop.f32.mrb[0].mxu0
  %595 = vmatprep.mubr.bf16.mxu0 0
  %596 = vmatmul.mubr.bf16.gmra.mrb[0].mxu0 %v515
  %v597 = vpop.f32.mrb[0].mxu0
  %v598 = vadd.f32 %v465, %v597
  %v599 = vpop.f32.mrb[0].mxu0
  %v600 = vpop.f32.mrb[0].mxu0
  %v601 = vadd.f32 %v468, %v600
  %v602 = vpop.f32.mrb[0].mxu0
  %603 = vmatprep.mubr.bf16.mxu0 0
  %604 = vmatmul.mubr.bf16.gmra.mrb[0].mxu0 %v518
  %v605 = vpop.f32.mrb[0].mxu0
  %v606 = vadd.f32 %v473, %v605
  %v607 = vpop.f32.mrb[0].mxu0
  %v608 = vpop.f32.mrb[0].mxu0
  %v609 = vadd.f32 %v476, %v608
  %v610 = vpop.f32.mrb[0].mxu0
  %611 = vmatprep.mubr.bf16.mxu0 0
  %612 = vmatmul.mubr.bf16.gmra.mrb[0].mxu0 %v521
  %v613 = vpop.f32.mrb[0].mxu0
  %v614 = vadd.f32 %v481, %v613
  %v615 = vpop.f32.mrb[0].mxu0
  %v616 = vpop.f32.mrb[0].mxu0
  %v617 = vadd.f32 %v484, %v616
  %v618 = vpop.f32.mrb[0].mxu0
  %619 = vdwg.mxu0
  %v620 = vld [vmem:[%s2] sm:$0xff]
  %v621 = vld [vmem:[%s2 + $0x8] sm:$0xff]
  %v622 = vld [vmem:[%s2 + $0x10] sm:$0xff]
  %v623 = vld [vmem:[%s2 + $0x18] sm:$0xff]
  %v624 = vld [vmem:[%s2 + $0x20] sm:$0xff]
  %v625 = vld [vmem:[%s2 + $0x28] sm:$0xff]
  %v626 = vld [vmem:[%s2 + $0x30] sm:$0xff]
  %v627 = vld [vmem:[%s2 + $0x38] sm:$0xff]
  %v628 = vld [vmem:[%s2 + $0x40] sm:$0xff]
  %v629 = vld [vmem:[%s2 + $0x48] sm:$0xff]
  %v630 = vld [vmem:[%s2 + $0x50] sm:$0xff]
  %v631 = vld [vmem:[%s2 + $0x58] sm:$0xff]
  %v632 = vld [vmem:[%s2 + $0x60] sm:$0xff]
  %v633 = vld [vmem:[%s2 + $0x68] sm:$0xff]
  %v634 = vld [vmem:[%s2 + $0x70] sm:$0xff]
  %v635 = vld [vmem:[%s2 + $0x78] sm:$0xff]
  %v636 = vadd.f32 %v558, %v620
  %v637 = vadd.f32 %v561, %v621
  %v638 = vadd.f32 %v566, %v622
  %v639 = vadd.f32 %v569, %v623
  %v640 = vadd.f32 %v574, %v624
  %v641 = vadd.f32 %v577, %v625
  %v642 = vadd.f32 %v582, %v626
  %v643 = vadd.f32 %v585, %v627
  %v644 = vadd.f32 %v590, %v628
  %v645 = vadd.f32 %v593, %v629
  %v646 = vadd.f32 %v598, %v630
  %v647 = vadd.f32 %v601, %v631
  %v648 = vadd.f32 %v606, %v632
  %v649 = vadd.f32 %v609, %v633
  %v650 = vadd.f32 %v614, %v634
  %v651 = vadd.f32 %v617, %v635
  %v652 = vmax.f32 %v636, 0.0
  %v653 = vmax.f32 %v637, 0.0
  %v654 = vmax.f32 %v638, 0.0
  %v655 = vmax.f32 %v639, 0.0
  %v656 = vmax.f32 %v640, 0.0
  %v657 = vmax.f32 %v641, 0.0
  %v658 = vmax.f32 %v642, 0.0
  %v659 = vmax.f32 %v643, 0.0
  %v660 = vmax.f32 %v644, 0.0
  %v661 = vmax.f32 %v645, 0.0
  %v662 = vmax.f32 %v646, 0.0
  %v663 = vmax.f32 %v647, 0.0
  %v664 = vmax.f32 %v648, 0.0
  %v665 = vmax.f32 %v649, 0.0
  %v666 = vmax.f32 %v650, 0.0
  %v667 = vmax.f32 %v651, 0.0
  %v668 = vpack.c.bf16 %v653, %v652
  %v669 = vpack.c.bf16 %v655, %v654
  %v670 = vpack.c.bf16 %v657, %v656
  %v671 = vpack.c.bf16 %v659, %v658
  %v672 = vpack.c.bf16 %v661, %v660
  %v673 = vpack.c.bf16 %v663, %v662
  %v674 = vpack.c.bf16 %v665, %v664
  %v675 = vpack.c.bf16 %v667, %v666
  %v676 = vld [vmem:[%s7] sm:$0xf]
  %v677 = vld [vmem:[%s7 + $0x4] sm:$0xf]
  %v678 = vld [vmem:[%s7 + $0x8] sm:$0xf]
  %v679 = vld [vmem:[%s7 + $0xc] sm:$0xf]
  %v680 = vld [vmem:[%s8] sm:$0x1]
  %v682 = vlaneseq
  %v683 = vshrl.u32 %v682, 7
  %v684 = vsub.s32 0, %v683
  %v685 = vrot.slane %v680, %v684
  %v691 = vunpack.c.l.b16 %v676
  %v692 = vunpack.c.l.b16 %v677
  %v693 = vunpack.c.l.b16 %v678
  %v694 = vunpack.c.l.b16 %v679
  %v695 = vpack.c.b16 %v692, %v691
  %v696 = vpack.c.b16 %v694, %v693
  %v700 = vsel %vm365, %v668, 0
  %v703 = vsel %vm365, %v669, 0
  %v706 = vsel %vm365, %v670, 0
  %v709 = vsel %vm365, %v671, 0
  %v712 = vsel %vm365, %v672, 0
  %v715 = vsel %vm365, %v673, 0
  %v718 = vsel %vm365, %v674, 0
  %v721 = vsel %vm365, %v675, 0
  %723 = vmatprep.subr.bf16.mxu0 0
  %724 = vmatpush1.bf16.msra.mxu0 %v695
  %725 = vmatprep.subr.bf16.mxu0 0
  %726 = vmatpush1.bf16.msra.mxu0 %v696
  %727 = vmatprep.subr.bf16.mxu0 0
  %728 = vmatpush1.bf16.msra.mxu0 0
  %729 = vmatprep.subr.bf16.mxu0 0
  %730 = vmatpush1.bf16.msra.mxu0 0
  %731 = vmatprep.subr.bf16.mxu0 0
  %732 = vmatpush1.bf16.msra.mxu0 0
  %733 = vmatprep.subr.bf16.mxu0 0
  %734 = vmatpush1.bf16.msra.mxu0 0
  %735 = vmatprep.subr.bf16.mxu0 0
  %736 = vmatpush1.bf16.msra.mxu0 0
  %737 = vmatprep.subr.bf16.mxu0 0
  %738 = vmatpush1.bf16.msra.mxu0 0
  %739 = vmatprep.subr.bf16.mxu0 0
  %740 = vmatpush1.bf16.msra.mxu0 0
  %741 = vmatprep.subr.bf16.mxu0 0
  %742 = vmatpush1.bf16.msra.mxu0 0
  %743 = vmatprep.subr.bf16.mxu0 0
  %744 = vmatpush1.bf16.msra.mxu0 0
  %745 = vmatprep.subr.bf16.mxu0 0
  %746 = vmatpush1.bf16.msra.mxu0 0
  %747 = vmatprep.subr.bf16.mxu0 0
  %748 = vmatpush1.bf16.msra.mxu0 0
  %749 = vmatprep.subr.bf16.mxu0 0
  %750 = vmatpush1.bf16.msra.mxu0 0
  %751 = vmatprep.subr.bf16.mxu0 0
  %752 = vmatpush1.bf16.msra.mxu0 0
  %753 = vmatprep.subr.bf16.mxu0 0
  %754 = vmatpush1.bf16.msra.mxu0 0
  %755 = vmatprep.mubr.bf16.mxu0 0
  %756 = vmatmul.mubr.bf16.gmra.mrb[0].mxu0 %v700
  %v757 = vpop.f32.mrb[0].mxu0
  %v758 = vadd.f32 %v685, %v757
  %v759 = vpop.f32.mrb[0].mxu0
  %v760 = vpop.f32.mrb[0].mxu0
  %v761 = vadd.f32 %v685, %v760
  %v762 = vpop.f32.mrb[0].mxu0
  %763 = vmatprep.mubr.bf16.mxu0 0
  %764 = vmatmul.mubr.bf16.gmra.mrb[0].mxu0 %v703
  %v765 = vpop.f32.mrb[0].mxu0
  %v766 = vadd.f32 %v685, %v765
  %v767 = vpop.f32.mrb[0].mxu0
  %v768 = vpop.f32.mrb[0].mxu0
  %v769 = vadd.f32 %v685, %v768
  %v770 = vpop.f32.mrb[0].mxu0
  %771 = vmatprep.mubr.bf16.mxu0 0
  %772 = vmatmul.mubr.bf16.gmra.mrb[0].mxu0 %v706
  %v773 = vpop.f32.mrb[0].mxu0
  %v774 = vadd.f32 %v685, %v773
  %v775 = vpop.f32.mrb[0].mxu0
  %v776 = vpop.f32.mrb[0].mxu0
  %v777 = vadd.f32 %v685, %v776
  %v778 = vpop.f32.mrb[0].mxu0
  %779 = vmatprep.mubr.bf16.mxu0 0
  %780 = vmatmul.mubr.bf16.gmra.mrb[0].mxu0 %v709
  %v781 = vpop.f32.mrb[0].mxu0
  %v782 = vadd.f32 %v685, %v781
  %v783 = vpop.f32.mrb[0].mxu0
  %v784 = vpop.f32.mrb[0].mxu0
  %v785 = vadd.f32 %v685, %v784
  %v786 = vpop.f32.mrb[0].mxu0
  %787 = vmatprep.mubr.bf16.mxu0 0
  %788 = vmatmul.mubr.bf16.gmra.mrb[0].mxu0 %v712
  %v789 = vpop.f32.mrb[0].mxu0
  %v790 = vadd.f32 %v685, %v789
  %v791 = vpop.f32.mrb[0].mxu0
  %v792 = vpop.f32.mrb[0].mxu0
  %v793 = vadd.f32 %v685, %v792
  %v794 = vpop.f32.mrb[0].mxu0
  %795 = vmatprep.mubr.bf16.mxu0 0
  %796 = vmatmul.mubr.bf16.gmra.mrb[0].mxu0 %v715
  %v797 = vpop.f32.mrb[0].mxu0
  %v798 = vadd.f32 %v685, %v797
  %v799 = vpop.f32.mrb[0].mxu0
  %v800 = vpop.f32.mrb[0].mxu0
  %v801 = vadd.f32 %v685, %v800
  %v802 = vpop.f32.mrb[0].mxu0
  %803 = vmatprep.mubr.bf16.mxu0 0
  %804 = vmatmul.mubr.bf16.gmra.mrb[0].mxu0 %v718
  %v805 = vpop.f32.mrb[0].mxu0
  %v806 = vadd.f32 %v685, %v805
  %v807 = vpop.f32.mrb[0].mxu0
  %v808 = vpop.f32.mrb[0].mxu0
  %v809 = vadd.f32 %v685, %v808
  %v810 = vpop.f32.mrb[0].mxu0
  %811 = vmatprep.mubr.bf16.mxu0 0
  %812 = vmatmul.mubr.bf16.gmra.mrb[0].mxu0 %v721
  %v813 = vpop.f32.mrb[0].mxu0
  %v814 = vadd.f32 %v685, %v813
  %v815 = vpop.f32.mrb[0].mxu0
  %v816 = vpop.f32.mrb[0].mxu0
  %v817 = vadd.f32 %v685, %v816
  %v818 = vpop.f32.mrb[0].mxu0
  %819 = vdwg.mxu0
  %v820 = vld [vmem:[%s10] sm:$0xf]
  %v821 = vld [vmem:[%s10 + $0x4] sm:$0xf]
  %v822 = vld [vmem:[%s10 + $0x8] sm:$0xf]
  %v823 = vld [vmem:[%s10 + $0xc] sm:$0xf]
  %v824 = vld [vmem:[%s10 + $0x10] sm:$0xf]
  %v825 = vld [vmem:[%s10 + $0x14] sm:$0xf]
  %v826 = vld [vmem:[%s10 + $0x18] sm:$0xf]
  %v827 = vld [vmem:[%s10 + $0x1c] sm:$0xf]
  %v828 = vld [vmem:[%s11] sm:$0x1]
  %v830 = vlaneseq
  %v831 = vshrl.u32 %v830, 7
  %v832 = vsub.s32 0, %v831
  %v833 = vrot.slane %v828, %v832
  %v843 = vunpack.c.l.b16 %v820
  %v844 = vunpack.c.l.b16 %v821
  %v845 = vunpack.c.l.b16 %v822
  %v846 = vunpack.c.l.b16 %v823
  %v847 = vunpack.c.l.b16 %v824
  %v848 = vunpack.c.l.b16 %v825
  %v849 = vunpack.c.l.b16 %v826
  %v850 = vunpack.c.l.b16 %v827
  %v851 = vpack.c.b16 %v844, %v843
  %v852 = vpack.c.b16 %v846, %v845
  %v853 = vpack.c.b16 %v848, %v847
  %v854 = vpack.c.b16 %v850, %v849
  %859 = vmatprep.subr.bf16.mxu0 0
  %860 = vmatpush1.bf16.msra.mxu0 %v851
  %861 = vmatprep.subr.bf16.mxu0 0
  %862 = vmatpush1.bf16.msra.mxu0 %v852
  %863 = vmatprep.subr.bf16.mxu0 0
  %864 = vmatpush1.bf16.msra.mxu0 %v853
  %865 = vmatprep.subr.bf16.mxu0 0
  %866 = vmatpush1.bf16.msra.mxu0 %v854
  %867 = vmatprep.subr.bf16.mxu0 0
  %868 = vmatpush1.bf16.msra.mxu0 0
  %869 = vmatprep.subr.bf16.mxu0 0
  %870 = vmatpush1.bf16.msra.mxu0 0
  %871 = vmatprep.subr.bf16.mxu0 0
  %872 = vmatpush1.bf16.msra.mxu0 0
  %873 = vmatprep.subr.bf16.mxu0 0
  %874 = vmatpush1.bf16.msra.mxu0 0
  %875 = vmatprep.subr.bf16.mxu0 0
  %876 = vmatpush1.bf16.msra.mxu0 0
  %877 = vmatprep.subr.bf16.mxu0 0
  %878 = vmatpush1.bf16.msra.mxu0 0
  %879 = vmatprep.subr.bf16.mxu0 0
  %880 = vmatpush1.bf16.msra.mxu0 0
  %881 = vmatprep.subr.bf16.mxu0 0
  %882 = vmatpush1.bf16.msra.mxu0 0
  %883 = vmatprep.subr.bf16.mxu0 0
  %884 = vmatpush1.bf16.msra.mxu0 0
  %885 = vmatprep.subr.bf16.mxu0 0
  %886 = vmatpush1.bf16.msra.mxu0 0
  %887 = vmatprep.subr.bf16.mxu0 0
  %888 = vmatpush1.bf16.msra.mxu0 0
  %889 = vmatprep.subr.bf16.mxu0 0
  %890 = vmatpush1.bf16.msra.mxu0 0
  %891 = vmatprep.mubr.bf16.mxu0 0
  %892 = vmatmul.mubr.bf16.gmra.mrb[0].mxu0 %v145
  %v893 = vpop.f32.mrb[0].mxu0
  %v894 = vadd.f32 %v833, %v893
  %v895 = vpop.f32.mrb[0].mxu0
  %v896 = vpop.f32.mrb[0].mxu0
  %v897 = vadd.f32 %v833, %v896
  %v898 = vpop.f32.mrb[0].mxu0
  %899 = vmatprep.mubr.bf16.mxu0 0
  %900 = vmatmul.mubr.bf16.gmra.mrb[0].mxu0 %v148
  %v901 = vpop.f32.mrb[0].mxu0
  %v902 = vadd.f32 %v833, %v901
  %v903 = vpop.f32.mrb[0].mxu0
  %v904 = vpop.f32.mrb[0].mxu0
  %v905 = vadd.f32 %v833, %v904
  %v906 = vpop.f32.mrb[0].mxu0
  %907 = vmatprep.mubr.bf16.mxu0 0
  %908 = vmatmul.mubr.bf16.gmra.mrb[0].mxu0 %v151
  %v909 = vpop.f32.mrb[0].mxu0
  %v910 = vadd.f32 %v833, %v909
  %v911 = vpop.f32.mrb[0].mxu0
  %v912 = vpop.f32.mrb[0].mxu0
  %v913 = vadd.f32 %v833, %v912
  %v914 = vpop.f32.mrb[0].mxu0
  %915 = vmatprep.mubr.bf16.mxu0 0
  %916 = vmatmul.mubr.bf16.gmra.mrb[0].mxu0 %v154
  %v917 = vpop.f32.mrb[0].mxu0
  %v918 = vadd.f32 %v833, %v917
  %v919 = vpop.f32.mrb[0].mxu0
  %v920 = vpop.f32.mrb[0].mxu0
  %v921 = vadd.f32 %v833, %v920
  %v922 = vpop.f32.mrb[0].mxu0
  %923 = vmatprep.mubr.bf16.mxu0 0
  %924 = vmatmul.mubr.bf16.gmra.mrb[0].mxu0 %v157
  %v925 = vpop.f32.mrb[0].mxu0
  %v926 = vadd.f32 %v833, %v925
  %v927 = vpop.f32.mrb[0].mxu0
  %v928 = vpop.f32.mrb[0].mxu0
  %v929 = vadd.f32 %v833, %v928
  %v930 = vpop.f32.mrb[0].mxu0
  %931 = vmatprep.mubr.bf16.mxu0 0
  %932 = vmatmul.mubr.bf16.gmra.mrb[0].mxu0 %v160
  %v933 = vpop.f32.mrb[0].mxu0
  %v934 = vadd.f32 %v833, %v933
  %v935 = vpop.f32.mrb[0].mxu0
  %v936 = vpop.f32.mrb[0].mxu0
  %v937 = vadd.f32 %v833, %v936
  %v938 = vpop.f32.mrb[0].mxu0
  %939 = vmatprep.mubr.bf16.mxu0 0
  %940 = vmatmul.mubr.bf16.gmra.mrb[0].mxu0 %v163
  %v941 = vpop.f32.mrb[0].mxu0
  %v942 = vadd.f32 %v833, %v941
  %v943 = vpop.f32.mrb[0].mxu0
  %v944 = vpop.f32.mrb[0].mxu0
  %v945 = vadd.f32 %v833, %v944
  %v946 = vpop.f32.mrb[0].mxu0
  %947 = vmatprep.mubr.bf16.mxu0 0
  %948 = vmatmul.mubr.bf16.gmra.mrb[0].mxu0 %v166
  %v949 = vpop.f32.mrb[0].mxu0
  %v950 = vadd.f32 %v833, %v949
  %v951 = vpop.f32.mrb[0].mxu0
  %v952 = vpop.f32.mrb[0].mxu0
  %v953 = vadd.f32 %v833, %v952
  %v954 = vpop.f32.mrb[0].mxu0
  %955 = vdwg.mxu0
  %v956 = vmax.f32 %v894, 0.0
  %v957 = vmax.f32 %v897, 0.0
  %v958 = vmax.f32 %v902, 0.0
  %v959 = vmax.f32 %v905, 0.0
  %v960 = vmax.f32 %v910, 0.0
  %v961 = vmax.f32 %v913, 0.0
  %v962 = vmax.f32 %v918, 0.0
  %v963 = vmax.f32 %v921, 0.0
  %v964 = vmax.f32 %v926, 0.0
  %v965 = vmax.f32 %v929, 0.0
  %v966 = vmax.f32 %v934, 0.0
  %v967 = vmax.f32 %v937, 0.0
  %v968 = vmax.f32 %v942, 0.0
  %v969 = vmax.f32 %v945, 0.0
  %v970 = vmax.f32 %v950, 0.0
  %v971 = vmax.f32 %v953, 0.0
  %v972 = vpack.c.bf16 %v957, %v956
  %v973 = vpack.c.bf16 %v959, %v958
  %v974 = vpack.c.bf16 %v961, %v960
  %v975 = vpack.c.bf16 %v963, %v962
  %v976 = vpack.c.bf16 %v965, %v964
  %v977 = vpack.c.bf16 %v967, %v966
  %v978 = vpack.c.bf16 %v969, %v968
  %v979 = vpack.c.bf16 %v971, %v970
  %v980 = vld [vmem:[%s9] sm:$0xf]
  %v981 = vpack.c.bf16 %v980, %v980
  %v983 = vsel %vm143, %v972, 0
  %v986 = vsel %vm143, %v973, 0
  %v989 = vsel %vm143, %v974, 0
  %v992 = vsel %vm143, %v975, 0
  %v995 = vsel %vm143, %v976, 0
  %v998 = vsel %vm143, %v977, 0
  %v1001 = vsel %vm143, %v978, 0
  %v1004 = vsel %vm143, %v979, 0
  %v1007 = vsel %vm143, %v981, 0
  %1009 = vmatprep.subr.bf16.mxu0 0
  %1010 = vmatpush1.bf16.xpose.msra.mxu0 %v1007
  %1011 = vmatprep.subr.bf16.mxu0 0
  %1012 = vmatpush1.bf16.xpose.msra.mxu0 0
  %1013 = vmatprep.subr.bf16.mxu0 0
  %1014 = vmatpush1.bf16.xpose.msra.mxu0 0
  %1015 = vmatprep.subr.bf16.mxu0 0
  %1016 = vmatpush1.bf16.xpose.msra.mxu0 0
  %1017 = vmatprep.subr.bf16.mxu0 0
  %1018 = vmatpush1.bf16.xpose.msra.mxu0 0
  %1019 = vmatprep.subr.bf16.mxu0 0
  %1020 = vmatpush1.bf16.xpose.msra.mxu0 0
  %1021 = vmatprep.subr.bf16.mxu0 0
  %1022 = vmatpush1.bf16.xpose.msra.mxu0 0
  %1023 = vmatprep.subr.bf16.mxu0 0
  %1024 = vmatpush1.bf16.xpose.msra.mxu0 0
  %1025 = vmatprep.subr.bf16.mxu0 0
  %1026 = vmatpush1.bf16.xpose.msra.mxu0 0
  %1027 = vmatprep.subr.bf16.mxu0 0
  %1028 = vmatpush1.bf16.xpose.msra.mxu0 0
  %1029 = vmatprep.subr.bf16.mxu0 0
  %1030 = vmatpush1.bf16.xpose.msra.mxu0 0
  %1031 = vmatprep.subr.bf16.mxu0 0
  %1032 = vmatpush1.bf16.xpose.msra.mxu0 0
  %1033 = vmatprep.subr.bf16.mxu0 0
  %1034 = vmatpush1.bf16.xpose.msra.mxu0 0
  %1035 = vmatprep.subr.bf16.mxu0 0
  %1036 = vmatpush1.bf16.xpose.msra.mxu0 0
  %1037 = vmatprep.subr.bf16.mxu0 0
  %1038 = vmatpush1.bf16.xpose.msra.mxu0 0
  %1039 = vmatprep.subr.bf16.mxu0 0
  %1040 = vmatpush1.bf16.xpose.msra.mxu0 0
  %1041 = vmatprep.mubr.bf16.mxu0 0
  %1042 = vmatmul.mubr.bf16.gmra.mrb[0].mxu0 %v983
  %v1043 = vpop.f32.mrb[0].mxu0
  %v1044 = vadd.f32 %v758, %v1043
  %v1045 = vpop.f32.mrb[0].mxu0
  %v1046 = vpop.f32.mrb[0].mxu0
  %v1047 = vadd.f32 %v761, %v1046
  %v1048 = vpop.f32.mrb[0].mxu0
  %1049 = vmatprep.mubr.bf16.mxu0 0
  %1050 = vmatmul.mubr.bf16.gmra.mrb[0].mxu0 %v986
  %v1051 = vpop.f32.mrb[0].mxu0
  %v1052 = vadd.f32 %v766, %v1051
  %v1053 = vpop.f32.mrb[0].mxu0
  %v1054 = vpop.f32.mrb[0].mxu0
  %v1055 = vadd.f32 %v769, %v1054
  %v1056 = vpop.f32.mrb[0].mxu0
  %1057 = vmatprep.mubr.bf16.mxu0 0
  %1058 = vmatmul.mubr.bf16.gmra.mrb[0].mxu0 %v989
  %v1059 = vpop.f32.mrb[0].mxu0
  %v1060 = vadd.f32 %v774, %v1059
  %v1061 = vpop.f32.mrb[0].mxu0
  %v1062 = vpop.f32.mrb[0].mxu0
  %v1063 = vadd.f32 %v777, %v1062
  %v1064 = vpop.f32.mrb[0].mxu0
  %1065 = vmatprep.mubr.bf16.mxu0 0
  %1066 = vmatmul.mubr.bf16.gmra.mrb[0].mxu0 %v992
  %v1067 = vpop.f32.mrb[0].mxu0
  %v1068 = vadd.f32 %v782, %v1067
  %v1069 = vpop.f32.mrb[0].mxu0
  %v1070 = vpop.f32.mrb[0].mxu0
  %v1071 = vadd.f32 %v785, %v1070
  %v1072 = vpop.f32.mrb[0].mxu0
  %1073 = vmatprep.mubr.bf16.mxu0 0
  %1074 = vmatmul.mubr.bf16.gmra.mrb[0].mxu0 %v995
  %v1075 = vpop.f32.mrb[0].mxu0
  %v1076 = vadd.f32 %v790, %v1075
  %v1077 = vpop.f32.mrb[0].mxu0
  %v1078 = vpop.f32.mrb[0].mxu0
  %v1079 = vadd.f32 %v793, %v1078
  %v1080 = vpop.f32.mrb[0].mxu0
  %1081 = vmatprep.mubr.bf16.mxu0 0
  %1082 = vmatmul.mubr.bf16.gmra.mrb[0].mxu0 %v998
  %v1083 = vpop.f32.mrb[0].mxu0
  %v1084 = vadd.f32 %v798, %v1083
  %v1085 = vpop.f32.mrb[0].mxu0
  %v1086 = vpop.f32.mrb[0].mxu0
  %v1087 = vadd.f32 %v801, %v1086
  %v1088 = vpop.f32.mrb[0].mxu0
  %1089 = vmatprep.mubr.bf16.mxu0 0
  %1090 = vmatmul.mubr.bf16.gmra.mrb[0].mxu0 %v1001
  %v1091 = vpop.f32.mrb[0].mxu0
  %v1092 = vadd.f32 %v806, %v1091
  %v1093 = vpop.f32.mrb[0].mxu0
  %v1094 = vpop.f32.mrb[0].mxu0
  %v1095 = vadd.f32 %v809, %v1094
  %v1096 = vpop.f32.mrb[0].mxu0
  %1097 = vmatprep.mubr.bf16.mxu0 0
  %1098 = vmatmul.mubr.bf16.gmra.mrb[0].mxu0 %v1004
  %v1099 = vpop.f32.mrb[0].mxu0
  %v1100 = vadd.f32 %v814, %v1099
  %v1101 = vpop.f32.mrb[0].mxu0
  %v1102 = vpop.f32.mrb[0].mxu0
  %v1103 = vadd.f32 %v817, %v1102
  %v1104 = vpop.f32.mrb[0].mxu0
  %1105 = vdwg.mxu0
  %vm1106 = vcmask 31744
  %v1107 = vsel %vm1106, %v1044, -inf
  %1108 = vmax.xlane.f32.xlu0 %v1107
  %v1109 = vpop.xlane.xlu0 %1108
  %v1110 = vsel %vm1106, %v1047, -inf
  %1111 = vmax.xlane.f32.xlu0 %v1110
  %v1112 = vpop.xlane.xlu0 %1111
  %v1113 = vsel %vm1106, %v1052, -inf
  %1114 = vmax.xlane.f32.xlu0 %v1113
  %v1115 = vpop.xlane.xlu0 %1114
  %v1116 = vsel %vm1106, %v1055, -inf
  %1117 = vmax.xlane.f32.xlu0 %v1116
  %v1118 = vpop.xlane.xlu0 %1117
  %v1119 = vsel %vm1106, %v1060, -inf
  %1120 = vmax.xlane.f32.xlu0 %v1119
  %v1121 = vpop.xlane.xlu0 %1120
  %v1122 = vsel %vm1106, %v1063, -inf
  %1123 = vmax.xlane.f32.xlu0 %v1122
  %v1124 = vpop.xlane.xlu0 %1123
  %v1125 = vsel %vm1106, %v1068, -inf
  %1126 = vmax.xlane.f32.xlu0 %v1125
  %v1127 = vpop.xlane.xlu0 %1126
  %v1128 = vsel %vm1106, %v1071, -inf
  %1129 = vmax.xlane.f32.xlu0 %v1128
  %v1130 = vpop.xlane.xlu0 %1129
  %v1131 = vsel %vm1106, %v1076, -inf
  %1132 = vmax.xlane.f32.xlu0 %v1131
  %v1133 = vpop.xlane.xlu0 %1132
  %v1134 = vsel %vm1106, %v1079, -inf
  %1135 = vmax.xlane.f32.xlu0 %v1134
  %v1136 = vpop.xlane.xlu0 %1135
  %v1137 = vsel %vm1106, %v1084, -inf
  %1138 = vmax.xlane.f32.xlu0 %v1137
  %v1139 = vpop.xlane.xlu0 %1138
  %v1140 = vsel %vm1106, %v1087, -inf
  %1141 = vmax.xlane.f32.xlu0 %v1140
  %v1142 = vpop.xlane.xlu0 %1141
  %v1143 = vsel %vm1106, %v1092, -inf
  %1144 = vmax.xlane.f32.xlu0 %v1143
  %v1145 = vpop.xlane.xlu0 %1144
  %v1146 = vsel %vm1106, %v1095, -inf
  %1147 = vmax.xlane.f32.xlu0 %v1146
  %v1148 = vpop.xlane.xlu0 %1147
  %v1149 = vsel %vm1106, %v1100, -inf
  %1150 = vmax.xlane.f32.xlu0 %v1149
  %v1151 = vpop.xlane.xlu0 %1150
  %v1152 = vsel %vm1106, %v1103, -inf
  %1153 = vmax.xlane.f32.xlu0 %v1152
  %v1154 = vpop.xlane.xlu0 %1153
  %v1155 = vsub.f32 %v1044, %v1109
  %v1156 = vsub.f32 %v1047, %v1112
  %v1157 = vsub.f32 %v1052, %v1115
  %v1158 = vsub.f32 %v1055, %v1118
  %v1159 = vsub.f32 %v1060, %v1121
  %v1160 = vsub.f32 %v1063, %v1124
  %v1161 = vsub.f32 %v1068, %v1127
  %v1162 = vsub.f32 %v1071, %v1130
  %v1163 = vsub.f32 %v1076, %v1133
  %v1164 = vsub.f32 %v1079, %v1136
  %v1165 = vsub.f32 %v1084, %v1139
  %v1166 = vsub.f32 %v1087, %v1142
  %v1167 = vsub.f32 %v1092, %v1145
  %v1168 = vsub.f32 %v1095, %v1148
  %v1169 = vsub.f32 %v1100, %v1151
  %v1170 = vsub.f32 %v1103, %v1154
  %v1171 = vmul.f32 %v1155, 1.442695
  %v1172 = vpow.pop %v1171
  %v1173 = vmul.f32 %v1156, 1.442695
  %v1174 = vpow.pop %v1173
  %v1175 = vmul.f32 %v1157, 1.442695
  %v1176 = vpow.pop %v1175
  %v1177 = vmul.f32 %v1158, 1.442695
  %v1178 = vpow.pop %v1177
  %v1179 = vmul.f32 %v1159, 1.442695
  %v1180 = vpow.pop %v1179
  %v1181 = vmul.f32 %v1160, 1.442695
  %v1182 = vpow.pop %v1181
  %v1183 = vmul.f32 %v1161, 1.442695
  %v1184 = vpow.pop %v1183
  %v1185 = vmul.f32 %v1162, 1.442695
  %v1186 = vpow.pop %v1185
  %v1187 = vmul.f32 %v1163, 1.442695
  %v1188 = vpow.pop %v1187
  %v1189 = vmul.f32 %v1164, 1.442695
  %v1190 = vpow.pop %v1189
  %v1191 = vmul.f32 %v1165, 1.442695
  %v1192 = vpow.pop %v1191
  %v1193 = vmul.f32 %v1166, 1.442695
  %v1194 = vpow.pop %v1193
  %v1195 = vmul.f32 %v1167, 1.442695
  %v1196 = vpow.pop %v1195
  %v1197 = vmul.f32 %v1168, 1.442695
  %v1198 = vpow.pop %v1197
  %v1199 = vmul.f32 %v1169, 1.442695
  %v1200 = vpow.pop %v1199
  %v1201 = vmul.f32 %v1170, 1.442695
  %v1202 = vpow.pop %v1201
  %v1203 = vsel %vm1106, %v1172, 0.0
  %1204 = vadd.xlane.f32.xlu0 %v1203
  %v1205 = vpop.xlane.xlu0 %1204
  %v1206 = vsel %vm1106, %v1174, 0.0
  %1207 = vadd.xlane.f32.xlu0 %v1206
  %v1208 = vpop.xlane.xlu0 %1207
  %v1209 = vsel %vm1106, %v1176, 0.0
  %1210 = vadd.xlane.f32.xlu0 %v1209
  %v1211 = vpop.xlane.xlu0 %1210
  %v1212 = vsel %vm1106, %v1178, 0.0
  %1213 = vadd.xlane.f32.xlu0 %v1212
  %v1214 = vpop.xlane.xlu0 %1213
  %v1215 = vsel %vm1106, %v1180, 0.0
  %1216 = vadd.xlane.f32.xlu0 %v1215
  %v1217 = vpop.xlane.xlu0 %1216
  %v1218 = vsel %vm1106, %v1182, 0.0
  %1219 = vadd.xlane.f32.xlu0 %v1218
  %v1220 = vpop.xlane.xlu0 %1219
  %v1221 = vsel %vm1106, %v1184, 0.0
  %1222 = vadd.xlane.f32.xlu0 %v1221
  %v1223 = vpop.xlane.xlu0 %1222
  %v1224 = vsel %vm1106, %v1186, 0.0
  %1225 = vadd.xlane.f32.xlu0 %v1224
  %v1226 = vpop.xlane.xlu0 %1225
  %v1227 = vsel %vm1106, %v1188, 0.0
  %1228 = vadd.xlane.f32.xlu0 %v1227
  %v1229 = vpop.xlane.xlu0 %1228
  %v1230 = vsel %vm1106, %v1190, 0.0
  %1231 = vadd.xlane.f32.xlu0 %v1230
  %v1232 = vpop.xlane.xlu0 %1231
  %v1233 = vsel %vm1106, %v1192, 0.0
  %1234 = vadd.xlane.f32.xlu0 %v1233
  %v1235 = vpop.xlane.xlu0 %1234
  %v1236 = vsel %vm1106, %v1194, 0.0
  %1237 = vadd.xlane.f32.xlu0 %v1236
  %v1238 = vpop.xlane.xlu0 %1237
  %v1239 = vsel %vm1106, %v1196, 0.0
  %1240 = vadd.xlane.f32.xlu0 %v1239
  %v1241 = vpop.xlane.xlu0 %1240
  %v1242 = vsel %vm1106, %v1198, 0.0
  %1243 = vadd.xlane.f32.xlu0 %v1242
  %v1244 = vpop.xlane.xlu0 %1243
  %v1245 = vsel %vm1106, %v1200, 0.0
  %1246 = vadd.xlane.f32.xlu0 %v1245
  %v1247 = vpop.xlane.xlu0 %1246
  %v1248 = vsel %vm1106, %v1202, 0.0
  %1249 = vadd.xlane.f32.xlu0 %v1248
  %v1250 = vpop.xlane.xlu0 %1249
  %v1251 = vrcp.pop %v1205
  %v1252 = vrcp.pop %v1208
  %v1253 = vrcp.pop %v1211
  %v1254 = vrcp.pop %v1214
  %v1255 = vrcp.pop %v1217
  %v1256 = vrcp.pop %v1220
  %v1257 = vrcp.pop %v1223
  %v1258 = vrcp.pop %v1226
  %v1259 = vrcp.pop %v1229
  %v1260 = vrcp.pop %v1232
  %v1261 = vrcp.pop %v1235
  %v1262 = vrcp.pop %v1238
  %v1263 = vrcp.pop %v1241
  %v1264 = vrcp.pop %v1244
  %v1265 = vrcp.pop %v1247
  %v1266 = vrcp.pop %v1250
  %v1267 = vmul.f32 %v1172, %v1251
  %v1268 = vmul.f32 %v1174, %v1252
  %v1269 = vmul.f32 %v1176, %v1253
  %v1270 = vmul.f32 %v1178, %v1254
  %v1271 = vmul.f32 %v1180, %v1255
  %v1272 = vmul.f32 %v1182, %v1256
  %v1273 = vmul.f32 %v1184, %v1257
  %v1274 = vmul.f32 %v1186, %v1258
  %v1275 = vmul.f32 %v1188, %v1259
  %v1276 = vmul.f32 %v1190, %v1260
  %v1277 = vmul.f32 %v1192, %v1261
  %v1278 = vmul.f32 %v1194, %v1262
  %v1279 = vmul.f32 %v1196, %v1263
  %v1280 = vmul.f32 %v1198, %v1264
  %v1281 = vmul.f32 %v1200, %v1265
  %v1282 = vmul.f32 %v1202, %v1266
  %v1283 = vpack.c.bf16 %v1268, %v1267
  %v1284 = vpack.c.bf16 %v1270, %v1269
  %v1285 = vpack.c.bf16 %v1272, %v1271
  %v1286 = vpack.c.bf16 %v1274, %v1273
  %v1287 = vpack.c.bf16 %v1276, %v1275
  %v1288 = vpack.c.bf16 %v1278, %v1277
  %v1289 = vpack.c.bf16 %v1280, %v1279
  %v1290 = vpack.c.bf16 %v1282, %v1281
  %v1292 = vsel %vm1106, %v1283, 0
  %v1295 = vsel %vm1106, %v1284, 0
  %v1298 = vsel %vm1106, %v1285, 0
  %v1301 = vsel %vm1106, %v1286, 0
  %v1304 = vsel %vm1106, %v1287, 0
  %v1307 = vsel %vm1106, %v1288, 0
  %v1310 = vsel %vm1106, %v1289, 0
  %v1313 = vsel %vm1106, %v1290, 0
  %vm1315 = vcmask 1041408
  %v1316 = vsel %vm1315, %v981, 0
  %1318 = vmatprep.subr.bf16.mxu0 0
  %1319 = vmatpush1.bf16.msra.mxu0 %v1316
  %1320 = vmatprep.subr.bf16.mxu0 0
  %1321 = vmatpush1.bf16.msra.mxu0 0
  %1322 = vmatprep.subr.bf16.mxu0 0
  %1323 = vmatpush1.bf16.msra.mxu0 0
  %1324 = vmatprep.subr.bf16.mxu0 0
  %1325 = vmatpush1.bf16.msra.mxu0 0
  %1326 = vmatprep.subr.bf16.mxu0 0
  %1327 = vmatpush1.bf16.msra.mxu0 0
  %1328 = vmatprep.subr.bf16.mxu0 0
  %1329 = vmatpush1.bf16.msra.mxu0 0
  %1330 = vmatprep.subr.bf16.mxu0 0
  %1331 = vmatpush1.bf16.msra.mxu0 0
  %1332 = vmatprep.subr.bf16.mxu0 0
  %1333 = vmatpush1.bf16.msra.mxu0 0
  %1334 = vmatprep.subr.bf16.mxu0 0
  %1335 = vmatpush1.bf16.msra.mxu0 0
  %1336 = vmatprep.subr.bf16.mxu0 0
  %1337 = vmatpush1.bf16.msra.mxu0 0
  %1338 = vmatprep.subr.bf16.mxu0 0
  %1339 = vmatpush1.bf16.msra.mxu0 0
  %1340 = vmatprep.subr.bf16.mxu0 0
  %1341 = vmatpush1.bf16.msra.mxu0 0
  %1342 = vmatprep.subr.bf16.mxu0 0
  %1343 = vmatpush1.bf16.msra.mxu0 0
  %1344 = vmatprep.subr.bf16.mxu0 0
  %1345 = vmatpush1.bf16.msra.mxu0 0
  %1346 = vmatprep.subr.bf16.mxu0 0
  %1347 = vmatpush1.bf16.msra.mxu0 0
  %1348 = vmatprep.subr.bf16.mxu0 0
  %1349 = vmatpush1.bf16.msra.mxu0 0
  %1350 = vmatprep.mubr.bf16.mxu0 0
  %1351 = vmatmul.mubr.bf16.gmra.mrb[0].mxu0 %v1292
  %v1352 = vpop.f32.mrb[0].mxu0
  %v1353 = vadd.f32 0.0, %v1352
  %v1354 = vpop.f32.mrb[0].mxu0
  %v1355 = vpop.f32.mrb[0].mxu0
  %v1356 = vadd.f32 0.0, %v1355
  %v1357 = vpop.f32.mrb[0].mxu0
  %1358 = vmatprep.mubr.bf16.mxu0 0
  %1359 = vmatmul.mubr.bf16.gmra.mrb[0].mxu0 %v1295
  %v1360 = vpop.f32.mrb[0].mxu0
  %v1361 = vadd.f32 0.0, %v1360
  %v1362 = vpop.f32.mrb[0].mxu0
  %v1363 = vpop.f32.mrb[0].mxu0
  %v1364 = vadd.f32 0.0, %v1363
  %v1365 = vpop.f32.mrb[0].mxu0
  %1366 = vmatprep.mubr.bf16.mxu0 0
  %1367 = vmatmul.mubr.bf16.gmra.mrb[0].mxu0 %v1298
  %v1368 = vpop.f32.mrb[0].mxu0
  %v1369 = vadd.f32 0.0, %v1368
  %v1370 = vpop.f32.mrb[0].mxu0
  %v1371 = vpop.f32.mrb[0].mxu0
  %v1372 = vadd.f32 0.0, %v1371
  %v1373 = vpop.f32.mrb[0].mxu0
  %1374 = vmatprep.mubr.bf16.mxu0 0
  %1375 = vmatmul.mubr.bf16.gmra.mrb[0].mxu0 %v1301
  %v1376 = vpop.f32.mrb[0].mxu0
  %v1377 = vadd.f32 0.0, %v1376
  %v1378 = vpop.f32.mrb[0].mxu0
  %v1379 = vpop.f32.mrb[0].mxu0
  %v1380 = vadd.f32 0.0, %v1379
  %v1381 = vpop.f32.mrb[0].mxu0
  %1382 = vmatprep.mubr.bf16.mxu0 0
  %1383 = vmatmul.mubr.bf16.gmra.mrb[0].mxu0 %v1304
  %v1384 = vpop.f32.mrb[0].mxu0
  %v1385 = vadd.f32 0.0, %v1384
  %v1386 = vpop.f32.mrb[0].mxu0
  %v1387 = vpop.f32.mrb[0].mxu0
  %v1388 = vadd.f32 0.0, %v1387
  %v1389 = vpop.f32.mrb[0].mxu0
  %1390 = vmatprep.mubr.bf16.mxu0 0
  %1391 = vmatmul.mubr.bf16.gmra.mrb[0].mxu0 %v1307
  %v1392 = vpop.f32.mrb[0].mxu0
  %v1393 = vadd.f32 0.0, %v1392
  %v1394 = vpop.f32.mrb[0].mxu0
  %v1395 = vpop.f32.mrb[0].mxu0
  %v1396 = vadd.f32 0.0, %v1395
  %v1397 = vpop.f32.mrb[0].mxu0
  %1398 = vmatprep.mubr.bf16.mxu0 0
  %1399 = vmatmul.mubr.bf16.gmra.mrb[0].mxu0 %v1310
  %v1400 = vpop.f32.mrb[0].mxu0
  %v1401 = vadd.f32 0.0, %v1400
  %v1402 = vpop.f32.mrb[0].mxu0
  %v1403 = vpop.f32.mrb[0].mxu0
  %v1404 = vadd.f32 0.0, %v1403
  %v1405 = vpop.f32.mrb[0].mxu0
  %1406 = vmatprep.mubr.bf16.mxu0 0
  %1407 = vmatmul.mubr.bf16.gmra.mrb[0].mxu0 %v1313
  %v1408 = vpop.f32.mrb[0].mxu0
  %v1409 = vadd.f32 0.0, %v1408
  %v1410 = vpop.f32.mrb[0].mxu0
  %v1411 = vpop.f32.mrb[0].mxu0
  %v1412 = vadd.f32 0.0, %v1411
  %v1413 = vpop.f32.mrb[0].mxu0
  %1414 = vdwg.mxu0
  %v1415 = vpack.c.bf16 %v1356, %v1353
  %v1416 = vpack.c.bf16 %v1364, %v1361
  %v1417 = vpack.c.bf16 %v1372, %v1369
  %v1418 = vpack.c.bf16 %v1380, %v1377
  %v1419 = vpack.c.bf16 %v1388, %v1385
  %v1420 = vpack.c.bf16 %v1396, %v1393
  %v1421 = vpack.c.bf16 %v1404, %v1401
  %v1422 = vpack.c.bf16 %v1412, %v1409
  %1431 = vrot.lane.b32.xlu0 %v1415, 64
  %v1432 = vpop.permute.xlu0 %1431
  %1433 = vrot.lane.b32.xlu0 %v1416, 64
  %v1434 = vpop.permute.xlu0 %1433
  %1435 = vrot.lane.b32.xlu0 %v1417, 64
  %v1436 = vpop.permute.xlu0 %1435
  %1437 = vrot.lane.b32.xlu0 %v1418, 64
  %v1438 = vpop.permute.xlu0 %1437
  %1439 = vrot.lane.b32.xlu0 %v1419, 64
  %v1440 = vpop.permute.xlu0 %1439
  %1441 = vrot.lane.b32.xlu0 %v1420, 64
  %v1442 = vpop.permute.xlu0 %1441
  %1443 = vrot.lane.b32.xlu0 %v1421, 64
  %v1444 = vpop.permute.xlu0 %1443
  %1445 = vrot.lane.b32.xlu0 %v1422, 64
  %v1446 = vpop.permute.xlu0 %1445
  %v1448 = vsel %vm143, %v972, %v1432
  %v1451 = vsel %vm143, %v973, %v1434
  %v1454 = vsel %vm143, %v974, %v1436
  %v1457 = vsel %vm143, %v975, %v1438
  %v1460 = vsel %vm143, %v976, %v1440
  %v1463 = vsel %vm143, %v977, %v1442
  %v1466 = vsel %vm143, %v978, %v1444
  %v1469 = vsel %vm143, %v979, %v1446
  %v1471 = vld [vmem:[%s12] sm:$0xf]
  %v1472 = vld [vmem:[%s12 + $0x4] sm:$0xf]
  %v1473 = vld [vmem:[%s12 + $0x8] sm:$0xf]
  %v1474 = vld [vmem:[%s12 + $0xc] sm:$0xf]
  %v1475 = vld [vmem:[%s12 + $0x10] sm:$0xf]
  %v1476 = vld [vmem:[%s12 + $0x14] sm:$0xf]
  %v1477 = vld [vmem:[%s12 + $0x18] sm:$0xf]
  %v1478 = vld [vmem:[%s12 + $0x1c] sm:$0xf]
  %v1479 = vld [vmem:[%s12 + $0x20] sm:$0xf]
  %v1480 = vld [vmem:[%s12 + $0x24] sm:$0xf]
  %v1481 = vld [vmem:[%s12 + $0x28] sm:$0xf]
  %v1482 = vld [vmem:[%s12 + $0x2c] sm:$0xf]
  %v1483 = vld [vmem:[%s12 + $0x30] sm:$0xf]
  %v1484 = vld [vmem:[%s12 + $0x34] sm:$0xf]
  %v1485 = vld [vmem:[%s12 + $0x38] sm:$0xf]
  %v1486 = vld [vmem:[%s12 + $0x3c] sm:$0xf]
  %v1487 = vld [vmem:[%s13] sm:$0x1]
  %v1489 = vlaneseq
  %v1490 = vshrl.u32 %v1489, 7
  %v1491 = vsub.s32 0, %v1490
  %v1492 = vrot.slane %v1487, %v1491
  %v1510 = vunpack.c.l.b16 %v1471
  %v1511 = vunpack.c.l.b16 %v1472
  %v1512 = vunpack.c.l.b16 %v1473
  %v1513 = vunpack.c.l.b16 %v1474
  %v1514 = vunpack.c.l.b16 %v1475
  %v1515 = vunpack.c.l.b16 %v1476
  %v1516 = vunpack.c.l.b16 %v1477
  %v1517 = vunpack.c.l.b16 %v1478
  %v1518 = vunpack.c.l.b16 %v1479
  %v1519 = vunpack.c.l.b16 %v1480
  %v1520 = vunpack.c.l.b16 %v1481
  %v1521 = vunpack.c.l.b16 %v1482
  %v1522 = vunpack.c.l.b16 %v1483
  %v1523 = vunpack.c.l.b16 %v1484
  %v1524 = vunpack.c.l.b16 %v1485
  %v1525 = vunpack.c.l.b16 %v1486
  %v1526 = vpack.c.b16 %v1511, %v1510
  %v1527 = vpack.c.b16 %v1513, %v1512
  %v1528 = vpack.c.b16 %v1515, %v1514
  %v1529 = vpack.c.b16 %v1517, %v1516
  %v1530 = vpack.c.b16 %v1519, %v1518
  %v1531 = vpack.c.b16 %v1521, %v1520
  %v1532 = vpack.c.b16 %v1523, %v1522
  %v1533 = vpack.c.b16 %v1525, %v1524
  %1542 = vmatprep.subr.bf16.mxu0 0
  %1543 = vmatpush1.bf16.msra.mxu0 %v1526
  %1544 = vmatprep.subr.bf16.mxu0 0
  %1545 = vmatpush1.bf16.msra.mxu0 %v1527
  %1546 = vmatprep.subr.bf16.mxu0 0
  %1547 = vmatpush1.bf16.msra.mxu0 %v1528
  %1548 = vmatprep.subr.bf16.mxu0 0
  %1549 = vmatpush1.bf16.msra.mxu0 %v1529
  %1550 = vmatprep.subr.bf16.mxu0 0
  %1551 = vmatpush1.bf16.msra.mxu0 %v1530
  %1552 = vmatprep.subr.bf16.mxu0 0
  %1553 = vmatpush1.bf16.msra.mxu0 %v1531
  %1554 = vmatprep.subr.bf16.mxu0 0
  %1555 = vmatpush1.bf16.msra.mxu0 %v1532
  %1556 = vmatprep.subr.bf16.mxu0 0
  %1557 = vmatpush1.bf16.msra.mxu0 %v1533
  %1558 = vmatprep.subr.bf16.mxu0 0
  %1559 = vmatpush1.bf16.msra.mxu0 0
  %1560 = vmatprep.subr.bf16.mxu0 0
  %1561 = vmatpush1.bf16.msra.mxu0 0
  %1562 = vmatprep.subr.bf16.mxu0 0
  %1563 = vmatpush1.bf16.msra.mxu0 0
  %1564 = vmatprep.subr.bf16.mxu0 0
  %1565 = vmatpush1.bf16.msra.mxu0 0
  %1566 = vmatprep.subr.bf16.mxu0 0
  %1567 = vmatpush1.bf16.msra.mxu0 0
  %1568 = vmatprep.subr.bf16.mxu0 0
  %1569 = vmatpush1.bf16.msra.mxu0 0
  %1570 = vmatprep.subr.bf16.mxu0 0
  %1571 = vmatpush1.bf16.msra.mxu0 0
  %1572 = vmatprep.subr.bf16.mxu0 0
  %1573 = vmatpush1.bf16.msra.mxu0 0
  %1574 = vmatprep.mubr.bf16.mxu0 0
  %1575 = vmatmul.mubr.bf16.gmra.mrb[0].mxu0 %v1448
  %v1576 = vpop.f32.mrb[0].mxu0
  %v1577 = vadd.f32 %v1492, %v1576
  %v1578 = vpop.f32.mrb[0].mxu0
  %v1579 = vpop.f32.mrb[0].mxu0
  %v1580 = vadd.f32 %v1492, %v1579
  %v1581 = vpop.f32.mrb[0].mxu0
  %1582 = vmatprep.mubr.bf16.mxu0 0
  %1583 = vmatmul.mubr.bf16.gmra.mrb[0].mxu0 %v1451
  %v1584 = vpop.f32.mrb[0].mxu0
  %v1585 = vadd.f32 %v1492, %v1584
  %v1586 = vpop.f32.mrb[0].mxu0
  %v1587 = vpop.f32.mrb[0].mxu0
  %v1588 = vadd.f32 %v1492, %v1587
  %v1589 = vpop.f32.mrb[0].mxu0
  %1590 = vmatprep.mubr.bf16.mxu0 0
  %1591 = vmatmul.mubr.bf16.gmra.mrb[0].mxu0 %v1454
  %v1592 = vpop.f32.mrb[0].mxu0
  %v1593 = vadd.f32 %v1492, %v1592
  %v1594 = vpop.f32.mrb[0].mxu0
  %v1595 = vpop.f32.mrb[0].mxu0
  %v1596 = vadd.f32 %v1492, %v1595
  %v1597 = vpop.f32.mrb[0].mxu0
  %1598 = vmatprep.mubr.bf16.mxu0 0
  %1599 = vmatmul.mubr.bf16.gmra.mrb[0].mxu0 %v1457
  %v1600 = vpop.f32.mrb[0].mxu0
  %v1601 = vadd.f32 %v1492, %v1600
  %v1602 = vpop.f32.mrb[0].mxu0
  %v1603 = vpop.f32.mrb[0].mxu0
  %v1604 = vadd.f32 %v1492, %v1603
  %v1605 = vpop.f32.mrb[0].mxu0
  %1606 = vmatprep.mubr.bf16.mxu0 0
  %1607 = vmatmul.mubr.bf16.gmra.mrb[0].mxu0 %v1460
  %v1608 = vpop.f32.mrb[0].mxu0
  %v1609 = vadd.f32 %v1492, %v1608
  %v1610 = vpop.f32.mrb[0].mxu0
  %v1611 = vpop.f32.mrb[0].mxu0
  %v1612 = vadd.f32 %v1492, %v1611
  %v1613 = vpop.f32.mrb[0].mxu0
  %1614 = vmatprep.mubr.bf16.mxu0 0
  %1615 = vmatmul.mubr.bf16.gmra.mrb[0].mxu0 %v1463
  %v1616 = vpop.f32.mrb[0].mxu0
  %v1617 = vadd.f32 %v1492, %v1616
  %v1618 = vpop.f32.mrb[0].mxu0
  %v1619 = vpop.f32.mrb[0].mxu0
  %v1620 = vadd.f32 %v1492, %v1619
  %v1621 = vpop.f32.mrb[0].mxu0
  %1622 = vmatprep.mubr.bf16.mxu0 0
  %1623 = vmatmul.mubr.bf16.gmra.mrb[0].mxu0 %v1466
  %v1624 = vpop.f32.mrb[0].mxu0
  %v1625 = vadd.f32 %v1492, %v1624
  %v1626 = vpop.f32.mrb[0].mxu0
  %v1627 = vpop.f32.mrb[0].mxu0
  %v1628 = vadd.f32 %v1492, %v1627
  %v1629 = vpop.f32.mrb[0].mxu0
  %1630 = vmatprep.mubr.bf16.mxu0 0
  %1631 = vmatmul.mubr.bf16.gmra.mrb[0].mxu0 %v1469
  %v1632 = vpop.f32.mrb[0].mxu0
  %v1633 = vadd.f32 %v1492, %v1632
  %v1634 = vpop.f32.mrb[0].mxu0
  %v1635 = vpop.f32.mrb[0].mxu0
  %v1636 = vadd.f32 %v1492, %v1635
  %v1637 = vpop.f32.mrb[0].mxu0
  %1638 = vdwg.mxu0
  %v1639 = vmax.f32 %v1577, 0.0
  %v1640 = vmax.f32 %v1580, 0.0
  %v1641 = vmax.f32 %v1585, 0.0
  %v1642 = vmax.f32 %v1588, 0.0
  %v1643 = vmax.f32 %v1593, 0.0
  %v1644 = vmax.f32 %v1596, 0.0
  %v1645 = vmax.f32 %v1601, 0.0
  %v1646 = vmax.f32 %v1604, 0.0
  %v1647 = vmax.f32 %v1609, 0.0
  %v1648 = vmax.f32 %v1612, 0.0
  %v1649 = vmax.f32 %v1617, 0.0
  %v1650 = vmax.f32 %v1620, 0.0
  %v1651 = vmax.f32 %v1625, 0.0
  %v1652 = vmax.f32 %v1628, 0.0
  %v1653 = vmax.f32 %v1633, 0.0
  %v1654 = vmax.f32 %v1636, 0.0
  %v1655 = vpack.c.bf16 %v1640, %v1639
  %v1656 = vpack.c.bf16 %v1642, %v1641
  %v1657 = vpack.c.bf16 %v1644, %v1643
  %v1658 = vpack.c.bf16 %v1646, %v1645
  %v1659 = vpack.c.bf16 %v1648, %v1647
  %v1660 = vpack.c.bf16 %v1650, %v1649
  %v1661 = vpack.c.bf16 %v1652, %v1651
  %v1662 = vpack.c.bf16 %v1654, %v1653
  %v1671 = vunpack.c.l.b16 %v1655
  %v1672 = vunpack.c.h.b16 %v1655
  %v1673 = vunpack.c.l.b16 %v1656
  %v1674 = vunpack.c.h.b16 %v1656
  %v1675 = vunpack.c.l.b16 %v1657
  %v1676 = vunpack.c.h.b16 %v1657
  %v1677 = vunpack.c.l.b16 %v1658
  %v1678 = vunpack.c.h.b16 %v1658
  %v1679 = vunpack.c.l.b16 %v1659
  %v1680 = vunpack.c.h.b16 %v1659
  %v1681 = vunpack.c.l.b16 %v1660
  %v1682 = vunpack.c.h.b16 %v1660
  %v1683 = vunpack.c.l.b16 %v1661
  %v1684 = vunpack.c.h.b16 %v1661
  %v1685 = vunpack.c.l.b16 %v1662
  %v1686 = vunpack.c.h.b16 %v1662
  %v1687 = vpack.c.b16 %v1671, %v1671
  %v1688 = vpack.c.b16 %v1672, %v1672
  %v1689 = vpack.c.b16 %v1673, %v1673
  %v1690 = vpack.c.b16 %v1674, %v1674
  %v1691 = vpack.c.b16 %v1675, %v1675
  %v1692 = vpack.c.b16 %v1676, %v1676
  %v1693 = vpack.c.b16 %v1677, %v1677
  %v1694 = vpack.c.b16 %v1678, %v1678
  %v1695 = vpack.c.b16 %v1679, %v1679
  %v1696 = vpack.c.b16 %v1680, %v1680
  %v1697 = vpack.c.b16 %v1681, %v1681
  %v1698 = vpack.c.b16 %v1682, %v1682
  %v1699 = vpack.c.b16 %v1683, %v1683
  %v1700 = vpack.c.b16 %v1684, %v1684
  %v1701 = vpack.c.b16 %v1685, %v1685
  %v1702 = vpack.c.b16 %v1686, %v1686
  %vm1719 = vcmask 257024
  %1720 = vst.msk [vmem:[%s14] sm:$0xf] %vm1719, %v1687
  %1721 = vst.msk [vmem:[%s14 + $0x4] sm:$0xf] %vm1719, %v1688
  %1722 = vst.msk [vmem:[%s14 + $0x8] sm:$0xf] %vm1719, %v1689
  %1723 = vst.msk [vmem:[%s14 + $0xc] sm:$0xf] %vm1719, %v1690
  %1724 = vst.msk [vmem:[%s14 + $0x10] sm:$0xf] %vm1719, %v1691
  %1725 = vst.msk [vmem:[%s14 + $0x14] sm:$0xf] %vm1719, %v1692
  %1726 = vst.msk [vmem:[%s14 + $0x18] sm:$0xf] %vm1719, %v1693
  %1727 = vst.msk [vmem:[%s14 + $0x1c] sm:$0xf] %vm1719, %v1694
  %1728 = vst.msk [vmem:[%s14 + $0x20] sm:$0xf] %vm1719, %v1695
  %1729 = vst.msk [vmem:[%s14 + $0x24] sm:$0xf] %vm1719, %v1696
  %1730 = vst.msk [vmem:[%s14 + $0x28] sm:$0xf] %vm1719, %v1697
  %1731 = vst.msk [vmem:[%s14 + $0x2c] sm:$0xf] %vm1719, %v1698
  %1732 = vst.msk [vmem:[%s14 + $0x30] sm:$0xf] %vm1719, %v1699
  %1733 = vst.msk [vmem:[%s14 + $0x34] sm:$0xf] %vm1719, %v1700
  %1734 = vst.msk [vmem:[%s14 + $0x38] sm:$0xf] %vm1719, %v1701
  %1735 = vst.msk [vmem:[%s14 + $0x3c] sm:$0xf] %vm1719, %v1702
  // Predicated region
  $region58: #{protomgnet_forward.4} parent=0 // pred_check
    _
  $region59: #{protomgnet_forward.4} parent=0 // pred_check_branch
    %1737 = sbr.rel (0) target = $region61
  $region60: #{protomgnet_forward.4} parent=0 // pred_region
    _
  $region61: #{protomgnet_forward.4} parent=0 // pred_fallthru
    _
  // Predicated region
  $region62: #{protomgnet_forward.4} parent=0 // pred_check
    _
  $region63: #{protomgnet_forward.4} parent=0 // pred_check_branch
    %1739 = sbr.rel (0) target = $region65
  $region64: #{protomgnet_forward.4} parent=0 // pred_region
    _
  $region65: #{protomgnet_forward.4} parent=0 // pred_fallthru
    _

// kernel: protomgnet_forward.6
$region0: #{protomgnet_forward.6}
  #allocation0 [shape = 'u32[]', space=smem, size = 0x4, offset = 0x4, fixed_abs, tag = 'smem constant byte address 0x4 - core index']
  #allocation1 [shape = 'u32[144,128]{1,0:T(1,128)}', space=vmem, size = 0x12000, scoped, tag = 'internal scratch']
  %s0 = inlined_call_operand.vmem [shape: bf16[512,32], index: 0, kind: input, shape index: {}]
  %s1 = inlined_call_operand.vmem [shape: bf16[512,16], index: 1, kind: input, shape index: {}]
  %s2 = inlined_call_operand.vmem [shape: bf16[32,32], index: 2, kind: input, shape index: {}]
  %s3 = inlined_call_operand.vmem [shape: bf16[16,32], index: 3, kind: input, shape index: {}]
  %s4 = inlined_call_operand.vmem [shape: f32[1,32], index: 4, kind: input, shape index: {}]
  %s5 = inlined_call_operand.vmem [shape: f32[1,32], index: 5, kind: input, shape index: {}]
  %s6 = inlined_call_operand.vmem [shape: bf16[512,32], index: 6, kind: output, shape index: {}]
  %s7 = sld [smem:[#allocation0]]
  $region34: #{protomgnet_forward.6} parent=0
    _
  %s9 = ssub.s32 1, %s7
  %s10 = scalar_select 0, %s9, %s7
  // Predicated region
  $region2: #{protomgnet_forward.6} parent=0 // pred_check
    _
  $region3: #{protomgnet_forward.6} parent=0 // pred_check_branch
    %12 = sbr.rel (0) target = $region5
  $region4: #{protomgnet_forward.6} parent=0 // pred_region
    _
  $region5: #{protomgnet_forward.6} parent=0 // pred_fallthru
    _
  // Predicated region
  $region6: #{protomgnet_forward.6} parent=0 // pred_check
    _
  $region7: #{protomgnet_forward.6} parent=0 // pred_check_branch
    %14 = sbr.rel (0) target = $region9
  $region8: #{protomgnet_forward.6} parent=0 // pred_region
    _
  $region9: #{protomgnet_forward.6} parent=0 // pred_fallthru
    _
  // Predicated region
  $region10: #{protomgnet_forward.6} parent=0 // pred_check
    _
  $region11: #{protomgnet_forward.6} parent=0 // pred_check_branch
    %16 = sbr.rel (0) target = $region13
  $region12: #{protomgnet_forward.6} parent=0 // pred_region
    _
  $region13: #{protomgnet_forward.6} parent=0 // pred_fallthru
    _
  // Predicated region
  $region14: #{protomgnet_forward.6} parent=0 // pred_check
    _
  $region15: #{protomgnet_forward.6} parent=0 // pred_check_branch
    %18 = sbr.rel (0) target = $region17
  $region16: #{protomgnet_forward.6} parent=0 // pred_region
    _
  $region17: #{protomgnet_forward.6} parent=0 // pred_fallthru
    _
  // Predicated region
  $region18: #{protomgnet_forward.6} parent=0 // pred_check
    _
  $region19: #{protomgnet_forward.6} parent=0 // pred_check_branch
    %20 = sbr.rel (0) target = $region21
  $region20: #{protomgnet_forward.6} parent=0 // pred_region
    _
  $region21: #{protomgnet_forward.6} parent=0 // pred_fallthru
    _
  // Predicated region
  $region22: #{protomgnet_forward.6} parent=0 // pred_check
    _
  $region23: #{protomgnet_forward.6} parent=0 // pred_check_branch
    %22 = sbr.rel (0) target = $region25
  $region24: #{protomgnet_forward.6} parent=0 // pred_region
    _
  $region25: #{protomgnet_forward.6} parent=0 // pred_fallthru
    _
  %v24 = vld [vmem:[%s0] sm:$0xf]
  %v25 = vld [vmem:[%s0 + $0x4] sm:$0xf]
  %v26 = vld [vmem:[%s0 + $0x8] sm:$0xf]
  %v27 = vld [vmem:[%s0 + $0xc] sm:$0xf]
  %v28 = vld [vmem:[%s0 + $0x10] sm:$0xf]
  %v29 = vld [vmem:[%s0 + $0x14] sm:$0xf]
  %v30 = vld [vmem:[%s0 + $0x18] sm:$0xf]
  %v31 = vld [vmem:[%s0 + $0x1c] sm:$0xf]
  %v32 = vld [vmem:[%s0 + $0x20] sm:$0xf]
  %v33 = vld [vmem:[%s0 + $0x24] sm:$0xf]
  %v34 = vld [vmem:[%s0 + $0x28] sm:$0xf]
  %v35 = vld [vmem:[%s0 + $0x2c] sm:$0xf]
  %v36 = vld [vmem:[%s0 + $0x30] sm:$0xf]
  %v37 = vld [vmem:[%s0 + $0x34] sm:$0xf]
  %v38 = vld [vmem:[%s0 + $0x38] sm:$0xf]
  %v39 = vld [vmem:[%s0 + $0x3c] sm:$0xf]
  %v40 = vld [vmem:[%s0 + $0x40] sm:$0xf]
  %v41 = vld [vmem:[%s0 + $0x44] sm:$0xf]
  %v42 = vld [vmem:[%s0 + $0x48] sm:$0xf]
  %v43 = vld [vmem:[%s0 + $0x4c] sm:$0xf]
  %v44 = vld [vmem:[%s0 + $0x50] sm:$0xf]
  %v45 = vld [vmem:[%s0 + $0x54] sm:$0xf]
  %v46 = vld [vmem:[%s0 + $0x58] sm:$0xf]
  %v47 = vld [vmem:[%s0 + $0x5c] sm:$0xf]
  %v48 = vld [vmem:[%s0 + $0x60] sm:$0xf]
  %v49 = vld [vmem:[%s0 + $0x64] sm:$0xf]
  %v50 = vld [vmem:[%s0 + $0x68] sm:$0xf]
  %v51 = vld [vmem:[%s0 + $0x6c] sm:$0xf]
  %v52 = vld [vmem:[%s0 + $0x70] sm:$0xf]
  %v53 = vld [vmem:[%s0 + $0x74] sm:$0xf]
  %v54 = vld [vmem:[%s0 + $0x78] sm:$0xf]
  %v55 = vld [vmem:[%s0 + $0x7c] sm:$0xf]
  %v56 = vld [vmem:[%s0 + $0x80] sm:$0xf]
  %v57 = vld [vmem:[%s0 + $0x84] sm:$0xf]
  %v58 = vld [vmem:[%s0 + $0x88] sm:$0xf]
  %v59 = vld [vmem:[%s0 + $0x8c] sm:$0xf]
  %v60 = vld [vmem:[%s0 + $0x90] sm:$0xf]
  %v61 = vld [vmem:[%s0 + $0x94] sm:$0xf]
  %v62 = vld [vmem:[%s0 + $0x98] sm:$0xf]
  %v63 = vld [vmem:[%s0 + $0x9c] sm:$0xf]
  %v64 = vld [vmem:[%s0 + $0xa0] sm:$0xf]
  %v65 = vld [vmem:[%s0 + $0xa4] sm:$0xf]
  %v66 = vld [vmem:[%s0 + $0xa8] sm:$0xf]
  %v67 = vld [vmem:[%s0 + $0xac] sm:$0xf]
  %v68 = vld [vmem:[%s0 + $0xb0] sm:$0xf]
  %v69 = vld [vmem:[%s0 + $0xb4] sm:$0xf]
  %v70 = vld [vmem:[%s0 + $0xb8] sm:$0xf]
  %v71 = vld [vmem:[%s0 + $0xbc] sm:$0xf]
  %v72 = vld [vmem:[%s0 + $0xc0] sm:$0xf]
  %v73 = vld [vmem:[%s0 + $0xc4] sm:$0xf]
  %v74 = vld [vmem:[%s0 + $0xc8] sm:$0xf]
  %v75 = vld [vmem:[%s0 + $0xcc] sm:$0xf]
  %v76 = vld [vmem:[%s0 + $0xd0] sm:$0xf]
  %v77 = vld [vmem:[%s0 + $0xd4] sm:$0xf]
  %v78 = vld [vmem:[%s0 + $0xd8] sm:$0xf]
  %v79 = vld [vmem:[%s0 + $0xdc] sm:$0xf]
  %v80 = vld [vmem:[%s0 + $0xe0] sm:$0xf]
  %v81 = vld [vmem:[%s0 + $0xe4] sm:$0xf]
  %v82 = vld [vmem:[%s0 + $0xe8] sm:$0xf]
  %v83 = vld [vmem:[%s0 + $0xec] sm:$0xf]
  %v84 = vld [vmem:[%s0 + $0xf0] sm:$0xf]
  %v85 = vld [vmem:[%s0 + $0xf4] sm:$0xf]
  %v86 = vld [vmem:[%s0 + $0xf8] sm:$0xf]
  %v87 = vld [vmem:[%s0 + $0xfc] sm:$0xf]
  %v88 = vld [vmem:[%s2] sm:$0xf]
  %v89 = vld [vmem:[%s2 + $0x4] sm:$0xf]
  %v90 = vld [vmem:[%s2 + $0x8] sm:$0xf]
  %v91 = vld [vmem:[%s2 + $0xc] sm:$0xf]
  %v92 = vld [vmem:[%s4] sm:$0x1]
  %v94 = vlaneseq
  %v95 = vshrl.u32 %v94, 7
  %v96 = vsub.s32 0, %v95
  %v97 = vrot.slane %v92, %v96
  %v163 = vunpack.c.l.b16 %v24
  %v164 = vunpack.c.l.b16 %v25
  %v165 = vunpack.c.l.b16 %v26
  %v166 = vunpack.c.l.b16 %v27
  %v167 = vunpack.c.l.b16 %v28
  %v168 = vunpack.c.l.b16 %v29
  %v169 = vunpack.c.l.b16 %v30
  %v170 = vunpack.c.l.b16 %v31
  %v171 = vunpack.c.l.b16 %v32
  %v172 = vunpack.c.l.b16 %v33
  %v173 = vunpack.c.l.b16 %v34
  %v174 = vunpack.c.l.b16 %v35
  %v175 = vunpack.c.l.b16 %v36
  %v176 = vunpack.c.l.b16 %v37
  %v177 = vunpack.c.l.b16 %v38
  %v178 = vunpack.c.l.b16 %v39
  %v179 = vunpack.c.l.b16 %v40
  %v180 = vunpack.c.l.b16 %v41
  %v181 = vunpack.c.l.b16 %v42
  %v182 = vunpack.c.l.b16 %v43
  %v183 = vunpack.c.l.b16 %v44
  %v184 = vunpack.c.l.b16 %v45
  %v185 = vunpack.c.l.b16 %v46
  %v186 = vunpack.c.l.b16 %v47
  %v187 = vunpack.c.l.b16 %v48
  %v188 = vunpack.c.l.b16 %v49
  %v189 = vunpack.c.l.b16 %v50
  %v190 = vunpack.c.l.b16 %v51
  %v191 = vunpack.c.l.b16 %v52
  %v192 = vunpack.c.l.b16 %v53
  %v193 = vunpack.c.l.b16 %v54
  %v194 = vunpack.c.l.b16 %v55
  %v195 = vunpack.c.l.b16 %v56
  %v196 = vunpack.c.l.b16 %v57
  %v197 = vunpack.c.l.b16 %v58
  %v198 = vunpack.c.l.b16 %v59
  %v199 = vunpack.c.l.b16 %v60
  %v200 = vunpack.c.l.b16 %v61
  %v201 = vunpack.c.l.b16 %v62
  %v202 = vunpack.c.l.b16 %v63
  %v203 = vunpack.c.l.b16 %v64
  %v204 = vunpack.c.l.b16 %v65
  %v205 = vunpack.c.l.b16 %v66
  %v206 = vunpack.c.l.b16 %v67
  %v207 = vunpack.c.l.b16 %v68
  %v208 = vunpack.c.l.b16 %v69
  %v209 = vunpack.c.l.b16 %v70
  %v210 = vunpack.c.l.b16 %v71
  %v211 = vunpack.c.l.b16 %v72
  %v212 = vunpack.c.l.b16 %v73
  %v213 = vunpack.c.l.b16 %v74
  %v214 = vunpack.c.l.b16 %v75
  %v215 = vunpack.c.l.b16 %v76
  %v216 = vunpack.c.l.b16 %v77
  %v217 = vunpack.c.l.b16 %v78
  %v218 = vunpack.c.l.b16 %v79
  %v219 = vunpack.c.l.b16 %v80
  %v220 = vunpack.c.l.b16 %v81
  %v221 = vunpack.c.l.b16 %v82
  %v222 = vunpack.c.l.b16 %v83
  %v223 = vunpack.c.l.b16 %v84
  %v224 = vunpack.c.l.b16 %v85
  %v225 = vunpack.c.l.b16 %v86
  %v226 = vunpack.c.l.b16 %v87
  %v227 = vpack.c.b16 %v164, %v163
  %v228 = vpack.c.b16 %v166, %v165
  %v229 = vpack.c.b16 %v168, %v167
  %v230 = vpack.c.b16 %v170, %v169
  %v231 = vpack.c.b16 %v172, %v171
  %v232 = vpack.c.b16 %v174, %v173
  %v233 = vpack.c.b16 %v176, %v175
  %v234 = vpack.c.b16 %v178, %v177
  %v235 = vpack.c.b16 %v180, %v179
  %v236 = vpack.c.b16 %v182, %v181
  %v237 = vpack.c.b16 %v184, %v183
  %v238 = vpack.c.b16 %v186, %v185
  %v239 = vpack.c.b16 %v188, %v187
  %v240 = vpack.c.b16 %v190, %v189
  %v241 = vpack.c.b16 %v192, %v191
  %v242 = vpack.c.b16 %v194, %v193
  %v243 = vpack.c.b16 %v196, %v195
  %v244 = vpack.c.b16 %v198, %v197
  %v245 = vpack.c.b16 %v200, %v199
  %v246 = vpack.c.b16 %v202, %v201
  %v247 = vpack.c.b16 %v204, %v203
  %v248 = vpack.c.b16 %v206, %v205
  %v249 = vpack.c.b16 %v208, %v207
  %v250 = vpack.c.b16 %v210, %v209
  %v251 = vpack.c.b16 %v212, %v211
  %v252 = vpack.c.b16 %v214, %v213
  %v253 = vpack.c.b16 %v216, %v215
  %v254 = vpack.c.b16 %v218, %v217
  %v255 = vpack.c.b16 %v220, %v219
  %v256 = vpack.c.b16 %v222, %v221
  %v257 = vpack.c.b16 %v224, %v223
  %v258 = vpack.c.b16 %v226, %v225
  %v263 = vunpack.c.l.b16 %v88
  %v264 = vunpack.c.l.b16 %v89
  %v265 = vunpack.c.l.b16 %v90
  %v266 = vunpack.c.l.b16 %v91
  %v267 = vpack.c.b16 %v264, %v263
  %v268 = vpack.c.b16 %v266, %v265
  %vm271 = vcmask 261120
  %v273 = vsel %vm271, %v227, 0
  %v276 = vsel %vm271, %v228, 0
  %v279 = vsel %vm271, %v229, 0
  %v282 = vsel %vm271, %v230, 0
  %v285 = vsel %vm271, %v231, 0
  %v288 = vsel %vm271, %v232, 0
  %v291 = vsel %vm271, %v233, 0
  %v294 = vsel %vm271, %v234, 0
  %v297 = vsel %vm271, %v235, 0
  %v300 = vsel %vm271, %v236, 0
  %v303 = vsel %vm271, %v237, 0
  %v306 = vsel %vm271, %v238, 0
  %v309 = vsel %vm271, %v239, 0
  %v312 = vsel %vm271, %v240, 0
  %v315 = vsel %vm271, %v241, 0
  %v318 = vsel %vm271, %v242, 0
  %v321 = vsel %vm271, %v243, 0
  %v324 = vsel %vm271, %v244, 0
  %v327 = vsel %vm271, %v245, 0
  %v330 = vsel %vm271, %v246, 0
  %v333 = vsel %vm271, %v247, 0
  %v336 = vsel %vm271, %v248, 0
  %v339 = vsel %vm271, %v249, 0
  %v342 = vsel %vm271, %v250, 0
  %v345 = vsel %vm271, %v251, 0
  %v348 = vsel %vm271, %v252, 0
  %v351 = vsel %vm271, %v253, 0
  %v354 = vsel %vm271, %v254, 0
  %v357 = vsel %vm271, %v255, 0
  %v360 = vsel %vm271, %v256, 0
  %v363 = vsel %vm271, %v257, 0
  %v366 = vsel %vm271, %v258, 0
  %368 = vmatprep.subr.bf16.mxu0 0
  %369 = vmatpush1.bf16.msra.mxu0 %v267
  %370 = vmatprep.subr.bf16.mxu0 0
  %371 = vmatpush1.bf16.msra.mxu0 %v268
  %372 = vmatprep.subr.bf16.mxu0 0
  %373 = vmatpush1.bf16.msra.mxu0 0
  %374 = vmatprep.subr.bf16.mxu0 0
  %375 = vmatpush1.bf16.msra.mxu0 0
  %376 = vmatprep.subr.bf16.mxu0 0
  %377 = vmatpush1.bf16.msra.mxu0 0
  %378 = vmatprep.subr.bf16.mxu0 0
  %379 = vmatpush1.bf16.msra.mxu0 0
  %380 = vmatprep.subr.bf16.mxu0 0
  %381 = vmatpush1.bf16.msra.mxu0 0
  %382 = vmatprep.subr.bf16.mxu0 0
  %383 = vmatpush1.bf16.msra.mxu0 0
  %384 = vmatprep.subr.bf16.mxu0 0
  %385 = vmatpush1.bf16.msra.mxu0 0
  %386 = vmatprep.subr.bf16.mxu0 0
  %387 = vmatpush1.bf16.msra.mxu0 0
  %388 = vmatprep.subr.bf16.mxu0 0
  %389 = vmatpush1.bf16.msra.mxu0 0
  %390 = vmatprep.subr.bf16.mxu0 0
  %391 = vmatpush1.bf16.msra.mxu0 0
  %392 = vmatprep.subr.bf16.mxu0 0
  %393 = vmatpush1.bf16.msra.mxu0 0
  %394 = vmatprep.subr.bf16.mxu0 0
  %395 = vmatpush1.bf16.msra.mxu0 0
  %396 = vmatprep.subr.bf16.mxu0 0
  %397 = vmatpush1.bf16.msra.mxu0 0
  %398 = vmatprep.subr.bf16.mxu0 0
  %399 = vmatpush1.bf16.msra.mxu0 0
  %400 = vmatprep.mubr.bf16.mxu0 0
  %401 = vmatmul.mubr.bf16.gmra.mrb[0].mxu0 %v273
  %v402 = vpop.f32.mrb[0].mxu0
  %v403 = vadd.f32 %v97, %v402
  %v404 = vpop.f32.mrb[0].mxu0
  %v405 = vpop.f32.mrb[0].mxu0
  %v406 = vadd.f32 %v97, %v405
  %v407 = vpop.f32.mrb[0].mxu0
  %408 = vmatprep.mubr.bf16.mxu0 0
  %409 = vmatmul.mubr.bf16.gmra.mrb[0].mxu0 %v276
  %v410 = vpop.f32.mrb[0].mxu0
  %v411 = vadd.f32 %v97, %v410
  %v412 = vpop.f32.mrb[0].mxu0
  %v413 = vpop.f32.mrb[0].mxu0
  %v414 = vadd.f32 %v97, %v413
  %v415 = vpop.f32.mrb[0].mxu0
  %416 = vmatprep.mubr.bf16.mxu0 0
  %417 = vmatmul.mubr.bf16.gmra.mrb[0].mxu0 %v279
  %v418 = vpop.f32.mrb[0].mxu0
  %v419 = vadd.f32 %v97, %v418
  %v420 = vpop.f32.mrb[0].mxu0
  %v421 = vpop.f32.mrb[0].mxu0
  %v422 = vadd.f32 %v97, %v421
  %v423 = vpop.f32.mrb[0].mxu0
  %424 = vmatprep.mubr.bf16.mxu0 0
  %425 = vmatmul.mubr.bf16.gmra.mrb[0].mxu0 %v282
  %v426 = vpop.f32.mrb[0].mxu0
  %v427 = vadd.f32 %v97, %v426
  %v428 = vpop.f32.mrb[0].mxu0
  %v429 = vpop.f32.mrb[0].mxu0
  %v430 = vadd.f32 %v97, %v429
  %v431 = vpop.f32.mrb[0].mxu0
  %432 = vmatprep.mubr.bf16.mxu0 0
  %433 = vmatmul.mubr.bf16.gmra.mrb[0].mxu0 %v285
  %v434 = vpop.f32.mrb[0].mxu0
  %v435 = vadd.f32 %v97, %v434
  %v436 = vpop.f32.mrb[0].mxu0
  %v437 = vpop.f32.mrb[0].mxu0
  %v438 = vadd.f32 %v97, %v437
  %v439 = vpop.f32.mrb[0].mxu0
  %440 = vmatprep.mubr.bf16.mxu0 0
  %441 = vmatmul.mubr.bf16.gmra.mrb[0].mxu0 %v288
  %v442 = vpop.f32.mrb[0].mxu0
  %v443 = vadd.f32 %v97, %v442
  %v444 = vpop.f32.mrb[0].mxu0
  %v445 = vpop.f32.mrb[0].mxu0
  %v446 = vadd.f32 %v97, %v445
  %v447 = vpop.f32.mrb[0].mxu0
  %448 = vmatprep.mubr.bf16.mxu0 0
  %449 = vmatmul.mubr.bf16.gmra.mrb[0].mxu0 %v291
  %v450 = vpop.f32.mrb[0].mxu0
  %v451 = vadd.f32 %v97, %v450
  %v452 = vpop.f32.mrb[0].mxu0
  %v453 = vpop.f32.mrb[0].mxu0
  %v454 = vadd.f32 %v97, %v453
  %v455 = vpop.f32.mrb[0].mxu0
  %456 = vmatprep.mubr.bf16.mxu0 0
  %457 = vmatmul.mubr.bf16.gmra.mrb[0].mxu0 %v294
  %v458 = vpop.f32.mrb[0].mxu0
  %v459 = vadd.f32 %v97, %v458
  %v460 = vpop.f32.mrb[0].mxu0
  %v461 = vpop.f32.mrb[0].mxu0
  %v462 = vadd.f32 %v97, %v461
  %v463 = vpop.f32.mrb[0].mxu0
  %464 = vmatprep.mubr.bf16.mxu0 0
  %465 = vmatmul.mubr.bf16.gmra.mrb[0].mxu0 %v297
  %v466 = vpop.f32.mrb[0].mxu0
  %v467 = vadd.f32 %v97, %v466
  %v468 = vpop.f32.mrb[0].mxu0
  %v469 = vpop.f32.mrb[0].mxu0
  %v470 = vadd.f32 %v97, %v469
  %v471 = vpop.f32.mrb[0].mxu0
  %472 = vmatprep.mubr.bf16.mxu0 0
  %473 = vmatmul.mubr.bf16.gmra.mrb[0].mxu0 %v300
  %v474 = vpop.f32.mrb[0].mxu0
  %v475 = vadd.f32 %v97, %v474
  %v476 = vpop.f32.mrb[0].mxu0
  %v477 = vpop.f32.mrb[0].mxu0
  %v478 = vadd.f32 %v97, %v477
  %v479 = vpop.f32.mrb[0].mxu0
  %480 = vmatprep.mubr.bf16.mxu0 0
  %481 = vmatmul.mubr.bf16.gmra.mrb[0].mxu0 %v303
  %v482 = vpop.f32.mrb[0].mxu0
  %v483 = vadd.f32 %v97, %v482
  %v484 = vpop.f32.mrb[0].mxu0
  %v485 = vpop.f32.mrb[0].mxu0
  %v486 = vadd.f32 %v97, %v485
  %v487 = vpop.f32.mrb[0].mxu0
  %488 = vmatprep.mubr.bf16.mxu0 0
  %489 = vmatmul.mubr.bf16.gmra.mrb[0].mxu0 %v306
  %v490 = vpop.f32.mrb[0].mxu0
  %v491 = vadd.f32 %v97, %v490
  %v492 = vpop.f32.mrb[0].mxu0
  %v493 = vpop.f32.mrb[0].mxu0
  %v494 = vadd.f32 %v97, %v493
  %v495 = vpop.f32.mrb[0].mxu0
  %496 = vmatprep.mubr.bf16.mxu0 0
  %497 = vmatmul.mubr.bf16.gmra.mrb[0].mxu0 %v309
  %v498 = vpop.f32.mrb[0].mxu0
  %v499 = vadd.f32 %v97, %v498
  %v500 = vpop.f32.mrb[0].mxu0
  %v501 = vpop.f32.mrb[0].mxu0
  %v502 = vadd.f32 %v97, %v501
  %v503 = vpop.f32.mrb[0].mxu0
  %504 = vmatprep.mubr.bf16.mxu0 0
  %505 = vmatmul.mubr.bf16.gmra.mrb[0].mxu0 %v312
  %v506 = vpop.f32.mrb[0].mxu0
  %v507 = vadd.f32 %v97, %v506
  %v508 = vpop.f32.mrb[0].mxu0
  %v509 = vpop.f32.mrb[0].mxu0
  %v510 = vadd.f32 %v97, %v509
  %v511 = vpop.f32.mrb[0].mxu0
  %512 = vmatprep.mubr.bf16.mxu0 0
  %513 = vmatmul.mubr.bf16.gmra.mrb[0].mxu0 %v315
  %v514 = vpop.f32.mrb[0].mxu0
  %v515 = vadd.f32 %v97, %v514
  %v516 = vpop.f32.mrb[0].mxu0
  %v517 = vpop.f32.mrb[0].mxu0
  %v518 = vadd.f32 %v97, %v517
  %v519 = vpop.f32.mrb[0].mxu0
  %520 = vmatprep.mubr.bf16.mxu0 0
  %521 = vmatmul.mubr.bf16.gmra.mrb[0].mxu0 %v318
  %v522 = vpop.f32.mrb[0].mxu0
  %v523 = vadd.f32 %v97, %v522
  %v524 = vpop.f32.mrb[0].mxu0
  %v525 = vpop.f32.mrb[0].mxu0
  %v526 = vadd.f32 %v97, %v525
  %v527 = vpop.f32.mrb[0].mxu0
  %528 = vmatprep.mubr.bf16.mxu0 0
  %529 = vmatmul.mubr.bf16.gmra.mrb[0].mxu0 %v321
  %v530 = vpop.f32.mrb[0].mxu0
  %v531 = vadd.f32 %v97, %v530
  %v532 = vpop.f32.mrb[0].mxu0
  %v533 = vpop.f32.mrb[0].mxu0
  %v534 = vadd.f32 %v97, %v533
  %v535 = vpop.f32.mrb[0].mxu0
  %536 = vmatprep.mubr.bf16.mxu0 0
  %537 = vmatmul.mubr.bf16.gmra.mrb[0].mxu0 %v324
  %v538 = vpop.f32.mrb[0].mxu0
  %v539 = vadd.f32 %v97, %v538
  %v540 = vpop.f32.mrb[0].mxu0
  %v541 = vpop.f32.mrb[0].mxu0
  %v542 = vadd.f32 %v97, %v541
  %v543 = vpop.f32.mrb[0].mxu0
  %544 = vmatprep.mubr.bf16.mxu0 0
  %545 = vmatmul.mubr.bf16.gmra.mrb[0].mxu0 %v327
  %v546 = vpop.f32.mrb[0].mxu0
  %v547 = vadd.f32 %v97, %v546
  %v548 = vpop.f32.mrb[0].mxu0
  %v549 = vpop.f32.mrb[0].mxu0
  %v550 = vadd.f32 %v97, %v549
  %v551 = vpop.f32.mrb[0].mxu0
  %552 = vmatprep.mubr.bf16.mxu0 0
  %553 = vmatmul.mubr.bf16.gmra.mrb[0].mxu0 %v330
  %v554 = vpop.f32.mrb[0].mxu0
  %v555 = vadd.f32 %v97, %v554
  %v556 = vpop.f32.mrb[0].mxu0
  %v557 = vpop.f32.mrb[0].mxu0
  %v558 = vadd.f32 %v97, %v557
  %v559 = vpop.f32.mrb[0].mxu0
  %560 = vmatprep.mubr.bf16.mxu0 0
  %561 = vmatmul.mubr.bf16.gmra.mrb[0].mxu0 %v333
  %v562 = vpop.f32.mrb[0].mxu0
  %v563 = vadd.f32 %v97, %v562
  %v564 = vpop.f32.mrb[0].mxu0
  %v565 = vpop.f32.mrb[0].mxu0
  %v566 = vadd.f32 %v97, %v565
  %v567 = vpop.f32.mrb[0].mxu0
  %568 = vmatprep.mubr.bf16.mxu0 0
  %569 = vmatmul.mubr.bf16.gmra.mrb[0].mxu0 %v336
  %v570 = vpop.f32.mrb[0].mxu0
  %v571 = vadd.f32 %v97, %v570
  %v572 = vpop.f32.mrb[0].mxu0
  %v573 = vpop.f32.mrb[0].mxu0
  %v574 = vadd.f32 %v97, %v573
  %v575 = vpop.f32.mrb[0].mxu0
  %576 = vmatprep.mubr.bf16.mxu0 0
  %577 = vmatmul.mubr.bf16.gmra.mrb[0].mxu0 %v339
  %v578 = vpop.f32.mrb[0].mxu0
  %v579 = vadd.f32 %v97, %v578
  %v580 = vpop.f32.mrb[0].mxu0
  %v581 = vpop.f32.mrb[0].mxu0
  %v582 = vadd.f32 %v97, %v581
  %v583 = vpop.f32.mrb[0].mxu0
  %584 = vmatprep.mubr.bf16.mxu0 0
  %585 = vmatmul.mubr.bf16.gmra.mrb[0].mxu0 %v342
  %v586 = vpop.f32.mrb[0].mxu0
  %v587 = vadd.f32 %v97, %v586
  %v588 = vpop.f32.mrb[0].mxu0
  %v589 = vpop.f32.mrb[0].mxu0
  %v590 = vadd.f32 %v97, %v589
  %v591 = vpop.f32.mrb[0].mxu0
  %592 = vmatprep.mubr.bf16.mxu0 0
  %593 = vmatmul.mubr.bf16.gmra.mrb[0].mxu0 %v345
  %v594 = vpop.f32.mrb[0].mxu0
  %v595 = vadd.f32 %v97, %v594
  %v596 = vpop.f32.mrb[0].mxu0
  %v597 = vpop.f32.mrb[0].mxu0
  %v598 = vadd.f32 %v97, %v597
  %v599 = vpop.f32.mrb[0].mxu0
  %600 = vmatprep.mubr.bf16.mxu0 0
  %601 = vmatmul.mubr.bf16.gmra.mrb[0].mxu0 %v348
  %v602 = vpop.f32.mrb[0].mxu0
  %v603 = vadd.f32 %v97, %v602
  %v604 = vpop.f32.mrb[0].mxu0
  %v605 = vpop.f32.mrb[0].mxu0
  %v606 = vadd.f32 %v97, %v605
  %v607 = vpop.f32.mrb[0].mxu0
  %608 = vmatprep.mubr.bf16.mxu0 0
  %609 = vmatmul.mubr.bf16.gmra.mrb[0].mxu0 %v351
  %v610 = vpop.f32.mrb[0].mxu0
  %v611 = vadd.f32 %v97, %v610
  %v612 = vpop.f32.mrb[0].mxu0
  %v613 = vpop.f32.mrb[0].mxu0
  %v614 = vadd.f32 %v97, %v613
  %v615 = vpop.f32.mrb[0].mxu0
  %616 = vmatprep.mubr.bf16.mxu0 0
  %617 = vmatmul.mubr.bf16.gmra.mrb[0].mxu0 %v354
  %v618 = vpop.f32.mrb[0].mxu0
  %v619 = vadd.f32 %v97, %v618
  %v620 = vpop.f32.mrb[0].mxu0
  %v621 = vpop.f32.mrb[0].mxu0
  %v622 = vadd.f32 %v97, %v621
  %v623 = vpop.f32.mrb[0].mxu0
  %624 = vmatprep.mubr.bf16.mxu0 0
  %625 = vmatmul.mubr.bf16.gmra.mrb[0].mxu0 %v357
  %v626 = vpop.f32.mrb[0].mxu0
  %v627 = vadd.f32 %v97, %v626
  %v628 = vpop.f32.mrb[0].mxu0
  %v629 = vpop.f32.mrb[0].mxu0
  %v630 = vadd.f32 %v97, %v629
  %v631 = vpop.f32.mrb[0].mxu0
  %632 = vmatprep.mubr.bf16.mxu0 0
  %633 = vmatmul.mubr.bf16.gmra.mrb[0].mxu0 %v360
  %v634 = vpop.f32.mrb[0].mxu0
  %v635 = vadd.f32 %v97, %v634
  %v636 = vpop.f32.mrb[0].mxu0
  %v637 = vpop.f32.mrb[0].mxu0
  %v638 = vadd.f32 %v97, %v637
  %v639 = vpop.f32.mrb[0].mxu0
  %640 = vmatprep.mubr.bf16.mxu0 0
  %641 = vmatmul.mubr.bf16.gmra.mrb[0].mxu0 %v363
  %v642 = vpop.f32.mrb[0].mxu0
  %v643 = vadd.f32 %v97, %v642
  %v644 = vpop.f32.mrb[0].mxu0
  %v645 = vpop.f32.mrb[0].mxu0
  %v646 = vadd.f32 %v97, %v645
  %v647 = vpop.f32.mrb[0].mxu0
  %648 = vmatprep.mubr.bf16.mxu0 0
  %649 = vmatmul.mubr.bf16.gmra.mrb[0].mxu0 %v366
  %v650 = vpop.f32.mrb[0].mxu0
  %v651 = vadd.f32 %v97, %v650
  %v652 = vpop.f32.mrb[0].mxu0
  %v653 = vpop.f32.mrb[0].mxu0
  %v654 = vadd.f32 %v97, %v653
  %v655 = vpop.f32.mrb[0].mxu0
  %656 = vdwg.mxu0
  %v657 = vld [vmem:[%s1] sm:$0xf]
  %v658 = vld [vmem:[%s1 + $0x4] sm:$0xf]
  %v659 = vld [vmem:[%s1 + $0x8] sm:$0xf]
  %v660 = vld [vmem:[%s1 + $0xc] sm:$0xf]
  %v661 = vld [vmem:[%s1 + $0x10] sm:$0xf]
  %v662 = vld [vmem:[%s1 + $0x14] sm:$0xf]
  %v663 = vld [vmem:[%s1 + $0x18] sm:$0xf]
  %v664 = vld [vmem:[%s1 + $0x1c] sm:$0xf]
  %v665 = vld [vmem:[%s1 + $0x20] sm:$0xf]
  %v666 = vld [vmem:[%s1 + $0x24] sm:$0xf]
  %v667 = vld [vmem:[%s1 + $0x28] sm:$0xf]
  %v668 = vld [vmem:[%s1 + $0x2c] sm:$0xf]
  %v669 = vld [vmem:[%s1 + $0x30] sm:$0xf]
  %v670 = vld [vmem:[%s1 + $0x34] sm:$0xf]
  %v671 = vld [vmem:[%s1 + $0x38] sm:$0xf]
  %v672 = vld [vmem:[%s1 + $0x3c] sm:$0xf]
  %v673 = vld [vmem:[%s1 + $0x40] sm:$0xf]
  %v674 = vld [vmem:[%s1 + $0x44] sm:$0xf]
  %v675 = vld [vmem:[%s1 + $0x48] sm:$0xf]
  %v676 = vld [vmem:[%s1 + $0x4c] sm:$0xf]
  %v677 = vld [vmem:[%s1 + $0x50] sm:$0xf]
  %v678 = vld [vmem:[%s1 + $0x54] sm:$0xf]
  %v679 = vld [vmem:[%s1 + $0x58] sm:$0xf]
  %v680 = vld [vmem:[%s1 + $0x5c] sm:$0xf]
  %v681 = vld [vmem:[%s1 + $0x60] sm:$0xf]
  %v682 = vld [vmem:[%s1 + $0x64] sm:$0xf]
  %v683 = vld [vmem:[%s1 + $0x68] sm:$0xf]
  %v684 = vld [vmem:[%s1 + $0x6c] sm:$0xf]
  %v685 = vld [vmem:[%s1 + $0x70] sm:$0xf]
  %v686 = vld [vmem:[%s1 + $0x74] sm:$0xf]
  %v687 = vld [vmem:[%s1 + $0x78] sm:$0xf]
  %v688 = vld [vmem:[%s1 + $0x7c] sm:$0xf]
  %v689 = vld [vmem:[%s1 + $0x80] sm:$0xf]
  %v690 = vld [vmem:[%s1 + $0x84] sm:$0xf]
  %v691 = vld [vmem:[%s1 + $0x88] sm:$0xf]
  %v692 = vld [vmem:[%s1 + $0x8c] sm:$0xf]
  %v693 = vld [vmem:[%s1 + $0x90] sm:$0xf]
  %v694 = vld [vmem:[%s1 + $0x94] sm:$0xf]
  %v695 = vld [vmem:[%s1 + $0x98] sm:$0xf]
  %v696 = vld [vmem:[%s1 + $0x9c] sm:$0xf]
  %v697 = vld [vmem:[%s1 + $0xa0] sm:$0xf]
  %v698 = vld [vmem:[%s1 + $0xa4] sm:$0xf]
  %v699 = vld [vmem:[%s1 + $0xa8] sm:$0xf]
  %v700 = vld [vmem:[%s1 + $0xac] sm:$0xf]
  %v701 = vld [vmem:[%s1 + $0xb0] sm:$0xf]
  %v702 = vld [vmem:[%s1 + $0xb4] sm:$0xf]
  %v703 = vld [vmem:[%s1 + $0xb8] sm:$0xf]
  %v704 = vld [vmem:[%s1 + $0xbc] sm:$0xf]
  %v705 = vld [vmem:[%s1 + $0xc0] sm:$0xf]
  %v706 = vld [vmem:[%s1 + $0xc4] sm:$0xf]
  %v707 = vld [vmem:[%s1 + $0xc8] sm:$0xf]
  %v708 = vld [vmem:[%s1 + $0xcc] sm:$0xf]
  %v709 = vld [vmem:[%s1 + $0xd0] sm:$0xf]
  %v710 = vld [vmem:[%s1 + $0xd4] sm:$0xf]
  %v711 = vld [vmem:[%s1 + $0xd8] sm:$0xf]
  %v712 = vld [vmem:[%s1 + $0xdc] sm:$0xf]
  %v713 = vld [vmem:[%s1 + $0xe0] sm:$0xf]
  %v714 = vld [vmem:[%s1 + $0xe4] sm:$0xf]
  %v715 = vld [vmem:[%s1 + $0xe8] sm:$0xf]
  %v716 = vld [vmem:[%s1 + $0xec] sm:$0xf]
  %v717 = vld [vmem:[%s1 + $0xf0] sm:$0xf]
  %v718 = vld [vmem:[%s1 + $0xf4] sm:$0xf]
  %v719 = vld [vmem:[%s1 + $0xf8] sm:$0xf]
  %v720 = vld [vmem:[%s1 + $0xfc] sm:$0xf]
  %v721 = vld [vmem:[%s3] sm:$0xf]
  %v722 = vld [vmem:[%s3 + $0x4] sm:$0xf]
  %v723 = vld [vmem:[%s5] sm:$0x1]
  %v725 = vlaneseq
  %v726 = vshrl.u32 %v725, 7
  %v727 = vsub.s32 0, %v726
  %v728 = vrot.slane %v723, %v727
  %v794 = vunpack.c.l.b16 %v657
  %v795 = vunpack.c.l.b16 %v658
  %v796 = vunpack.c.l.b16 %v659
  %v797 = vunpack.c.l.b16 %v660
  %v798 = vunpack.c.l.b16 %v661
  %v799 = vunpack.c.l.b16 %v662
  %v800 = vunpack.c.l.b16 %v663
  %v801 = vunpack.c.l.b16 %v664
  %v802 = vunpack.c.l.b16 %v665
  %v803 = vunpack.c.l.b16 %v666
  %v804 = vunpack.c.l.b16 %v667
  %v805 = vunpack.c.l.b16 %v668
  %v806 = vunpack.c.l.b16 %v669
  %v807 = vunpack.c.l.b16 %v670
  %v808 = vunpack.c.l.b16 %v671
  %v809 = vunpack.c.l.b16 %v672
  %v810 = vunpack.c.l.b16 %v673
  %v811 = vunpack.c.l.b16 %v674
  %v812 = vunpack.c.l.b16 %v675
  %v813 = vunpack.c.l.b16 %v676
  %v814 = vunpack.c.l.b16 %v677
  %v815 = vunpack.c.l.b16 %v678
  %v816 = vunpack.c.l.b16 %v679
  %v817 = vunpack.c.l.b16 %v680
  %v818 = vunpack.c.l.b16 %v681
  %v819 = vunpack.c.l.b16 %v682
  %v820 = vunpack.c.l.b16 %v683
  %v821 = vunpack.c.l.b16 %v684
  %v822 = vunpack.c.l.b16 %v685
  %v823 = vunpack.c.l.b16 %v686
  %v824 = vunpack.c.l.b16 %v687
  %v825 = vunpack.c.l.b16 %v688
  %v826 = vunpack.c.l.b16 %v689
  %v827 = vunpack.c.l.b16 %v690
  %v828 = vunpack.c.l.b16 %v691
  %v829 = vunpack.c.l.b16 %v692
  %v830 = vunpack.c.l.b16 %v693
  %v831 = vunpack.c.l.b16 %v694
  %v832 = vunpack.c.l.b16 %v695
  %v833 = vunpack.c.l.b16 %v696
  %v834 = vunpack.c.l.b16 %v697
  %v835 = vunpack.c.l.b16 %v698
  %v836 = vunpack.c.l.b16 %v699
  %v837 = vunpack.c.l.b16 %v700
  %v838 = vunpack.c.l.b16 %v701
  %v839 = vunpack.c.l.b16 %v702
  %v840 = vunpack.c.l.b16 %v703
  %v841 = vunpack.c.l.b16 %v704
  %v842 = vunpack.c.l.b16 %v705
  %v843 = vunpack.c.l.b16 %v706
  %v844 = vunpack.c.l.b16 %v707
  %v845 = vunpack.c.l.b16 %v708
  %v846 = vunpack.c.l.b16 %v709
  %v847 = vunpack.c.l.b16 %v710
  %v848 = vunpack.c.l.b16 %v711
  %v849 = vunpack.c.l.b16 %v712
  %v850 = vunpack.c.l.b16 %v713
  %v851 = vunpack.c.l.b16 %v714
  %v852 = vunpack.c.l.b16 %v715
  %v853 = vunpack.c.l.b16 %v716
  %v854 = vunpack.c.l.b16 %v717
  %v855 = vunpack.c.l.b16 %v718
  %v856 = vunpack.c.l.b16 %v719
  %v857 = vunpack.c.l.b16 %v720
  %v858 = vpack.c.b16 %v795, %v794
  %v859 = vpack.c.b16 %v797, %v796
  %v860 = vpack.c.b16 %v799, %v798
  %v861 = vpack.c.b16 %v801, %v800
  %v862 = vpack.c.b16 %v803, %v802
  %v863 = vpack.c.b16 %v805, %v804
  %v864 = vpack.c.b16 %v807, %v806
  %v865 = vpack.c.b16 %v809, %v808
  %v866 = vpack.c.b16 %v811, %v810
  %v867 = vpack.c.b16 %v813, %v812
  %v868 = vpack.c.b16 %v815, %v814
  %v869 = vpack.c.b16 %v817, %v816
  %v870 = vpack.c.b16 %v819, %v818
  %v871 = vpack.c.b16 %v821, %v820
  %v872 = vpack.c.b16 %v823, %v822
  %v873 = vpack.c.b16 %v825, %v824
  %v874 = vpack.c.b16 %v827, %v826
  %v875 = vpack.c.b16 %v829, %v828
  %v876 = vpack.c.b16 %v831, %v830
  %v877 = vpack.c.b16 %v833, %v832
  %v878 = vpack.c.b16 %v835, %v834
  %v879 = vpack.c.b16 %v837, %v836
  %v880 = vpack.c.b16 %v839, %v838
  %v881 = vpack.c.b16 %v841, %v840
  %v882 = vpack.c.b16 %v843, %v842
  %v883 = vpack.c.b16 %v845, %v844
  %v884 = vpack.c.b16 %v847, %v846
  %v885 = vpack.c.b16 %v849, %v848
  %v886 = vpack.c.b16 %v851, %v850
  %v887 = vpack.c.b16 %v853, %v852
  %v888 = vpack.c.b16 %v855, %v854
  %v889 = vpack.c.b16 %v857, %v856
  %v892 = vunpack.c.l.b16 %v721
  %v893 = vunpack.c.l.b16 %v722
  %v894 = vpack.c.b16 %v893, %v892
  %vm896 = vcmask 130048
  %v898 = vsel %vm896, %v858, 0
  %v901 = vsel %vm896, %v859, 0
  %v904 = vsel %vm896, %v860, 0
  %v907 = vsel %vm896, %v861, 0
  %v910 = vsel %vm896, %v862, 0
  %v913 = vsel %vm896, %v863, 0
  %v916 = vsel %vm896, %v864, 0
  %v919 = vsel %vm896, %v865, 0
  %v922 = vsel %vm896, %v866, 0
  %v925 = vsel %vm896, %v867, 0
  %v928 = vsel %vm896, %v868, 0
  %v931 = vsel %vm896, %v869, 0
  %v934 = vsel %vm896, %v870, 0
  %v937 = vsel %vm896, %v871, 0
  %v940 = vsel %vm896, %v872, 0
  %v943 = vsel %vm896, %v873, 0
  %v946 = vsel %vm896, %v874, 0
  %v949 = vsel %vm896, %v875, 0
  %v952 = vsel %vm896, %v876, 0
  %v955 = vsel %vm896, %v877, 0
  %v958 = vsel %vm896, %v878, 0
  %v961 = vsel %vm896, %v879, 0
  %v964 = vsel %vm896, %v880, 0
  %v967 = vsel %vm896, %v881, 0
  %v970 = vsel %vm896, %v882, 0
  %v973 = vsel %vm896, %v883, 0
  %v976 = vsel %vm896, %v884, 0
  %v979 = vsel %vm896, %v885, 0
  %v982 = vsel %vm896, %v886, 0
  %v985 = vsel %vm896, %v887, 0
  %v988 = vsel %vm896, %v888, 0
  %v991 = vsel %vm896, %v889, 0
  %993 = vmatprep.subr.bf16.mxu0 0
  %994 = vmatpush1.bf16.msra.mxu0 %v894
  %995 = vmatprep.subr.bf16.mxu0 0
  %996 = vmatpush1.bf16.msra.mxu0 0
  %997 = vmatprep.subr.bf16.mxu0 0
  %998 = vmatpush1.bf16.msra.mxu0 0
  %999 = vmatprep.subr.bf16.mxu0 0
  %1000 = vmatpush1.bf16.msra.mxu0 0
  %1001 = vmatprep.subr.bf16.mxu0 0
  %1002 = vmatpush1.bf16.msra.mxu0 0
  %1003 = vmatprep.subr.bf16.mxu0 0
  %1004 = vmatpush1.bf16.msra.mxu0 0
  %1005 = vmatprep.subr.bf16.mxu0 0
  %1006 = vmatpush1.bf16.msra.mxu0 0
  %1007 = vmatprep.subr.bf16.mxu0 0
  %1008 = vmatpush1.bf16.msra.mxu0 0
  %1009 = vmatprep.subr.bf16.mxu0 0
  %1010 = vmatpush1.bf16.msra.mxu0 0
  %1011 = vmatprep.subr.bf16.mxu0 0
  %1012 = vmatpush1.bf16.msra.mxu0 0
  %1013 = vmatprep.subr.bf16.mxu0 0
  %1014 = vmatpush1.bf16.msra.mxu0 0
  %1015 = vmatprep.subr.bf16.mxu0 0
  %1016 = vmatpush1.bf16.msra.mxu0 0
  %1017 = vmatprep.subr.bf16.mxu0 0
  %1018 = vmatpush1.bf16.msra.mxu0 0
  %1019 = vmatprep.subr.bf16.mxu0 0
  %1020 = vmatpush1.bf16.msra.mxu0 0
  %1021 = vmatprep.subr.bf16.mxu0 0
  %1022 = vmatpush1.bf16.msra.mxu0 0
  %1023 = vmatprep.subr.bf16.mxu0 0
  %1024 = vmatpush1.bf16.msra.mxu0 0
  %1025 = vmatprep.mubr.bf16.mxu0 0
  %1026 = vmatmul.mubr.bf16.gmra.mrb[0].mxu0 %v898
  %v1027 = vpop.f32.mrb[0].mxu0
  %v1028 = vadd.f32 %v728, %v1027
  %v1029 = vpop.f32.mrb[0].mxu0
  %v1030 = vpop.f32.mrb[0].mxu0
  %v1031 = vadd.f32 %v728, %v1030
  %v1032 = vpop.f32.mrb[0].mxu0
  %1033 = vmatprep.mubr.bf16.mxu0 0
  %1034 = vmatmul.mubr.bf16.gmra.mrb[0].mxu0 %v901
  %v1035 = vpop.f32.mrb[0].mxu0
  %v1036 = vadd.f32 %v728, %v1035
  %v1037 = vpop.f32.mrb[0].mxu0
  %v1038 = vpop.f32.mrb[0].mxu0
  %v1039 = vadd.f32 %v728, %v1038
  %v1040 = vpop.f32.mrb[0].mxu0
  %1041 = vmatprep.mubr.bf16.mxu0 0
  %1042 = vmatmul.mubr.bf16.gmra.mrb[0].mxu0 %v904
  %v1043 = vpop.f32.mrb[0].mxu0
  %v1044 = vadd.f32 %v728, %v1043
  %v1045 = vpop.f32.mrb[0].mxu0
  %v1046 = vpop.f32.mrb[0].mxu0
  %v1047 = vadd.f32 %v728, %v1046
  %v1048 = vpop.f32.mrb[0].mxu0
  %1049 = vmatprep.mubr.bf16.mxu0 0
  %1050 = vmatmul.mubr.bf16.gmra.mrb[0].mxu0 %v907
  %v1051 = vpop.f32.mrb[0].mxu0
  %v1052 = vadd.f32 %v728, %v1051
  %v1053 = vpop.f32.mrb[0].mxu0
  %v1054 = vpop.f32.mrb[0].mxu0
  %v1055 = vadd.f32 %v728, %v1054
  %v1056 = vpop.f32.mrb[0].mxu0
  %1057 = vmatprep.mubr.bf16.mxu0 0
  %1058 = vmatmul.mubr.bf16.gmra.mrb[0].mxu0 %v910
  %v1059 = vpop.f32.mrb[0].mxu0
  %v1060 = vadd.f32 %v728, %v1059
  %v1061 = vpop.f32.mrb[0].mxu0
  %v1062 = vpop.f32.mrb[0].mxu0
  %v1063 = vadd.f32 %v728, %v1062
  %v1064 = vpop.f32.mrb[0].mxu0
  %1065 = vmatprep.mubr.bf16.mxu0 0
  %1066 = vmatmul.mubr.bf16.gmra.mrb[0].mxu0 %v913
  %v1067 = vpop.f32.mrb[0].mxu0
  %v1068 = vadd.f32 %v728, %v1067
  %v1069 = vpop.f32.mrb[0].mxu0
  %v1070 = vpop.f32.mrb[0].mxu0
  %v1071 = vadd.f32 %v728, %v1070
  %v1072 = vpop.f32.mrb[0].mxu0
  %1073 = vmatprep.mubr.bf16.mxu0 0
  %1074 = vmatmul.mubr.bf16.gmra.mrb[0].mxu0 %v916
  %v1075 = vpop.f32.mrb[0].mxu0
  %v1076 = vadd.f32 %v728, %v1075
  %v1077 = vpop.f32.mrb[0].mxu0
  %v1078 = vpop.f32.mrb[0].mxu0
  %v1079 = vadd.f32 %v728, %v1078
  %v1080 = vpop.f32.mrb[0].mxu0
  %1081 = vmatprep.mubr.bf16.mxu0 0
  %1082 = vmatmul.mubr.bf16.gmra.mrb[0].mxu0 %v919
  %v1083 = vpop.f32.mrb[0].mxu0
  %v1084 = vadd.f32 %v728, %v1083
  %v1085 = vpop.f32.mrb[0].mxu0
  %v1086 = vpop.f32.mrb[0].mxu0
  %v1087 = vadd.f32 %v728, %v1086
  %v1088 = vpop.f32.mrb[0].mxu0
  %1089 = vmatprep.mubr.bf16.mxu0 0
  %1090 = vmatmul.mubr.bf16.gmra.mrb[0].mxu0 %v922
  %v1091 = vpop.f32.mrb[0].mxu0
  %v1092 = vadd.f32 %v728, %v1091
  %v1093 = vpop.f32.mrb[0].mxu0
  %v1094 = vpop.f32.mrb[0].mxu0
  %v1095 = vadd.f32 %v728, %v1094
  %v1096 = vpop.f32.mrb[0].mxu0
  %1097 = vmatprep.mubr.bf16.mxu0 0
  %1098 = vmatmul.mubr.bf16.gmra.mrb[0].mxu0 %v925
  %v1099 = vpop.f32.mrb[0].mxu0
  %v1100 = vadd.f32 %v728, %v1099
  %v1101 = vpop.f32.mrb[0].mxu0
  %v1102 = vpop.f32.mrb[0].mxu0
  %v1103 = vadd.f32 %v728, %v1102
  %v1104 = vpop.f32.mrb[0].mxu0
  %1105 = vmatprep.mubr.bf16.mxu0 0
  %1106 = vmatmul.mubr.bf16.gmra.mrb[0].mxu0 %v928
  %v1107 = vpop.f32.mrb[0].mxu0
  %v1108 = vadd.f32 %v728, %v1107
  %v1109 = vpop.f32.mrb[0].mxu0
  %v1110 = vpop.f32.mrb[0].mxu0
  %v1111 = vadd.f32 %v728, %v1110
  %v1112 = vpop.f32.mrb[0].mxu0
  %1113 = vmatprep.mubr.bf16.mxu0 0
  %1114 = vmatmul.mubr.bf16.gmra.mrb[0].mxu0 %v931
  %v1115 = vpop.f32.mrb[0].mxu0
  %v1116 = vadd.f32 %v728, %v1115
  %v1117 = vpop.f32.mrb[0].mxu0
  %v1118 = vpop.f32.mrb[0].mxu0
  %v1119 = vadd.f32 %v728, %v1118
  %v1120 = vpop.f32.mrb[0].mxu0
  %1121 = vmatprep.mubr.bf16.mxu0 0
  %1122 = vmatmul.mubr.bf16.gmra.mrb[0].mxu0 %v934
  %v1123 = vpop.f32.mrb[0].mxu0
  %v1124 = vadd.f32 %v728, %v1123
  %v1125 = vpop.f32.mrb[0].mxu0
  %v1126 = vpop.f32.mrb[0].mxu0
  %v1127 = vadd.f32 %v728, %v1126
  %v1128 = vpop.f32.mrb[0].mxu0
  %1129 = vmatprep.mubr.bf16.mxu0 0
  %1130 = vmatmul.mubr.bf16.gmra.mrb[0].mxu0 %v937
  %v1131 = vpop.f32.mrb[0].mxu0
  %v1132 = vadd.f32 %v728, %v1131
  %v1133 = vpop.f32.mrb[0].mxu0
  %v1134 = vpop.f32.mrb[0].mxu0
  %v1135 = vadd.f32 %v728, %v1134
  %v1136 = vpop.f32.mrb[0].mxu0
  %1137 = vmatprep.mubr.bf16.mxu0 0
  %1138 = vmatmul.mubr.bf16.gmra.mrb[0].mxu0 %v940
  %v1139 = vpop.f32.mrb[0].mxu0
  %v1140 = vadd.f32 %v728, %v1139
  %v1141 = vpop.f32.mrb[0].mxu0
  %v1142 = vpop.f32.mrb[0].mxu0
  %v1143 = vadd.f32 %v728, %v1142
  %v1144 = vpop.f32.mrb[0].mxu0
  %1145 = vmatprep.mubr.bf16.mxu0 0
  %1146 = vmatmul.mubr.bf16.gmra.mrb[0].mxu0 %v943
  %v1147 = vpop.f32.mrb[0].mxu0
  %v1148 = vadd.f32 %v728, %v1147
  %v1149 = vpop.f32.mrb[0].mxu0
  %v1150 = vpop.f32.mrb[0].mxu0
  %v1151 = vadd.f32 %v728, %v1150
  %v1152 = vpop.f32.mrb[0].mxu0
  %1153 = vmatprep.mubr.bf16.mxu0 0
  %1154 = vmatmul.mubr.bf16.gmra.mrb[0].mxu0 %v946
  %v1155 = vpop.f32.mrb[0].mxu0
  %v1156 = vadd.f32 %v728, %v1155
  %v1157 = vpop.f32.mrb[0].mxu0
  %v1158 = vpop.f32.mrb[0].mxu0
  %v1159 = vadd.f32 %v728, %v1158
  %v1160 = vpop.f32.mrb[0].mxu0
  %1161 = vmatprep.mubr.bf16.mxu0 0
  %1162 = vmatmul.mubr.bf16.gmra.mrb[0].mxu0 %v949
  %v1163 = vpop.f32.mrb[0].mxu0
  %v1164 = vadd.f32 %v728, %v1163
  %v1165 = vpop.f32.mrb[0].mxu0
  %v1166 = vpop.f32.mrb[0].mxu0
  %v1167 = vadd.f32 %v728, %v1166
  %v1168 = vpop.f32.mrb[0].mxu0
  %1169 = vmatprep.mubr.bf16.mxu0 0
  %1170 = vmatmul.mubr.bf16.gmra.mrb[0].mxu0 %v952
  %v1171 = vpop.f32.mrb[0].mxu0
  %v1172 = vadd.f32 %v728, %v1171
  %v1173 = vpop.f32.mrb[0].mxu0
  %v1174 = vpop.f32.mrb[0].mxu0
  %v1175 = vadd.f32 %v728, %v1174
  %v1176 = vpop.f32.mrb[0].mxu0
  %1177 = vmatprep.mubr.bf16.mxu0 0
  %1178 = vmatmul.mubr.bf16.gmra.mrb[0].mxu0 %v955
  %v1179 = vpop.f32.mrb[0].mxu0
  %v1180 = vadd.f32 %v728, %v1179
  %v1181 = vpop.f32.mrb[0].mxu0
  %v1182 = vpop.f32.mrb[0].mxu0
  %v1183 = vadd.f32 %v728, %v1182
  %v1184 = vpop.f32.mrb[0].mxu0
  %1185 = vmatprep.mubr.bf16.mxu0 0
  %1186 = vmatmul.mubr.bf16.gmra.mrb[0].mxu0 %v958
  %v1187 = vpop.f32.mrb[0].mxu0
  %v1188 = vadd.f32 %v728, %v1187
  %v1189 = vpop.f32.mrb[0].mxu0
  %v1190 = vpop.f32.mrb[0].mxu0
  %v1191 = vadd.f32 %v728, %v1190
  %v1192 = vpop.f32.mrb[0].mxu0
  %1193 = vmatprep.mubr.bf16.mxu0 0
  %1194 = vmatmul.mubr.bf16.gmra.mrb[0].mxu0 %v961
  %v1195 = vpop.f32.mrb[0].mxu0
  %v1196 = vadd.f32 %v728, %v1195
  %v1197 = vpop.f32.mrb[0].mxu0
  %v1198 = vpop.f32.mrb[0].mxu0
  %v1199 = vadd.f32 %v728, %v1198
  %v1200 = vpop.f32.mrb[0].mxu0
  %1201 = vmatprep.mubr.bf16.mxu0 0
  %1202 = vmatmul.mubr.bf16.gmra.mrb[0].mxu0 %v964
  %v1203 = vpop.f32.mrb[0].mxu0
  %v1204 = vadd.f32 %v728, %v1203
  %v1205 = vpop.f32.mrb[0].mxu0
  %v1206 = vpop.f32.mrb[0].mxu0
  %v1207 = vadd.f32 %v728, %v1206
  %v1208 = vpop.f32.mrb[0].mxu0
  %1209 = vmatprep.mubr.bf16.mxu0 0
  %1210 = vmatmul.mubr.bf16.gmra.mrb[0].mxu0 %v967
  %v1211 = vpop.f32.mrb[0].mxu0
  %v1212 = vadd.f32 %v728, %v1211
  %v1213 = vpop.f32.mrb[0].mxu0
  %v1214 = vpop.f32.mrb[0].mxu0
  %v1215 = vadd.f32 %v728, %v1214
  %v1216 = vpop.f32.mrb[0].mxu0
  %1217 = vmatprep.mubr.bf16.mxu0 0
  %1218 = vmatmul.mubr.bf16.gmra.mrb[0].mxu0 %v970
  %v1219 = vpop.f32.mrb[0].mxu0
  %v1220 = vadd.f32 %v728, %v1219
  %v1221 = vpop.f32.mrb[0].mxu0
  %v1222 = vpop.f32.mrb[0].mxu0
  %v1223 = vadd.f32 %v728, %v1222
  %v1224 = vpop.f32.mrb[0].mxu0
  %1225 = vmatprep.mubr.bf16.mxu0 0
  %1226 = vmatmul.mubr.bf16.gmra.mrb[0].mxu0 %v973
  %v1227 = vpop.f32.mrb[0].mxu0
  %v1228 = vadd.f32 %v728, %v1227
  %v1229 = vpop.f32.mrb[0].mxu0
  %v1230 = vpop.f32.mrb[0].mxu0
  %v1231 = vadd.f32 %v728, %v1230
  %v1232 = vpop.f32.mrb[0].mxu0
  %1233 = vmatprep.mubr.bf16.mxu0 0
  %1234 = vmatmul.mubr.bf16.gmra.mrb[0].mxu0 %v976
  %v1235 = vpop.f32.mrb[0].mxu0
  %v1236 = vadd.f32 %v728, %v1235
  %v1237 = vpop.f32.mrb[0].mxu0
  %v1238 = vpop.f32.mrb[0].mxu0
  %v1239 = vadd.f32 %v728, %v1238
  %v1240 = vpop.f32.mrb[0].mxu0
  %1241 = vmatprep.mubr.bf16.mxu0 0
  %1242 = vmatmul.mubr.bf16.gmra.mrb[0].mxu0 %v979
  %v1243 = vpop.f32.mrb[0].mxu0
  %v1244 = vadd.f32 %v728, %v1243
  %v1245 = vpop.f32.mrb[0].mxu0
  %v1246 = vpop.f32.mrb[0].mxu0
  %v1247 = vadd.f32 %v728, %v1246
  %v1248 = vpop.f32.mrb[0].mxu0
  %1249 = vmatprep.mubr.bf16.mxu0 0
  %1250 = vmatmul.mubr.bf16.gmra.mrb[0].mxu0 %v982
  %v1251 = vpop.f32.mrb[0].mxu0
  %v1252 = vadd.f32 %v728, %v1251
  %v1253 = vpop.f32.mrb[0].mxu0
  %v1254 = vpop.f32.mrb[0].mxu0
  %v1255 = vadd.f32 %v728, %v1254
  %v1256 = vpop.f32.mrb[0].mxu0
  %1257 = vmatprep.mubr.bf16.mxu0 0
  %1258 = vmatmul.mubr.bf16.gmra.mrb[0].mxu0 %v985
  %v1259 = vpop.f32.mrb[0].mxu0
  %v1260 = vadd.f32 %v728, %v1259
  %v1261 = vpop.f32.mrb[0].mxu0
  %v1262 = vpop.f32.mrb[0].mxu0
  %v1263 = vadd.f32 %v728, %v1262
  %v1264 = vpop.f32.mrb[0].mxu0
  %1265 = vmatprep.mubr.bf16.mxu0 0
  %1266 = vmatmul.mubr.bf16.gmra.mrb[0].mxu0 %v988
  %v1267 = vpop.f32.mrb[0].mxu0
  %v1268 = vadd.f32 %v728, %v1267
  %v1269 = vpop.f32.mrb[0].mxu0
  %v1270 = vpop.f32.mrb[0].mxu0
  %v1271 = vadd.f32 %v728, %v1270
  %v1272 = vpop.f32.mrb[0].mxu0
  %1273 = vmatprep.mubr.bf16.mxu0 0
  %1274 = vmatmul.mubr.bf16.gmra.mrb[0].mxu0 %v991
  %v1275 = vpop.f32.mrb[0].mxu0
  %v1276 = vadd.f32 %v728, %v1275
  %v1277 = vpop.f32.mrb[0].mxu0
  %v1278 = vpop.f32.mrb[0].mxu0
  %v1279 = vadd.f32 %v728, %v1278
  %v1280 = vpop.f32.mrb[0].mxu0
  %1281 = vdwg.mxu0
  %v1282 = vadd.f32 %v403, %v1028
  %v1283 = vadd.f32 %v406, %v1031
  %v1284 = vadd.f32 %v411, %v1036
  %v1285 = vadd.f32 %v414, %v1039
  %v1286 = vadd.f32 %v419, %v1044
  %v1287 = vadd.f32 %v422, %v1047
  %v1288 = vadd.f32 %v427, %v1052
  %v1289 = vadd.f32 %v430, %v1055
  %v1290 = vadd.f32 %v435, %v1060
  %v1291 = vadd.f32 %v438, %v1063
  %v1292 = vadd.f32 %v443, %v1068
  %v1293 = vadd.f32 %v446, %v1071
  %v1294 = vadd.f32 %v451, %v1076
  %v1295 = vadd.f32 %v454, %v1079
  %v1296 = vadd.f32 %v459, %v1084
  %v1297 = vadd.f32 %v462, %v1087
  %v1298 = vadd.f32 %v467, %v1092
  %v1299 = vadd.f32 %v470, %v1095
  %v1300 = vadd.f32 %v475, %v1100
  %v1301 = vadd.f32 %v478, %v1103
  %v1302 = vadd.f32 %v483, %v1108
  %v1303 = vadd.f32 %v486, %v1111
  %v1304 = vadd.f32 %v491, %v1116
  %v1305 = vadd.f32 %v494, %v1119
  %v1306 = vadd.f32 %v499, %v1124
  %v1307 = vadd.f32 %v502, %v1127
  %v1308 = vadd.f32 %v507, %v1132
  %v1309 = vadd.f32 %v510, %v1135
  %v1310 = vadd.f32 %v515, %v1140
  %v1311 = vadd.f32 %v518, %v1143
  %v1312 = vadd.f32 %v523, %v1148
  %v1313 = vadd.f32 %v526, %v1151
  %v1314 = vadd.f32 %v531, %v1156
  %v1315 = vadd.f32 %v534, %v1159
  %v1316 = vadd.f32 %v539, %v1164
  %v1317 = vadd.f32 %v542, %v1167
  %v1318 = vadd.f32 %v547, %v1172
  %v1319 = vadd.f32 %v550, %v1175
  %v1320 = vadd.f32 %v555, %v1180
  %v1321 = vadd.f32 %v558, %v1183
  %v1322 = vadd.f32 %v563, %v1188
  %v1323 = vadd.f32 %v566, %v1191
  %v1324 = vadd.f32 %v571, %v1196
  %v1325 = vadd.f32 %v574, %v1199
  %v1326 = vadd.f32 %v579, %v1204
  %v1327 = vadd.f32 %v582, %v1207
  %v1328 = vadd.f32 %v587, %v1212
  %v1329 = vadd.f32 %v590, %v1215
  %v1330 = vadd.f32 %v595, %v1220
  %v1331 = vadd.f32 %v598, %v1223
  %v1332 = vadd.f32 %v603, %v1228
  %v1333 = vadd.f32 %v606, %v1231
  %v1334 = vadd.f32 %v611, %v1236
  %v1335 = vadd.f32 %v614, %v1239
  %v1336 = vadd.f32 %v619, %v1244
  %v1337 = vadd.f32 %v622, %v1247
  %v1338 = vadd.f32 %v627, %v1252
  %v1339 = vadd.f32 %v630, %v1255
  %v1340 = vadd.f32 %v635, %v1260
  %v1341 = vadd.f32 %v638, %v1263
  %v1342 = vadd.f32 %v643, %v1268
  %v1343 = vadd.f32 %v646, %v1271
  %v1344 = vadd.f32 %v651, %v1276
  %v1345 = vadd.f32 %v654, %v1279
  %v1346 = vmax.f32 %v1282, 0.0
  %v1347 = vmax.f32 %v1283, 0.0
  %v1348 = vmax.f32 %v1284, 0.0
  %v1349 = vmax.f32 %v1285, 0.0
  %v1350 = vmax.f32 %v1286, 0.0
  %v1351 = vmax.f32 %v1287, 0.0
  %v1352 = vmax.f32 %v1288, 0.0
  %v1353 = vmax.f32 %v1289, 0.0
  %v1354 = vmax.f32 %v1290, 0.0
  %v1355 = vmax.f32 %v1291, 0.0
  %v1356 = vmax.f32 %v1292, 0.0
  %v1357 = vmax.f32 %v1293, 0.0
  %v1358 = vmax.f32 %v1294, 0.0
  %v1359 = vmax.f32 %v1295, 0.0
  %v1360 = vmax.f32 %v1296, 0.0
  %v1361 = vmax.f32 %v1297, 0.0
  %v1362 = vmax.f32 %v1298, 0.0
  %v1363 = vmax.f32 %v1299, 0.0
  %v1364 = vmax.f32 %v1300, 0.0
  %v1365 = vmax.f32 %v1301, 0.0
  %v1366 = vmax.f32 %v1302, 0.0
  %v1367 = vmax.f32 %v1303, 0.0
  %v1368 = vmax.f32 %v1304, 0.0
  %v1369 = vmax.f32 %v1305, 0.0
  %v1370 = vmax.f32 %v1306, 0.0
  %v1371 = vmax.f32 %v1307, 0.0
  %v1372 = vmax.f32 %v1308, 0.0
  %v1373 = vmax.f32 %v1309, 0.0
  %v1374 = vmax.f32 %v1310, 0.0
  %v1375 = vmax.f32 %v1311, 0.0
  %v1376 = vmax.f32 %v1312, 0.0
  %v1377 = vmax.f32 %v1313, 0.0
  %v1378 = vmax.f32 %v1314, 0.0
  %v1379 = vmax.f32 %v1315, 0.0
  %v1380 = vmax.f32 %v1316, 0.0
  %v1381 = vmax.f32 %v1317, 0.0
  %v1382 = vmax.f32 %v1318, 0.0
  %v1383 = vmax.f32 %v1319, 0.0
  %v1384 = vmax.f32 %v1320, 0.0
  %v1385 = vmax.f32 %v1321, 0.0
  %v1386 = vmax.f32 %v1322, 0.0
  %v1387 = vmax.f32 %v1323, 0.0
  %v1388 = vmax.f32 %v1324, 0.0
  %v1389 = vmax.f32 %v1325, 0.0
  %v1390 = vmax.f32 %v1326, 0.0
  %v1391 = vmax.f32 %v1327, 0.0
  %v1392 = vmax.f32 %v1328, 0.0
  %v1393 = vmax.f32 %v1329, 0.0
  %v1394 = vmax.f32 %v1330, 0.0
  %v1395 = vmax.f32 %v1331, 0.0
  %v1396 = vmax.f32 %v1332, 0.0
  %v1397 = vmax.f32 %v1333, 0.0
  %v1398 = vmax.f32 %v1334, 0.0
  %v1399 = vmax.f32 %v1335, 0.0
  %v1400 = vmax.f32 %v1336, 0.0
  %v1401 = vmax.f32 %v1337, 0.0
  %v1402 = vmax.f32 %v1338, 0.0
  %v1403 = vmax.f32 %v1339, 0.0
  %v1404 = vmax.f32 %v1340, 0.0
  %v1405 = vmax.f32 %v1341, 0.0
  %v1406 = vmax.f32 %v1342, 0.0
  %v1407 = vmax.f32 %v1343, 0.0
  %v1408 = vmax.f32 %v1344, 0.0
  %v1409 = vmax.f32 %v1345, 0.0
  %v1410 = vpack.c.bf16 %v1347, %v1346
  %v1411 = vpack.c.bf16 %v1349, %v1348
  %v1412 = vpack.c.bf16 %v1351, %v1350
  %v1413 = vpack.c.bf16 %v1353, %v1352
  %v1414 = vpack.c.bf16 %v1355, %v1354
  %v1415 = vpack.c.bf16 %v1357, %v1356
  %v1416 = vpack.c.bf16 %v1359, %v1358
  %v1417 = vpack.c.bf16 %v1361, %v1360
  %v1418 = vpack.c.bf16 %v1363, %v1362
  %v1419 = vpack.c.bf16 %v1365, %v1364
  %v1420 = vpack.c.bf16 %v1367, %v1366
  %v1421 = vpack.c.bf16 %v1369, %v1368
  %v1422 = vpack.c.bf16 %v1371, %v1370
  %v1423 = vpack.c.bf16 %v1373, %v1372
  %v1424 = vpack.c.bf16 %v1375, %v1374
  %v1425 = vpack.c.bf16 %v1377, %v1376
  %v1426 = vpack.c.bf16 %v1379, %v1378
  %v1427 = vpack.c.bf16 %v1381, %v1380
  %v1428 = vpack.c.bf16 %v1383, %v1382
  %v1429 = vpack.c.bf16 %v1385, %v1384
  %v1430 = vpack.c.bf16 %v1387, %v1386
  %v1431 = vpack.c.bf16 %v1389, %v1388
  %v1432 = vpack.c.bf16 %v1391, %v1390
  %v1433 = vpack.c.bf16 %v1393, %v1392
  %v1434 = vpack.c.bf16 %v1395, %v1394
  %v1435 = vpack.c.bf16 %v1397, %v1396
  %v1436 = vpack.c.bf16 %v1399, %v1398
  %v1437 = vpack.c.bf16 %v1401, %v1400
  %v1438 = vpack.c.bf16 %v1403, %v1402
  %v1439 = vpack.c.bf16 %v1405, %v1404
  %v1440 = vpack.c.bf16 %v1407, %v1406
  %v1441 = vpack.c.bf16 %v1409, %v1408
  %1442 = vst.msk [vmem:[%s6] sm:$0xff] %vm271, %v1410
  %1443 = vst.msk [vmem:[%s6 + $0x8] sm:$0xff] %vm271, %v1411
  %1444 = vst.msk [vmem:[%s6 + $0x10] sm:$0xff] %vm271, %v1412
  %1445 = vst.msk [vmem:[%s6 + $0x18] sm:$0xff] %vm271, %v1413
  %1446 = vst.msk [vmem:[%s6 + $0x20] sm:$0xff] %vm271, %v1414
  %1447 = vst.msk [vmem:[%s6 + $0x28] sm:$0xff] %vm271, %v1415
  %1448 = vst.msk [vmem:[%s6 + $0x30] sm:$0xff] %vm271, %v1416
  %1449 = vst.msk [vmem:[%s6 + $0x38] sm:$0xff] %vm271, %v1417
  %1450 = vst.msk [vmem:[%s6 + $0x40] sm:$0xff] %vm271, %v1418
  %1451 = vst.msk [vmem:[%s6 + $0x48] sm:$0xff] %vm271, %v1419
  %1452 = vst.msk [vmem:[%s6 + $0x50] sm:$0xff] %vm271, %v1420
  %1453 = vst.msk [vmem:[%s6 + $0x58] sm:$0xff] %vm271, %v1421
  %1454 = vst.msk [vmem:[%s6 + $0x60] sm:$0xff] %vm271, %v1422
  %1455 = vst.msk [vmem:[%s6 + $0x68] sm:$0xff] %vm271, %v1423
  %1456 = vst.msk [vmem:[%s6 + $0x70] sm:$0xff] %vm271, %v1424
  %1457 = vst.msk [vmem:[%s6 + $0x78] sm:$0xff] %vm271, %v1425
  %1458 = vst.msk [vmem:[%s6 + $0x80] sm:$0xff] %vm271, %v1426
  %1459 = vst.msk [vmem:[%s6 + $0x88] sm:$0xff] %vm271, %v1427
  %1460 = vst.msk [vmem:[%s6 + $0x90] sm:$0xff] %vm271, %v1428
  %1461 = vst.msk [vmem:[%s6 + $0x98] sm:$0xff] %vm271, %v1429
  %1462 = vst.msk [vmem:[%s6 + $0xa0] sm:$0xff] %vm271, %v1430
  %1463 = vst.msk [vmem:[%s6 + $0xa8] sm:$0xff] %vm271, %v1431
  %1464 = vst.msk [vmem:[%s6 + $0xb0] sm:$0xff] %vm271, %v1432
  %1465 = vst.msk [vmem:[%s6 + $0xb8] sm:$0xff] %vm271, %v1433
  %1466 = vst.msk [vmem:[%s6 + $0xc0] sm:$0xff] %vm271, %v1434
  %1467 = vst.msk [vmem:[%s6 + $0xc8] sm:$0xff] %vm271, %v1435
  %1468 = vst.msk [vmem:[%s6 + $0xd0] sm:$0xff] %vm271, %v1436
  %1469 = vst.msk [vmem:[%s6 + $0xd8] sm:$0xff] %vm271, %v1437
  %1470 = vst.msk [vmem:[%s6 + $0xe0] sm:$0xff] %vm271, %v1438
  %1471 = vst.msk [vmem:[%s6 + $0xe8] sm:$0xff] %vm271, %v1439
  %1472 = vst.msk [vmem:[%s6 + $0xf0] sm:$0xff] %vm271, %v1440
  %1473 = vst.msk [vmem:[%s6 + $0xf8] sm:$0xff] %vm271, %v1441
  // Predicated region
  $region26: #{protomgnet_forward.6} parent=0 // pred_check
    _
  $region27: #{protomgnet_forward.6} parent=0 // pred_check_branch
    %1475 = sbr.rel (0) target = $region29
  $region28: #{protomgnet_forward.6} parent=0 // pred_region
    _
  $region29: #{protomgnet_forward.6} parent=0 // pred_fallthru
    _
  // Predicated region
  $region30: #{protomgnet_forward.6} parent=0 // pred_check
    _
  $region31: #{protomgnet_forward.6} parent=0 // pred_check_branch
    %1477 = sbr.rel (0) target = $region33
  $region32: #{protomgnet_forward.6} parent=0 // pred_region
    _
  $region33: #{protomgnet_forward.6} parent=0 // pred_fallthru
    _

// kernel: protomgnet_forward.7
$region0: #{protomgnet_forward.7}
  #allocation0 [shape = 'u32[]', space=smem, size = 0x4, offset = 0x4, fixed_abs, tag = 'smem constant byte address 0x4 - core index']
  #allocation1 [shape = 'u32[144,128]{1,0:T(1,128)}', space=vmem, size = 0x12000, scoped, tag = 'internal scratch']
  #allocation2 [shape = 'f32[4,65]{1,0:T(4,128)}', space=vmem, size = 0x800, scoped, tag = 'scratch operand']
  %s0 = inlined_call_operand.vmem [shape: s32[8192,1], index: 0, kind: input, shape index: {}]
  %s1 = inlined_call_operand.vmem [shape: f32[8192,65], index: 1, kind: input, shape index: {}]
  %s2 = inlined_call_operand.vmem [shape: f32[4,64], index: 2, kind: input, shape index: {}]
  %s3 = inlined_call_operand.hbm [shape: f32[4,64], index: 3, kind: output, shape index: {}]
  %s4 = sld [smem:[#allocation0]]
  $region53: #{protomgnet_forward.7} parent=0
    _
  %s6 = ssub.s32 1, %s4
  %s7 = scalar_select 0, %s6, %s4
  $region1: #{protomgnet_forward.7} parent=0
    #allocation3 [shape = 'u8[2048]{0}', space=vmem, size = 0x800, scoped, tag = 'output window, operand 0, single buffered']
    #allocation4 [shape = 's32[2]{0}', space=sflag, size = 0x8, scoped, tag = 'scoped memory for protomgnet_forward.7']
    %8 = vsyncpa [#allocation4], 0
    loop: start=0, step=1, limit=18
    $region2: #{protomgnet_forward.7} parent=1 // loop_pre_header
      _
    $region3: #{protomgnet_forward.7} parent=1 // loop_header
      %s10 = sphi 0, %s14
      %p11 = scmp.ge.s32.totalorder %s10, 18
      %s20 = sphi 0, %s22
      %s23 = sphi 0, %s20
      %s24 = sphi 0, %s23
      %s40 = sphi 0, %s24
      %s46 = sphi 0, %s48
      %s49 = sphi 0, %s46
      %s50 = sphi 0, %s49
      %s66 = sphi 0, %s50
      %s70 = sphi 0, %s70
      %s72 = sphi 0, %s70
      %s73 = sphi 0, %s72
      %s87 = sphi 0, %s73
      %s91 = sphi 0, %s91
      %s93 = sphi 0, %s91
      %s94 = sphi 0, %s93
      %s108 = sphi 0, %s94
    $region4: #{protomgnet_forward.7} parent=1 // loop_header_branch
      %13 = sbr.rel (%p11) target = $region8
    $region5: #{protomgnet_forward.7} parent=1 // loop_body
      %s15 = ssub.s32 %s10, 1
      %s16 = ssub.s32 %s10, 2
      %s17 = sadd.s32 %s10, 1
      %s18 = ssub.s32 %s10, %s17
      %p19 = scmp.eq.s32.totalorder %s18, 0
      %s21 = sadd.s32 %s20, 1
      %s22 = scalar_select %p19, %s20, %s21
      %p25 = pneg %p19
      %p26 = scmp.eq.s32.totalorder %s10, 15
      %p27 = por %p25, %p26
      %p28 = scmp.ne.s32.totalorder %s20, %s23
      %p29 = scmp.eq.s32.totalorder %s10, 0
      %p30 = por %p28, %p29
      %p31 = scmp.ne.s32.totalorder %s20, %s23
      %p32 = scmp.eq.s32.totalorder %s15, 15
      %p33 = por %p31, %p32
      %p34 = scmp.ne.s32.totalorder %s23, %s24
      %p35 = scmp.eq.s32.totalorder %s15, 0
      %p36 = por %p34, %p35
      %p37 = scmp.ne.s32.totalorder %s23, %s24
      %p38 = scmp.eq.s32.totalorder %s16, 15
      %p39 = por %p37, %p38
      %p41 = scmp.ne.s32.totalorder %s24, %s40
      %p42 = scmp.eq.s32.totalorder %s16, 0
      %p43 = por %p41, %p42
      %s44 = ssub.s32 %s10, %s17
      %p45 = scmp.eq.s32.totalorder %s44, 0
      %s47 = sadd.s32 %s46, 1
      %s48 = scalar_select %p45, %s46, %s47
      %p51 = pneg %p45
      %p52 = scmp.eq.s32.totalorder %s10, 15
      %p53 = por %p51, %p52
      %p54 = scmp.ne.s32.totalorder %s46, %s49
      %p55 = scmp.eq.s32.totalorder %s10, 0
      %p56 = por %p54, %p55
      %p57 = scmp.ne.s32.totalorder %s46, %s49
      %p58 = scmp.eq.s32.totalorder %s15, 15
      %p59 = por %p57, %p58
      %p60 = scmp.ne.s32.totalorder %s49, %s50
      %p61 = scmp.eq.s32.totalorder %s15, 0
      %p62 = por %p60, %p61
      %p63 = scmp.ne.s32.totalorder %s49, %s50
      %p64 = scmp.eq.s32.totalorder %s16, 15
      %p65 = por %p63, %p64
      %p67 = scmp.ne.s32.totalorder %s50, %s66
      %p68 = scmp.eq.s32.totalorder %s16, 0
      %p69 = por %p67, %p68
      %s71 = sadd.s32 %s70, 1
      %p74 = scmp.eq.s32.totalorder %s10, 15
      %p75 = scmp.ne.s32.totalorder %s70, %s72
      %p76 = scmp.eq.s32.totalorder %s10, 0
      %p77 = por %p75, %p76
      %p78 = scmp.ne.s32.totalorder %s70, %s72
      %p79 = scmp.eq.s32.totalorder %s15, 15
      %p80 = por %p78, %p79
      %p81 = scmp.ne.s32.totalorder %s72, %s73
      %p82 = scmp.eq.s32.totalorder %s15, 0
      %p83 = por %p81, %p82
      %p84 = scmp.ne.s32.totalorder %s72, %s73
      %p85 = scmp.eq.s32.totalorder %s16, 15
      %p86 = por %p84, %p85
      %p88 = scmp.ne.s32.totalorder %s73, %s87
      %p89 = scmp.eq.s32.totalorder %s16, 0
      %p90 = por %p88, %p89
      %s92 = sadd.s32 %s91, 1
      %p95 = scmp.eq.s32.totalorder %s10, 15
      %p96 = scmp.ne.s32.totalorder %s91, %s93
      %p97 = scmp.eq.s32.totalorder %s10, 0
      %p98 = por %p96, %p97
      %p99 = scmp.ne.s32.totalorder %s91, %s93
      %p100 = scmp.eq.s32.totalorder %s15, 15
      %p101 = por %p99, %p100
      %p102 = scmp.ne.s32.totalorder %s93, %s94
      %p103 = scmp.eq.s32.totalorder %s15, 0
      %p104 = por %p102, %p103
      %p105 = scmp.ne.s32.totalorder %s93, %s94
      %p106 = scmp.eq.s32.totalorder %s16, 15
      %p107 = por %p105, %p106
      %p109 = scmp.ne.s32.totalorder %s94, %s108
      %p110 = scmp.eq.s32.totalorder %s16, 0
      %p111 = por %p109, %p110
      %p112 = scmp.le.s32.totalorder 1, %s10
      %p113 = scmp.lt.s32.totalorder %s10, 17
      %p114 = pnand %p112, %p113
      %p115 = pneg %p114
      // Predicated region
      $region9: #{protomgnet_forward.7} parent=5 // pred_check
        _
      $region10: #{protomgnet_forward.7} parent=5 // pred_check_branch
        %117 = sbr.rel (%p114) target = $region12
      $region11: #{protomgnet_forward.7} parent=5 // pred_region
        %s118 = ssub.s32 %s10, 1
        // Predicated region
        $region13: #{protomgnet_forward.7} parent=11 // pred_check
          %p119 = pneg %p83
        $region14: #{protomgnet_forward.7} parent=11 // pred_check_branch
          %121 = sbr.rel (%p119) target = $region16
        $region15: #{protomgnet_forward.7} parent=11 // pred_region
          _
        $region16: #{protomgnet_forward.7} parent=11 // pred_fallthru
          _
      $region12: #{protomgnet_forward.7} parent=5 // pred_fallthru
        _
      %p122 = scmp.lt.s32.totalorder %s10, 16
      // Predicated region
      $region17: #{protomgnet_forward.7} parent=5 // pred_check
        %p123 = pneg %p122
      $region18: #{protomgnet_forward.7} parent=5 // pred_check_branch
        %125 = sbr.rel (%p123) target = $region20
      $region19: #{protomgnet_forward.7} parent=5 // pred_region
        // Predicated region
        $region21: #{protomgnet_forward.7} parent=19 // pred_check
          %p126 = pneg %p30
        $region22: #{protomgnet_forward.7} parent=19 // pred_check_branch
          %128 = sbr.rel (%p126) target = $region24
        $region23: #{protomgnet_forward.7} parent=19 // pred_region
          %s129 = smul.u32 64, %s10
          %p130 = scmp.lt.s32.totalorder %s129, 1023
          %s131 = scalar_select %p130, %s129, 1023
          %s132 = smul.addr %s131, 8
          %s133 = scalar_lea.vmem %s0, %s132
          %s134 = smul.u32 64, %s10
        $region24: #{protomgnet_forward.7} parent=19 // pred_fallthru
          _
        // Predicated region
        $region25: #{protomgnet_forward.7} parent=19 // pred_check
          %p135 = pneg %p56
        $region26: #{protomgnet_forward.7} parent=19 // pred_check_branch
          %137 = sbr.rel (%p135) target = $region28
        $region27: #{protomgnet_forward.7} parent=19 // pred_region
          %s138 = smul.u32 64, %s10
          %p139 = scmp.lt.s32.totalorder %s138, 1023
          %s140 = scalar_select %p139, %s138, 1023
          %s141 = smul.addr %s140, 8
          %s142 = scalar_lea.vmem %s1, %s141
          %s143 = smul.u32 64, %s10
        $region28: #{protomgnet_forward.7} parent=19 // pred_fallthru
          _
      $region20: #{protomgnet_forward.7} parent=5 // pred_fallthru
        _
      %p144 = scmp.le.s32.totalorder 1, %s10
      %p145 = scmp.lt.s32.totalorder %s10, 17
      %p146 = pnand %p144, %p145
      %p147 = pneg %p146
      // Predicated region
      $region29: #{protomgnet_forward.7} parent=5 // pred_check
        _
      $region30: #{protomgnet_forward.7} parent=5 // pred_check_branch
        %149 = sbr.rel (%p146) target = $region32
      $region31: #{protomgnet_forward.7} parent=5 // pred_region
        %s150 = ssub.s32 %s10, 1
        %s151 = smul.u32 64, %s15
        %p152 = scmp.lt.s32.totalorder %s151, 1023
        %s153 = scalar_select %p152, %s151, 1023
        %s154 = smul.addr %s153, 8
        %s155 = scalar_lea.vmem %s0, %s154
        %p156 = pneg %p36
        %p157 = pneg %p33
        %s158 = smul.u32 64, %s15
        %p159 = scmp.lt.s32.totalorder %s158, 1023
        %s160 = scalar_select %p159, %s158, 1023
        %s161 = smul.addr %s160, 8
        %s162 = scalar_lea.vmem %s1, %s161
        %p163 = pneg %p62
        %p164 = pneg %p59
        %p165 = pneg %p83
        %p166 = pneg %p80
        %p167 = pneg %p104
        %p168 = pneg %p101
        %s169 = smul.u32 64, %s15
        %p170 = scmp.lt.s32.totalorder %s169, 1023
        %s171 = scalar_select %p170, %s169, 1023
        %s172 = smul.addr %s171, 8
        %s173 = scalar_lea.vmem %s0, %s172
        %s174 = smul.u32 64, %s15
        %s175 = smul.u32 64, %s15
        %p176 = scmp.lt.s32.totalorder %s175, 1023
        %s177 = scalar_select %p176, %s175, 1023
        %s178 = smul.addr %s177, 8
        %s179 = scalar_lea.vmem %s1, %s178
        %s180 = smul.u32 64, %s15
        %p181 = scmp.eq.s32.totalorder %s15, 0
        // Predicated region
        $region33: #{protomgnet_forward.7} parent=31 // pred_check
          %p182 = pneg %p181
        $region34: #{protomgnet_forward.7} parent=31 // pred_check_branch
          %184 = sbr.rel (%p182) target = $region36
        $region35: #{protomgnet_forward.7} parent=31 // pred_region
          %vm185 = vcmask 527360
          %186 = vst.msk [vmem:[#allocation2] sm:$0xf] %vm185, 0.0
        $region36: #{protomgnet_forward.7} parent=31 // pred_fallthru
          _
        %v187 = vld [vmem:[%s173] sm:$0xff]
        %v188 = vld [vmem:[%s173 + $0x8] sm:$0xff]
        %v189 = vld [vmem:[%s173 + $0x10] sm:$0xff]
        %v190 = vld [vmem:[%s173 + $0x18] sm:$0xff]
        %v191 = vld [vmem:[%s173 + $0x20] sm:$0xff]
        %v192 = vld [vmem:[%s173 + $0x28] sm:$0xff]
        %v193 = vld [vmem:[%s173 + $0x30] sm:$0xff]
        %v194 = vld [vmem:[%s173 + $0x38] sm:$0xff]
        %v195 = vld [vmem:[%s173 + $0x40] sm:$0xff]
        %v196 = vld [vmem:[%s173 + $0x48] sm:$0xff]
        %v197 = vld [vmem:[%s173 + $0x50] sm:$0xff]
        %v198 = vld [vmem:[%s173 + $0x58] sm:$0xff]
        %v199 = vld [vmem:[%s173 + $0x60] sm:$0xff]
        %v200 = vld [vmem:[%s173 + $0x68] sm:$0xff]
        %v201 = vld [vmem:[%s173 + $0x70] sm:$0xff]
        %v202 = vld [vmem:[%s173 + $0x78] sm:$0xff]
        %v203 = vld [vmem:[%s173 + $0x80] sm:$0xff]
        %v204 = vld [vmem:[%s173 + $0x88] sm:$0xff]
        %v205 = vld [vmem:[%s173 + $0x90] sm:$0xff]
        %v206 = vld [vmem:[%s173 + $0x98] sm:$0xff]
        %v207 = vld [vmem:[%s173 + $0xa0] sm:$0xff]
        %v208 = vld [vmem:[%s173 + $0xa8] sm:$0xff]
        %v209 = vld [vmem:[%s173 + $0xb0] sm:$0xff]
        %v210 = vld [vmem:[%s173 + $0xb8] sm:$0xff]
        %v211 = vld [vmem:[%s173 + $0xc0] sm:$0xff]
        %v212 = vld [vmem:[%s173 + $0xc8] sm:$0xff]
        %v213 = vld [vmem:[%s173 + $0xd0] sm:$0xff]
        %v214 = vld [vmem:[%s173 + $0xd8] sm:$0xff]
        %v215 = vld [vmem:[%s173 + $0xe0] sm:$0xff]
        %v216 = vld [vmem:[%s173 + $0xe8] sm:$0xff]
        %v217 = vld [vmem:[%s173 + $0xf0] sm:$0xff]
        %v218 = vld [vmem:[%s173 + $0xf8] sm:$0xff]
        %v219 = vld [vmem:[%s173 + $0x100] sm:$0xff]
        %v220 = vld [vmem:[%s173 + $0x108] sm:$0xff]
        %v221 = vld [vmem:[%s173 + $0x110] sm:$0xff]
        %v222 = vld [vmem:[%s173 + $0x118] sm:$0xff]
        %v223 = vld [vmem:[%s173 + $0x120] sm:$0xff]
        %v224 = vld [vmem:[%s173 + $0x128] sm:$0xff]
        %v225 = vld [vmem:[%s173 + $0x130] sm:$0xff]
        %v226 = vld [vmem:[%s173 + $0x138] sm:$0xff]
        %v227 = vld [vmem:[%s173 + $0x140] sm:$0xff]
        %v228 = vld [vmem:[%s173 + $0x148] sm:$0xff]
        %v229 = vld [vmem:[%s173 + $0x150] sm:$0xff]
        %v230 = vld [vmem:[%s173 + $0x158] sm:$0xff]
        %v231 = vld [vmem:[%s173 + $0x160] sm:$0xff]
        %v232 = vld [vmem:[%s173 + $0x168] sm:$0xff]
        %v233 = vld [vmem:[%s173 + $0x170] sm:$0xff]
        %v234 = vld [vmem:[%s173 + $0x178] sm:$0xff]
        %v235 = vld [vmem:[%s173 + $0x180] sm:$0xff]
        %v236 = vld [vmem:[%s173 + $0x188] sm:$0xff]
        %v237 = vld [vmem:[%s173 + $0x190] sm:$0xff]
        %v238 = vld [vmem:[%s173 + $0x198] sm:$0xff]
        %v239 = vld [vmem:[%s173 + $0x1a0] sm:$0xff]
        %v240 = vld [vmem:[%s173 + $0x1a8] sm:$0xff]
        %v241 = vld [vmem:[%s173 + $0x1b0] sm:$0xff]
        %v242 = vld [vmem:[%s173 + $0x1b8] sm:$0xff]
        %v243 = vld [vmem:[%s173 + $0x1c0] sm:$0xff]
        %v244 = vld [vmem:[%s173 + $0x1c8] sm:$0xff]
        %v245 = vld [vmem:[%s173 + $0x1d0] sm:$0xff]
        %v246 = vld [vmem:[%s173 + $0x1d8] sm:$0xff]
        %v247 = vld [vmem:[%s173 + $0x1e0] sm:$0xff]
        %v248 = vld [vmem:[%s173 + $0x1e8] sm:$0xff]
        %v249 = vld [vmem:[%s173 + $0x1f0] sm:$0xff]
        %v250 = vld [vmem:[%s173 + $0x1f8] sm:$0xff]
        %v251 = vld [vmem:[%s179] sm:$0xff]
        %v252 = vld [vmem:[%s179 + $0x8] sm:$0xff]
        %v253 = vld [vmem:[%s179 + $0x10] sm:$0xff]
        %v254 = vld [vmem:[%s179 + $0x18] sm:$0xff]
        %v255 = vld [vmem:[%s179 + $0x20] sm:$0xff]
        %v256 = vld [vmem:[%s179 + $0x28] sm:$0xff]
        %v257 = vld [vmem:[%s179 + $0x30] sm:$0xff]
        %v258 = vld [vmem:[%s179 + $0x38] sm:$0xff]
        %v259 = vld [vmem:[%s179 + $0x40] sm:$0xff]
        %v260 = vld [vmem:[%s179 + $0x48] sm:$0xff]
        %v261 = vld [vmem:[%s179 + $0x50] sm:$0xff]
        %v262 = vld [vmem:[%s179 + $0x58] sm:$0xff]
        %v263 = vld [vmem:[%s179 + $0x60] sm:$0xff]
        %v264 = vld [vmem:[%s179 + $0x68] sm:$0xff]
        %v265 = vld [vmem:[%s179 + $0x70] sm:$0xff]
        %v266 = vld [vmem:[%s179 + $0x78] sm:$0xff]
        %v267 = vld [vmem:[%s179 + $0x80] sm:$0xff]
        %v268 = vld [vmem:[%s179 + $0x88] sm:$0xff]
        %v269 = vld [vmem:[%s179 + $0x90] sm:$0xff]
        %v270 = vld [vmem:[%s179 + $0x98] sm:$0xff]
        %v271 = vld [vmem:[%s179 + $0xa0] sm:$0xff]
        %v272 = vld [vmem:[%s179 + $0xa8] sm:$0xff]
        %v273 = vld [vmem:[%s179 + $0xb0] sm:$0xff]
        %v274 = vld [vmem:[%s179 + $0xb8] sm:$0xff]
        %v275 = vld [vmem:[%s179 + $0xc0] sm:$0xff]
        %v276 = vld [vmem:[%s179 + $0xc8] sm:$0xff]
        %v277 = vld [vmem:[%s179 + $0xd0] sm:$0xff]
        %v278 = vld [vmem:[%s179 + $0xd8] sm:$0xff]
        %v279 = vld [vmem:[%s179 + $0xe0] sm:$0xff]
        %v280 = vld [vmem:[%s179 + $0xe8] sm:$0xff]
        %v281 = vld [vmem:[%s179 + $0xf0] sm:$0xff]
        %v282 = vld [vmem:[%s179 + $0xf8] sm:$0xff]
        %v283 = vld [vmem:[%s179 + $0x100] sm:$0xff]
        %v284 = vld [vmem:[%s179 + $0x108] sm:$0xff]
        %v285 = vld [vmem:[%s179 + $0x110] sm:$0xff]
        %v286 = vld [vmem:[%s179 + $0x118] sm:$0xff]
        %v287 = vld [vmem:[%s179 + $0x120] sm:$0xff]
        %v288 = vld [vmem:[%s179 + $0x128] sm:$0xff]
        %v289 = vld [vmem:[%s179 + $0x130] sm:$0xff]
        %v290 = vld [vmem:[%s179 + $0x138] sm:$0xff]
        %v291 = vld [vmem:[%s179 + $0x140] sm:$0xff]
        %v292 = vld [vmem:[%s179 + $0x148] sm:$0xff]
        %v293 = vld [vmem:[%s179 + $0x150] sm:$0xff]
        %v294 = vld [vmem:[%s179 + $0x158] sm:$0xff]
        %v295 = vld [vmem:[%s179 + $0x160] sm:$0xff]
        %v296 = vld [vmem:[%s179 + $0x168] sm:$0xff]
        %v297 = vld [vmem:[%s179 + $0x170] sm:$0xff]
        %v298 = vld [vmem:[%s179 + $0x178] sm:$0xff]
        %v299 = vld [vmem:[%s179 + $0x180] sm:$0xff]
        %v300 = vld [vmem:[%s179 + $0x188] sm:$0xff]
        %v301 = vld [vmem:[%s179 + $0x190] sm:$0xff]
        %v302 = vld [vmem:[%s179 + $0x198] sm:$0xff]
        %v303 = vld [vmem:[%s179 + $0x1a0] sm:$0xff]
        %v304 = vld [vmem:[%s179 + $0x1a8] sm:$0xff]
        %v305 = vld [vmem:[%s179 + $0x1b0] sm:$0xff]
        %v306 = vld [vmem:[%s179 + $0x1b8] sm:$0xff]
        %v307 = vld [vmem:[%s179 + $0x1c0] sm:$0xff]
        %v308 = vld [vmem:[%s179 + $0x1c8] sm:$0xff]
        %v309 = vld [vmem:[%s179 + $0x1d0] sm:$0xff]
        %v310 = vld [vmem:[%s179 + $0x1d8] sm:$0xff]
        %v311 = vld [vmem:[%s179 + $0x1e0] sm:$0xff]
        %v312 = vld [vmem:[%s179 + $0x1e8] sm:$0xff]
        %v313 = vld [vmem:[%s179 + $0x1f0] sm:$0xff]
        %v314 = vld [vmem:[%s179 + $0x1f8] sm:$0xff]
        %v315 = vlaneseq
        %v316 = vand.u32 %v315, 127
        %317 = vset.pattern.permute.xlu0 0
        %318 = vperm.xlu0 %317, %v187
        %v319 = vpop.permute.xlu0 %318
        %320 = vset.pattern.permute.xlu0 0
        %321 = vperm.xlu0 %320, %v188
        %v322 = vpop.permute.xlu0 %321
        %323 = vset.pattern.permute.xlu0 0
        %324 = vperm.xlu0 %323, %v189
        %v325 = vpop.permute.xlu0 %324
        %326 = vset.pattern.permute.xlu0 0
        %327 = vperm.xlu0 %326, %v190
        %v328 = vpop.permute.xlu0 %327
        %329 = vset.pattern.permute.xlu0 0
        %330 = vperm.xlu0 %329, %v191
        %v331 = vpop.permute.xlu0 %330
        %332 = vset.pattern.permute.xlu0 0
        %333 = vperm.xlu0 %332, %v192
        %v334 = vpop.permute.xlu0 %333
        %335 = vset.pattern.permute.xlu0 0
        %336 = vperm.xlu0 %335, %v193
        %v337 = vpop.permute.xlu0 %336
        %338 = vset.pattern.permute.xlu0 0
        %339 = vperm.xlu0 %338, %v194
        %v340 = vpop.permute.xlu0 %339
        %341 = vset.pattern.permute.xlu0 0
        %342 = vperm.xlu0 %341, %v195
        %v343 = vpop.permute.xlu0 %342
        %344 = vset.pattern.permute.xlu0 0
        %345 = vperm.xlu0 %344, %v196
        %v346 = vpop.permute.xlu0 %345
        %347 = vset.pattern.permute.xlu0 0
        %348 = vperm.xlu0 %347, %v197
        %v349 = vpop.permute.xlu0 %348
        %350 = vset.pattern.permute.xlu0 0
        %351 = vperm.xlu0 %350, %v198
        %v352 = vpop.permute.xlu0 %351
        %353 = vset.pattern.permute.xlu0 0
        %354 = vperm.xlu0 %353, %v199
        %v355 = vpop.permute.xlu0 %354
        %356 = vset.pattern.permute.xlu0 0
        %357 = vperm.xlu0 %356, %v200
        %v358 = vpop.permute.xlu0 %357
        %359 = vset.pattern.permute.xlu0 0
        %360 = vperm.xlu0 %359, %v201
        %v361 = vpop.permute.xlu0 %360
        %362 = vset.pattern.permute.xlu0 0
        %363 = vperm.xlu0 %362, %v202
        %v364 = vpop.permute.xlu0 %363
        %365 = vset.pattern.permute.xlu0 0
        %366 = vperm.xlu0 %365, %v203
        %v367 = vpop.permute.xlu0 %366
        %368 = vset.pattern.permute.xlu0 0
        %369 = vperm.xlu0 %368, %v204
        %v370 = vpop.permute.xlu0 %369
        %371 = vset.pattern.permute.xlu0 0
        %372 = vperm.xlu0 %371, %v205
        %v373 = vpop.permute.xlu0 %372
        %374 = vset.pattern.permute.xlu0 0
        %375 = vperm.xlu0 %374, %v206
        %v376 = vpop.permute.xlu0 %375
        %377 = vset.pattern.permute.xlu0 0
        %378 = vperm.xlu0 %377, %v207
        %v379 = vpop.permute.xlu0 %378
        %380 = vset.pattern.permute.xlu0 0
        %381 = vperm.xlu0 %380, %v208
        %v382 = vpop.permute.xlu0 %381
        %383 = vset.pattern.permute.xlu0 0
        %384 = vperm.xlu0 %383, %v209
        %v385 = vpop.permute.xlu0 %384
        %386 = vset.pattern.permute.xlu0 0
        %387 = vperm.xlu0 %386, %v210
        %v388 = vpop.permute.xlu0 %387
        %389 = vset.pattern.permute.xlu0 0
        %390 = vperm.xlu0 %389, %v211
        %v391 = vpop.permute.xlu0 %390
        %392 = vset.pattern.permute.xlu0 0
        %393 = vperm.xlu0 %392, %v212
        %v394 = vpop.permute.xlu0 %393
        %395 = vset.pattern.permute.xlu0 0
        %396 = vperm.xlu0 %395, %v213
        %v397 = vpop.permute.xlu0 %396
        %398 = vset.pattern.permute.xlu0 0
        %399 = vperm.xlu0 %398, %v214
        %v400 = vpop.permute.xlu0 %399
        %401 = vset.pattern.permute.xlu0 0
        %402 = vperm.xlu0 %401, %v215
        %v403 = vpop.permute.xlu0 %402
        %404 = vset.pattern.permute.xlu0 0
        %405 = vperm.xlu0 %404, %v216
        %v406 = vpop.permute.xlu0 %405
        %407 = vset.pattern.permute.xlu0 0
        %408 = vperm.xlu0 %407, %v217
        %v409 = vpop.permute.xlu0 %408
        %410 = vset.pattern.permute.xlu0 0
        %411 = vperm.xlu0 %410, %v218
        %v412 = vpop.permute.xlu0 %411
        %413 = vset.pattern.permute.xlu0 0
        %414 = vperm.xlu0 %413, %v219
        %v415 = vpop.permute.xlu0 %414
        %416 = vset.pattern.permute.xlu0 0
        %417 = vperm.xlu0 %416, %v220
        %v418 = vpop.permute.xlu0 %417
        %419 = vset.pattern.permute.xlu0 0
        %420 = vperm.xlu0 %419, %v221
        %v421 = vpop.permute.xlu0 %420
        %422 = vset.pattern.permute.xlu0 0
        %423 = vperm.xlu0 %422, %v222
        %v424 = vpop.permute.xlu0 %423
        %425 = vset.pattern.permute.xlu0 0
        %426 = vperm.xlu0 %425, %v223
        %v427 = vpop.permute.xlu0 %426
        %428 = vset.pattern.permute.xlu0 0
        %429 = vperm.xlu0 %428, %v224
        %v430 = vpop.permute.xlu0 %429
        %431 = vset.pattern.permute.xlu0 0
        %432 = vperm.xlu0 %431, %v225
        %v433 = vpop.permute.xlu0 %432
        %434 = vset.pattern.permute.xlu0 0
        %435 = vperm.xlu0 %434, %v226
        %v436 = vpop.permute.xlu0 %435
        %437 = vset.pattern.permute.xlu0 0
        %438 = vperm.xlu0 %437, %v227
        %v439 = vpop.permute.xlu0 %438
        %440 = vset.pattern.permute.xlu0 0
        %441 = vperm.xlu0 %440, %v228
        %v442 = vpop.permute.xlu0 %441
        %443 = vset.pattern.permute.xlu0 0
        %444 = vperm.xlu0 %443, %v229
        %v445 = vpop.permute.xlu0 %444
        %446 = vset.pattern.permute.xlu0 0
        %447 = vperm.xlu0 %446, %v230
        %v448 = vpop.permute.xlu0 %447
        %449 = vset.pattern.permute.xlu0 0
        %450 = vperm.xlu0 %449, %v231
        %v451 = vpop.permute.xlu0 %450
        %452 = vset.pattern.permute.xlu0 0
        %453 = vperm.xlu0 %452, %v232
        %v454 = vpop.permute.xlu0 %453
        %455 = vset.pattern.permute.xlu0 0
        %456 = vperm.xlu0 %455, %v233
        %v457 = vpop.permute.xlu0 %456
        %458 = vset.pattern.permute.xlu0 0
        %459 = vperm.xlu0 %458, %v234
        %v460 = vpop.permute.xlu0 %459
        %461 = vset.pattern.permute.xlu0 0
        %462 = vperm.xlu0 %461, %v235
        %v463 = vpop.permute.xlu0 %462
        %464 = vset.pattern.permute.xlu0 0
        %465 = vperm.xlu0 %464, %v236
        %v466 = vpop.permute.xlu0 %465
        %467 = vset.pattern.permute.xlu0 0
        %468 = vperm.xlu0 %467, %v237
        %v469 = vpop.permute.xlu0 %468
        %470 = vset.pattern.permute.xlu0 0
        %471 = vperm.xlu0 %470, %v238
        %v472 = vpop.permute.xlu0 %471
        %473 = vset.pattern.permute.xlu0 0
        %474 = vperm.xlu0 %473, %v239
        %v475 = vpop.permute.xlu0 %474
        %476 = vset.pattern.permute.xlu0 0
        %477 = vperm.xlu0 %476, %v240
        %v478 = vpop.permute.xlu0 %477
        %479 = vset.pattern.permute.xlu0 0
        %480 = vperm.xlu0 %479, %v241
        %v481 = vpop.permute.xlu0 %480
        %482 = vset.pattern.permute.xlu0 0
        %483 = vperm.xlu0 %482, %v242
        %v484 = vpop.permute.xlu0 %483
        %485 = vset.pattern.permute.xlu0 0
        %486 = vperm.xlu0 %485, %v243
        %v487 = vpop.permute.xlu0 %486
        %488 = vset.pattern.permute.xlu0 0
        %489 = vperm.xlu0 %488, %v244
        %v490 = vpop.permute.xlu0 %489
        %491 = vset.pattern.permute.xlu0 0
        %492 = vperm.xlu0 %491, %v245
        %v493 = vpop.permute.xlu0 %492
        %494 = vset.pattern.permute.xlu0 0
        %495 = vperm.xlu0 %494, %v246
        %v496 = vpop.permute.xlu0 %495
        %497 = vset.pattern.permute.xlu0 0
        %498 = vperm.xlu0 %497, %v247
        %v499 = vpop.permute.xlu0 %498
        %500 = vset.pattern.permute.xlu0 0
        %501 = vperm.xlu0 %500, %v248
        %v502 = vpop.permute.xlu0 %501
        %503 = vset.pattern.permute.xlu0 0
        %504 = vperm.xlu0 %503, %v249
        %v505 = vpop.permute.xlu0 %504
        %506 = vset.pattern.permute.xlu0 0
        %507 = vperm.xlu0 %506, %v250
        %v508 = vpop.permute.xlu0 %507
        %vm509 = vcmp.eq.s32.totalorder %v319, %v316
        %vm510 = vcmp.eq.s32.totalorder %v322, %v316
        %vm511 = vcmp.eq.s32.totalorder %v325, %v316
        %vm512 = vcmp.eq.s32.totalorder %v328, %v316
        %vm513 = vcmp.eq.s32.totalorder %v331, %v316
        %vm514 = vcmp.eq.s32.totalorder %v334, %v316
        %vm515 = vcmp.eq.s32.totalorder %v337, %v316
        %vm516 = vcmp.eq.s32.totalorder %v340, %v316
        %vm517 = vcmp.eq.s32.totalorder %v343, %v316
        %vm518 = vcmp.eq.s32.totalorder %v346, %v316
        %vm519 = vcmp.eq.s32.totalorder %v349, %v316
        %vm520 = vcmp.eq.s32.totalorder %v352, %v316
        %vm521 = vcmp.eq.s32.totalorder %v355, %v316
        %vm522 = vcmp.eq.s32.totalorder %v358, %v316
        %vm523 = vcmp.eq.s32.totalorder %v361, %v316
        %vm524 = vcmp.eq.s32.totalorder %v364, %v316
        %vm525 = vcmp.eq.s32.totalorder %v367, %v316
        %vm526 = vcmp.eq.s32.totalorder %v370, %v316
        %vm527 = vcmp.eq.s32.totalorder %v373, %v316
        %vm528 = vcmp.eq.s32.totalorder %v376, %v316
        %vm529 = vcmp.eq.s32.totalorder %v379, %v316
        %vm530 = vcmp.eq.s32.totalorder %v382, %v316
        %vm531 = vcmp.eq.s32.totalorder %v385, %v316
        %vm532 = vcmp.eq.s32.totalorder %v388, %v316
        %vm533 = vcmp.eq.s32.totalorder %v391, %v316
        %vm534 = vcmp.eq.s32.totalorder %v394, %v316
        %vm535 = vcmp.eq.s32.totalorder %v397, %v316
        %vm536 = vcmp.eq.s32.totalorder %v400, %v316
        %vm537 = vcmp.eq.s32.totalorder %v403, %v316
        %vm538 = vcmp.eq.s32.totalorder %v406, %v316
        %vm539 = vcmp.eq.s32.totalorder %v409, %v316
        %vm540 = vcmp.eq.s32.totalorder %v412, %v316
        %vm541 = vcmp.eq.s32.totalorder %v415, %v316
        %vm542 = vcmp.eq.s32.totalorder %v418, %v316
        %vm543 = vcmp.eq.s32.totalorder %v421, %v316
        %vm544 = vcmp.eq.s32.totalorder %v424, %v316
        %vm545 = vcmp.eq.s32.totalorder %v427, %v316
        %vm546 = vcmp.eq.s32.totalorder %v430, %v316
        %vm547 = vcmp.eq.s32.totalorder %v433, %v316
        %vm548 = vcmp.eq.s32.totalorder %v436, %v316
        %vm549 = vcmp.eq.s32.totalorder %v439, %v316
        %vm550 = vcmp.eq.s32.totalorder %v442, %v316
        %vm551 = vcmp.eq.s32.totalorder %v445, %v316
        %vm552 = vcmp.eq.s32.totalorder %v448, %v316
        %vm553 = vcmp.eq.s32.totalorder %v451, %v316
        %vm554 = vcmp.eq.s32.totalorder %v454, %v316
        %vm555 = vcmp.eq.s32.totalorder %v457, %v316
        %vm556 = vcmp.eq.s32.totalorder %v460, %v316
        %vm557 = vcmp.eq.s32.totalorder %v463, %v316
        %vm558 = vcmp.eq.s32.totalorder %v466, %v316
        %vm559 = vcmp.eq.s32.totalorder %v469, %v316
        %vm560 = vcmp.eq.s32.totalorder %v472, %v316
        %vm561 = vcmp.eq.s32.totalorder %v475, %v316
        %vm562 = vcmp.eq.s32.totalorder %v478, %v316
        %vm563 = vcmp.eq.s32.totalorder %v481, %v316
        %vm564 = vcmp.eq.s32.totalorder %v484, %v316
        %vm565 = vcmp.eq.s32.totalorder %v487, %v316
        %vm566 = vcmp.eq.s32.totalorder %v490, %v316
        %vm567 = vcmp.eq.s32.totalorder %v493, %v316
        %vm568 = vcmp.eq.s32.totalorder %v496, %v316
        %vm569 = vcmp.eq.s32.totalorder %v499, %v316
        %vm570 = vcmp.eq.s32.totalorder %v502, %v316
        %vm571 = vcmp.eq.s32.totalorder %v505, %v316
        %vm572 = vcmp.eq.s32.totalorder %v508, %v316
        %v573 = vsel %vm509, 1, 0
        %v574 = vsel %vm510, 1, 0
        %v575 = vsel %vm511, 1, 0
        %v576 = vsel %vm512, 1, 0
        %v577 = vsel %vm513, 1, 0
        %v578 = vsel %vm514, 1, 0
        %v579 = vsel %vm515, 1, 0
        %v580 = vsel %vm516, 1, 0
        %v581 = vsel %vm517, 1, 0
        %v582 = vsel %vm518, 1, 0
        %v583 = vsel %vm519, 1, 0
        %v584 = vsel %vm520, 1, 0
        %v585 = vsel %vm521, 1, 0
        %v586 = vsel %vm522, 1, 0
        %v587 = vsel %vm523, 1, 0
        %v588 = vsel %vm524, 1, 0
        %v589 = vsel %vm525, 1, 0
        %v590 = vsel %vm526, 1, 0
        %v591 = vsel %vm527, 1, 0
        %v592 = vsel %vm528, 1, 0
        %v593 = vsel %vm529, 1, 0
        %v594 = vsel %vm530, 1, 0
        %v595 = vsel %vm531, 1, 0
        %v596 = vsel %vm532, 1, 0
        %v597 = vsel %vm533, 1, 0
        %v598 = vsel %vm534, 1, 0
        %v599 = vsel %vm535, 1, 0
        %v600 = vsel %vm536, 1, 0
        %v601 = vsel %vm537, 1, 0
        %v602 = vsel %vm538, 1, 0
        %v603 = vsel %vm539, 1, 0
        %v604 = vsel %vm540, 1, 0
        %v605 = vsel %vm541, 1, 0
        %v606 = vsel %vm542, 1, 0
        %v607 = vsel %vm543, 1, 0
        %v608 = vsel %vm544, 1, 0
        %v609 = vsel %vm545, 1, 0
        %v610 = vsel %vm546, 1, 0
        %v611 = vsel %vm547, 1, 0
        %v612 = vsel %vm548, 1, 0
        %v613 = vsel %vm549, 1, 0
        %v614 = vsel %vm550, 1, 0
        %v615 = vsel %vm551, 1, 0
        %v616 = vsel %vm552, 1, 0
        %v617 = vsel %vm553, 1, 0
        %v618 = vsel %vm554, 1, 0
        %v619 = vsel %vm555, 1, 0
        %v620 = vsel %vm556, 1, 0
        %v621 = vsel %vm557, 1, 0
        %v622 = vsel %vm558, 1, 0
        %v623 = vsel %vm559, 1, 0
        %v624 = vsel %vm560, 1, 0
        %v625 = vsel %vm561, 1, 0
        %v626 = vsel %vm562, 1, 0
        %v627 = vsel %vm563, 1, 0
        %v628 = vsel %vm564, 1, 0
        %v629 = vsel %vm565, 1, 0
        %v630 = vsel %vm566, 1, 0
        %v631 = vsel %vm567, 1, 0
        %v632 = vsel %vm568, 1, 0
        %v633 = vsel %vm569, 1, 0
        %v634 = vsel %vm570, 1, 0
        %v635 = vsel %vm571, 1, 0
        %v636 = vsel %vm572, 1, 0
        %v637 = vcvt.s32.f32 %v573
        %v638 = vcvt.s32.f32 %v574
        %v639 = vcvt.s32.f32 %v575
        %v640 = vcvt.s32.f32 %v576
        %v641 = vcvt.s32.f32 %v577
        %v642 = vcvt.s32.f32 %v578
        %v643 = vcvt.s32.f32 %v579
        %v644 = vcvt.s32.f32 %v580
        %v645 = vcvt.s32.f32 %v581
        %v646 = vcvt.s32.f32 %v582
        %v647 = vcvt.s32.f32 %v583
        %v648 = vcvt.s32.f32 %v584
        %v649 = vcvt.s32.f32 %v585
        %v650 = vcvt.s32.f32 %v586
        %v651 = vcvt.s32.f32 %v587
        %v652 = vcvt.s32.f32 %v588
        %v653 = vcvt.s32.f32 %v589
        %v654 = vcvt.s32.f32 %v590
        %v655 = vcvt.s32.f32 %v591
        %v656 = vcvt.s32.f32 %v592
        %v657 = vcvt.s32.f32 %v593
        %v658 = vcvt.s32.f32 %v594
        %v659 = vcvt.s32.f32 %v595
        %v660 = vcvt.s32.f32 %v596
        %v661 = vcvt.s32.f32 %v597
        %v662 = vcvt.s32.f32 %v598
        %v663 = vcvt.s32.f32 %v599
        %v664 = vcvt.s32.f32 %v600
        %v665 = vcvt.s32.f32 %v601
        %v666 = vcvt.s32.f32 %v602
        %v667 = vcvt.s32.f32 %v603
        %v668 = vcvt.s32.f32 %v604
        %v669 = vcvt.s32.f32 %v605
        %v670 = vcvt.s32.f32 %v606
        %v671 = vcvt.s32.f32 %v607
        %v672 = vcvt.s32.f32 %v608
        %v673 = vcvt.s32.f32 %v609
        %v674 = vcvt.s32.f32 %v610
        %v675 = vcvt.s32.f32 %v611
        %v676 = vcvt.s32.f32 %v612
        %v677 = vcvt.s32.f32 %v613
        %v678 = vcvt.s32.f32 %v614
        %v679 = vcvt.s32.f32 %v615
        %v680 = vcvt.s32.f32 %v616
        %v681 = vcvt.s32.f32 %v617
        %v682 = vcvt.s32.f32 %v618
        %v683 = vcvt.s32.f32 %v619
        %v684 = vcvt.s32.f32 %v620
        %v685 = vcvt.s32.f32 %v621
        %v686 = vcvt.s32.f32 %v622
        %v687 = vcvt.s32.f32 %v623
        %v688 = vcvt.s32.f32 %v624
        %v689 = vcvt.s32.f32 %v625
        %v690 = vcvt.s32.f32 %v626
        %v691 = vcvt.s32.f32 %v627
        %v692 = vcvt.s32.f32 %v628
        %v693 = vcvt.s32.f32 %v629
        %v694 = vcvt.s32.f32 %v630
        %v695 = vcvt.s32.f32 %v631
        %v696 = vcvt.s32.f32 %v632
        %v697 = vcvt.s32.f32 %v633
        %v698 = vcvt.s32.f32 %v634
        %v699 = vcvt.s32.f32 %v635
        %v700 = vcvt.s32.f32 %v636
        %v701 = vld [vmem:[#allocation2] sm:$0xf]
        %702 = vxpose.xlu0.b32.start [1/16] %v637, 128
        %703 = vxpose.xlu0.b32.cont [2/16] %v638, 128
        %704 = vxpose.xlu0.b32.cont [3/16] %v639, 128
        %705 = vxpose.xlu0.b32.cont [4/16] %v640, 128
        %706 = vxpose.xlu0.b32.cont [5/16] %v641, 128
        %707 = vxpose.xlu0.b32.cont [6/16] %v642, 128
        %708 = vxpose.xlu0.b32.cont [7/16] %v643, 128
        %709 = vxpose.xlu0.b32.cont [8/16] %v644, 128
        %710 = vxpose.xlu0.b32.cont [9/16] %v645, 128
        %711 = vxpose.xlu0.b32.cont [10/16] %v646, 128
        %712 = vxpose.xlu0.b32.cont [11/16] %v647, 128
        %713 = vxpose.xlu0.b32.cont [12/16] %v648, 128
        %714 = vxpose.xlu0.b32.cont [13/16] %v649, 128
        %715 = vxpose.xlu0.b32.cont [14/16] %v650, 128
        %716 = vxpose.xlu0.b32.cont [15/16] %v651, 128
        %717 = vxpose.xlu0.b32.end [16/16] %v652, 128
        %v718 = vpop.trf.xlu0
        %v719 = vpop.trf.xlu0
        %v720 = vpop.trf.xlu0
        %v721 = vpop.trf.xlu0
        %v722 = vpop.trf.xlu0
        %v723 = vpop.trf.xlu0
        %v724 = vpop.trf.xlu0
        %v725 = vpop.trf.xlu0
        %v726 = vpop.trf.xlu0
        %v727 = vpop.trf.xlu0
        %v728 = vpop.trf.xlu0
        %v729 = vpop.trf.xlu0
        %v730 = vpop.trf.xlu0
        %v731 = vpop.trf.xlu0
        %v732 = vpop.trf.xlu0
        %v733 = vpop.trf.xlu0
        %734 = vxpose.xlu0.b32.start [1/16] %v653, 128
        %735 = vxpose.xlu0.b32.cont [2/16] %v654, 128
        %736 = vxpose.xlu0.b32.cont [3/16] %v655, 128
        %737 = vxpose.xlu0.b32.cont [4/16] %v656, 128
        %738 = vxpose.xlu0.b32.cont [5/16] %v657, 128
        %739 = vxpose.xlu0.b32.cont [6/16] %v658, 128
        %740 = vxpose.xlu0.b32.cont [7/16] %v659, 128
        %741 = vxpose.xlu0.b32.cont [8/16] %v660, 128
        %742 = vxpose.xlu0.b32.cont [9/16] %v661, 128
        %743 = vxpose.xlu0.b32.cont [10/16] %v662, 128
        %744 = vxpose.xlu0.b32.cont [11/16] %v663, 128
        %745 = vxpose.xlu0.b32.cont [12/16] %v664, 128
        %746 = vxpose.xlu0.b32.cont [13/16] %v665, 128
        %747 = vxpose.xlu0.b32.cont [14/16] %v666, 128
        %748 = vxpose.xlu0.b32.cont [15/16] %v667, 128
        %749 = vxpose.xlu0.b32.end [16/16] %v668, 128
        %v750 = vpop.trf.xlu0
        %v751 = vpop.trf.xlu0
        %v752 = vpop.trf.xlu0
        %v753 = vpop.trf.xlu0
        %v754 = vpop.trf.xlu0
        %v755 = vpop.trf.xlu0
        %v756 = vpop.trf.xlu0
        %v757 = vpop.trf.xlu0
        %v758 = vpop.trf.xlu0
        %v759 = vpop.trf.xlu0
        %v760 = vpop.trf.xlu0
        %v761 = vpop.trf.xlu0
        %v762 = vpop.trf.xlu0
        %v763 = vpop.trf.xlu0
        %v764 = vpop.trf.xlu0
        %v765 = vpop.trf.xlu0
        %766 = vxpose.xlu0.b32.start [1/16] %v669, 128
        %767 = vxpose.xlu0.b32.cont [2/16] %v670, 128
        %768 = vxpose.xlu0.b32.cont [3/16] %v671, 128
        %769 = vxpose.xlu0.b32.cont [4/16] %v672, 128
        %770 = vxpose.xlu0.b32.cont [5/16] %v673, 128
        %771 = vxpose.xlu0.b32.cont [6/16] %v674, 128
        %772 = vxpose.xlu0.b32.cont [7/16] %v675, 128
        %773 = vxpose.xlu0.b32.cont [8/16] %v676, 128
        %774 = vxpose.xlu0.b32.cont [9/16] %v677, 128
        %775 = vxpose.xlu0.b32.cont [10/16] %v678, 128
        %776 = vxpose.xlu0.b32.cont [11/16] %v679, 128
        %777 = vxpose.xlu0.b32.cont [12/16] %v680, 128
        %778 = vxpose.xlu0.b32.cont [13/16] %v681, 128
        %779 = vxpose.xlu0.b32.cont [14/16] %v682, 128
        %780 = vxpose.xlu0.b32.cont [15/16] %v683, 128
        %781 = vxpose.xlu0.b32.end [16/16] %v684, 128
        %v782 = vpop.trf.xlu0
        %v783 = vpop.trf.xlu0
        %v784 = vpop.trf.xlu0
        %v785 = vpop.trf.xlu0
        %v786 = vpop.trf.xlu0
        %v787 = vpop.trf.xlu0
        %v788 = vpop.trf.xlu0
        %v789 = vpop.trf.xlu0
        %v790 = vpop.trf.xlu0
        %v791 = vpop.trf.xlu0
        %v792 = vpop.trf.xlu0
        %v793 = vpop.trf.xlu0
        %v794 = vpop.trf.xlu0
        %v795 = vpop.trf.xlu0
        %v796 = vpop.trf.xlu0
        %v797 = vpop.trf.xlu0
        %798 = vxpose.xlu0.b32.start [1/16] %v685, 128
        %799 = vxpose.xlu0.b32.cont [2/16] %v686, 128
        %800 = vxpose.xlu0.b32.cont [3/16] %v687, 128
        %801 = vxpose.xlu0.b32.cont [4/16] %v688, 128
        %802 = vxpose.xlu0.b32.cont [5/16] %v689, 128
        %803 = vxpose.xlu0.b32.cont [6/16] %v690, 128
        %804 = vxpose.xlu0.b32.cont [7/16] %v691, 128
        %805 = vxpose.xlu0.b32.cont [8/16] %v692, 128
        %806 = vxpose.xlu0.b32.cont [9/16] %v693, 128
        %807 = vxpose.xlu0.b32.cont [10/16] %v694, 128
        %808 = vxpose.xlu0.b32.cont [11/16] %v695, 128
        %809 = vxpose.xlu0.b32.cont [12/16] %v696, 128
        %810 = vxpose.xlu0.b32.cont [13/16] %v697, 128
        %811 = vxpose.xlu0.b32.cont [14/16] %v698, 128
        %812 = vxpose.xlu0.b32.cont [15/16] %v699, 128
        %813 = vxpose.xlu0.b32.end [16/16] %v700, 128
        %v814 = vpop.trf.xlu0
        %v815 = vpop.trf.xlu0
        %v816 = vpop.trf.xlu0
        %v817 = vpop.trf.xlu0
        %v818 = vpop.trf.xlu0
        %v819 = vpop.trf.xlu0
        %v820 = vpop.trf.xlu0
        %v821 = vpop.trf.xlu0
        %v822 = vpop.trf.xlu0
        %v823 = vpop.trf.xlu0
        %v824 = vpop.trf.xlu0
        %v825 = vpop.trf.xlu0
        %v826 = vpop.trf.xlu0
        %v827 = vpop.trf.xlu0
        %v828 = vpop.trf.xlu0
        %v829 = vpop.trf.xlu0
        %830 = vmatprep.subr.mxu0 0.0
        %831 = vmatpush1.msra.mxu0 %v251
        %832 = vmatprep.subr.mxu0 0.0
        %833 = vmatpush1.msra.mxu0 %v252
        %834 = vmatprep.subr.mxu0 0.0
        %835 = vmatpush1.msra.mxu0 %v253
        %836 = vmatprep.subr.mxu0 0.0
        %837 = vmatpush1.msra.mxu0 %v254
        %838 = vmatprep.subr.mxu0 0.0
        %839 = vmatpush1.msra.mxu0 %v255
        %840 = vmatprep.subr.mxu0 0.0
        %841 = vmatpush1.msra.mxu0 %v256
        %842 = vmatprep.subr.mxu0 0.0
        %843 = vmatpush1.msra.mxu0 %v257
        %844 = vmatprep.subr.mxu0 0.0
        %845 = vmatpush1.msra.mxu0 %v258
        %846 = vmatprep.subr.mxu0 0.0
        %847 = vmatpush1.msra.mxu0 %v259
        %848 = vmatprep.subr.mxu0 0.0
        %849 = vmatpush1.msra.mxu0 %v260
        %850 = vmatprep.subr.mxu0 0.0
        %851 = vmatpush1.msra.mxu0 %v261
        %852 = vmatprep.subr.mxu0 0.0
        %853 = vmatpush1.msra.mxu0 %v262
        %854 = vmatprep.subr.mxu0 0.0
        %855 = vmatpush1.msra.mxu0 %v263
        %856 = vmatprep.subr.mxu0 0.0
        %857 = vmatpush1.msra.mxu0 %v264
        %858 = vmatprep.subr.mxu0 0.0
        %859 = vmatpush1.msra.mxu0 %v265
        %860 = vmatprep.subr.mxu0 0.0
        %861 = vmatpush1.msra.mxu0 %v266
        %862 = vmatprep.subr.mxu0 0.0
        %863 = vmatpush1.msra.mxu0 %v267
        %864 = vmatprep.subr.mxu0 0.0
        %865 = vmatpush1.msra.mxu0 %v268
        %866 = vmatprep.subr.mxu0 0.0
        %867 = vmatpush1.msra.mxu0 %v269
        %868 = vmatprep.subr.mxu0 0.0
        %869 = vmatpush1.msra.mxu0 %v270
        %870 = vmatprep.subr.mxu0 0.0
        %871 = vmatpush1.msra.mxu0 %v271
        %872 = vmatprep.subr.mxu0 0.0
        %873 = vmatpush1.msra.mxu0 %v272
        %874 = vmatprep.subr.mxu0 0.0
        %875 = vmatpush1.msra.mxu0 %v273
        %876 = vmatprep.subr.mxu0 0.0
        %877 = vmatpush1.msra.mxu0 %v274
        %878 = vmatprep.subr.mxu0 0.0
        %879 = vmatpush1.msra.mxu0 %v275
        %880 = vmatprep.subr.mxu0 0.0
        %881 = vmatpush1.msra.mxu0 %v276
        %882 = vmatprep.subr.mxu0 0.0
        %883 = vmatpush1.msra.mxu0 %v277
        %884 = vmatprep.subr.mxu0 0.0
        %885 = vmatpush1.msra.mxu0 %v278
        %886 = vmatprep.subr.mxu0 0.0
        %887 = vmatpush1.msra.mxu0 %v279
        %888 = vmatprep.subr.mxu0 0.0
        %889 = vmatpush1.msra.mxu0 %v280
        %890 = vmatprep.subr.mxu0 0.0
        %891 = vmatpush1.msra.mxu0 %v281
        %892 = vmatprep.subr.mxu0 0.0
        %893 = vmatpush1.msra.mxu0 %v282
        %894 = vmatprep.mubr.f32.mxu0 %v750
        %895 = vmatmul.mubr.f32.gmra.mrb[0].mxu0 %v718
        %v896 = vpop.f32.mrb[0].mxu0
        %v897 = vadd.f32 0.0, %v896
        %v898 = vpop.f32.mrb[0].mxu0
        %899 = vdwg.mxu0
        %900 = vmatprep.subr.mxu0 0.0
        %901 = vmatpush1.msra.mxu0 %v283
        %902 = vmatprep.subr.mxu0 0.0
        %903 = vmatpush1.msra.mxu0 %v284
        %904 = vmatprep.subr.mxu0 0.0
        %905 = vmatpush1.msra.mxu0 %v285
        %906 = vmatprep.subr.mxu0 0.0
        %907 = vmatpush1.msra.mxu0 %v286
        %908 = vmatprep.subr.mxu0 0.0
        %909 = vmatpush1.msra.mxu0 %v287
        %910 = vmatprep.subr.mxu0 0.0
        %911 = vmatpush1.msra.mxu0 %v288
        %912 = vmatprep.subr.mxu0 0.0
        %913 = vmatpush1.msra.mxu0 %v289
        %914 = vmatprep.subr.mxu0 0.0
        %915 = vmatpush1.msra.mxu0 %v290
        %916 = vmatprep.subr.mxu0 0.0
        %917 = vmatpush1.msra.mxu0 %v291
        %918 = vmatprep.subr.mxu0 0.0
        %919 = vmatpush1.msra.mxu0 %v292
        %920 = vmatprep.subr.mxu0 0.0
        %921 = vmatpush1.msra.mxu0 %v293
        %922 = vmatprep.subr.mxu0 0.0
        %923 = vmatpush1.msra.mxu0 %v294
        %924 = vmatprep.subr.mxu0 0.0
        %925 = vmatpush1.msra.mxu0 %v295
        %926 = vmatprep.subr.mxu0 0.0
        %927 = vmatpush1.msra.mxu0 %v296
        %928 = vmatprep.subr.mxu0 0.0
        %929 = vmatpush1.msra.mxu0 %v297
        %930 = vmatprep.subr.mxu0 0.0
        %931 = vmatpush1.msra.mxu0 %v298
        %932 = vmatprep.subr.mxu0 0.0
        %933 = vmatpush1.msra.mxu0 %v299
        %934 = vmatprep.subr.mxu0 0.0
        %935 = vmatpush1.msra.mxu0 %v300
        %936 = vmatprep.subr.mxu0 0.0
        %937 = vmatpush1.msra.mxu0 %v301
        %938 = vmatprep.subr.mxu0 0.0
        %939 = vmatpush1.msra.mxu0 %v302
        %940 = vmatprep.subr.mxu0 0.0
        %941 = vmatpush1.msra.mxu0 %v303
        %942 = vmatprep.subr.mxu0 0.0
        %943 = vmatpush1.msra.mxu0 %v304
        %944 = vmatprep.subr.mxu0 0.0
        %945 = vmatpush1.msra.mxu0 %v305
        %946 = vmatprep.subr.mxu0 0.0
        %947 = vmatpush1.msra.mxu0 %v306
        %948 = vmatprep.subr.mxu0 0.0
        %949 = vmatpush1.msra.mxu0 %v307
        %950 = vmatprep.subr.mxu0 0.0
        %951 = vmatpush1.msra.mxu0 %v308
        %952 = vmatprep.subr.mxu0 0.0
        %953 = vmatpush1.msra.mxu0 %v309
        %954 = vmatprep.subr.mxu0 0.0
        %955 = vmatpush1.msra.mxu0 %v310
        %956 = vmatprep.subr.mxu0 0.0
        %957 = vmatpush1.msra.mxu0 %v311
        %958 = vmatprep.subr.mxu0 0.0
        %959 = vmatpush1.msra.mxu0 %v312
        %960 = vmatprep.subr.mxu0 0.0
        %961 = vmatpush1.msra.mxu0 %v313
        %962 = vmatprep.subr.mxu0 0.0
        %963 = vmatpush1.msra.mxu0 %v314
        %964 = vmatprep.mubr.f32.mxu0 %v814
        %965 = vmatmul.mubr.f32.gmra.mrb[0].mxu0 %v782
        %v966 = vpop.f32.mrb[0].mxu0
        %v967 = vadd.f32 %v897, %v966
        %v968 = vpop.f32.mrb[0].mxu0
        %969 = vdwg.mxu0
        %v970 = vadd.f32 %v701, %v967
        %vm971 = vcmask 527360
        %972 = vst.msk [vmem:[#allocation2] sm:$0xf] %vm971, %v970
        %p973 = scmp.eq.s32.totalorder %s15, 15
        // Predicated region
        $region37: #{protomgnet_forward.7} parent=31 // pred_check
          %p974 = pneg %p973
        $region38: #{protomgnet_forward.7} parent=31 // pred_check_branch
          %976 = sbr.rel (%p974) target = $region40
        $region39: #{protomgnet_forward.7} parent=31 // pred_region
          %v977 = vld [vmem:[#allocation2] sm:$0xf]
          %v978 = vmax.f32 %v977, 1.0
          %980 = vset.pattern.permute.xlu0 64
          %981 = vperm.xlu0 %980, %v978
          %v982 = vpop.permute.xlu0 %981
          %v984 = vrcp.pop %v982
          %v985 = vmul.f32 %v977, %v984
          %v986 = vld [vmem:[%s2] sm:$0xf]
          %vm987 = vcmp.gt.f32.partialorder %v977, 0.0
          %v988 = vmul.f32 %v986, 0.9
          %v989 = vmul.f32 %v985, 0.1
          %v990 = vadd.f32 %v988, %v989
          %v991 = vsel %vm987, 1, 0
          %992 = vset.pattern.permute.xlu0 64
          %993 = vperm.xlu0 %992, %v991
          %v994 = vpop.permute.xlu0 %993
          %vm995 = vcmp.eq.s32.totalorder %v994, 1
          %v996 = vsel %vm995, %v990, %v986
          %vm997 = vcmask 519168
          %998 = vst.msk [vmem:[#allocation3] sm:$0xf] %vm997, %v996
        $region40: #{protomgnet_forward.7} parent=31 // pred_fallthru
          _
        // Predicated region
        $region41: #{protomgnet_forward.7} parent=31 // pred_check
          %p999 = pneg %p101
        $region42: #{protomgnet_forward.7} parent=31 // pred_check_branch
          %1001 = sbr.rel (%p999) target = $region44
        $region43: #{protomgnet_forward.7} parent=31 // pred_region
          %s1003 = ssub.s32 64, 64
          %1004 = vsyncadd [#allocation4], %s1003
          %s1006 = sshll.u32 [#allocation3], 4
          %s1007 = int_to_ptr.vmem [resolvable:$true] %s1006
          %1009 = dma.vmem_to_hbm [thread:$0]  %s1007, 64, %s3, [#allocation4]
        $region44: #{protomgnet_forward.7} parent=31 // pred_fallthru
          _
        // Predicated region
        $region45: #{protomgnet_forward.7} parent=31 // pred_check
          %p1010 = pneg %p101
        $region46: #{protomgnet_forward.7} parent=31 // pred_check_branch
          %1012 = sbr.rel (%p1010) target = $region48
        $region47: #{protomgnet_forward.7} parent=31 // pred_region
          %1013 = dma.done [#allocation4], 64
        $region48: #{protomgnet_forward.7} parent=31 // pred_fallthru
          _
      $region32: #{protomgnet_forward.7} parent=5 // pred_fallthru
        _
      %p1014 = scmp.le.s32.totalorder 2, %s10
      // Predicated region
      $region49: #{protomgnet_forward.7} parent=5 // pred_check
        %p1015 = pneg %p1014
      $region50: #{protomgnet_forward.7} parent=5 // pred_check_branch
        %1017 = sbr.rel (%p1015) target = $region52
      $region51: #{protomgnet_forward.7} parent=5 // pred_region
        %s1018 = ssub.s32 %s10, 2
      $region52: #{protomgnet_forward.7} parent=5 // pred_fallthru
        _
    $region6: #{protomgnet_forward.7} parent=1 // loop_footer
      %s14 = sadd.s32 1, %s10
    $region7: #{protomgnet_forward.7} parent=1 // loop_footer_branch
      %9 = sbr.rel target = $region3
    $region8: #{protomgnet_forward.7} parent=1 // loop_exit
      _
    %1019 = vsyncpa [#allocation4], 1
    %s1020 = scalar_lea.sflag [#allocation4], 1
    %1021 = vsyncpa %s1020, 1

</llo_original>
